<compile_context>
chip_gen: v7x
topology: tpu7x:2x2x1
jax: 0.10.0
libtpu: 0.0.40
codegen_flags: <defaults>
</compile_context>

<pallas_src>
import functools

import jax
import jax.numpy as jnp
from jax import lax
from jax.experimental import pallas as pl
from jax.experimental.pallas import tpu as pltpu


# ------------------------------ Pallas kernels ------------------------------ #

def _gemm_bn_relu_kernel(a_ref, b_ref, g_ref, e_ref, ga_ref, be_ref, y_ref, *,
                         inv_count, eps):
    """Fused full-layer step: bf16 GEMM -> BN batch stats -> normalize -> ReLU.

    Column layout of the GEMM output is "group-major, channel-minor" (group =
    sub-pixel parity, or the 4x4 spatial position for layer 0).  g_ref/e_ref
    are precomputed 0/1 fold / expand matrices that turn per-column sums into
    per-channel sums replicated back over the packed columns, so no cross-lane
    reshapes are needed inside the kernel.
    """
    nc = b_ref.shape[1]
    acc = jnp.dot(a_ref[...], b_ref[...], preferred_element_type=jnp.float32)  # (M, Nc)

    # Per-column partial sums, replicated over 8 sublanes (cheap, avoids 1-row MXU ops).
    s = jnp.broadcast_to(jnp.sum(acc, axis=0, keepdims=True), (8, nc))
    q = jnp.broadcast_to(jnp.sum(acc * acc, axis=0, keepdims=True), (8, nc))

    # Fold across parity/spatial groups to per-channel, expand back to columns.
    s = jnp.dot(jnp.dot(s, g_ref[...], preferred_element_type=jnp.float32),
                e_ref[...], preferred_element_type=jnp.float32)                # (8, Nc)
    q = jnp.dot(jnp.dot(q, g_ref[...], preferred_element_type=jnp.float32),
                e_ref[...], preferred_element_type=jnp.float32)

    mean = s[0:1] * inv_count                                                  # (1, Nc)
    ex2 = q[0:1] * inv_count
    var = jnp.maximum(ex2 - mean * mean, 0.0)      # one-pass var, clamped >= 0
    scale = ga_ref[...] * lax.rsqrt(var + eps)
    shift = be_ref[...] - mean * scale
    y_ref[...] = jnp.maximum(acc * scale + shift, 0.0).astype(y_ref.dtype)


def _gemm_tanh_kernel(a_ref, b_ref, y_ref):
    """Final layer: full-K bf16 GEMM with tanh fused into the epilogue (bf16 out)."""
    acc = jnp.dot(a_ref[...], b_ref[...], preferred_element_type=jnp.float32)
    y_ref[...] = jnp.tanh(acc).astype(y_ref.dtype)


# ------------------------------ Pallas wrappers ------------------------------ #

def conv_gemm_bn_relu(a, b, g, e, gcols, bcols, count, eps):
    """a: (M, K) bf16, b: (K, Nc) bf16, g: (Nc, C) f32, e: (C, Nc) f32,
    gcols/bcols: (1, Nc) f32 packed gamma/beta.  Returns normalized+ReLU'd
    (M, Nc) bf16 in one pass.  Single grid step: every operand fits in VMEM.
    """
    M, K = a.shape
    Nc = b.shape[1]
    C = g.shape[1]
    kern = functools.partial(_gemm_bn_relu_kernel,
                             inv_count=1.0 / float(count), eps=float(eps))
    return pl.pallas_call(
        kern,
        out_shape=jax.ShapeDtypeStruct((M, Nc), jnp.bfloat16),
        grid_spec=pltpu.PrefetchScalarGridSpec(
            num_scalar_prefetch=0,
            grid=(1,),
            in_specs=[pl.BlockSpec((M, K), lambda i: (0, 0)),
                      pl.BlockSpec((K, Nc), lambda i: (0, 0)),
                      pl.BlockSpec((Nc, C), lambda i: (0, 0)),
                      pl.BlockSpec((C, Nc), lambda i: (0, 0)),
                      pl.BlockSpec((1, Nc), lambda i: (0, 0)),
                      pl.BlockSpec((1, Nc), lambda i: (0, 0))],
            out_specs=pl.BlockSpec((M, Nc), lambda i: (0, 0))),
        compiler_params=pltpu.CompilerParams(
            dimension_semantics=("arbitrary",)),
    )(a, b, g, e, gcols, bcols)


def _pick_tm(m):
    """Largest row tile that still gives >=2 grid steps (v7x megacore)."""
    for t in (1024, 512, 256, 128, 64, 32, 16, 8):
        if m % t == 0 and m // t >= 2:
            return t
    return m


def conv_gemm_tanh(a, b):
    """Final-layer GEMM with fused tanh; output bf16 (M, Nc)."""
    M, K = a.shape
    Nc = b.shape[1]
    tm = _pick_tm(M)
    return pl.pallas_call(
        _gemm_tanh_kernel,
        out_shape=jax.ShapeDtypeStruct((M, Nc), jnp.bfloat16),
        grid_spec=pltpu.PrefetchScalarGridSpec(
            num_scalar_prefetch=0,
            grid=(M // tm,),
            in_specs=[pl.BlockSpec((tm, K), lambda i: (i, 0)),
                      pl.BlockSpec((K, Nc), lambda i: (0, 0))],
            out_specs=pl.BlockSpec((tm, Nc), lambda i: (i, 0))),
        compiler_params=pltpu.CompilerParams(
            dimension_semantics=("parallel",)),
    )(a, b)


# --------------------------- layer glue (plain JAX) -------------------------- #

def _nine_shift_patches(x):
    """x: (N, H, W, Cin) bf16 -> (N*H*W, 9*Cin) bf16.

    Shared im2col operand for all 4 output parities of a stride-2, pad-1, k=4
    ConvTranspose: column block s = dy*3 + dx holds x_pad[n, h+dy, w+dx, :]
    with x zero-padded by 1 on each side.
    """
    N, H, W, C = x.shape
    xe = jnp.pad(x, ((0, 0), (1, 1), (1, 1), (0, 0)))
    shifts = [xe[:, dy:dy + H, dx:dx + W, :] for dy in range(3) for dx in range(3)]
    return jnp.concatenate(shifts, axis=-1).reshape(N * H * W, 9 * C)


def _unpack_interleave(y, N, H, W, cout):
    """y: (N*H*W, Nc) with col = (2*po+pw)*cout + c  ->  (N, 2H, 2W, cout) NHWC."""
    y = y[:, :4 * cout].reshape(N, H, W, 2, 2, cout)   # (n, h, w, po, pw, c)
    y = jnp.transpose(y, (0, 1, 3, 2, 4, 5))           # (n, h, po, w, pw, c)
    return y.reshape(N, 2 * H, 2 * W, cout)


def _fold_expand(nc, cout, n_valid_cols):
    """0/1 fold matrix g (nc, cout) and expand matrix e = g.T (cout, nc) for the
    "group-major, channel-minor" packed column layout (channel = col % cout,
    columns >= n_valid_cols are padding)."""
    j = jnp.arange(nc)
    valid = j < n_valid_cols
    g = ((j[:, None] % cout) == jnp.arange(cout)[None, :]) & valid[:, None]
    g = g.astype(jnp.float32)
    return g, g.T


def prepare_params(raw):
    """One-time (off hot path) weight prep into GEMM-ready operands."""
    proc = {}

    # Layer 0: ConvTranspose2d(k=4, s=1, p=0) on a 1x1 input is a plain GEMM:
    #   out[n, kh, kw, cout] = sum_cin z[n, cin] * w0[cin, cout, kh, kw]
    w0 = raw["w0"]
    cin0, cout0 = w0.shape[0], w0.shape[1]
    nc0 = 16 * cout0
    proc["b0"] = jnp.transpose(w0, (0, 2, 3, 1)).reshape(cin0, nc0).astype(jnp.bfloat16)
    g0, e0 = _fold_expand(nc0, cout0, nc0)
    proc["g0"], proc["e0"] = g0, e0
    proc["gamma_cols0"] = jnp.tile(raw["gamma0"], 16)[None, :].astype(jnp.float32)
    proc["beta_cols0"] = jnp.tile(raw["beta0"], 16)[None, :].astype(jnp.float32)

    # Layers 1..4: stride-2 sub-pixel decomposition with all 4 parities packed
    # into GEMM columns (col = (2*po+pw)*cout + c) against the shared 9-shift
    # im2col operand.  For parity (po, pw) and tap (dh, dw) the contributing
    # weight is w[:, :, 3-(2*dh+po), 3-(2*dw+pw)] placed in row block
    # s = (po+dh)*3 + (pw+dw); all other entries are zero.
    for li in range(1, 5):
        w = raw[f"w{li}"]
        cin, cout = w.shape[0], w.shape[1]
        ncp = max(128, ((4 * cout + 127) // 128) * 128)   # lane-dense columns
        b = jnp.zeros((9 * cin, ncp), jnp.float32)
        for po in range(2):
            for pw in range(2):
                p = 2 * po + pw
                for dh in range(2):
                    for dw in range(2):
                        s = (po + dh) * 3 + (pw + dw)
                        b = b.at[s * cin:(s + 1) * cin,
                                 p * cout:(p + 1) * cout].set(
                            w[:, :, 3 - (2 * dh + po), 3 - (2 * dw + pw)])
        proc[f"b{li}"] = b.astype(jnp.bfloat16)
        if li < 4:
            g, e = _fold_expand(ncp, cout, 4 * cout)
            proc[f"g{li}"], proc[f"e{li}"] = g, e
            gc = jnp.pad(jnp.tile(raw[f"gamma{li}"], 4), (0, ncp - 4 * cout))
            bc = jnp.pad(jnp.tile(raw[f"beta{li}"], 4), (0, ncp - 4 * cout))
            proc[f"gamma_cols{li}"] = gc[None, :].astype(jnp.float32)
            proc[f"beta_cols{li}"] = bc[None, :].astype(jnp.float32)
    return proc


def generator_forward(z_nchw, params, couts, eps=1e-5):
    """Forward pass. z_nchw: (N, lat_emb_size, 1, 1). couts: static per-layer Cout."""
    N = z_nchw.shape[0]
    lat = z_nchw.shape[1]

    # ---- layer 0: 1x1 -> 4x4, fused GEMM + BN(batch stats) + ReLU ------------
    m0 = -(-N // 8) * 8                                   # row-pad to sublane multiple
    a0 = jnp.pad(z_nchw.reshape(N, lat),
                 ((0, m0 - N), (0, 0))).astype(jnp.bfloat16)
    y0 = conv_gemm_bn_relu(a0, params["b0"], params["g0"], params["e0"],
                           params["gamma_cols0"], params["beta_cols0"],
                           count=N * 16, eps=eps)          # (m0, 16*C0) bf16
    c0 = couts[0]
    x = y0[:N].reshape(N, 4, 4, c0)                        # NHWC bf16

    # ---- layers 1..3: fused parity-packed GEMM + BN + ReLU --------------------
    for li in range(1, 4):
        H, W = x.shape[1], x.shape[2]
        a = _nine_shift_patches(x)                         # (N*H*W, 9*Cin) bf16
        cout = couts[li]
        y = conv_gemm_bn_relu(a, params[f"b{li}"], params[f"g{li}"], params[f"e{li}"],
                              params[f"gamma_cols{li}"], params[f"beta_cols{li}"],
                              count=4 * N * H * W, eps=eps)
        x = _unpack_interleave(y, N, H, W, cout)

    # ---- layer 4: fused parity-packed GEMM + tanh -----------------------------
    H, W = x.shape[1], x.shape[2]
    a = _nine_shift_patches(x)
    y = conv_gemm_tanh(a, params["b4"])                    # (N*H*W, 128) bf16
    x = _unpack_interleave(y, N, H, W, couts[4])

    return jnp.transpose(x, (0, 3, 1, 2)).astype(jnp.float32)   # back to NCHW


# ------------------------- init & pure-JAX reference ------------------------- #

def init_params(key, lat_emb_size, gen_fea_map_size, n_channels):
    g = gen_fea_map_size
    dims = [lat_emb_size, 8 * g, 4 * g, 2 * g, g, n_channels]
    params = {}
    keys = jax.random.split(key, 3 * 5)
    for li in range(5):
        cin, cout = dims[li], dims[li + 1]
        params[f"w{li}"] = 0.02 * jax.random.normal(
            keys[3 * li], (cin, cout, 4, 4), jnp.float32)
        if li < 4:
            params[f"gamma{li}"] = 1.0 + 0.1 * jax.random.normal(
                keys[3 * li + 1], (cout,), jnp.float32)
            params[f"beta{li}"] = 0.1 * jax.random.normal(
                keys[3 * li + 2], (cout,), jnp.float32)
    return params


def _ref_conv_transpose(x_nhwc, w_pt, stride, pad):
    w_conv = jnp.transpose(w_pt[:, :, ::-1, ::-1], (2, 3, 0, 1))   # (kh, kw, Cin, Cout)
    return jax.lax.conv_general_dilated(
        x_nhwc, w_conv, window_strides=(1, 1),
        padding=[(3 - pad, 3 - pad)] * 2,
        lhs_dilation=(stride, stride),
        dimension_numbers=("NHWC", "HWIO", "NHWC"))


def reference_forward(z_nchw, raw, eps=1e-5):
    x = jnp.transpose(z_nchw, (0, 2, 3, 1))
    cfgs = [(1, 0), (2, 1), (2, 1), (2, 1), (2, 1)]
    for li, (s, p) in enumerate(cfgs):
        x = _ref_conv_transpose(x, raw[f"w{li}"], s, p)
        if li < 4:
            mean = x.mean(axis=(0, 1, 2))
            var = x.var(axis=(0, 1, 2))
            x = (x - mean) / jnp.sqrt(var + eps) * raw[f"gamma{li}"] + raw[f"beta{li}"]
            x = jnp.maximum(x, 0.0)
        else:
            x = jnp.tanh(x)
    return jnp.transpose(x, (0, 3, 1, 2))


# ----------------------------------- main ------------------------------------ #

if __name__ == "__main__":
    lat_emb_size = 16
    gen_fea_map_size = 8
    n_channels = 3
    batch = 2

    key = jax.random.PRNGKey(0)
    k_z, k_p = jax.random.split(key)
    raw = init_params(k_p, lat_emb_size, gen_fea_map_size, n_channels)
    params = prepare_params(raw)                      # hoisted, one-time weight prep
    z = jax.random.normal(k_z, (batch, lat_emb_size, 1, 1), jnp.float32)

    g = gen_fea_map_size
    couts = (8 * g, 4 * g, 2 * g, g, n_channels)
    fwd = jax.jit(functools.partial(generator_forward, couts=couts))
    out = jax.block_until_ready(fwd(z, params))

    assert out.shape == (batch, n_channels, 64, 64), out.shape
    assert bool(jnp.all(jnp.isfinite(out)))
    assert bool(jnp.max(jnp.abs(out)) <= 1.0 + 1e-6)            # tanh range

    ref = reference_forward(z, raw)
    assert float(jnp.max(jnp.abs(out - ref))) < 0.1             # bf16-GEMM tolerance
    print("KERNEL_OK")
</pallas_src>

<mosaic_0001>
module attributes {stable_mosaic.version = 11 : i64} {
  func.func @_gemm_bn_relu_kernel(%arg0: i32, %arg1: memref<8x16xbf16, #tpu.memory_space<vmem>>, %arg2: memref<16x1024xbf16, #tpu.memory_space<vmem>>, %arg3: memref<1024x64xf32, #tpu.memory_space<vmem>>, %arg4: memref<64x1024xf32, #tpu.memory_space<vmem>>, %arg5: memref<1x1024xf32, #tpu.memory_space<vmem>>, %arg6: memref<1x1024xf32, #tpu.memory_space<vmem>>, %arg7: memref<8x1024xbf16, #tpu.memory_space<vmem>>) attributes {dimension_semantics = [#tpu.dimension_semantics<arbitrary>], iteration_bounds = array<i64: 1>, scalar_prefetch = 0 : i64, scratch_operands = 0 : i64, tpu.core_type = #tpu.core_type<tc>, window_params = [{pipeline_mode = #tpu.pipeline_mode<synchronous>, transform_indices = @transform_0, window_bounds = array<i64: 8, 16>}, {pipeline_mode = #tpu.pipeline_mode<synchronous>, transform_indices = @transform_1, window_bounds = array<i64: 16, 1024>}, {pipeline_mode = #tpu.pipeline_mode<synchronous>, transform_indices = @transform_2, window_bounds = array<i64: 1024, 64>}, {pipeline_mode = #tpu.pipeline_mode<synchronous>, transform_indices = @transform_3, window_bounds = array<i64: 64, 1024>}, {pipeline_mode = #tpu.pipeline_mode<synchronous>, transform_indices = @transform_4, window_bounds = array<i64: 1, 1024>}, {pipeline_mode = #tpu.pipeline_mode<synchronous>, transform_indices = @transform_5, window_bounds = array<i64: 1, 1024>}, {pipeline_mode = #tpu.pipeline_mode<synchronous>, transform_indices = @transform_6, window_bounds = array<i64: 8, 1024>}]} {
    %c0 = arith.constant 0 : index
    %c0_0 = arith.constant 0 : index
    %0 = vector.load %arg1[%c0, %c0_0] : memref<8x16xbf16, #tpu.memory_space<vmem>>, vector<8x16xbf16>
    %c0_1 = arith.constant 0 : index
    %c0_2 = arith.constant 0 : index
    %1 = vector.load %arg2[%c0_1, %c0_2] : memref<16x1024xbf16, #tpu.memory_space<vmem>>, vector<16x1024xbf16>
    %cst = arith.constant dense<0.000000e+00> : vector<8x1024xf32>
    %2 = tpu.matmul %0, %1, %cst {dimension_numbers = #tpu.dot_dimension_numbers<[1], [0], [0], [1], [0, 0, 1, 1], [], []>} : vector<8x16xbf16>, vector<16x1024xbf16>, vector<8x1024xf32> -> vector<8x1024xf32>
    %cst_3 = arith.constant dense<0.000000e+00> : vector<1024xf32>
    %3 = vector.multi_reduction <add>, %2, %cst_3 [0] : vector<8x1024xf32> to vector<1024xf32>
    %4 = vector.shape_cast %3 : vector<1024xf32> to vector<1x1024xf32>
    %5 = vector.shape_cast %4 : vector<1x1024xf32> to vector<1x1024xf32>
    %6 = vector.broadcast %5 : vector<1x1024xf32> to vector<8x1024xf32>
    %7 = arith.mulf %2, %2 : vector<8x1024xf32>
    %cst_4 = arith.constant dense<0.000000e+00> : vector<1024xf32>
    %8 = vector.multi_reduction <add>, %7, %cst_4 [0] : vector<8x1024xf32> to vector<1024xf32>
    %9 = vector.shape_cast %8 : vector<1024xf32> to vector<1x1024xf32>
    %10 = vector.shape_cast %9 : vector<1x1024xf32> to vector<1x1024xf32>
    %11 = vector.broadcast %10 : vector<1x1024xf32> to vector<8x1024xf32>
    %c0_5 = arith.constant 0 : index
    %c0_6 = arith.constant 0 : index
    %12 = vector.load %arg3[%c0_5, %c0_6] : memref<1024x64xf32, #tpu.memory_space<vmem>>, vector<1024x64xf32>
    %cst_7 = arith.constant dense<0.000000e+00> : vector<8x64xf32>
    %13 = tpu.matmul %6, %12, %cst_7 {dimension_numbers = #tpu.dot_dimension_numbers<[1], [0], [0], [1], [0, 0, 1, 1], [], []>} : vector<8x1024xf32>, vector<1024x64xf32>, vector<8x64xf32> -> vector<8x64xf32>
    %c0_8 = arith.constant 0 : index
    %c0_9 = arith.constant 0 : index
    %14 = vector.load %arg4[%c0_8, %c0_9] : memref<64x1024xf32, #tpu.memory_space<vmem>>, vector<64x1024xf32>
    %cst_10 = arith.constant dense<0.000000e+00> : vector<8x1024xf32>
    %15 = tpu.matmul %13, %14, %cst_10 {dimension_numbers = #tpu.dot_dimension_numbers<[1], [0], [0], [1], [0, 0, 1, 1], [], []>} : vector<8x64xf32>, vector<64x1024xf32>, vector<8x1024xf32> -> vector<8x1024xf32>
    %c0_11 = arith.constant 0 : index
    %c0_12 = arith.constant 0 : index
    %16 = vector.load %arg3[%c0_11, %c0_12] : memref<1024x64xf32, #tpu.memory_space<vmem>>, vector<1024x64xf32>
    %cst_13 = arith.constant dense<0.000000e+00> : vector<8x64xf32>
    %17 = tpu.matmul %11, %16, %cst_13 {dimension_numbers = #tpu.dot_dimension_numbers<[1], [0], [0], [1], [0, 0, 1, 1], [], []>} : vector<8x1024xf32>, vector<1024x64xf32>, vector<8x64xf32> -> vector<8x64xf32>
    %c0_14 = arith.constant 0 : index
    %c0_15 = arith.constant 0 : index
    %18 = vector.load %arg4[%c0_14, %c0_15] : memref<64x1024xf32, #tpu.memory_space<vmem>>, vector<64x1024xf32>
    %cst_16 = arith.constant dense<0.000000e+00> : vector<8x1024xf32>
    %19 = tpu.matmul %17, %18, %cst_16 {dimension_numbers = #tpu.dot_dimension_numbers<[1], [0], [0], [1], [0, 0, 1, 1], [], []>} : vector<8x64xf32>, vector<64x1024xf32>, vector<8x1024xf32> -> vector<8x1024xf32>
    %20 = vector.extract_strided_slice %15 {offsets = [0, 0], sizes = [1, 1024], strides = [1, 1]} : vector<8x1024xf32> to vector<1x1024xf32>
    %cst_17 = arith.constant 3.125000e-02 : f32
    %21 = vector.broadcast %cst_17 : f32 to vector<1x1024xf32>
    %22 = arith.mulf %20, %21 : vector<1x1024xf32>
    %23 = vector.extract_strided_slice %19 {offsets = [0, 0], sizes = [1, 1024], strides = [1, 1]} : vector<8x1024xf32> to vector<1x1024xf32>
    %cst_18 = arith.constant 3.125000e-02 : f32
    %24 = vector.broadcast %cst_18 : f32 to vector<1x1024xf32>
    %25 = arith.mulf %23, %24 : vector<1x1024xf32>
    %26 = arith.mulf %22, %22 : vector<1x1024xf32>
    %27 = arith.subf %25, %26 : vector<1x1024xf32>
    %cst_19 = arith.constant 0.000000e+00 : f32
    %28 = vector.broadcast %cst_19 : f32 to vector<1x1024xf32>
    %29 = arith.maximumf %27, %28 : vector<1x1024xf32>
    %c0_20 = arith.constant 0 : index
    %c0_21 = arith.constant 0 : index
    %30 = vector.load %arg5[%c0_20, %c0_21] : memref<1x1024xf32, #tpu.memory_space<vmem>>, vector<1x1024xf32>
    %cst_22 = arith.constant 9.99999974E-6 : f32
    %31 = vector.broadcast %cst_22 : f32 to vector<1x1024xf32>
    %32 = arith.addf %29, %31 : vector<1x1024xf32>
    %33 = math.rsqrt %32 : vector<1x1024xf32>
    %34 = arith.mulf %30, %33 : vector<1x1024xf32>
    %c0_23 = arith.constant 0 : index
    %c0_24 = arith.constant 0 : index
    %35 = vector.load %arg6[%c0_23, %c0_24] : memref<1x1024xf32, #tpu.memory_space<vmem>>, vector<1x1024xf32>
    %36 = arith.mulf %22, %34 : vector<1x1024xf32>
    %37 = arith.subf %35, %36 : vector<1x1024xf32>
    %38 = vector.broadcast %34 : vector<1x1024xf32> to vector<8x1024xf32>
    %39 = arith.mulf %2, %38 : vector<8x1024xf32>
    %40 = vector.broadcast %37 : vector<1x1024xf32> to vector<8x1024xf32>
    %41 = arith.addf %39, %40 : vector<8x1024xf32>
    %cst_25 = arith.constant 0.000000e+00 : f32
    %42 = vector.broadcast %cst_25 : f32 to vector<8x1024xf32>
    %43 = arith.maximumf %41, %42 : vector<8x1024xf32>
    %44 = arith.truncf %43 : vector<8x1024xf32> to vector<8x1024xbf16>
    %c0_26 = arith.constant 0 : index
    %c0_27 = arith.constant 0 : index
    %45 = vector.load %arg7[%c0_26, %c0_27] : memref<8x1024xbf16, #tpu.memory_space<vmem>>, vector<8x1024xbf16>
    tpu.vector_store %arg7[%c0_26, %c0_27], %44 {strides = array<i32>} : memref<8x1024xbf16, #tpu.memory_space<vmem>>, vector<8x1024xbf16>,
    return
  }
  func.func @transform_0(%arg0: i32) -> (i32, i32) {
    %c0_i32 = arith.constant 0 : i32
    %c0_i32_0 = arith.constant 0 : i32
    %c0_i32_1 = arith.constant 0 : i32
    return %c0_i32, %c0_i32_0 : i32, i32
  }
  func.func @transform_1(%arg0: i32) -> (i32, i32) {
    %c0_i32 = arith.constant 0 : i32
    %c0_i32_0 = arith.constant 0 : i32
    %c0_i32_1 = arith.constant 0 : i32
    return %c0_i32, %c0_i32_0 : i32, i32
  }
  func.func @transform_2(%arg0: i32) -> (i32, i32) {
    %c0_i32 = arith.constant 0 : i32
    %c0_i32_0 = arith.constant 0 : i32
    %c0_i32_1 = arith.constant 0 : i32
    return %c0_i32, %c0_i32_0 : i32, i32
  }
  func.func @transform_3(%arg0: i32) -> (i32, i32) {
    %c0_i32 = arith.constant 0 : i32
    %c0_i32_0 = arith.constant 0 : i32
    %c0_i32_1 = arith.constant 0 : i32
    return %c0_i32, %c0_i32_0 : i32, i32
  }
  func.func @transform_4(%arg0: i32) -> (i32, i32) {
    %c0_i32 = arith.constant 0 : i32
    %c0_i32_0 = arith.constant 0 : i32
    %c0_i32_1 = arith.constant 0 : i32
    return %c0_i32, %c0_i32_0 : i32, i32
  }
  func.func @transform_5(%arg0: i32) -> (i32, i32) {
    %c0_i32 = arith.constant 0 : i32
    %c0_i32_0 = arith.constant 0 : i32
    %c0_i32_1 = arith.constant 0 : i32
    return %c0_i32, %c0_i32_0 : i32, i32
  }
  func.func @transform_6(%arg0: i32) -> (i32, i32) {
    %c0_i32 = arith.constant 0 : i32
    %c0_i32_0 = arith.constant 0 : i32
    %c0_i32_1 = arith.constant 0 : i32
    return %c0_i32, %c0_i32_0 : i32, i32
  }
}

module attributes {stable_mosaic.version = 11 : i64} {
  func.func @_gemm_bn_relu_kernel(%arg0: i32, %arg1: memref<32x576xbf16, #tpu.memory_space<vmem>>, %arg2: memref<576x128xbf16, #tpu.memory_space<vmem>>, %arg3: memref<128x32xf32, #tpu.memory_space<vmem>>, %arg4: memref<32x128xf32, #tpu.memory_space<vmem>>, %arg5: memref<1x128xf32, #tpu.memory_space<vmem>>, %arg6: memref<1x128xf32, #tpu.memory_space<vmem>>, %arg7: memref<32x128xbf16, #tpu.memory_space<vmem>>) attributes {dimension_semantics = [#tpu.dimension_semantics<arbitrary>], iteration_bounds = array<i64: 1>, scalar_prefetch = 0 : i64, scratch_operands = 0 : i64, tpu.core_type = #tpu.core_type<tc>, window_params = [{pipeline_mode = #tpu.pipeline_mode<synchronous>, transform_indices = @transform_0, window_bounds = array<i64: 32, 576>}, {pipeline_mode = #tpu.pipeline_mode<synchronous>, transform_indices = @transform_1, window_bounds = array<i64: 576, 128>}, {pipeline_mode = #tpu.pipeline_mode<synchronous>, transform_indices = @transform_2, window_bounds = array<i64: 128, 32>}, {pipeline_mode = #tpu.pipeline_mode<synchronous>, transform_indices = @transform_3, window_bounds = array<i64: 32, 128>}, {pipeline_mode = #tpu.pipeline_mode<synchronous>, transform_indices = @transform_4, window_bounds = array<i64: 1, 128>}, {pipeline_mode = #tpu.pipeline_mode<synchronous>, transform_indices = @transform_5, window_bounds = array<i64: 1, 128>}, {pipeline_mode = #tpu.pipeline_mode<synchronous>, transform_indices = @transform_6, window_bounds = array<i64: 32, 128>}]} {
    %c0 = arith.constant 0 : index
    %c0_0 = arith.constant 0 : index
    %0 = vector.load %arg1[%c0, %c0_0] : memref<32x576xbf16, #tpu.memory_space<vmem>>, vector<32x576xbf16>
    %c0_1 = arith.constant 0 : index
    %c0_2 = arith.constant 0 : index
    %1 = vector.load %arg2[%c0_1, %c0_2] : memref<576x128xbf16, #tpu.memory_space<vmem>>, vector<576x128xbf16>
    %cst = arith.constant dense<0.000000e+00> : vector<32x128xf32>
    %2 = tpu.matmul %0, %1, %cst {dimension_numbers = #tpu.dot_dimension_numbers<[1], [0], [0], [1], [0, 0, 1, 1], [], []>} : vector<32x576xbf16>, vector<576x128xbf16>, vector<32x128xf32> -> vector<32x128xf32>
    %cst_3 = arith.constant dense<0.000000e+00> : vector<128xf32>
    %3 = vector.multi_reduction <add>, %2, %cst_3 [0] : vector<32x128xf32> to vector<128xf32>
    %4 = vector.shape_cast %3 : vector<128xf32> to vector<1x128xf32>
    %5 = vector.shape_cast %4 : vector<1x128xf32> to vector<1x128xf32>
    %6 = vector.broadcast %5 : vector<1x128xf32> to vector<8x128xf32>
    %7 = arith.mulf %2, %2 : vector<32x128xf32>
    %cst_4 = arith.constant dense<0.000000e+00> : vector<128xf32>
    %8 = vector.multi_reduction <add>, %7, %cst_4 [0] : vector<32x128xf32> to vector<128xf32>
    %9 = vector.shape_cast %8 : vector<128xf32> to vector<1x128xf32>
    %10 = vector.shape_cast %9 : vector<1x128xf32> to vector<1x128xf32>
    %11 = vector.broadcast %10 : vector<1x128xf32> to vector<8x128xf32>
    %c0_5 = arith.constant 0 : index
    %c0_6 = arith.constant 0 : index
    %12 = vector.load %arg3[%c0_5, %c0_6] : memref<128x32xf32, #tpu.memory_space<vmem>>, vector<128x32xf32>
    %cst_7 = arith.constant dense<0.000000e+00> : vector<8x32xf32>
    %13 = tpu.matmul %6, %12, %cst_7 {dimension_numbers = #tpu.dot_dimension_numbers<[1], [0], [0], [1], [0, 0, 1, 1], [], []>} : vector<8x128xf32>, vector<128x32xf32>, vector<8x32xf32> -> vector<8x32xf32>
    %c0_8 = arith.constant 0 : index
    %c0_9 = arith.constant 0 : index
    %14 = vector.load %arg4[%c0_8, %c0_9] : memref<32x128xf32, #tpu.memory_space<vmem>>, vector<32x128xf32>
    %cst_10 = arith.constant dense<0.000000e+00> : vector<8x128xf32>
    %15 = tpu.matmul %13, %14, %cst_10 {dimension_numbers = #tpu.dot_dimension_numbers<[1], [0], [0], [1], [0, 0, 1, 1], [], []>} : vector<8x32xf32>, vector<32x128xf32>, vector<8x128xf32> -> vector<8x128xf32>
    %c0_11 = arith.constant 0 : index
    %c0_12 = arith.constant 0 : index
    %16 = vector.load %arg3[%c0_11, %c0_12] : memref<128x32xf32, #tpu.memory_space<vmem>>, vector<128x32xf32>
    %cst_13 = arith.constant dense<0.000000e+00> : vector<8x32xf32>
    %17 = tpu.matmul %11, %16, %cst_13 {dimension_numbers = #tpu.dot_dimension_numbers<[1], [0], [0], [1], [0, 0, 1, 1], [], []>} : vector<8x128xf32>, vector<128x32xf32>, vector<8x32xf32> -> vector<8x32xf32>
    %c0_14 = arith.constant 0 : index
    %c0_15 = arith.constant 0 : index
    %18 = vector.load %arg4[%c0_14, %c0_15] : memref<32x128xf32, #tpu.memory_space<vmem>>, vector<32x128xf32>
    %cst_16 = arith.constant dense<0.000000e+00> : vector<8x128xf32>
    %19 = tpu.matmul %17, %18, %cst_16 {dimension_numbers = #tpu.dot_dimension_numbers<[1], [0], [0], [1], [0, 0, 1, 1], [], []>} : vector<8x32xf32>, vector<32x128xf32>, vector<8x128xf32> -> vector<8x128xf32>
    %20 = vector.extract_strided_slice %15 {offsets = [0, 0], sizes = [1, 128], strides = [1, 1]} : vector<8x128xf32> to vector<1x128xf32>
    %cst_17 = arith.constant 7.812500e-03 : f32
    %21 = vector.broadcast %cst_17 : f32 to vector<1x128xf32>
    %22 = arith.mulf %20, %21 : vector<1x128xf32>
    %23 = vector.extract_strided_slice %19 {offsets = [0, 0], sizes = [1, 128], strides = [1, 1]} : vector<8x128xf32> to vector<1x128xf32>
    %cst_18 = arith.constant 7.812500e-03 : f32
    %24 = vector.broadcast %cst_18 : f32 to vector<1x128xf32>
    %25 = arith.mulf %23, %24 : vector<1x128xf32>
    %26 = arith.mulf %22, %22 : vector<1x128xf32>
    %27 = arith.subf %25, %26 : vector<1x128xf32>
    %cst_19 = arith.constant 0.000000e+00 : f32
    %28 = vector.broadcast %cst_19 : f32 to vector<1x128xf32>
    %29 = arith.maximumf %27, %28 : vector<1x128xf32>
    %c0_20 = arith.constant 0 : index
    %c0_21 = arith.constant 0 : index
    %30 = vector.load %arg5[%c0_20, %c0_21] : memref<1x128xf32, #tpu.memory_space<vmem>>, vector<1x128xf32>
    %cst_22 = arith.constant 9.99999974E-6 : f32
    %31 = vector.broadcast %cst_22 : f32 to vector<1x128xf32>
    %32 = arith.addf %29, %31 : vector<1x128xf32>
    %33 = math.rsqrt %32 : vector<1x128xf32>
    %34 = arith.mulf %30, %33 : vector<1x128xf32>
    %c0_23 = arith.constant 0 : index
    %c0_24 = arith.constant 0 : index
    %35 = vector.load %arg6[%c0_23, %c0_24] : memref<1x128xf32, #tpu.memory_space<vmem>>, vector<1x128xf32>
    %36 = arith.mulf %22, %34 : vector<1x128xf32>
    %37 = arith.subf %35, %36 : vector<1x128xf32>
    %38 = vector.broadcast %34 : vector<1x128xf32> to vector<32x128xf32>
    %39 = arith.mulf %2, %38 : vector<32x128xf32>
    %40 = vector.broadcast %37 : vector<1x128xf32> to vector<32x128xf32>
    %41 = arith.addf %39, %40 : vector<32x128xf32>
    %cst_25 = arith.constant 0.000000e+00 : f32
    %42 = vector.broadcast %cst_25 : f32 to vector<32x128xf32>
    %43 = arith.maximumf %41, %42 : vector<32x128xf32>
    %44 = arith.truncf %43 : vector<32x128xf32> to vector<32x128xbf16>
    %c0_26 = arith.constant 0 : index
    %c0_27 = arith.constant 0 : index
    %45 = vector.load %arg7[%c0_26, %c0_27] : memref<32x128xbf16, #tpu.memory_space<vmem>>, vector<32x128xbf16>
    tpu.vector_store %arg7[%c0_26, %c0_27], %44 {strides = array<i32>} : memref<32x128xbf16, #tpu.memory_space<vmem>>, vector<32x128xbf16>,
    return
  }
  func.func @transform_0(%arg0: i32) -> (i32, i32) {
    %c0_i32 = arith.constant 0 : i32
    %c0_i32_0 = arith.constant 0 : i32
    %c0_i32_1 = arith.constant 0 : i32
    return %c0_i32, %c0_i32_0 : i32, i32
  }
  func.func @transform_1(%arg0: i32) -> (i32, i32) {
    %c0_i32 = arith.constant 0 : i32
    %c0_i32_0 = arith.constant 0 : i32
    %c0_i32_1 = arith.constant 0 : i32
    return %c0_i32, %c0_i32_0 : i32, i32
  }
  func.func @transform_2(%arg0: i32) -> (i32, i32) {
    %c0_i32 = arith.constant 0 : i32
    %c0_i32_0 = arith.constant 0 : i32
    %c0_i32_1 = arith.constant 0 : i32
    return %c0_i32, %c0_i32_0 : i32, i32
  }
  func.func @transform_3(%arg0: i32) -> (i32, i32) {
    %c0_i32 = arith.constant 0 : i32
    %c0_i32_0 = arith.constant 0 : i32
    %c0_i32_1 = arith.constant 0 : i32
    return %c0_i32, %c0_i32_0 : i32, i32
  }
  func.func @transform_4(%arg0: i32) -> (i32, i32) {
    %c0_i32 = arith.constant 0 : i32
    %c0_i32_0 = arith.constant 0 : i32
    %c0_i32_1 = arith.constant 0 : i32
    return %c0_i32, %c0_i32_0 : i32, i32
  }
  func.func @transform_5(%arg0: i32) -> (i32, i32) {
    %c0_i32 = arith.constant 0 : i32
    %c0_i32_0 = arith.constant 0 : i32
    %c0_i32_1 = arith.constant 0 : i32
    return %c0_i32, %c0_i32_0 : i32, i32
  }
  func.func @transform_6(%arg0: i32) -> (i32, i32) {
    %c0_i32 = arith.constant 0 : i32
    %c0_i32_0 = arith.constant 0 : i32
    %c0_i32_1 = arith.constant 0 : i32
    return %c0_i32, %c0_i32_0 : i32, i32
  }
}

module attributes {stable_mosaic.version = 11 : i64} {
  func.func @_gemm_bn_relu_kernel(%arg0: i32, %arg1: memref<128x288xbf16, #tpu.memory_space<vmem>>, %arg2: memref<288x128xbf16, #tpu.memory_space<vmem>>, %arg3: memref<128x16xf32, #tpu.memory_space<vmem>>, %arg4: memref<16x128xf32, #tpu.memory_space<vmem>>, %arg5: memref<1x128xf32, #tpu.memory_space<vmem>>, %arg6: memref<1x128xf32, #tpu.memory_space<vmem>>, %arg7: memref<128x128xbf16, #tpu.memory_space<vmem>>) attributes {dimension_semantics = [#tpu.dimension_semantics<arbitrary>], iteration_bounds = array<i64: 1>, scalar_prefetch = 0 : i64, scratch_operands = 0 : i64, tpu.core_type = #tpu.core_type<tc>, window_params = [{pipeline_mode = #tpu.pipeline_mode<synchronous>, transform_indices = @transform_0, window_bounds = array<i64: 128, 288>}, {pipeline_mode = #tpu.pipeline_mode<synchronous>, transform_indices = @transform_1, window_bounds = array<i64: 288, 128>}, {pipeline_mode = #tpu.pipeline_mode<synchronous>, transform_indices = @transform_2, window_bounds = array<i64: 128, 16>}, {pipeline_mode = #tpu.pipeline_mode<synchronous>, transform_indices = @transform_3, window_bounds = array<i64: 16, 128>}, {pipeline_mode = #tpu.pipeline_mode<synchronous>, transform_indices = @transform_4, window_bounds = array<i64: 1, 128>}, {pipeline_mode = #tpu.pipeline_mode<synchronous>, transform_indices = @transform_5, window_bounds = array<i64: 1, 128>}, {pipeline_mode = #tpu.pipeline_mode<synchronous>, transform_indices = @transform_6, window_bounds = array<i64: 128, 128>}]} {
    %c0 = arith.constant 0 : index
    %c0_0 = arith.constant 0 : index
    %0 = vector.load %arg1[%c0, %c0_0] : memref<128x288xbf16, #tpu.memory_space<vmem>>, vector<128x288xbf16>
    %c0_1 = arith.constant 0 : index
    %c0_2 = arith.constant 0 : index
    %1 = vector.load %arg2[%c0_1, %c0_2] : memref<288x128xbf16, #tpu.memory_space<vmem>>, vector<288x128xbf16>
    %cst = arith.constant dense<0.000000e+00> : vector<128x128xf32>
    %2 = tpu.matmul %0, %1, %cst {dimension_numbers = #tpu.dot_dimension_numbers<[1], [0], [0], [1], [0, 0, 1, 1], [], []>} : vector<128x288xbf16>, vector<288x128xbf16>, vector<128x128xf32> -> vector<128x128xf32>
    %cst_3 = arith.constant dense<0.000000e+00> : vector<128xf32>
    %3 = vector.multi_reduction <add>, %2, %cst_3 [0] : vector<128x128xf32> to vector<128xf32>
    %4 = vector.shape_cast %3 : vector<128xf32> to vector<1x128xf32>
    %5 = vector.shape_cast %4 : vector<1x128xf32> to vector<1x128xf32>
    %6 = vector.broadcast %5 : vector<1x128xf32> to vector<8x128xf32>
    %7 = arith.mulf %2, %2 : vector<128x128xf32>
    %cst_4 = arith.constant dense<0.000000e+00> : vector<128xf32>
    %8 = vector.multi_reduction <add>, %7, %cst_4 [0] : vector<128x128xf32> to vector<128xf32>
    %9 = vector.shape_cast %8 : vector<128xf32> to vector<1x128xf32>
    %10 = vector.shape_cast %9 : vector<1x128xf32> to vector<1x128xf32>
    %11 = vector.broadcast %10 : vector<1x128xf32> to vector<8x128xf32>
    %c0_5 = arith.constant 0 : index
    %c0_6 = arith.constant 0 : index
    %12 = vector.load %arg3[%c0_5, %c0_6] : memref<128x16xf32, #tpu.memory_space<vmem>>, vector<128x16xf32>
    %cst_7 = arith.constant dense<0.000000e+00> : vector<8x16xf32>
    %13 = tpu.matmul %6, %12, %cst_7 {dimension_numbers = #tpu.dot_dimension_numbers<[1], [0], [0], [1], [0, 0, 1, 1], [], []>} : vector<8x128xf32>, vector<128x16xf32>, vector<8x16xf32> -> vector<8x16xf32>
    %c0_8 = arith.constant 0 : index
    %c0_9 = arith.constant 0 : index
    %14 = vector.load %arg4[%c0_8, %c0_9] : memref<16x128xf32, #tpu.memory_space<vmem>>, vector<16x128xf32>
    %cst_10 = arith.constant dense<0.000000e+00> : vector<8x128xf32>
    %15 = tpu.matmul %13, %14, %cst_10 {dimension_numbers = #tpu.dot_dimension_numbers<[1], [0], [0], [1], [0, 0, 1, 1], [], []>} : vector<8x16xf32>, vector<16x128xf32>, vector<8x128xf32> -> vector<8x128xf32>
    %c0_11 = arith.constant 0 : index
    %c0_12 = arith.constant 0 : index
    %16 = vector.load %arg3[%c0_11, %c0_12] : memref<128x16xf32, #tpu.memory_space<vmem>>, vector<128x16xf32>
    %cst_13 = arith.constant dense<0.000000e+00> : vector<8x16xf32>
    %17 = tpu.matmul %11, %16, %cst_13 {dimension_numbers = #tpu.dot_dimension_numbers<[1], [0], [0], [1], [0, 0, 1, 1], [], []>} : vector<8x128xf32>, vector<128x16xf32>, vector<8x16xf32> -> vector<8x16xf32>
    %c0_14 = arith.constant 0 : index
    %c0_15 = arith.constant 0 : index
    %18 = vector.load %arg4[%c0_14, %c0_15] : memref<16x128xf32, #tpu.memory_space<vmem>>, vector<16x128xf32>
    %cst_16 = arith.constant dense<0.000000e+00> : vector<8x128xf32>
    %19 = tpu.matmul %17, %18, %cst_16 {dimension_numbers = #tpu.dot_dimension_numbers<[1], [0], [0], [1], [0, 0, 1, 1], [], []>} : vector<8x16xf32>, vector<16x128xf32>, vector<8x128xf32> -> vector<8x128xf32>
    %20 = vector.extract_strided_slice %15 {offsets = [0, 0], sizes = [1, 128], strides = [1, 1]} : vector<8x128xf32> to vector<1x128xf32>
    %cst_17 = arith.constant 0.001953125 : f32
    %21 = vector.broadcast %cst_17 : f32 to vector<1x128xf32>
    %22 = arith.mulf %20, %21 : vector<1x128xf32>
    %23 = vector.extract_strided_slice %19 {offsets = [0, 0], sizes = [1, 128], strides = [1, 1]} : vector<8x128xf32> to vector<1x128xf32>
    %cst_18 = arith.constant 0.001953125 : f32
    %24 = vector.broadcast %cst_18 : f32 to vector<1x128xf32>
    %25 = arith.mulf %23, %24 : vector<1x128xf32>
    %26 = arith.mulf %22, %22 : vector<1x128xf32>
    %27 = arith.subf %25, %26 : vector<1x128xf32>
    %cst_19 = arith.constant 0.000000e+00 : f32
    %28 = vector.broadcast %cst_19 : f32 to vector<1x128xf32>
    %29 = arith.maximumf %27, %28 : vector<1x128xf32>
    %c0_20 = arith.constant 0 : index
    %c0_21 = arith.constant 0 : index
    %30 = vector.load %arg5[%c0_20, %c0_21] : memref<1x128xf32, #tpu.memory_space<vmem>>, vector<1x128xf32>
    %cst_22 = arith.constant 9.99999974E-6 : f32
    %31 = vector.broadcast %cst_22 : f32 to vector<1x128xf32>
    %32 = arith.addf %29, %31 : vector<1x128xf32>
    %33 = math.rsqrt %32 : vector<1x128xf32>
    %34 = arith.mulf %30, %33 : vector<1x128xf32>
    %c0_23 = arith.constant 0 : index
    %c0_24 = arith.constant 0 : index
    %35 = vector.load %arg6[%c0_23, %c0_24] : memref<1x128xf32, #tpu.memory_space<vmem>>, vector<1x128xf32>
    %36 = arith.mulf %22, %34 : vector<1x128xf32>
    %37 = arith.subf %35, %36 : vector<1x128xf32>
    %38 = vector.broadcast %34 : vector<1x128xf32> to vector<128x128xf32>
    %39 = arith.mulf %2, %38 : vector<128x128xf32>
    %40 = vector.broadcast %37 : vector<1x128xf32> to vector<128x128xf32>
    %41 = arith.addf %39, %40 : vector<128x128xf32>
    %cst_25 = arith.constant 0.000000e+00 : f32
    %42 = vector.broadcast %cst_25 : f32 to vector<128x128xf32>
    %43 = arith.maximumf %41, %42 : vector<128x128xf32>
    %44 = arith.truncf %43 : vector<128x128xf32> to vector<128x128xbf16>
    %c0_26 = arith.constant 0 : index
    %c0_27 = arith.constant 0 : index
    %45 = vector.load %arg7[%c0_26, %c0_27] : memref<128x128xbf16, #tpu.memory_space<vmem>>, vector<128x128xbf16>
    tpu.vector_store %arg7[%c0_26, %c0_27], %44 {strides = array<i32>} : memref<128x128xbf16, #tpu.memory_space<vmem>>, vector<128x128xbf16>,
    return
  }
  func.func @transform_0(%arg0: i32) -> (i32, i32) {
    %c0_i32 = arith.constant 0 : i32
    %c0_i32_0 = arith.constant 0 : i32
    %c0_i32_1 = arith.constant 0 : i32
    return %c0_i32, %c0_i32_0 : i32, i32
  }
  func.func @transform_1(%arg0: i32) -> (i32, i32) {
    %c0_i32 = arith.constant 0 : i32
    %c0_i32_0 = arith.constant 0 : i32
    %c0_i32_1 = arith.constant 0 : i32
    return %c0_i32, %c0_i32_0 : i32, i32
  }
  func.func @transform_2(%arg0: i32) -> (i32, i32) {
    %c0_i32 = arith.constant 0 : i32
    %c0_i32_0 = arith.constant 0 : i32
    %c0_i32_1 = arith.constant 0 : i32
    return %c0_i32, %c0_i32_0 : i32, i32
  }
  func.func @transform_3(%arg0: i32) -> (i32, i32) {
    %c0_i32 = arith.constant 0 : i32
    %c0_i32_0 = arith.constant 0 : i32
    %c0_i32_1 = arith.constant 0 : i32
    return %c0_i32, %c0_i32_0 : i32, i32
  }
  func.func @transform_4(%arg0: i32) -> (i32, i32) {
    %c0_i32 = arith.constant 0 : i32
    %c0_i32_0 = arith.constant 0 : i32
    %c0_i32_1 = arith.constant 0 : i32
    return %c0_i32, %c0_i32_0 : i32, i32
  }
  func.func @transform_5(%arg0: i32) -> (i32, i32) {
    %c0_i32 = arith.constant 0 : i32
    %c0_i32_0 = arith.constant 0 : i32
    %c0_i32_1 = arith.constant 0 : i32
    return %c0_i32, %c0_i32_0 : i32, i32
  }
  func.func @transform_6(%arg0: i32) -> (i32, i32) {
    %c0_i32 = arith.constant 0 : i32
    %c0_i32_0 = arith.constant 0 : i32
    %c0_i32_1 = arith.constant 0 : i32
    return %c0_i32, %c0_i32_0 : i32, i32
  }
}

module attributes {stable_mosaic.version = 11 : i64} {
  func.func @_gemm_bn_relu_kernel(%arg0: i32, %arg1: memref<512x144xbf16, #tpu.memory_space<vmem>>, %arg2: memref<144x128xbf16, #tpu.memory_space<vmem>>, %arg3: memref<128x8xf32, #tpu.memory_space<vmem>>, %arg4: memref<8x128xf32, #tpu.memory_space<vmem>>, %arg5: memref<1x128xf32, #tpu.memory_space<vmem>>, %arg6: memref<1x128xf32, #tpu.memory_space<vmem>>, %arg7: memref<512x128xbf16, #tpu.memory_space<vmem>>) attributes {dimension_semantics = [#tpu.dimension_semantics<arbitrary>], iteration_bounds = array<i64: 1>, scalar_prefetch = 0 : i64, scratch_operands = 0 : i64, tpu.core_type = #tpu.core_type<tc>, window_params = [{pipeline_mode = #tpu.pipeline_mode<synchronous>, transform_indices = @transform_0, window_bounds = array<i64: 512, 144>}, {pipeline_mode = #tpu.pipeline_mode<synchronous>, transform_indices = @transform_1, window_bounds = array<i64: 144, 128>}, {pipeline_mode = #tpu.pipeline_mode<synchronous>, transform_indices = @transform_2, window_bounds = array<i64: 128, 8>}, {pipeline_mode = #tpu.pipeline_mode<synchronous>, transform_indices = @transform_3, window_bounds = array<i64: 8, 128>}, {pipeline_mode = #tpu.pipeline_mode<synchronous>, transform_indices = @transform_4, window_bounds = array<i64: 1, 128>}, {pipeline_mode = #tpu.pipeline_mode<synchronous>, transform_indices = @transform_5, window_bounds = array<i64: 1, 128>}, {pipeline_mode = #tpu.pipeline_mode<synchronous>, transform_indices = @transform_6, window_bounds = array<i64: 512, 128>}]} {
    %c0 = arith.constant 0 : index
    %c0_0 = arith.constant 0 : index
    %0 = vector.load %arg1[%c0, %c0_0] : memref<512x144xbf16, #tpu.memory_space<vmem>>, vector<512x144xbf16>
    %c0_1 = arith.constant 0 : index
    %c0_2 = arith.constant 0 : index
    %1 = vector.load %arg2[%c0_1, %c0_2] : memref<144x128xbf16, #tpu.memory_space<vmem>>, vector<144x128xbf16>
    %cst = arith.constant dense<0.000000e+00> : vector<512x128xf32>
    %2 = tpu.matmul %0, %1, %cst {dimension_numbers = #tpu.dot_dimension_numbers<[1], [0], [0], [1], [0, 0, 1, 1], [], []>} : vector<512x144xbf16>, vector<144x128xbf16>, vector<512x128xf32> -> vector<512x128xf32>
    %cst_3 = arith.constant dense<0.000000e+00> : vector<128xf32>
    %3 = vector.multi_reduction <add>, %2, %cst_3 [0] : vector<512x128xf32> to vector<128xf32>
    %4 = vector.shape_cast %3 : vector<128xf32> to vector<1x128xf32>
    %5 = vector.shape_cast %4 : vector<1x128xf32> to vector<1x128xf32>
    %6 = vector.broadcast %5 : vector<1x128xf32> to vector<8x128xf32>
    %7 = arith.mulf %2, %2 : vector<512x128xf32>
    %cst_4 = arith.constant dense<0.000000e+00> : vector<128xf32>
    %8 = vector.multi_reduction <add>, %7, %cst_4 [0] : vector<512x128xf32> to vector<128xf32>
    %9 = vector.shape_cast %8 : vector<128xf32> to vector<1x128xf32>
    %10 = vector.shape_cast %9 : vector<1x128xf32> to vector<1x128xf32>
    %11 = vector.broadcast %10 : vector<1x128xf32> to vector<8x128xf32>
    %c0_5 = arith.constant 0 : index
    %c0_6 = arith.constant 0 : index
    %12 = vector.load %arg3[%c0_5, %c0_6] : memref<128x8xf32, #tpu.memory_space<vmem>>, vector<128x8xf32>
    %cst_7 = arith.constant dense<0.000000e+00> : vector<8x8xf32>
    %13 = tpu.matmul %6, %12, %cst_7 {dimension_numbers = #tpu.dot_dimension_numbers<[1], [0], [0], [1], [0, 0, 1, 1], [], []>} : vector<8x128xf32>, vector<128x8xf32>, vector<8x8xf32> -> vector<8x8xf32>
    %c0_8 = arith.constant 0 : index
    %c0_9 = arith.constant 0 : index
    %14 = vector.load %arg4[%c0_8, %c0_9] : memref<8x128xf32, #tpu.memory_space<vmem>>, vector<8x128xf32>
    %cst_10 = arith.constant dense<0.000000e+00> : vector<8x128xf32>
    %15 = tpu.matmul %13, %14, %cst_10 {dimension_numbers = #tpu.dot_dimension_numbers<[1], [0], [0], [1], [0, 0, 1, 1], [], []>} : vector<8x8xf32>, vector<8x128xf32>, vector<8x128xf32> -> vector<8x128xf32>
    %c0_11 = arith.constant 0 : index
    %c0_12 = arith.constant 0 : index
    %16 = vector.load %arg3[%c0_11, %c0_12] : memref<128x8xf32, #tpu.memory_space<vmem>>, vector<128x8xf32>
    %cst_13 = arith.constant dense<0.000000e+00> : vector<8x8xf32>
    %17 = tpu.matmul %11, %16, %cst_13 {dimension_numbers = #tpu.dot_dimension_numbers<[1], [0], [0], [1], [0, 0, 1, 1], [], []>} : vector<8x128xf32>, vector<128x8xf32>, vector<8x8xf32> -> vector<8x8xf32>
    %c0_14 = arith.constant 0 : index
    %c0_15 = arith.constant 0 : index
    %18 = vector.load %arg4[%c0_14, %c0_15] : memref<8x128xf32, #tpu.memory_space<vmem>>, vector<8x128xf32>
    %cst_16 = arith.constant dense<0.000000e+00> : vector<8x128xf32>
    %19 = tpu.matmul %17, %18, %cst_16 {dimension_numbers = #tpu.dot_dimension_numbers<[1], [0], [0], [1], [0, 0, 1, 1], [], []>} : vector<8x8xf32>, vector<8x128xf32>, vector<8x128xf32> -> vector<8x128xf32>
    %20 = vector.extract_strided_slice %15 {offsets = [0, 0], sizes = [1, 128], strides = [1, 1]} : vector<8x128xf32> to vector<1x128xf32>
    %cst_17 = arith.constant 4.8828125E-4 : f32
    %21 = vector.broadcast %cst_17 : f32 to vector<1x128xf32>
    %22 = arith.mulf %20, %21 : vector<1x128xf32>
    %23 = vector.extract_strided_slice %19 {offsets = [0, 0], sizes = [1, 128], strides = [1, 1]} : vector<8x128xf32> to vector<1x128xf32>
    %cst_18 = arith.constant 4.8828125E-4 : f32
    %24 = vector.broadcast %cst_18 : f32 to vector<1x128xf32>
    %25 = arith.mulf %23, %24 : vector<1x128xf32>
    %26 = arith.mulf %22, %22 : vector<1x128xf32>
    %27 = arith.subf %25, %26 : vector<1x128xf32>
    %cst_19 = arith.constant 0.000000e+00 : f32
    %28 = vector.broadcast %cst_19 : f32 to vector<1x128xf32>
    %29 = arith.maximumf %27, %28 : vector<1x128xf32>
    %c0_20 = arith.constant 0 : index
    %c0_21 = arith.constant 0 : index
    %30 = vector.load %arg5[%c0_20, %c0_21] : memref<1x128xf32, #tpu.memory_space<vmem>>, vector<1x128xf32>
    %cst_22 = arith.constant 9.99999974E-6 : f32
    %31 = vector.broadcast %cst_22 : f32 to vector<1x128xf32>
    %32 = arith.addf %29, %31 : vector<1x128xf32>
    %33 = math.rsqrt %32 : vector<1x128xf32>
    %34 = arith.mulf %30, %33 : vector<1x128xf32>
    %c0_23 = arith.constant 0 : index
    %c0_24 = arith.constant 0 : index
    %35 = vector.load %arg6[%c0_23, %c0_24] : memref<1x128xf32, #tpu.memory_space<vmem>>, vector<1x128xf32>
    %36 = arith.mulf %22, %34 : vector<1x128xf32>
    %37 = arith.subf %35, %36 : vector<1x128xf32>
    %38 = vector.broadcast %34 : vector<1x128xf32> to vector<512x128xf32>
    %39 = arith.mulf %2, %38 : vector<512x128xf32>
    %40 = vector.broadcast %37 : vector<1x128xf32> to vector<512x128xf32>
    %41 = arith.addf %39, %40 : vector<512x128xf32>
    %cst_25 = arith.constant 0.000000e+00 : f32
    %42 = vector.broadcast %cst_25 : f32 to vector<512x128xf32>
    %43 = arith.maximumf %41, %42 : vector<512x128xf32>
    %44 = arith.truncf %43 : vector<512x128xf32> to vector<512x128xbf16>
    %c0_26 = arith.constant 0 : index
    %c0_27 = arith.constant 0 : index
    %45 = vector.load %arg7[%c0_26, %c0_27] : memref<512x128xbf16, #tpu.memory_space<vmem>>, vector<512x128xbf16>
    tpu.vector_store %arg7[%c0_26, %c0_27], %44 {strides = array<i32>} : memref<512x128xbf16, #tpu.memory_space<vmem>>, vector<512x128xbf16>,
    return
  }
  func.func @transform_0(%arg0: i32) -> (i32, i32) {
    %c0_i32 = arith.constant 0 : i32
    %c0_i32_0 = arith.constant 0 : i32
    %c0_i32_1 = arith.constant 0 : i32
    return %c0_i32, %c0_i32_0 : i32, i32
  }
  func.func @transform_1(%arg0: i32) -> (i32, i32) {
    %c0_i32 = arith.constant 0 : i32
    %c0_i32_0 = arith.constant 0 : i32
    %c0_i32_1 = arith.constant 0 : i32
    return %c0_i32, %c0_i32_0 : i32, i32
  }
  func.func @transform_2(%arg0: i32) -> (i32, i32) {
    %c0_i32 = arith.constant 0 : i32
    %c0_i32_0 = arith.constant 0 : i32
    %c0_i32_1 = arith.constant 0 : i32
    return %c0_i32, %c0_i32_0 : i32, i32
  }
  func.func @transform_3(%arg0: i32) -> (i32, i32) {
    %c0_i32 = arith.constant 0 : i32
    %c0_i32_0 = arith.constant 0 : i32
    %c0_i32_1 = arith.constant 0 : i32
    return %c0_i32, %c0_i32_0 : i32, i32
  }
  func.func @transform_4(%arg0: i32) -> (i32, i32) {
    %c0_i32 = arith.constant 0 : i32
    %c0_i32_0 = arith.constant 0 : i32
    %c0_i32_1 = arith.constant 0 : i32
    return %c0_i32, %c0_i32_0 : i32, i32
  }
  func.func @transform_5(%arg0: i32) -> (i32, i32) {
    %c0_i32 = arith.constant 0 : i32
    %c0_i32_0 = arith.constant 0 : i32
    %c0_i32_1 = arith.constant 0 : i32
    return %c0_i32, %c0_i32_0 : i32, i32
  }
  func.func @transform_6(%arg0: i32) -> (i32, i32) {
    %c0_i32 = arith.constant 0 : i32
    %c0_i32_0 = arith.constant 0 : i32
    %c0_i32_1 = arith.constant 0 : i32
    return %c0_i32, %c0_i32_0 : i32, i32
  }
}

module attributes {stable_mosaic.version = 11 : i64} {
  func.func @_gemm_tanh_kernel(%arg0: i32, %arg1: memref<1024x72xbf16, #tpu.memory_space<vmem>>, %arg2: memref<72x128xbf16, #tpu.memory_space<vmem>>, %arg3: memref<1024x128xbf16, #tpu.memory_space<vmem>>) attributes {dimension_semantics = [#tpu.dimension_semantics<parallel>], iteration_bounds = array<i64: 2>, scalar_prefetch = 0 : i64, scratch_operands = 0 : i64, tpu.core_type = #tpu.core_type<tc>, window_params = [{transform_indices = @transform_0, window_bounds = array<i64: 1024, 72>}, {pipeline_mode = #tpu.pipeline_mode<synchronous>, transform_indices = @transform_1, window_bounds = array<i64: 72, 128>}, {transform_indices = @transform_2, window_bounds = array<i64: 1024, 128>}]} {
    %c0 = arith.constant 0 : index
    %c0_0 = arith.constant 0 : index
    %0 = vector.load %arg1[%c0, %c0_0] : memref<1024x72xbf16, #tpu.memory_space<vmem>>, vector<1024x72xbf16>
    %c0_1 = arith.constant 0 : index
    %c0_2 = arith.constant 0 : index
    %1 = vector.load %arg2[%c0_1, %c0_2] : memref<72x128xbf16, #tpu.memory_space<vmem>>, vector<72x128xbf16>
    %cst = arith.constant dense<0.000000e+00> : vector<1024x128xf32>
    %2 = tpu.matmul %0, %1, %cst {dimension_numbers = #tpu.dot_dimension_numbers<[1], [0], [0], [1], [0, 0, 1, 1], [], []>} : vector<1024x72xbf16>, vector<72x128xbf16>, vector<1024x128xf32> -> vector<1024x128xf32>
    %3 = math.tanh %2 : vector<1024x128xf32>
    %4 = arith.truncf %3 : vector<1024x128xf32> to vector<1024x128xbf16>
    %c0_3 = arith.constant 0 : index
    %c0_4 = arith.constant 0 : index
    %5 = vector.load %arg3[%c0_3, %c0_4] : memref<1024x128xbf16, #tpu.memory_space<vmem>>, vector<1024x128xbf16>
    tpu.vector_store %arg3[%c0_3, %c0_4], %4 {strides = array<i32>} : memref<1024x128xbf16, #tpu.memory_space<vmem>>, vector<1024x128xbf16>,
    return
  }
  func.func @transform_0(%arg0: i32) -> (i32, i32) {
    %c0_i32 = arith.constant 0 : i32
    %c0_i32_0 = arith.constant 0 : i32
    return %arg0, %c0_i32 : i32, i32
  }
  func.func @transform_1(%arg0: i32) -> (i32, i32) {
    %c0_i32 = arith.constant 0 : i32
    %c0_i32_0 = arith.constant 0 : i32
    %c0_i32_1 = arith.constant 0 : i32
    return %c0_i32, %c0_i32_0 : i32, i32
  }
  func.func @transform_2(%arg0: i32) -> (i32, i32) {
    %c0_i32 = arith.constant 0 : i32
    %c0_i32_0 = arith.constant 0 : i32
    return %arg0, %c0_i32 : i32, i32
  }
}

</mosaic_0001>

<llo_original>
// kernel: generator_forward.6
$region0: #{generator_forward.6}
  #allocation0 [shape = 'u32[]', space=smem, size = 0x4, offset = 0x4, fixed_abs, tag = 'smem constant byte address 0x4 - core index']
  #allocation1 [shape = 'u32[144,128]{1,0:T(1,128)}', space=vmem, size = 0x12000, scoped, tag = 'internal scratch']
  %s0 = inlined_call_operand.vmem [shape: bf16[32,576], index: 0, kind: input, shape index: {}]
  %s1 = inlined_call_operand.hbm [shape: bf16[576,128], index: 1, kind: input, shape index: {}]
  %s2 = inlined_call_operand.vmem [shape: f32[128,32], index: 2, kind: input, shape index: {}]
  %s3 = inlined_call_operand.hbm [shape: f32[32,128], index: 3, kind: input, shape index: {}]
  %s4 = inlined_call_operand.hbm [shape: f32[1,128], index: 4, kind: input, shape index: {}]
  %s5 = inlined_call_operand.hbm [shape: f32[1,128], index: 5, kind: input, shape index: {}]
  %s6 = inlined_call_operand.vmem [shape: bf16[32,128], index: 6, kind: output, shape index: {}]
  %s7 = sld [smem:[#allocation0]]
  $region50: #{generator_forward.6} parent=0
    _
  %s9 = ssub.s32 1, %s7
  %s10 = scalar_select 0, %s9, %s7
  $region1: #{generator_forward.6} parent=0
    #allocation2 [shape = 'u8[147456]{0}', space=vmem, size = 0x24000, scoped, tag = 'input window, operand 1, single buffered']
    #allocation3 [shape = 's32[1]{0}', space=sflag, size = 0x4, scoped, tag = 'scoped memory for generator_forward.6']
    #allocation4 [shape = 'u8[16384]{0}', space=vmem, size = 0x4000, scoped, tag = 'input window, operand 3, single buffered']
    #allocation5 [shape = 's32[1]{0}', space=sflag, size = 0x4, scoped, tag = 'scoped memory for generator_forward.6']
    #allocation6 [shape = 'u8[512]{0}', space=vmem, size = 0x400, scoped, tag = 'input window, operand 4, single buffered']
    #allocation7 [shape = 'u8[512]{0}', space=vmem, size = 0x400, scoped, tag = 'input window, operand 5, single buffered']
    #allocation8 [shape = 's32[1]{0}', space=sflag, size = 0x4, scoped, tag = 'scoped memory for generator_forward.6']
    %11 = vsyncpa [#allocation3], 0
    %12 = vsyncpa [#allocation5], 0
    %13 = vsyncpa [#allocation8], 0
    // Predicated region
    $region2: #{generator_forward.6} parent=1 // pred_check
      _
    $region3: #{generator_forward.6} parent=1 // pred_check_branch
      %15 = sbr.rel (0) target = $region5
    $region4: #{generator_forward.6} parent=1 // pred_region
      _
    $region5: #{generator_forward.6} parent=1 // pred_fallthru
      _
    // Predicated region
    $region6: #{generator_forward.6} parent=1 // pred_check
      _
    $region7: #{generator_forward.6} parent=1 // pred_check_branch
      %17 = sbr.rel (0) target = $region9
    $region8: #{generator_forward.6} parent=1 // pred_region
      %s19 = ssub.s32 4608, 4608
      %20 = vsyncadd [#allocation3], %s19
      %s21 = sshll.u32 [#allocation2], 4
      %s22 = int_to_ptr.vmem [resolvable:$true] %s21
      %27 = dma.hbm_to_vmem [thread:$0]  %s1, 4608, %s22, [#allocation3], 64, 64, 4
    $region9: #{generator_forward.6} parent=1 // pred_fallthru
      _
    // Predicated region
    $region10: #{generator_forward.6} parent=1 // pred_check
      _
    $region11: #{generator_forward.6} parent=1 // pred_check_branch
      %29 = sbr.rel (0) target = $region13
    $region12: #{generator_forward.6} parent=1 // pred_region
      _
    $region13: #{generator_forward.6} parent=1 // pred_fallthru
      _
    // Predicated region
    $region14: #{generator_forward.6} parent=1 // pred_check
      _
    $region15: #{generator_forward.6} parent=1 // pred_check_branch
      %31 = sbr.rel (0) target = $region17
    $region16: #{generator_forward.6} parent=1 // pred_region
      %s33 = ssub.s32 512, 512
      %34 = vsyncadd [#allocation5], %s33
      %s35 = sshll.u32 [#allocation4], 4
      %s36 = int_to_ptr.vmem [resolvable:$true] %s35
      %41 = dma.hbm_to_vmem [thread:$0]  %s3, 512, %s36, [#allocation5], 128, 128, 8
    $region17: #{generator_forward.6} parent=1 // pred_fallthru
      _
    // Predicated region
    $region18: #{generator_forward.6} parent=1 // pred_check
      _
    $region19: #{generator_forward.6} parent=1 // pred_check_branch
      %43 = sbr.rel (0) target = $region21
    $region20: #{generator_forward.6} parent=1 // pred_region
      %s45 = ssub.s32 16, 16
      %46 = vsyncadd [#allocation5], %s45
      %s48 = sshll.u32 [#allocation6], 4
      %s49 = int_to_ptr.vmem [resolvable:$true] %s48
      %51 = dma.hbm_to_vmem [thread:$0]  %s4, 16, %s49, [#allocation5]
    $region21: #{generator_forward.6} parent=1 // pred_fallthru
      _
    // Predicated region
    $region22: #{generator_forward.6} parent=1 // pred_check
      _
    $region23: #{generator_forward.6} parent=1 // pred_check_branch
      %53 = sbr.rel (0) target = $region25
    $region24: #{generator_forward.6} parent=1 // pred_region
      %s55 = ssub.s32 16, 16
      %56 = vsyncadd [#allocation8], %s55
      %s58 = sshll.u32 [#allocation7], 4
      %s59 = int_to_ptr.vmem [resolvable:$true] %s58
      %61 = dma.hbm_to_vmem [thread:$0]  %s5, 16, %s59, [#allocation8]
    $region25: #{generator_forward.6} parent=1 // pred_fallthru
      _
    // Predicated region
    $region26: #{generator_forward.6} parent=1 // pred_check
      _
    $region27: #{generator_forward.6} parent=1 // pred_check_branch
      %63 = sbr.rel (0) target = $region29
    $region28: #{generator_forward.6} parent=1 // pred_region
      %64 = dma.done [#allocation3], 4608
    $region29: #{generator_forward.6} parent=1 // pred_fallthru
      _
    // Predicated region
    $region30: #{generator_forward.6} parent=1 // pred_check
      _
    $region31: #{generator_forward.6} parent=1 // pred_check_branch
      %66 = sbr.rel (0) target = $region33
    $region32: #{generator_forward.6} parent=1 // pred_region
      %67 = dma.done [#allocation5], 512
    $region33: #{generator_forward.6} parent=1 // pred_fallthru
      _
    // Predicated region
    $region34: #{generator_forward.6} parent=1 // pred_check
      _
    $region35: #{generator_forward.6} parent=1 // pred_check_branch
      %69 = sbr.rel (0) target = $region37
    $region36: #{generator_forward.6} parent=1 // pred_region
      %70 = dma.done [#allocation5], 16
    $region37: #{generator_forward.6} parent=1 // pred_fallthru
      _
    // Predicated region
    $region38: #{generator_forward.6} parent=1 // pred_check
      _
    $region39: #{generator_forward.6} parent=1 // pred_check_branch
      %72 = sbr.rel (0) target = $region41
    $region40: #{generator_forward.6} parent=1 // pred_region
      %73 = dma.done [#allocation8], 16
    $region41: #{generator_forward.6} parent=1 // pred_fallthru
      _
    %v75 = vld [vmem:[%s0] sm:$0xff]
    %v76 = vld [vmem:[%s0 + $0x8] sm:$0xff]
    %v77 = vld [vmem:[%s0 + $0x10] sm:$0xf]
    %v78 = vld [vmem:[%s0 + $0x14] sm:$0xff]
    %v79 = vld [vmem:[%s0 + $0x1c] sm:$0xff]
    %v80 = vld [vmem:[%s0 + $0x24] sm:$0xf]
    %v81 = vld [vmem:[%s0 + $0x28] sm:$0xff]
    %v82 = vld [vmem:[%s0 + $0x30] sm:$0xff]
    %v83 = vld [vmem:[%s0 + $0x38] sm:$0xf]
    %v84 = vld [vmem:[%s0 + $0x3c] sm:$0xff]
    %v85 = vld [vmem:[%s0 + $0x44] sm:$0xff]
    %v86 = vld [vmem:[%s0 + $0x4c] sm:$0xf]
    %v87 = vld [vmem:[#allocation2] sm:$0xf]
    %v88 = vld [vmem:[#allocation2 + $0x4] sm:$0xf]
    %v89 = vld [vmem:[#allocation2 + $0x8] sm:$0xf]
    %v90 = vld [vmem:[#allocation2 + $0xc] sm:$0xf]
    %v91 = vld [vmem:[#allocation2 + $0x10] sm:$0xf]
    %v92 = vld [vmem:[#allocation2 + $0x14] sm:$0xf]
    %v93 = vld [vmem:[#allocation2 + $0x18] sm:$0xf]
    %v94 = vld [vmem:[#allocation2 + $0x1c] sm:$0xf]
    %v95 = vld [vmem:[#allocation2 + $0x20] sm:$0xf]
    %v96 = vld [vmem:[#allocation2 + $0x24] sm:$0xf]
    %v97 = vld [vmem:[#allocation2 + $0x28] sm:$0xf]
    %v98 = vld [vmem:[#allocation2 + $0x2c] sm:$0xf]
    %v99 = vld [vmem:[#allocation2 + $0x30] sm:$0xf]
    %v100 = vld [vmem:[#allocation2 + $0x34] sm:$0xf]
    %v101 = vld [vmem:[#allocation2 + $0x38] sm:$0xf]
    %v102 = vld [vmem:[#allocation2 + $0x3c] sm:$0xf]
    %v103 = vld [vmem:[#allocation2 + $0x40] sm:$0xf]
    %v104 = vld [vmem:[#allocation2 + $0x44] sm:$0xf]
    %v105 = vld [vmem:[#allocation2 + $0x48] sm:$0xf]
    %v106 = vld [vmem:[#allocation2 + $0x4c] sm:$0xf]
    %v107 = vld [vmem:[#allocation2 + $0x50] sm:$0xf]
    %v108 = vld [vmem:[#allocation2 + $0x54] sm:$0xf]
    %v109 = vld [vmem:[#allocation2 + $0x58] sm:$0xf]
    %v110 = vld [vmem:[#allocation2 + $0x5c] sm:$0xf]
    %v111 = vld [vmem:[#allocation2 + $0x60] sm:$0xf]
    %v112 = vld [vmem:[#allocation2 + $0x64] sm:$0xf]
    %v113 = vld [vmem:[#allocation2 + $0x68] sm:$0xf]
    %v114 = vld [vmem:[#allocation2 + $0x6c] sm:$0xf]
    %v115 = vld [vmem:[#allocation2 + $0x70] sm:$0xf]
    %v116 = vld [vmem:[#allocation2 + $0x74] sm:$0xf]
    %v117 = vld [vmem:[#allocation2 + $0x78] sm:$0xf]
    %v118 = vld [vmem:[#allocation2 + $0x7c] sm:$0xf]
    %v119 = vld [vmem:[#allocation2 + $0x80] sm:$0xf]
    %v120 = vld [vmem:[#allocation2 + $0x84] sm:$0xf]
    %v121 = vld [vmem:[#allocation2 + $0x88] sm:$0xf]
    %v122 = vld [vmem:[#allocation2 + $0x8c] sm:$0xf]
    %v123 = vld [vmem:[#allocation2 + $0x90] sm:$0xf]
    %v124 = vld [vmem:[#allocation2 + $0x94] sm:$0xf]
    %v125 = vld [vmem:[#allocation2 + $0x98] sm:$0xf]
    %v126 = vld [vmem:[#allocation2 + $0x9c] sm:$0xf]
    %v127 = vld [vmem:[#allocation2 + $0xa0] sm:$0xf]
    %v128 = vld [vmem:[#allocation2 + $0xa4] sm:$0xf]
    %v129 = vld [vmem:[#allocation2 + $0xa8] sm:$0xf]
    %v130 = vld [vmem:[#allocation2 + $0xac] sm:$0xf]
    %v131 = vld [vmem:[#allocation2 + $0xb0] sm:$0xf]
    %v132 = vld [vmem:[#allocation2 + $0xb4] sm:$0xf]
    %v133 = vld [vmem:[#allocation2 + $0xb8] sm:$0xf]
    %v134 = vld [vmem:[#allocation2 + $0xbc] sm:$0xf]
    %v135 = vld [vmem:[#allocation2 + $0xc0] sm:$0xf]
    %v136 = vld [vmem:[#allocation2 + $0xc4] sm:$0xf]
    %v137 = vld [vmem:[#allocation2 + $0xc8] sm:$0xf]
    %v138 = vld [vmem:[#allocation2 + $0xcc] sm:$0xf]
    %v139 = vld [vmem:[#allocation2 + $0xd0] sm:$0xf]
    %v140 = vld [vmem:[#allocation2 + $0xd4] sm:$0xf]
    %v141 = vld [vmem:[#allocation2 + $0xd8] sm:$0xf]
    %v142 = vld [vmem:[#allocation2 + $0xdc] sm:$0xf]
    %v143 = vld [vmem:[#allocation2 + $0xe0] sm:$0xf]
    %v144 = vld [vmem:[#allocation2 + $0xe4] sm:$0xf]
    %v145 = vld [vmem:[#allocation2 + $0xe8] sm:$0xf]
    %v146 = vld [vmem:[#allocation2 + $0xec] sm:$0xf]
    %v147 = vld [vmem:[#allocation2 + $0xf0] sm:$0xf]
    %v148 = vld [vmem:[#allocation2 + $0xf4] sm:$0xf]
    %v149 = vld [vmem:[#allocation2 + $0xf8] sm:$0xf]
    %v150 = vld [vmem:[#allocation2 + $0xfc] sm:$0xf]
    %v151 = vld [vmem:[#allocation2 + $0x100] sm:$0xf]
    %v152 = vld [vmem:[#allocation2 + $0x104] sm:$0xf]
    %v153 = vld [vmem:[#allocation2 + $0x108] sm:$0xf]
    %v154 = vld [vmem:[#allocation2 + $0x10c] sm:$0xf]
    %v155 = vld [vmem:[#allocation2 + $0x110] sm:$0xf]
    %v156 = vld [vmem:[#allocation2 + $0x114] sm:$0xf]
    %v157 = vld [vmem:[#allocation2 + $0x118] sm:$0xf]
    %v158 = vld [vmem:[#allocation2 + $0x11c] sm:$0xf]
    %v171 = vunpack.c.l.b16 %v75
    %v172 = vunpack.c.h.b16 %v75
    %v173 = vunpack.c.l.b16 %v76
    %v174 = vunpack.c.h.b16 %v76
    %v175 = vunpack.c.l.b16 %v77
    %v176 = vunpack.c.l.b16 %v78
    %v177 = vunpack.c.h.b16 %v78
    %v178 = vunpack.c.l.b16 %v79
    %v179 = vunpack.c.h.b16 %v79
    %v180 = vunpack.c.l.b16 %v80
    %v181 = vunpack.c.l.b16 %v81
    %v182 = vunpack.c.h.b16 %v81
    %v183 = vunpack.c.l.b16 %v82
    %v184 = vunpack.c.h.b16 %v82
    %v185 = vunpack.c.l.b16 %v83
    %v186 = vunpack.c.l.b16 %v84
    %v187 = vunpack.c.h.b16 %v84
    %v188 = vunpack.c.l.b16 %v85
    %v189 = vunpack.c.h.b16 %v85
    %v190 = vunpack.c.l.b16 %v86
    %v191 = vpack.c.b16 %v176, %v171
    %v192 = vpack.c.b16 %v177, %v172
    %v193 = vpack.c.b16 %v178, %v173
    %v194 = vpack.c.b16 %v179, %v174
    %v195 = vpack.c.b16 %v180, %v175
    %v196 = vpack.c.b16 %v186, %v181
    %v197 = vpack.c.b16 %v187, %v182
    %v198 = vpack.c.b16 %v188, %v183
    %v199 = vpack.c.b16 %v189, %v184
    %v200 = vpack.c.b16 %v190, %v185
    %v281 = vunpack.c.l.b16 %v87
    %v282 = vunpack.c.l.b16 %v88
    %v283 = vunpack.c.l.b16 %v89
    %v284 = vunpack.c.l.b16 %v90
    %v285 = vunpack.c.l.b16 %v91
    %v286 = vunpack.c.l.b16 %v92
    %v287 = vunpack.c.l.b16 %v93
    %v288 = vunpack.c.l.b16 %v94
    %v289 = vunpack.c.l.b16 %v95
    %v290 = vunpack.c.l.b16 %v96
    %v291 = vunpack.c.l.b16 %v97
    %v292 = vunpack.c.l.b16 %v98
    %v293 = vunpack.c.l.b16 %v99
    %v294 = vunpack.c.l.b16 %v100
    %v295 = vunpack.c.l.b16 %v101
    %v296 = vunpack.c.l.b16 %v102
    %v297 = vunpack.c.l.b16 %v103
    %v298 = vunpack.c.l.b16 %v104
    %v299 = vunpack.c.l.b16 %v105
    %v300 = vunpack.c.l.b16 %v106
    %v301 = vunpack.c.l.b16 %v107
    %v302 = vunpack.c.l.b16 %v108
    %v303 = vunpack.c.l.b16 %v109
    %v304 = vunpack.c.l.b16 %v110
    %v305 = vunpack.c.l.b16 %v111
    %v306 = vunpack.c.l.b16 %v112
    %v307 = vunpack.c.l.b16 %v113
    %v308 = vunpack.c.l.b16 %v114
    %v309 = vunpack.c.l.b16 %v115
    %v310 = vunpack.c.l.b16 %v116
    %v311 = vunpack.c.l.b16 %v117
    %v312 = vunpack.c.l.b16 %v118
    %v313 = vunpack.c.l.b16 %v119
    %v314 = vunpack.c.l.b16 %v120
    %v315 = vunpack.c.l.b16 %v121
    %v316 = vunpack.c.l.b16 %v122
    %v317 = vunpack.c.l.b16 %v123
    %v318 = vunpack.c.l.b16 %v124
    %v319 = vunpack.c.l.b16 %v125
    %v320 = vunpack.c.l.b16 %v126
    %v321 = vunpack.c.l.b16 %v127
    %v322 = vunpack.c.l.b16 %v128
    %v323 = vunpack.c.l.b16 %v129
    %v324 = vunpack.c.l.b16 %v130
    %v325 = vunpack.c.l.b16 %v131
    %v326 = vunpack.c.l.b16 %v132
    %v327 = vunpack.c.l.b16 %v133
    %v328 = vunpack.c.l.b16 %v134
    %v329 = vunpack.c.l.b16 %v135
    %v330 = vunpack.c.l.b16 %v136
    %v331 = vunpack.c.l.b16 %v137
    %v332 = vunpack.c.l.b16 %v138
    %v333 = vunpack.c.l.b16 %v139
    %v334 = vunpack.c.l.b16 %v140
    %v335 = vunpack.c.l.b16 %v141
    %v336 = vunpack.c.l.b16 %v142
    %v337 = vunpack.c.l.b16 %v143
    %v338 = vunpack.c.l.b16 %v144
    %v339 = vunpack.c.l.b16 %v145
    %v340 = vunpack.c.l.b16 %v146
    %v341 = vunpack.c.l.b16 %v147
    %v342 = vunpack.c.l.b16 %v148
    %v343 = vunpack.c.l.b16 %v149
    %v344 = vunpack.c.l.b16 %v150
    %v345 = vunpack.c.l.b16 %v151
    %v346 = vunpack.c.l.b16 %v152
    %v347 = vunpack.c.l.b16 %v153
    %v348 = vunpack.c.l.b16 %v154
    %v349 = vunpack.c.l.b16 %v155
    %v350 = vunpack.c.l.b16 %v156
    %v351 = vunpack.c.l.b16 %v157
    %v352 = vunpack.c.l.b16 %v158
    %v353 = vpack.c.b16 %v282, %v281
    %v354 = vpack.c.b16 %v284, %v283
    %v355 = vpack.c.b16 %v286, %v285
    %v356 = vpack.c.b16 %v288, %v287
    %v357 = vpack.c.b16 %v290, %v289
    %v358 = vpack.c.b16 %v292, %v291
    %v359 = vpack.c.b16 %v294, %v293
    %v360 = vpack.c.b16 %v296, %v295
    %v361 = vpack.c.b16 %v298, %v297
    %v362 = vpack.c.b16 %v300, %v299
    %v363 = vpack.c.b16 %v302, %v301
    %v364 = vpack.c.b16 %v304, %v303
    %v365 = vpack.c.b16 %v306, %v305
    %v366 = vpack.c.b16 %v308, %v307
    %v367 = vpack.c.b16 %v310, %v309
    %v368 = vpack.c.b16 %v312, %v311
    %v369 = vpack.c.b16 %v314, %v313
    %v370 = vpack.c.b16 %v316, %v315
    %v371 = vpack.c.b16 %v318, %v317
    %v372 = vpack.c.b16 %v320, %v319
    %v373 = vpack.c.b16 %v322, %v321
    %v374 = vpack.c.b16 %v324, %v323
    %v375 = vpack.c.b16 %v326, %v325
    %v376 = vpack.c.b16 %v328, %v327
    %v377 = vpack.c.b16 %v330, %v329
    %v378 = vpack.c.b16 %v332, %v331
    %v379 = vpack.c.b16 %v334, %v333
    %v380 = vpack.c.b16 %v336, %v335
    %v381 = vpack.c.b16 %v338, %v337
    %v382 = vpack.c.b16 %v340, %v339
    %v383 = vpack.c.b16 %v342, %v341
    %v384 = vpack.c.b16 %v344, %v343
    %v385 = vpack.c.b16 %v346, %v345
    %v386 = vpack.c.b16 %v348, %v347
    %v387 = vpack.c.b16 %v350, %v349
    %v388 = vpack.c.b16 %v352, %v351
    %vm425 = vcmask 523264
    %v427 = vsel %vm425, %v195, 0
    %v430 = vsel %vm425, %v200, 0
    %432 = vmatprep.subr.bf16.mxu0 0
    %433 = vmatpush1.bf16.msra.mxu0 %v353
    %434 = vmatprep.subr.bf16.mxu0 0
    %435 = vmatpush1.bf16.msra.mxu0 %v354
    %436 = vmatprep.subr.bf16.mxu0 0
    %437 = vmatpush1.bf16.msra.mxu0 %v355
    %438 = vmatprep.subr.bf16.mxu0 0
    %439 = vmatpush1.bf16.msra.mxu0 %v356
    %440 = vmatprep.subr.bf16.mxu0 0
    %441 = vmatpush1.bf16.msra.mxu0 %v357
    %442 = vmatprep.subr.bf16.mxu0 0
    %443 = vmatpush1.bf16.msra.mxu0 %v358
    %444 = vmatprep.subr.bf16.mxu0 0
    %445 = vmatpush1.bf16.msra.mxu0 %v359
    %446 = vmatprep.subr.bf16.mxu0 0
    %447 = vmatpush1.bf16.msra.mxu0 %v360
    %448 = vmatprep.subr.bf16.mxu0 0
    %449 = vmatpush1.bf16.msra.mxu0 %v361
    %450 = vmatprep.subr.bf16.mxu0 0
    %451 = vmatpush1.bf16.msra.mxu0 %v362
    %452 = vmatprep.subr.bf16.mxu0 0
    %453 = vmatpush1.bf16.msra.mxu0 %v363
    %454 = vmatprep.subr.bf16.mxu0 0
    %455 = vmatpush1.bf16.msra.mxu0 %v364
    %456 = vmatprep.subr.bf16.mxu0 0
    %457 = vmatpush1.bf16.msra.mxu0 %v365
    %458 = vmatprep.subr.bf16.mxu0 0
    %459 = vmatpush1.bf16.msra.mxu0 %v366
    %460 = vmatprep.subr.bf16.mxu0 0
    %461 = vmatpush1.bf16.msra.mxu0 %v367
    %462 = vmatprep.subr.bf16.mxu0 0
    %463 = vmatpush1.bf16.msra.mxu0 %v368
    %464 = vmatprep.mubr.bf16.mxu0 %v192
    %465 = vmatmul.mubr.bf16.gmra.mrb[0].mxu0 %v191
    %v466 = vpop.f32.mrb[0].mxu0
    %v467 = vadd.f32 0.0, %v466
    %v468 = vpop.f32.mrb[0].mxu0
    %v469 = vpop.f32.mrb[0].mxu0
    %v470 = vadd.f32 0.0, %v469
    %v471 = vpop.f32.mrb[0].mxu0
    %472 = vmatprep.mubr.bf16.mxu0 %v197
    %473 = vmatmul.mubr.bf16.gmra.mrb[0].mxu0 %v196
    %v474 = vpop.f32.mrb[0].mxu0
    %v475 = vadd.f32 0.0, %v474
    %v476 = vpop.f32.mrb[0].mxu0
    %v477 = vpop.f32.mrb[0].mxu0
    %v478 = vadd.f32 0.0, %v477
    %v479 = vpop.f32.mrb[0].mxu0
    %480 = vdwg.mxu0
    %481 = vmatprep.subr.bf16.mxu0 0
    %482 = vmatpush1.bf16.msra.mxu0 %v369
    %483 = vmatprep.subr.bf16.mxu0 0
    %484 = vmatpush1.bf16.msra.mxu0 %v370
    %485 = vmatprep.subr.bf16.mxu0 0
    %486 = vmatpush1.bf16.msra.mxu0 %v371
    %487 = vmatprep.subr.bf16.mxu0 0
    %488 = vmatpush1.bf16.msra.mxu0 %v372
    %489 = vmatprep.subr.bf16.mxu0 0
    %490 = vmatpush1.bf16.msra.mxu0 %v373
    %491 = vmatprep.subr.bf16.mxu0 0
    %492 = vmatpush1.bf16.msra.mxu0 %v374
    %493 = vmatprep.subr.bf16.mxu0 0
    %494 = vmatpush1.bf16.msra.mxu0 %v375
    %495 = vmatprep.subr.bf16.mxu0 0
    %496 = vmatpush1.bf16.msra.mxu0 %v376
    %497 = vmatprep.subr.bf16.mxu0 0
    %498 = vmatpush1.bf16.msra.mxu0 %v377
    %499 = vmatprep.subr.bf16.mxu0 0
    %500 = vmatpush1.bf16.msra.mxu0 %v378
    %501 = vmatprep.subr.bf16.mxu0 0
    %502 = vmatpush1.bf16.msra.mxu0 %v379
    %503 = vmatprep.subr.bf16.mxu0 0
    %504 = vmatpush1.bf16.msra.mxu0 %v380
    %505 = vmatprep.subr.bf16.mxu0 0
    %506 = vmatpush1.bf16.msra.mxu0 %v381
    %507 = vmatprep.subr.bf16.mxu0 0
    %508 = vmatpush1.bf16.msra.mxu0 %v382
    %509 = vmatprep.subr.bf16.mxu0 0
    %510 = vmatpush1.bf16.msra.mxu0 %v383
    %511 = vmatprep.subr.bf16.mxu0 0
    %512 = vmatpush1.bf16.msra.mxu0 %v384
    %513 = vmatprep.mubr.bf16.mxu0 %v194
    %514 = vmatmul.mubr.bf16.gmra.mrb[0].mxu0 %v193
    %v515 = vpop.f32.mrb[0].mxu0
    %v516 = vadd.f32 %v467, %v515
    %v517 = vpop.f32.mrb[0].mxu0
    %v518 = vpop.f32.mrb[0].mxu0
    %v519 = vadd.f32 %v470, %v518
    %v520 = vpop.f32.mrb[0].mxu0
    %521 = vmatprep.mubr.bf16.mxu0 %v199
    %522 = vmatmul.mubr.bf16.gmra.mrb[0].mxu0 %v198
    %v523 = vpop.f32.mrb[0].mxu0
    %v524 = vadd.f32 %v475, %v523
    %v525 = vpop.f32.mrb[0].mxu0
    %v526 = vpop.f32.mrb[0].mxu0
    %v527 = vadd.f32 %v478, %v526
    %v528 = vpop.f32.mrb[0].mxu0
    %529 = vdwg.mxu0
    %530 = vmatprep.subr.bf16.mxu0 0
    %531 = vmatpush1.bf16.msra.mxu0 %v385
    %532 = vmatprep.subr.bf16.mxu0 0
    %533 = vmatpush1.bf16.msra.mxu0 %v386
    %534 = vmatprep.subr.bf16.mxu0 0
    %535 = vmatpush1.bf16.msra.mxu0 %v387
    %536 = vmatprep.subr.bf16.mxu0 0
    %537 = vmatpush1.bf16.msra.mxu0 %v388
    %538 = vmatprep.subr.bf16.mxu0 0
    %539 = vmatpush1.bf16.msra.mxu0 0
    %540 = vmatprep.subr.bf16.mxu0 0
    %541 = vmatpush1.bf16.msra.mxu0 0
    %542 = vmatprep.subr.bf16.mxu0 0
    %543 = vmatpush1.bf16.msra.mxu0 0
    %544 = vmatprep.subr.bf16.mxu0 0
    %545 = vmatpush1.bf16.msra.mxu0 0
    %546 = vmatprep.subr.bf16.mxu0 0
    %547 = vmatpush1.bf16.msra.mxu0 0
    %548 = vmatprep.subr.bf16.mxu0 0
    %549 = vmatpush1.bf16.msra.mxu0 0
    %550 = vmatprep.subr.bf16.mxu0 0
    %551 = vmatpush1.bf16.msra.mxu0 0
    %552 = vmatprep.subr.bf16.mxu0 0
    %553 = vmatpush1.bf16.msra.mxu0 0
    %554 = vmatprep.subr.bf16.mxu0 0
    %555 = vmatpush1.bf16.msra.mxu0 0
    %556 = vmatprep.subr.bf16.mxu0 0
    %557 = vmatpush1.bf16.msra.mxu0 0
    %558 = vmatprep.subr.bf16.mxu0 0
    %559 = vmatpush1.bf16.msra.mxu0 0
    %560 = vmatprep.subr.bf16.mxu0 0
    %561 = vmatpush1.bf16.msra.mxu0 0
    %562 = vmatprep.mubr.bf16.mxu0 0
    %563 = vmatmul.mubr.bf16.gmra.mrb[0].mxu0 %v427
    %v564 = vpop.f32.mrb[0].mxu0
    %v565 = vadd.f32 %v516, %v564
    %v566 = vpop.f32.mrb[0].mxu0
    %v567 = vpop.f32.mrb[0].mxu0
    %v568 = vadd.f32 %v519, %v567
    %v569 = vpop.f32.mrb[0].mxu0
    %570 = vmatprep.mubr.bf16.mxu0 0
    %571 = vmatmul.mubr.bf16.gmra.mrb[0].mxu0 %v430
    %v572 = vpop.f32.mrb[0].mxu0
    %v573 = vadd.f32 %v524, %v572
    %v574 = vpop.f32.mrb[0].mxu0
    %v575 = vpop.f32.mrb[0].mxu0
    %v576 = vadd.f32 %v527, %v575
    %v577 = vpop.f32.mrb[0].mxu0
    %578 = vdwg.mxu0
    %v579 = vadd.f32 %v565, %v568
    %v580 = vadd.f32 %v579, %v573
    %v581 = vadd.f32 %v580, %v576
    %v582 = vrot.slane %v581, 4
    %v583 = vadd.f32 %v581, %v582
    %v584 = vrot.slane %v583, 2
    %v585 = vadd.f32 %v583, %v584
    %v586 = vrot.slane %v585, 1
    %v587 = vadd.f32 %v585, %v586
    %v588 = vmul.f32 %v565, %v565
    %v589 = vmul.f32 %v568, %v568
    %v590 = vmul.f32 %v573, %v573
    %v591 = vmul.f32 %v576, %v576
    %v592 = vadd.f32 %v588, %v589
    %v593 = vadd.f32 %v592, %v590
    %v594 = vadd.f32 %v593, %v591
    %v595 = vrot.slane %v594, 4
    %v596 = vadd.f32 %v594, %v595
    %v597 = vrot.slane %v596, 2
    %v598 = vadd.f32 %v596, %v597
    %v599 = vrot.slane %v598, 1
    %v600 = vadd.f32 %v598, %v599
    %v601 = vld [vmem:[%s2] sm:$0xff]
    %v602 = vld [vmem:[%s2 + $0x8] sm:$0xff]
    %v603 = vld [vmem:[%s2 + $0x10] sm:$0xff]
    %v604 = vld [vmem:[%s2 + $0x18] sm:$0xff]
    %v605 = vld [vmem:[%s2 + $0x20] sm:$0xff]
    %v606 = vld [vmem:[%s2 + $0x28] sm:$0xff]
    %v607 = vld [vmem:[%s2 + $0x30] sm:$0xff]
    %v608 = vld [vmem:[%s2 + $0x38] sm:$0xff]
    %v609 = vld [vmem:[%s2 + $0x40] sm:$0xff]
    %v610 = vld [vmem:[%s2 + $0x48] sm:$0xff]
    %v611 = vld [vmem:[%s2 + $0x50] sm:$0xff]
    %v612 = vld [vmem:[%s2 + $0x58] sm:$0xff]
    %v613 = vld [vmem:[%s2 + $0x60] sm:$0xff]
    %v614 = vld [vmem:[%s2 + $0x68] sm:$0xff]
    %v615 = vld [vmem:[%s2 + $0x70] sm:$0xff]
    %v616 = vld [vmem:[%s2 + $0x78] sm:$0xff]
    %617 = vmatprep.subr.mxu0 0.0
    %618 = vmatpush1.msra.mxu0 %v601
    %619 = vmatprep.subr.mxu0 0.0
    %620 = vmatpush1.msra.mxu0 %v602
    %621 = vmatprep.subr.mxu0 0.0
    %622 = vmatpush1.msra.mxu0 %v603
    %623 = vmatprep.subr.mxu0 0.0
    %624 = vmatpush1.msra.mxu0 %v604
    %625 = vmatprep.subr.mxu0 0.0
    %626 = vmatpush1.msra.mxu0 %v605
    %627 = vmatprep.subr.mxu0 0.0
    %628 = vmatpush1.msra.mxu0 %v606
    %629 = vmatprep.subr.mxu0 0.0
    %630 = vmatpush1.msra.mxu0 %v607
    %631 = vmatprep.subr.mxu0 0.0
    %632 = vmatpush1.msra.mxu0 %v608
    %633 = vmatprep.subr.mxu0 0.0
    %634 = vmatpush1.msra.mxu0 %v609
    %635 = vmatprep.subr.mxu0 0.0
    %636 = vmatpush1.msra.mxu0 %v610
    %637 = vmatprep.subr.mxu0 0.0
    %638 = vmatpush1.msra.mxu0 %v611
    %639 = vmatprep.subr.mxu0 0.0
    %640 = vmatpush1.msra.mxu0 %v612
    %641 = vmatprep.subr.mxu0 0.0
    %642 = vmatpush1.msra.mxu0 %v613
    %643 = vmatprep.subr.mxu0 0.0
    %644 = vmatpush1.msra.mxu0 %v614
    %645 = vmatprep.subr.mxu0 0.0
    %646 = vmatpush1.msra.mxu0 %v615
    %647 = vmatprep.subr.mxu0 0.0
    %648 = vmatpush1.msra.mxu0 %v616
    %649 = vmatprep.subr.mxu0 0.0
    %650 = vmatpush1.msra.mxu0 0.0
    %651 = vmatprep.subr.mxu0 0.0
    %652 = vmatpush1.msra.mxu0 0.0
    %653 = vmatprep.subr.mxu0 0.0
    %654 = vmatpush1.msra.mxu0 0.0
    %655 = vmatprep.subr.mxu0 0.0
    %656 = vmatpush1.msra.mxu0 0.0
    %657 = vmatprep.subr.mxu0 0.0
    %658 = vmatpush1.msra.mxu0 0.0
    %659 = vmatprep.subr.mxu0 0.0
    %660 = vmatpush1.msra.mxu0 0.0
    %661 = vmatprep.subr.mxu0 0.0
    %662 = vmatpush1.msra.mxu0 0.0
    %663 = vmatprep.subr.mxu0 0.0
    %664 = vmatpush1.msra.mxu0 0.0
    %665 = vmatprep.subr.mxu0 0.0
    %666 = vmatpush1.msra.mxu0 0.0
    %667 = vmatprep.subr.mxu0 0.0
    %668 = vmatpush1.msra.mxu0 0.0
    %669 = vmatprep.subr.mxu0 0.0
    %670 = vmatpush1.msra.mxu0 0.0
    %671 = vmatprep.subr.mxu0 0.0
    %672 = vmatpush1.msra.mxu0 0.0
    %673 = vmatprep.subr.mxu0 0.0
    %674 = vmatpush1.msra.mxu0 0.0
    %675 = vmatprep.subr.mxu0 0.0
    %676 = vmatpush1.msra.mxu0 0.0
    %677 = vmatprep.subr.mxu0 0.0
    %678 = vmatpush1.msra.mxu0 0.0
    %679 = vmatprep.subr.mxu0 0.0
    %680 = vmatpush1.msra.mxu0 0.0
    %681 = vmatprep.mubr.f32.mxu0 0.0
    %682 = vmatmul.mubr.f32.gmra.mrb[0].mxu0 %v587
    %v683 = vpop.f32.mrb[0].mxu0
    %v684 = vadd.f32 0.0, %v683
    %v685 = vpop.f32.mrb[0].mxu0
    %686 = vdwg.mxu0
    %v687 = vld [vmem:[#allocation4] sm:$0xff]
    %v688 = vld [vmem:[#allocation4 + $0x8] sm:$0xff]
    %v689 = vld [vmem:[#allocation4 + $0x10] sm:$0xff]
    %v690 = vld [vmem:[#allocation4 + $0x18] sm:$0xff]
    %vm691 = vcmask 261120
    %v693 = vsel %vm691, %v684, 0
    %695 = vmatprep.subr.mxu0 0.0
    %696 = vmatpush1.msra.mxu0 %v687
    %697 = vmatprep.subr.mxu0 0.0
    %698 = vmatpush1.msra.mxu0 %v688
    %699 = vmatprep.subr.mxu0 0.0
    %700 = vmatpush1.msra.mxu0 %v689
    %701 = vmatprep.subr.mxu0 0.0
    %702 = vmatpush1.msra.mxu0 %v690
    %703 = vmatprep.subr.mxu0 0.0
    %704 = vmatpush1.msra.mxu0 0.0
    %705 = vmatprep.subr.mxu0 0.0
    %706 = vmatpush1.msra.mxu0 0.0
    %707 = vmatprep.subr.mxu0 0.0
    %708 = vmatpush1.msra.mxu0 0.0
    %709 = vmatprep.subr.mxu0 0.0
    %710 = vmatpush1.msra.mxu0 0.0
    %711 = vmatprep.subr.mxu0 0.0
    %712 = vmatpush1.msra.mxu0 0.0
    %713 = vmatprep.subr.mxu0 0.0
    %714 = vmatpush1.msra.mxu0 0.0
    %715 = vmatprep.subr.mxu0 0.0
    %716 = vmatpush1.msra.mxu0 0.0
    %717 = vmatprep.subr.mxu0 0.0
    %718 = vmatpush1.msra.mxu0 0.0
    %719 = vmatprep.subr.mxu0 0.0
    %720 = vmatpush1.msra.mxu0 0.0
    %721 = vmatprep.subr.mxu0 0.0
    %722 = vmatpush1.msra.mxu0 0.0
    %723 = vmatprep.subr.mxu0 0.0
    %724 = vmatpush1.msra.mxu0 0.0
    %725 = vmatprep.subr.mxu0 0.0
    %726 = vmatpush1.msra.mxu0 0.0
    %727 = vmatprep.subr.mxu0 0.0
    %728 = vmatpush1.msra.mxu0 0.0
    %729 = vmatprep.subr.mxu0 0.0
    %730 = vmatpush1.msra.mxu0 0.0
    %731 = vmatprep.subr.mxu0 0.0
    %732 = vmatpush1.msra.mxu0 0.0
    %733 = vmatprep.subr.mxu0 0.0
    %734 = vmatpush1.msra.mxu0 0.0
    %735 = vmatprep.subr.mxu0 0.0
    %736 = vmatpush1.msra.mxu0 0.0
    %737 = vmatprep.subr.mxu0 0.0
    %738 = vmatpush1.msra.mxu0 0.0
    %739 = vmatprep.subr.mxu0 0.0
    %740 = vmatpush1.msra.mxu0 0.0
    %741 = vmatprep.subr.mxu0 0.0
    %742 = vmatpush1.msra.mxu0 0.0
    %743 = vmatprep.subr.mxu0 0.0
    %744 = vmatpush1.msra.mxu0 0.0
    %745 = vmatprep.subr.mxu0 0.0
    %746 = vmatpush1.msra.mxu0 0.0
    %747 = vmatprep.subr.mxu0 0.0
    %748 = vmatpush1.msra.mxu0 0.0
    %749 = vmatprep.subr.mxu0 0.0
    %750 = vmatpush1.msra.mxu0 0.0
    %751 = vmatprep.subr.mxu0 0.0
    %752 = vmatpush1.msra.mxu0 0.0
    %753 = vmatprep.subr.mxu0 0.0
    %754 = vmatpush1.msra.mxu0 0.0
    %755 = vmatprep.subr.mxu0 0.0
    %756 = vmatpush1.msra.mxu0 0.0
    %757 = vmatprep.subr.mxu0 0.0
    %758 = vmatpush1.msra.mxu0 0.0
    %759 = vmatprep.mubr.f32.mxu0 0.0
    %760 = vmatmul.mubr.f32.gmra.mrb[0].mxu0 %v693
    %v761 = vpop.f32.mrb[0].mxu0
    %v762 = vadd.f32 0.0, %v761
    %v763 = vpop.f32.mrb[0].mxu0
    %764 = vdwg.mxu0
    %765 = vmatprep.subr.mxu0 0.0
    %766 = vmatpush1.msra.mxu0 %v601
    %767 = vmatprep.subr.mxu0 0.0
    %768 = vmatpush1.msra.mxu0 %v602
    %769 = vmatprep.subr.mxu0 0.0
    %770 = vmatpush1.msra.mxu0 %v603
    %771 = vmatprep.subr.mxu0 0.0
    %772 = vmatpush1.msra.mxu0 %v604
    %773 = vmatprep.subr.mxu0 0.0
    %774 = vmatpush1.msra.mxu0 %v605
    %775 = vmatprep.subr.mxu0 0.0
    %776 = vmatpush1.msra.mxu0 %v606
    %777 = vmatprep.subr.mxu0 0.0
    %778 = vmatpush1.msra.mxu0 %v607
    %779 = vmatprep.subr.mxu0 0.0
    %780 = vmatpush1.msra.mxu0 %v608
    %781 = vmatprep.subr.mxu0 0.0
    %782 = vmatpush1.msra.mxu0 %v609
    %783 = vmatprep.subr.mxu0 0.0
    %784 = vmatpush1.msra.mxu0 %v610
    %785 = vmatprep.subr.mxu0 0.0
    %786 = vmatpush1.msra.mxu0 %v611
    %787 = vmatprep.subr.mxu0 0.0
    %788 = vmatpush1.msra.mxu0 %v612
    %789 = vmatprep.subr.mxu0 0.0
    %790 = vmatpush1.msra.mxu0 %v613
    %791 = vmatprep.subr.mxu0 0.0
    %792 = vmatpush1.msra.mxu0 %v614
    %793 = vmatprep.subr.mxu0 0.0
    %794 = vmatpush1.msra.mxu0 %v615
    %795 = vmatprep.subr.mxu0 0.0
    %796 = vmatpush1.msra.mxu0 %v616
    %797 = vmatprep.subr.mxu0 0.0
    %798 = vmatpush1.msra.mxu0 0.0
    %799 = vmatprep.subr.mxu0 0.0
    %800 = vmatpush1.msra.mxu0 0.0
    %801 = vmatprep.subr.mxu0 0.0
    %802 = vmatpush1.msra.mxu0 0.0
    %803 = vmatprep.subr.mxu0 0.0
    %804 = vmatpush1.msra.mxu0 0.0
    %805 = vmatprep.subr.mxu0 0.0
    %806 = vmatpush1.msra.mxu0 0.0
    %807 = vmatprep.subr.mxu0 0.0
    %808 = vmatpush1.msra.mxu0 0.0
    %809 = vmatprep.subr.mxu0 0.0
    %810 = vmatpush1.msra.mxu0 0.0
    %811 = vmatprep.subr.mxu0 0.0
    %812 = vmatpush1.msra.mxu0 0.0
    %813 = vmatprep.subr.mxu0 0.0
    %814 = vmatpush1.msra.mxu0 0.0
    %815 = vmatprep.subr.mxu0 0.0
    %816 = vmatpush1.msra.mxu0 0.0
    %817 = vmatprep.subr.mxu0 0.0
    %818 = vmatpush1.msra.mxu0 0.0
    %819 = vmatprep.subr.mxu0 0.0
    %820 = vmatpush1.msra.mxu0 0.0
    %821 = vmatprep.subr.mxu0 0.0
    %822 = vmatpush1.msra.mxu0 0.0
    %823 = vmatprep.subr.mxu0 0.0
    %824 = vmatpush1.msra.mxu0 0.0
    %825 = vmatprep.subr.mxu0 0.0
    %826 = vmatpush1.msra.mxu0 0.0
    %827 = vmatprep.subr.mxu0 0.0
    %828 = vmatpush1.msra.mxu0 0.0
    %829 = vmatprep.mubr.f32.mxu0 0.0
    %830 = vmatmul.mubr.f32.gmra.mrb[0].mxu0 %v600
    %v831 = vpop.f32.mrb[0].mxu0
    %v832 = vadd.f32 0.0, %v831
    %v833 = vpop.f32.mrb[0].mxu0
    %834 = vdwg.mxu0
    %v836 = vsel %vm691, %v832, 0
    %838 = vmatprep.subr.mxu0 0.0
    %839 = vmatpush1.msra.mxu0 %v687
    %840 = vmatprep.subr.mxu0 0.0
    %841 = vmatpush1.msra.mxu0 %v688
    %842 = vmatprep.subr.mxu0 0.0
    %843 = vmatpush1.msra.mxu0 %v689
    %844 = vmatprep.subr.mxu0 0.0
    %845 = vmatpush1.msra.mxu0 %v690
    %846 = vmatprep.subr.mxu0 0.0
    %847 = vmatpush1.msra.mxu0 0.0
    %848 = vmatprep.subr.mxu0 0.0
    %849 = vmatpush1.msra.mxu0 0.0
    %850 = vmatprep.subr.mxu0 0.0
    %851 = vmatpush1.msra.mxu0 0.0
    %852 = vmatprep.subr.mxu0 0.0
    %853 = vmatpush1.msra.mxu0 0.0
    %854 = vmatprep.subr.mxu0 0.0
    %855 = vmatpush1.msra.mxu0 0.0
    %856 = vmatprep.subr.mxu0 0.0
    %857 = vmatpush1.msra.mxu0 0.0
    %858 = vmatprep.subr.mxu0 0.0
    %859 = vmatpush1.msra.mxu0 0.0
    %860 = vmatprep.subr.mxu0 0.0
    %861 = vmatpush1.msra.mxu0 0.0
    %862 = vmatprep.subr.mxu0 0.0
    %863 = vmatpush1.msra.mxu0 0.0
    %864 = vmatprep.subr.mxu0 0.0
    %865 = vmatpush1.msra.mxu0 0.0
    %866 = vmatprep.subr.mxu0 0.0
    %867 = vmatpush1.msra.mxu0 0.0
    %868 = vmatprep.subr.mxu0 0.0
    %869 = vmatpush1.msra.mxu0 0.0
    %870 = vmatprep.subr.mxu0 0.0
    %871 = vmatpush1.msra.mxu0 0.0
    %872 = vmatprep.subr.mxu0 0.0
    %873 = vmatpush1.msra.mxu0 0.0
    %874 = vmatprep.subr.mxu0 0.0
    %875 = vmatpush1.msra.mxu0 0.0
    %876 = vmatprep.subr.mxu0 0.0
    %877 = vmatpush1.msra.mxu0 0.0
    %878 = vmatprep.subr.mxu0 0.0
    %879 = vmatpush1.msra.mxu0 0.0
    %880 = vmatprep.subr.mxu0 0.0
    %881 = vmatpush1.msra.mxu0 0.0
    %882 = vmatprep.subr.mxu0 0.0
    %883 = vmatpush1.msra.mxu0 0.0
    %884 = vmatprep.subr.mxu0 0.0
    %885 = vmatpush1.msra.mxu0 0.0
    %886 = vmatprep.subr.mxu0 0.0
    %887 = vmatpush1.msra.mxu0 0.0
    %888 = vmatprep.subr.mxu0 0.0
    %889 = vmatpush1.msra.mxu0 0.0
    %890 = vmatprep.subr.mxu0 0.0
    %891 = vmatpush1.msra.mxu0 0.0
    %892 = vmatprep.subr.mxu0 0.0
    %893 = vmatpush1.msra.mxu0 0.0
    %894 = vmatprep.subr.mxu0 0.0
    %895 = vmatpush1.msra.mxu0 0.0
    %896 = vmatprep.subr.mxu0 0.0
    %897 = vmatpush1.msra.mxu0 0.0
    %898 = vmatprep.subr.mxu0 0.0
    %899 = vmatpush1.msra.mxu0 0.0
    %900 = vmatprep.subr.mxu0 0.0
    %901 = vmatpush1.msra.mxu0 0.0
    %902 = vmatprep.mubr.f32.mxu0 0.0
    %903 = vmatmul.mubr.f32.gmra.mrb[0].mxu0 %v836
    %v904 = vpop.f32.mrb[0].mxu0
    %v905 = vadd.f32 0.0, %v904
    %v906 = vpop.f32.mrb[0].mxu0
    %907 = vdwg.mxu0
    %v908 = vmul.f32 %v762, 0.0078125
    %v909 = vmul.f32 %v905, 0.0078125
    %v910 = vmul.f32 %v908, %v908
    %v911 = vsub.f32 %v909, %v910
    %v912 = vmax.f32 %v911, 0.0
    %v913 = vld [vmem:[#allocation6] sm:$0x1]
    %v914 = vadd.f32 %v912, 1e-05
    %v915 = vrsqrt.pop %v914
    %v916 = vmul.f32 %v913, %v915
    %v917 = vld [vmem:[#allocation7] sm:$0x1]
    %v918 = vmul.f32 %v908, %v916
    %v919 = vsub.f32 %v917, %v918
    %v921 = vlaneseq
    %v922 = vshrl.u32 %v921, 7
    %v923 = vsub.s32 0, %v922
    %v924 = vrot.slane %v916, %v923
    %v926 = vmul.f32 %v565, %v924
    %v927 = vmul.f32 %v568, %v924
    %v928 = vmul.f32 %v573, %v924
    %v929 = vmul.f32 %v576, %v924
    %v931 = vlaneseq
    %v932 = vshrl.u32 %v931, 7
    %v933 = vsub.s32 0, %v932
    %v934 = vrot.slane %v919, %v933
    %v936 = vadd.f32 %v926, %v934
    %v937 = vadd.f32 %v927, %v934
    %v938 = vadd.f32 %v928, %v934
    %v939 = vadd.f32 %v929, %v934
    %v940 = vmax.f32 %v936, 0.0
    %v941 = vmax.f32 %v937, 0.0
    %v942 = vmax.f32 %v938, 0.0
    %v943 = vmax.f32 %v939, 0.0
    %v944 = vpack.c.bf16 %v941, %v940
    %v945 = vpack.c.bf16 %v943, %v942
    %v948 = vunpack.c.l.b16 %v944
    %v949 = vunpack.c.h.b16 %v944
    %v950 = vunpack.c.l.b16 %v945
    %v951 = vunpack.c.h.b16 %v945
    %v952 = vpack.c.b16 %v948, %v948
    %v953 = vpack.c.b16 %v949, %v949
    %v954 = vpack.c.b16 %v950, %v950
    %v955 = vpack.c.b16 %v951, %v951
    %960 = vst [vmem:[%s6] sm:$0xf] %v952
    %961 = vst [vmem:[%s6 + $0x4] sm:$0xf] %v953
    %962 = vst [vmem:[%s6 + $0x8] sm:$0xf] %v954
    %963 = vst [vmem:[%s6 + $0xc] sm:$0xf] %v955
    // Predicated region
    $region42: #{generator_forward.6} parent=1 // pred_check
      _
    $region43: #{generator_forward.6} parent=1 // pred_check_branch
      %965 = sbr.rel (0) target = $region45
    $region44: #{generator_forward.6} parent=1 // pred_region
      _
    $region45: #{generator_forward.6} parent=1 // pred_fallthru
      _
    // Predicated region
    $region46: #{generator_forward.6} parent=1 // pred_check
      _
    $region47: #{generator_forward.6} parent=1 // pred_check_branch
      %967 = sbr.rel (0) target = $region49
    $region48: #{generator_forward.6} parent=1 // pred_region
      _
    $region49: #{generator_forward.6} parent=1 // pred_fallthru
      _
    %968 = vsyncpa [#allocation3], 1
    %969 = vsyncpa [#allocation5], 1
    %970 = vsyncpa [#allocation8], 1

// kernel: generator_forward.5
$region0: #{generator_forward.5}
  #allocation0 [shape = 'u32[]', space=smem, size = 0x4, offset = 0x4, fixed_abs, tag = 'smem constant byte address 0x4 - core index']
  #allocation1 [shape = 'u32[144,128]{1,0:T(1,128)}', space=vmem, size = 0x12000, scoped, tag = 'internal scratch']
  %s0 = inlined_call_operand.vmem [shape: bf16[8,16], index: 0, kind: input, shape index: {}]
  %s1 = inlined_call_operand.hbm [shape: bf16[16,1024], index: 1, kind: input, shape index: {}]
  %s2 = inlined_call_operand.vmem [shape: f32[1024,64], index: 2, kind: input, shape index: {}]
  %s3 = inlined_call_operand.hbm [shape: f32[64,1024], index: 3, kind: input, shape index: {}]
  %s4 = inlined_call_operand.hbm [shape: f32[1,1024], index: 4, kind: input, shape index: {}]
  %s5 = inlined_call_operand.hbm [shape: f32[1,1024], index: 5, kind: input, shape index: {}]
  %s6 = inlined_call_operand.vmem [shape: bf16[8,1024], index: 6, kind: output, shape index: {}]
  %s7 = sld [smem:[#allocation0]]
  $region50: #{generator_forward.5} parent=0
    _
  %s9 = ssub.s32 1, %s7
  %s10 = scalar_select 0, %s9, %s7
  $region1: #{generator_forward.5} parent=0
    #allocation2 [shape = 'u8[32768]{0}', space=vmem, size = 0x8000, scoped, tag = 'input window, operand 1, single buffered']
    #allocation3 [shape = 's32[1]{0}', space=sflag, size = 0x4, scoped, tag = 'scoped memory for generator_forward.5']
    #allocation4 [shape = 'u8[262144]{0}', space=vmem, size = 0x40000, scoped, tag = 'input window, operand 3, single buffered']
    #allocation5 [shape = 's32[1]{0}', space=sflag, size = 0x4, scoped, tag = 'scoped memory for generator_forward.5']
    #allocation6 [shape = 'u8[4096]{0}', space=vmem, size = 0x1000, scoped, tag = 'input window, operand 4, single buffered']
    #allocation7 [shape = 'u8[4096]{0}', space=vmem, size = 0x1000, scoped, tag = 'input window, operand 5, single buffered']
    #allocation8 [shape = 's32[1]{0}', space=sflag, size = 0x4, scoped, tag = 'scoped memory for generator_forward.5']
    %11 = vsyncpa [#allocation3], 0
    %12 = vsyncpa [#allocation5], 0
    %13 = vsyncpa [#allocation8], 0
    // Predicated region
    $region2: #{generator_forward.5} parent=1 // pred_check
      _
    $region3: #{generator_forward.5} parent=1 // pred_check_branch
      %15 = sbr.rel (0) target = $region5
    $region4: #{generator_forward.5} parent=1 // pred_region
      _
    $region5: #{generator_forward.5} parent=1 // pred_fallthru
      _
    // Predicated region
    $region6: #{generator_forward.5} parent=1 // pred_check
      _
    $region7: #{generator_forward.5} parent=1 // pred_check_branch
      %17 = sbr.rel (0) target = $region9
    $region8: #{generator_forward.5} parent=1 // pred_region
      %s19 = ssub.s32 1024, 1024
      %20 = vsyncadd [#allocation3], %s19
      %s21 = sshll.u32 [#allocation2], 4
      %s22 = int_to_ptr.vmem [resolvable:$true] %s21
      %27 = dma.hbm_to_vmem [thread:$0]  %s1, 1024, %s22, [#allocation3], 512, 512, 32
    $region9: #{generator_forward.5} parent=1 // pred_fallthru
      _
    // Predicated region
    $region10: #{generator_forward.5} parent=1 // pred_check
      _
    $region11: #{generator_forward.5} parent=1 // pred_check_branch
      %29 = sbr.rel (0) target = $region13
    $region12: #{generator_forward.5} parent=1 // pred_region
      _
    $region13: #{generator_forward.5} parent=1 // pred_fallthru
      _
    // Predicated region
    $region14: #{generator_forward.5} parent=1 // pred_check
      _
    $region15: #{generator_forward.5} parent=1 // pred_check_branch
      %31 = sbr.rel (0) target = $region17
    $region16: #{generator_forward.5} parent=1 // pred_region
      %s33 = ssub.s32 8192, 8192
      %34 = vsyncadd [#allocation5], %s33
      %s35 = sshll.u32 [#allocation4], 4
      %s36 = int_to_ptr.vmem [resolvable:$true] %s35
      %41 = dma.hbm_to_vmem [thread:$0]  %s3, 8192, %s36, [#allocation5], 1024, 1024, 64
    $region17: #{generator_forward.5} parent=1 // pred_fallthru
      _
    // Predicated region
    $region18: #{generator_forward.5} parent=1 // pred_check
      _
    $region19: #{generator_forward.5} parent=1 // pred_check_branch
      %43 = sbr.rel (0) target = $region21
    $region20: #{generator_forward.5} parent=1 // pred_region
      %s45 = ssub.s32 128, 128
      %46 = vsyncadd [#allocation5], %s45
      %s48 = sshll.u32 [#allocation6], 4
      %s49 = int_to_ptr.vmem [resolvable:$true] %s48
      %51 = dma.hbm_to_vmem [thread:$0]  %s4, 128, %s49, [#allocation5]
    $region21: #{generator_forward.5} parent=1 // pred_fallthru
      _
    // Predicated region
    $region22: #{generator_forward.5} parent=1 // pred_check
      _
    $region23: #{generator_forward.5} parent=1 // pred_check_branch
      %53 = sbr.rel (0) target = $region25
    $region24: #{generator_forward.5} parent=1 // pred_region
      %s55 = ssub.s32 128, 128
      %56 = vsyncadd [#allocation8], %s55
      %s58 = sshll.u32 [#allocation7], 4
      %s59 = int_to_ptr.vmem [resolvable:$true] %s58
      %61 = dma.hbm_to_vmem [thread:$0]  %s5, 128, %s59, [#allocation8]
    $region25: #{generator_forward.5} parent=1 // pred_fallthru
      _
    // Predicated region
    $region26: #{generator_forward.5} parent=1 // pred_check
      _
    $region27: #{generator_forward.5} parent=1 // pred_check_branch
      %63 = sbr.rel (0) target = $region29
    $region28: #{generator_forward.5} parent=1 // pred_region
      %64 = dma.done [#allocation3], 1024
    $region29: #{generator_forward.5} parent=1 // pred_fallthru
      _
    // Predicated region
    $region30: #{generator_forward.5} parent=1 // pred_check
      _
    $region31: #{generator_forward.5} parent=1 // pred_check_branch
      %66 = sbr.rel (0) target = $region33
    $region32: #{generator_forward.5} parent=1 // pred_region
      %67 = dma.done [#allocation5], 8192
    $region33: #{generator_forward.5} parent=1 // pred_fallthru
      _
    // Predicated region
    $region34: #{generator_forward.5} parent=1 // pred_check
      _
    $region35: #{generator_forward.5} parent=1 // pred_check_branch
      %69 = sbr.rel (0) target = $region37
    $region36: #{generator_forward.5} parent=1 // pred_region
      %70 = dma.done [#allocation5], 128
    $region37: #{generator_forward.5} parent=1 // pred_fallthru
      _
    // Predicated region
    $region38: #{generator_forward.5} parent=1 // pred_check
      _
    $region39: #{generator_forward.5} parent=1 // pred_check_branch
      %72 = sbr.rel (0) target = $region41
    $region40: #{generator_forward.5} parent=1 // pred_region
      %73 = dma.done [#allocation8], 128
    $region41: #{generator_forward.5} parent=1 // pred_fallthru
      _
    %v75 = vld [vmem:[%s0] sm:$0xf]
    %v76 = vld [vmem:[#allocation2] sm:$0xff]
    %v77 = vld [vmem:[#allocation2 + $0x8] sm:$0xff]
    %v78 = vld [vmem:[#allocation2 + $0x10] sm:$0xff]
    %v79 = vld [vmem:[#allocation2 + $0x18] sm:$0xff]
    %v80 = vld [vmem:[#allocation2 + $0x20] sm:$0xff]
    %v81 = vld [vmem:[#allocation2 + $0x28] sm:$0xff]
    %v82 = vld [vmem:[#allocation2 + $0x30] sm:$0xff]
    %v83 = vld [vmem:[#allocation2 + $0x38] sm:$0xff]
    %v92 = vunpack.c.l.b16 %v76
    %v93 = vunpack.c.h.b16 %v76
    %v94 = vunpack.c.l.b16 %v77
    %v95 = vunpack.c.h.b16 %v77
    %v96 = vunpack.c.l.b16 %v78
    %v97 = vunpack.c.h.b16 %v78
    %v98 = vunpack.c.l.b16 %v79
    %v99 = vunpack.c.h.b16 %v79
    %v100 = vunpack.c.l.b16 %v80
    %v101 = vunpack.c.h.b16 %v80
    %v102 = vunpack.c.l.b16 %v81
    %v103 = vunpack.c.h.b16 %v81
    %v104 = vunpack.c.l.b16 %v82
    %v105 = vunpack.c.h.b16 %v82
    %v106 = vunpack.c.l.b16 %v83
    %v107 = vunpack.c.h.b16 %v83
    %v108 = vpack.c.b16 %v100, %v92
    %v109 = vpack.c.b16 %v101, %v93
    %v110 = vpack.c.b16 %v102, %v94
    %v111 = vpack.c.b16 %v103, %v95
    %v112 = vpack.c.b16 %v104, %v96
    %v113 = vpack.c.b16 %v105, %v97
    %v114 = vpack.c.b16 %v106, %v98
    %v115 = vpack.c.b16 %v107, %v99
    %vm124 = vcmask 130048
    %v126 = vsel %vm124, %v75, 0
    %128 = vmatprep.subr.bf16.mxu0 %v109
    %129 = vmatpush1.bf16.msra.mxu0 %v108
    %130 = vmatprep.subr.bf16.mxu0 0
    %131 = vmatpush1.bf16.msra.mxu0 0
    %132 = vmatprep.subr.bf16.mxu0 0
    %133 = vmatpush1.bf16.msra.mxu0 0
    %134 = vmatprep.subr.bf16.mxu0 0
    %135 = vmatpush1.bf16.msra.mxu0 0
    %136 = vmatprep.subr.bf16.mxu0 0
    %137 = vmatpush1.bf16.msra.mxu0 0
    %138 = vmatprep.subr.bf16.mxu0 0
    %139 = vmatpush1.bf16.msra.mxu0 0
    %140 = vmatprep.subr.bf16.mxu0 0
    %141 = vmatpush1.bf16.msra.mxu0 0
    %142 = vmatprep.subr.bf16.mxu0 0
    %143 = vmatpush1.bf16.msra.mxu0 0
    %144 = vmatprep.subr.bf16.mxu0 0
    %145 = vmatpush1.bf16.msra.mxu0 0
    %146 = vmatprep.subr.bf16.mxu0 0
    %147 = vmatpush1.bf16.msra.mxu0 0
    %148 = vmatprep.subr.bf16.mxu0 0
    %149 = vmatpush1.bf16.msra.mxu0 0
    %150 = vmatprep.subr.bf16.mxu0 0
    %151 = vmatpush1.bf16.msra.mxu0 0
    %152 = vmatprep.subr.bf16.mxu0 0
    %153 = vmatpush1.bf16.msra.mxu0 0
    %154 = vmatprep.subr.bf16.mxu0 0
    %155 = vmatpush1.bf16.msra.mxu0 0
    %156 = vmatprep.subr.bf16.mxu0 0
    %157 = vmatpush1.bf16.msra.mxu0 0
    %158 = vmatprep.subr.bf16.mxu0 0
    %159 = vmatpush1.bf16.msra.mxu0 0
    %160 = vmatprep.mubr.bf16.mxu0 0
    %161 = vmatmul.mubr.bf16.gmra.mrb[0].mxu0 %v126
    %v162 = vpop.f32.mrb[0].mxu0
    %v163 = vadd.f32 0.0, %v162
    %v164 = vpop.f32.mrb[0].mxu0
    %v165 = vadd.f32 0.0, %v164
    %v166 = vpop.f32.mrb[0].mxu0
    %v167 = vpop.f32.mrb[0].mxu0
    %168 = vdwg.mxu0
    %169 = vmatprep.subr.bf16.mxu0 %v111
    %170 = vmatpush1.bf16.msra.mxu0 %v110
    %171 = vmatprep.subr.bf16.mxu0 0
    %172 = vmatpush1.bf16.msra.mxu0 0
    %173 = vmatprep.subr.bf16.mxu0 0
    %174 = vmatpush1.bf16.msra.mxu0 0
    %175 = vmatprep.subr.bf16.mxu0 0
    %176 = vmatpush1.bf16.msra.mxu0 0
    %177 = vmatprep.subr.bf16.mxu0 0
    %178 = vmatpush1.bf16.msra.mxu0 0
    %179 = vmatprep.subr.bf16.mxu0 0
    %180 = vmatpush1.bf16.msra.mxu0 0
    %181 = vmatprep.subr.bf16.mxu0 0
    %182 = vmatpush1.bf16.msra.mxu0 0
    %183 = vmatprep.subr.bf16.mxu0 0
    %184 = vmatpush1.bf16.msra.mxu0 0
    %185 = vmatprep.subr.bf16.mxu0 0
    %186 = vmatpush1.bf16.msra.mxu0 0
    %187 = vmatprep.subr.bf16.mxu0 0
    %188 = vmatpush1.bf16.msra.mxu0 0
    %189 = vmatprep.subr.bf16.mxu0 0
    %190 = vmatpush1.bf16.msra.mxu0 0
    %191 = vmatprep.subr.bf16.mxu0 0
    %192 = vmatpush1.bf16.msra.mxu0 0
    %193 = vmatprep.subr.bf16.mxu0 0
    %194 = vmatpush1.bf16.msra.mxu0 0
    %195 = vmatprep.subr.bf16.mxu0 0
    %196 = vmatpush1.bf16.msra.mxu0 0
    %197 = vmatprep.subr.bf16.mxu0 0
    %198 = vmatpush1.bf16.msra.mxu0 0
    %199 = vmatprep.subr.bf16.mxu0 0
    %200 = vmatpush1.bf16.msra.mxu0 0
    %201 = vmatprep.mubr.bf16.mxu0 0
    %202 = vmatmul.mubr.bf16.gmra.mrb[0].mxu0 %v126
    %v203 = vpop.f32.mrb[0].mxu0
    %v204 = vadd.f32 0.0, %v203
    %v205 = vpop.f32.mrb[0].mxu0
    %v206 = vadd.f32 0.0, %v205
    %v207 = vpop.f32.mrb[0].mxu0
    %v208 = vpop.f32.mrb[0].mxu0
    %209 = vdwg.mxu0
    %210 = vmatprep.subr.bf16.mxu0 %v113
    %211 = vmatpush1.bf16.msra.mxu0 %v112
    %212 = vmatprep.subr.bf16.mxu0 0
    %213 = vmatpush1.bf16.msra.mxu0 0
    %214 = vmatprep.subr.bf16.mxu0 0
    %215 = vmatpush1.bf16.msra.mxu0 0
    %216 = vmatprep.subr.bf16.mxu0 0
    %217 = vmatpush1.bf16.msra.mxu0 0
    %218 = vmatprep.subr.bf16.mxu0 0
    %219 = vmatpush1.bf16.msra.mxu0 0
    %220 = vmatprep.subr.bf16.mxu0 0
    %221 = vmatpush1.bf16.msra.mxu0 0
    %222 = vmatprep.subr.bf16.mxu0 0
    %223 = vmatpush1.bf16.msra.mxu0 0
    %224 = vmatprep.subr.bf16.mxu0 0
    %225 = vmatpush1.bf16.msra.mxu0 0
    %226 = vmatprep.subr.bf16.mxu0 0
    %227 = vmatpush1.bf16.msra.mxu0 0
    %228 = vmatprep.subr.bf16.mxu0 0
    %229 = vmatpush1.bf16.msra.mxu0 0
    %230 = vmatprep.subr.bf16.mxu0 0
    %231 = vmatpush1.bf16.msra.mxu0 0
    %232 = vmatprep.subr.bf16.mxu0 0
    %233 = vmatpush1.bf16.msra.mxu0 0
    %234 = vmatprep.subr.bf16.mxu0 0
    %235 = vmatpush1.bf16.msra.mxu0 0
    %236 = vmatprep.subr.bf16.mxu0 0
    %237 = vmatpush1.bf16.msra.mxu0 0
    %238 = vmatprep.subr.bf16.mxu0 0
    %239 = vmatpush1.bf16.msra.mxu0 0
    %240 = vmatprep.subr.bf16.mxu0 0
    %241 = vmatpush1.bf16.msra.mxu0 0
    %242 = vmatprep.mubr.bf16.mxu0 0
    %243 = vmatmul.mubr.bf16.gmra.mrb[0].mxu0 %v126
    %v244 = vpop.f32.mrb[0].mxu0
    %v245 = vadd.f32 0.0, %v244
    %v246 = vpop.f32.mrb[0].mxu0
    %v247 = vadd.f32 0.0, %v246
    %v248 = vpop.f32.mrb[0].mxu0
    %v249 = vpop.f32.mrb[0].mxu0
    %250 = vdwg.mxu0
    %251 = vmatprep.subr.bf16.mxu0 %v115
    %252 = vmatpush1.bf16.msra.mxu0 %v114
    %253 = vmatprep.subr.bf16.mxu0 0
    %254 = vmatpush1.bf16.msra.mxu0 0
    %255 = vmatprep.subr.bf16.mxu0 0
    %256 = vmatpush1.bf16.msra.mxu0 0
    %257 = vmatprep.subr.bf16.mxu0 0
    %258 = vmatpush1.bf16.msra.mxu0 0
    %259 = vmatprep.subr.bf16.mxu0 0
    %260 = vmatpush1.bf16.msra.mxu0 0
    %261 = vmatprep.subr.bf16.mxu0 0
    %262 = vmatpush1.bf16.msra.mxu0 0
    %263 = vmatprep.subr.bf16.mxu0 0
    %264 = vmatpush1.bf16.msra.mxu0 0
    %265 = vmatprep.subr.bf16.mxu0 0
    %266 = vmatpush1.bf16.msra.mxu0 0
    %267 = vmatprep.subr.bf16.mxu0 0
    %268 = vmatpush1.bf16.msra.mxu0 0
    %269 = vmatprep.subr.bf16.mxu0 0
    %270 = vmatpush1.bf16.msra.mxu0 0
    %271 = vmatprep.subr.bf16.mxu0 0
    %272 = vmatpush1.bf16.msra.mxu0 0
    %273 = vmatprep.subr.bf16.mxu0 0
    %274 = vmatpush1.bf16.msra.mxu0 0
    %275 = vmatprep.subr.bf16.mxu0 0
    %276 = vmatpush1.bf16.msra.mxu0 0
    %277 = vmatprep.subr.bf16.mxu0 0
    %278 = vmatpush1.bf16.msra.mxu0 0
    %279 = vmatprep.subr.bf16.mxu0 0
    %280 = vmatpush1.bf16.msra.mxu0 0
    %281 = vmatprep.subr.bf16.mxu0 0
    %282 = vmatpush1.bf16.msra.mxu0 0
    %283 = vmatprep.mubr.bf16.mxu0 0
    %284 = vmatmul.mubr.bf16.gmra.mrb[0].mxu0 %v126
    %v285 = vpop.f32.mrb[0].mxu0
    %v286 = vadd.f32 0.0, %v285
    %v287 = vpop.f32.mrb[0].mxu0
    %v288 = vadd.f32 0.0, %v287
    %v289 = vpop.f32.mrb[0].mxu0
    %v290 = vpop.f32.mrb[0].mxu0
    %291 = vdwg.mxu0
    %v292 = vrot.slane %v163, 4
    %v293 = vadd.f32 %v163, %v292
    %v294 = vrot.slane %v293, 2
    %v295 = vadd.f32 %v293, %v294
    %v296 = vrot.slane %v295, 1
    %v297 = vadd.f32 %v295, %v296
    %v298 = vrot.slane %v165, 4
    %v299 = vadd.f32 %v165, %v298
    %v300 = vrot.slane %v299, 2
    %v301 = vadd.f32 %v299, %v300
    %v302 = vrot.slane %v301, 1
    %v303 = vadd.f32 %v301, %v302
    %v304 = vrot.slane %v204, 4
    %v305 = vadd.f32 %v204, %v304
    %v306 = vrot.slane %v305, 2
    %v307 = vadd.f32 %v305, %v306
    %v308 = vrot.slane %v307, 1
    %v309 = vadd.f32 %v307, %v308
    %v310 = vrot.slane %v206, 4
    %v311 = vadd.f32 %v206, %v310
    %v312 = vrot.slane %v311, 2
    %v313 = vadd.f32 %v311, %v312
    %v314 = vrot.slane %v313, 1
    %v315 = vadd.f32 %v313, %v314
    %v316 = vrot.slane %v245, 4
    %v317 = vadd.f32 %v245, %v316
    %v318 = vrot.slane %v317, 2
    %v319 = vadd.f32 %v317, %v318
    %v320 = vrot.slane %v319, 1
    %v321 = vadd.f32 %v319, %v320
    %v322 = vrot.slane %v247, 4
    %v323 = vadd.f32 %v247, %v322
    %v324 = vrot.slane %v323, 2
    %v325 = vadd.f32 %v323, %v324
    %v326 = vrot.slane %v325, 1
    %v327 = vadd.f32 %v325, %v326
    %v328 = vrot.slane %v286, 4
    %v329 = vadd.f32 %v286, %v328
    %v330 = vrot.slane %v329, 2
    %v331 = vadd.f32 %v329, %v330
    %v332 = vrot.slane %v331, 1
    %v333 = vadd.f32 %v331, %v332
    %v334 = vrot.slane %v288, 4
    %v335 = vadd.f32 %v288, %v334
    %v336 = vrot.slane %v335, 2
    %v337 = vadd.f32 %v335, %v336
    %v338 = vrot.slane %v337, 1
    %v339 = vadd.f32 %v337, %v338
    %v340 = vmul.f32 %v163, %v163
    %v341 = vmul.f32 %v165, %v165
    %v342 = vmul.f32 %v204, %v204
    %v343 = vmul.f32 %v206, %v206
    %v344 = vmul.f32 %v245, %v245
    %v345 = vmul.f32 %v247, %v247
    %v346 = vmul.f32 %v286, %v286
    %v347 = vmul.f32 %v288, %v288
    %v348 = vrot.slane %v340, 4
    %v349 = vadd.f32 %v340, %v348
    %v350 = vrot.slane %v349, 2
    %v351 = vadd.f32 %v349, %v350
    %v352 = vrot.slane %v351, 1
    %v353 = vadd.f32 %v351, %v352
    %v354 = vrot.slane %v341, 4
    %v355 = vadd.f32 %v341, %v354
    %v356 = vrot.slane %v355, 2
    %v357 = vadd.f32 %v355, %v356
    %v358 = vrot.slane %v357, 1
    %v359 = vadd.f32 %v357, %v358
    %v360 = vrot.slane %v342, 4
    %v361 = vadd.f32 %v342, %v360
    %v362 = vrot.slane %v361, 2
    %v363 = vadd.f32 %v361, %v362
    %v364 = vrot.slane %v363, 1
    %v365 = vadd.f32 %v363, %v364
    %v366 = vrot.slane %v343, 4
    %v367 = vadd.f32 %v343, %v366
    %v368 = vrot.slane %v367, 2
    %v369 = vadd.f32 %v367, %v368
    %v370 = vrot.slane %v369, 1
    %v371 = vadd.f32 %v369, %v370
    %v372 = vrot.slane %v344, 4
    %v373 = vadd.f32 %v344, %v372
    %v374 = vrot.slane %v373, 2
    %v375 = vadd.f32 %v373, %v374
    %v376 = vrot.slane %v375, 1
    %v377 = vadd.f32 %v375, %v376
    %v378 = vrot.slane %v345, 4
    %v379 = vadd.f32 %v345, %v378
    %v380 = vrot.slane %v379, 2
    %v381 = vadd.f32 %v379, %v380
    %v382 = vrot.slane %v381, 1
    %v383 = vadd.f32 %v381, %v382
    %v384 = vrot.slane %v346, 4
    %v385 = vadd.f32 %v346, %v384
    %v386 = vrot.slane %v385, 2
    %v387 = vadd.f32 %v385, %v386
    %v388 = vrot.slane %v387, 1
    %v389 = vadd.f32 %v387, %v388
    %v390 = vrot.slane %v347, 4
    %v391 = vadd.f32 %v347, %v390
    %v392 = vrot.slane %v391, 2
    %v393 = vadd.f32 %v391, %v392
    %v394 = vrot.slane %v393, 1
    %v395 = vadd.f32 %v393, %v394
    %v396 = vld [vmem:[%s2] sm:$0xff]
    %v397 = vld [vmem:[%s2 + $0x8] sm:$0xff]
    %v398 = vld [vmem:[%s2 + $0x10] sm:$0xff]
    %v399 = vld [vmem:[%s2 + $0x18] sm:$0xff]
    %v400 = vld [vmem:[%s2 + $0x20] sm:$0xff]
    %v401 = vld [vmem:[%s2 + $0x28] sm:$0xff]
    %v402 = vld [vmem:[%s2 + $0x30] sm:$0xff]
    %v403 = vld [vmem:[%s2 + $0x38] sm:$0xff]
    %v404 = vld [vmem:[%s2 + $0x40] sm:$0xff]
    %v405 = vld [vmem:[%s2 + $0x48] sm:$0xff]
    %v406 = vld [vmem:[%s2 + $0x50] sm:$0xff]
    %v407 = vld [vmem:[%s2 + $0x58] sm:$0xff]
    %v408 = vld [vmem:[%s2 + $0x60] sm:$0xff]
    %v409 = vld [vmem:[%s2 + $0x68] sm:$0xff]
    %v410 = vld [vmem:[%s2 + $0x70] sm:$0xff]
    %v411 = vld [vmem:[%s2 + $0x78] sm:$0xff]
    %v412 = vld [vmem:[%s2 + $0x80] sm:$0xff]
    %v413 = vld [vmem:[%s2 + $0x88] sm:$0xff]
    %v414 = vld [vmem:[%s2 + $0x90] sm:$0xff]
    %v415 = vld [vmem:[%s2 + $0x98] sm:$0xff]
    %v416 = vld [vmem:[%s2 + $0xa0] sm:$0xff]
    %v417 = vld [vmem:[%s2 + $0xa8] sm:$0xff]
    %v418 = vld [vmem:[%s2 + $0xb0] sm:$0xff]
    %v419 = vld [vmem:[%s2 + $0xb8] sm:$0xff]
    %v420 = vld [vmem:[%s2 + $0xc0] sm:$0xff]
    %v421 = vld [vmem:[%s2 + $0xc8] sm:$0xff]
    %v422 = vld [vmem:[%s2 + $0xd0] sm:$0xff]
    %v423 = vld [vmem:[%s2 + $0xd8] sm:$0xff]
    %v424 = vld [vmem:[%s2 + $0xe0] sm:$0xff]
    %v425 = vld [vmem:[%s2 + $0xe8] sm:$0xff]
    %v426 = vld [vmem:[%s2 + $0xf0] sm:$0xff]
    %v427 = vld [vmem:[%s2 + $0xf8] sm:$0xff]
    %v428 = vld [vmem:[%s2 + $0x100] sm:$0xff]
    %v429 = vld [vmem:[%s2 + $0x108] sm:$0xff]
    %v430 = vld [vmem:[%s2 + $0x110] sm:$0xff]
    %v431 = vld [vmem:[%s2 + $0x118] sm:$0xff]
    %v432 = vld [vmem:[%s2 + $0x120] sm:$0xff]
    %v433 = vld [vmem:[%s2 + $0x128] sm:$0xff]
    %v434 = vld [vmem:[%s2 + $0x130] sm:$0xff]
    %v435 = vld [vmem:[%s2 + $0x138] sm:$0xff]
    %v436 = vld [vmem:[%s2 + $0x140] sm:$0xff]
    %v437 = vld [vmem:[%s2 + $0x148] sm:$0xff]
    %v438 = vld [vmem:[%s2 + $0x150] sm:$0xff]
    %v439 = vld [vmem:[%s2 + $0x158] sm:$0xff]
    %v440 = vld [vmem:[%s2 + $0x160] sm:$0xff]
    %v441 = vld [vmem:[%s2 + $0x168] sm:$0xff]
    %v442 = vld [vmem:[%s2 + $0x170] sm:$0xff]
    %v443 = vld [vmem:[%s2 + $0x178] sm:$0xff]
    %v444 = vld [vmem:[%s2 + $0x180] sm:$0xff]
    %v445 = vld [vmem:[%s2 + $0x188] sm:$0xff]
    %v446 = vld [vmem:[%s2 + $0x190] sm:$0xff]
    %v447 = vld [vmem:[%s2 + $0x198] sm:$0xff]
    %v448 = vld [vmem:[%s2 + $0x1a0] sm:$0xff]
    %v449 = vld [vmem:[%s2 + $0x1a8] sm:$0xff]
    %v450 = vld [vmem:[%s2 + $0x1b0] sm:$0xff]
    %v451 = vld [vmem:[%s2 + $0x1b8] sm:$0xff]
    %v452 = vld [vmem:[%s2 + $0x1c0] sm:$0xff]
    %v453 = vld [vmem:[%s2 + $0x1c8] sm:$0xff]
    %v454 = vld [vmem:[%s2 + $0x1d0] sm:$0xff]
    %v455 = vld [vmem:[%s2 + $0x1d8] sm:$0xff]
    %v456 = vld [vmem:[%s2 + $0x1e0] sm:$0xff]
    %v457 = vld [vmem:[%s2 + $0x1e8] sm:$0xff]
    %v458 = vld [vmem:[%s2 + $0x1f0] sm:$0xff]
    %v459 = vld [vmem:[%s2 + $0x1f8] sm:$0xff]
    %v460 = vld [vmem:[%s2 + $0x200] sm:$0xff]
    %v461 = vld [vmem:[%s2 + $0x208] sm:$0xff]
    %v462 = vld [vmem:[%s2 + $0x210] sm:$0xff]
    %v463 = vld [vmem:[%s2 + $0x218] sm:$0xff]
    %v464 = vld [vmem:[%s2 + $0x220] sm:$0xff]
    %v465 = vld [vmem:[%s2 + $0x228] sm:$0xff]
    %v466 = vld [vmem:[%s2 + $0x230] sm:$0xff]
    %v467 = vld [vmem:[%s2 + $0x238] sm:$0xff]
    %v468 = vld [vmem:[%s2 + $0x240] sm:$0xff]
    %v469 = vld [vmem:[%s2 + $0x248] sm:$0xff]
    %v470 = vld [vmem:[%s2 + $0x250] sm:$0xff]
    %v471 = vld [vmem:[%s2 + $0x258] sm:$0xff]
    %v472 = vld [vmem:[%s2 + $0x260] sm:$0xff]
    %v473 = vld [vmem:[%s2 + $0x268] sm:$0xff]
    %v474 = vld [vmem:[%s2 + $0x270] sm:$0xff]
    %v475 = vld [vmem:[%s2 + $0x278] sm:$0xff]
    %v476 = vld [vmem:[%s2 + $0x280] sm:$0xff]
    %v477 = vld [vmem:[%s2 + $0x288] sm:$0xff]
    %v478 = vld [vmem:[%s2 + $0x290] sm:$0xff]
    %v479 = vld [vmem:[%s2 + $0x298] sm:$0xff]
    %v480 = vld [vmem:[%s2 + $0x2a0] sm:$0xff]
    %v481 = vld [vmem:[%s2 + $0x2a8] sm:$0xff]
    %v482 = vld [vmem:[%s2 + $0x2b0] sm:$0xff]
    %v483 = vld [vmem:[%s2 + $0x2b8] sm:$0xff]
    %v484 = vld [vmem:[%s2 + $0x2c0] sm:$0xff]
    %v485 = vld [vmem:[%s2 + $0x2c8] sm:$0xff]
    %v486 = vld [vmem:[%s2 + $0x2d0] sm:$0xff]
    %v487 = vld [vmem:[%s2 + $0x2d8] sm:$0xff]
    %v488 = vld [vmem:[%s2 + $0x2e0] sm:$0xff]
    %v489 = vld [vmem:[%s2 + $0x2e8] sm:$0xff]
    %v490 = vld [vmem:[%s2 + $0x2f0] sm:$0xff]
    %v491 = vld [vmem:[%s2 + $0x2f8] sm:$0xff]
    %v492 = vld [vmem:[%s2 + $0x300] sm:$0xff]
    %v493 = vld [vmem:[%s2 + $0x308] sm:$0xff]
    %v494 = vld [vmem:[%s2 + $0x310] sm:$0xff]
    %v495 = vld [vmem:[%s2 + $0x318] sm:$0xff]
    %v496 = vld [vmem:[%s2 + $0x320] sm:$0xff]
    %v497 = vld [vmem:[%s2 + $0x328] sm:$0xff]
    %v498 = vld [vmem:[%s2 + $0x330] sm:$0xff]
    %v499 = vld [vmem:[%s2 + $0x338] sm:$0xff]
    %v500 = vld [vmem:[%s2 + $0x340] sm:$0xff]
    %v501 = vld [vmem:[%s2 + $0x348] sm:$0xff]
    %v502 = vld [vmem:[%s2 + $0x350] sm:$0xff]
    %v503 = vld [vmem:[%s2 + $0x358] sm:$0xff]
    %v504 = vld [vmem:[%s2 + $0x360] sm:$0xff]
    %v505 = vld [vmem:[%s2 + $0x368] sm:$0xff]
    %v506 = vld [vmem:[%s2 + $0x370] sm:$0xff]
    %v507 = vld [vmem:[%s2 + $0x378] sm:$0xff]
    %v508 = vld [vmem:[%s2 + $0x380] sm:$0xff]
    %v509 = vld [vmem:[%s2 + $0x388] sm:$0xff]
    %v510 = vld [vmem:[%s2 + $0x390] sm:$0xff]
    %v511 = vld [vmem:[%s2 + $0x398] sm:$0xff]
    %v512 = vld [vmem:[%s2 + $0x3a0] sm:$0xff]
    %v513 = vld [vmem:[%s2 + $0x3a8] sm:$0xff]
    %v514 = vld [vmem:[%s2 + $0x3b0] sm:$0xff]
    %v515 = vld [vmem:[%s2 + $0x3b8] sm:$0xff]
    %v516 = vld [vmem:[%s2 + $0x3c0] sm:$0xff]
    %v517 = vld [vmem:[%s2 + $0x3c8] sm:$0xff]
    %v518 = vld [vmem:[%s2 + $0x3d0] sm:$0xff]
    %v519 = vld [vmem:[%s2 + $0x3d8] sm:$0xff]
    %v520 = vld [vmem:[%s2 + $0x3e0] sm:$0xff]
    %v521 = vld [vmem:[%s2 + $0x3e8] sm:$0xff]
    %v522 = vld [vmem:[%s2 + $0x3f0] sm:$0xff]
    %v523 = vld [vmem:[%s2 + $0x3f8] sm:$0xff]
    %524 = vmatprep.subr.mxu0 0.0
    %525 = vmatpush1.msra.mxu0 %v396
    %526 = vmatprep.subr.mxu0 0.0
    %527 = vmatpush1.msra.mxu0 %v397
    %528 = vmatprep.subr.mxu0 0.0
    %529 = vmatpush1.msra.mxu0 %v398
    %530 = vmatprep.subr.mxu0 0.0
    %531 = vmatpush1.msra.mxu0 %v399
    %532 = vmatprep.subr.mxu0 0.0
    %533 = vmatpush1.msra.mxu0 %v400
    %534 = vmatprep.subr.mxu0 0.0
    %535 = vmatpush1.msra.mxu0 %v401
    %536 = vmatprep.subr.mxu0 0.0
    %537 = vmatpush1.msra.mxu0 %v402
    %538 = vmatprep.subr.mxu0 0.0
    %539 = vmatpush1.msra.mxu0 %v403
    %540 = vmatprep.subr.mxu0 0.0
    %541 = vmatpush1.msra.mxu0 %v404
    %542 = vmatprep.subr.mxu0 0.0
    %543 = vmatpush1.msra.mxu0 %v405
    %544 = vmatprep.subr.mxu0 0.0
    %545 = vmatpush1.msra.mxu0 %v406
    %546 = vmatprep.subr.mxu0 0.0
    %547 = vmatpush1.msra.mxu0 %v407
    %548 = vmatprep.subr.mxu0 0.0
    %549 = vmatpush1.msra.mxu0 %v408
    %550 = vmatprep.subr.mxu0 0.0
    %551 = vmatpush1.msra.mxu0 %v409
    %552 = vmatprep.subr.mxu0 0.0
    %553 = vmatpush1.msra.mxu0 %v410
    %554 = vmatprep.subr.mxu0 0.0
    %555 = vmatpush1.msra.mxu0 %v411
    %556 = vmatprep.subr.mxu0 0.0
    %557 = vmatpush1.msra.mxu0 %v412
    %558 = vmatprep.subr.mxu0 0.0
    %559 = vmatpush1.msra.mxu0 %v413
    %560 = vmatprep.subr.mxu0 0.0
    %561 = vmatpush1.msra.mxu0 %v414
    %562 = vmatprep.subr.mxu0 0.0
    %563 = vmatpush1.msra.mxu0 %v415
    %564 = vmatprep.subr.mxu0 0.0
    %565 = vmatpush1.msra.mxu0 %v416
    %566 = vmatprep.subr.mxu0 0.0
    %567 = vmatpush1.msra.mxu0 %v417
    %568 = vmatprep.subr.mxu0 0.0
    %569 = vmatpush1.msra.mxu0 %v418
    %570 = vmatprep.subr.mxu0 0.0
    %571 = vmatpush1.msra.mxu0 %v419
    %572 = vmatprep.subr.mxu0 0.0
    %573 = vmatpush1.msra.mxu0 %v420
    %574 = vmatprep.subr.mxu0 0.0
    %575 = vmatpush1.msra.mxu0 %v421
    %576 = vmatprep.subr.mxu0 0.0
    %577 = vmatpush1.msra.mxu0 %v422
    %578 = vmatprep.subr.mxu0 0.0
    %579 = vmatpush1.msra.mxu0 %v423
    %580 = vmatprep.subr.mxu0 0.0
    %581 = vmatpush1.msra.mxu0 %v424
    %582 = vmatprep.subr.mxu0 0.0
    %583 = vmatpush1.msra.mxu0 %v425
    %584 = vmatprep.subr.mxu0 0.0
    %585 = vmatpush1.msra.mxu0 %v426
    %586 = vmatprep.subr.mxu0 0.0
    %587 = vmatpush1.msra.mxu0 %v427
    %588 = vmatprep.mubr.f32.mxu0 %v303
    %589 = vmatmul.mubr.f32.gmra.mrb[0].mxu0 %v297
    %v590 = vpop.f32.mrb[0].mxu0
    %v591 = vadd.f32 0.0, %v590
    %v592 = vpop.f32.mrb[0].mxu0
    %593 = vdwg.mxu0
    %594 = vmatprep.subr.mxu0 0.0
    %595 = vmatpush1.msra.mxu0 %v428
    %596 = vmatprep.subr.mxu0 0.0
    %597 = vmatpush1.msra.mxu0 %v429
    %598 = vmatprep.subr.mxu0 0.0
    %599 = vmatpush1.msra.mxu0 %v430
    %600 = vmatprep.subr.mxu0 0.0
    %601 = vmatpush1.msra.mxu0 %v431
    %602 = vmatprep.subr.mxu0 0.0
    %603 = vmatpush1.msra.mxu0 %v432
    %604 = vmatprep.subr.mxu0 0.0
    %605 = vmatpush1.msra.mxu0 %v433
    %606 = vmatprep.subr.mxu0 0.0
    %607 = vmatpush1.msra.mxu0 %v434
    %608 = vmatprep.subr.mxu0 0.0
    %609 = vmatpush1.msra.mxu0 %v435
    %610 = vmatprep.subr.mxu0 0.0
    %611 = vmatpush1.msra.mxu0 %v436
    %612 = vmatprep.subr.mxu0 0.0
    %613 = vmatpush1.msra.mxu0 %v437
    %614 = vmatprep.subr.mxu0 0.0
    %615 = vmatpush1.msra.mxu0 %v438
    %616 = vmatprep.subr.mxu0 0.0
    %617 = vmatpush1.msra.mxu0 %v439
    %618 = vmatprep.subr.mxu0 0.0
    %619 = vmatpush1.msra.mxu0 %v440
    %620 = vmatprep.subr.mxu0 0.0
    %621 = vmatpush1.msra.mxu0 %v441
    %622 = vmatprep.subr.mxu0 0.0
    %623 = vmatpush1.msra.mxu0 %v442
    %624 = vmatprep.subr.mxu0 0.0
    %625 = vmatpush1.msra.mxu0 %v443
    %626 = vmatprep.subr.mxu0 0.0
    %627 = vmatpush1.msra.mxu0 %v444
    %628 = vmatprep.subr.mxu0 0.0
    %629 = vmatpush1.msra.mxu0 %v445
    %630 = vmatprep.subr.mxu0 0.0
    %631 = vmatpush1.msra.mxu0 %v446
    %632 = vmatprep.subr.mxu0 0.0
    %633 = vmatpush1.msra.mxu0 %v447
    %634 = vmatprep.subr.mxu0 0.0
    %635 = vmatpush1.msra.mxu0 %v448
    %636 = vmatprep.subr.mxu0 0.0
    %637 = vmatpush1.msra.mxu0 %v449
    %638 = vmatprep.subr.mxu0 0.0
    %639 = vmatpush1.msra.mxu0 %v450
    %640 = vmatprep.subr.mxu0 0.0
    %641 = vmatpush1.msra.mxu0 %v451
    %642 = vmatprep.subr.mxu0 0.0
    %643 = vmatpush1.msra.mxu0 %v452
    %644 = vmatprep.subr.mxu0 0.0
    %645 = vmatpush1.msra.mxu0 %v453
    %646 = vmatprep.subr.mxu0 0.0
    %647 = vmatpush1.msra.mxu0 %v454
    %648 = vmatprep.subr.mxu0 0.0
    %649 = vmatpush1.msra.mxu0 %v455
    %650 = vmatprep.subr.mxu0 0.0
    %651 = vmatpush1.msra.mxu0 %v456
    %652 = vmatprep.subr.mxu0 0.0
    %653 = vmatpush1.msra.mxu0 %v457
    %654 = vmatprep.subr.mxu0 0.0
    %655 = vmatpush1.msra.mxu0 %v458
    %656 = vmatprep.subr.mxu0 0.0
    %657 = vmatpush1.msra.mxu0 %v459
    %658 = vmatprep.mubr.f32.mxu0 %v315
    %659 = vmatmul.mubr.f32.gmra.mrb[0].mxu0 %v309
    %v660 = vpop.f32.mrb[0].mxu0
    %v661 = vadd.f32 %v591, %v660
    %v662 = vpop.f32.mrb[0].mxu0
    %663 = vdwg.mxu0
    %664 = vmatprep.subr.mxu0 0.0
    %665 = vmatpush1.msra.mxu0 %v460
    %666 = vmatprep.subr.mxu0 0.0
    %667 = vmatpush1.msra.mxu0 %v461
    %668 = vmatprep.subr.mxu0 0.0
    %669 = vmatpush1.msra.mxu0 %v462
    %670 = vmatprep.subr.mxu0 0.0
    %671 = vmatpush1.msra.mxu0 %v463
    %672 = vmatprep.subr.mxu0 0.0
    %673 = vmatpush1.msra.mxu0 %v464
    %674 = vmatprep.subr.mxu0 0.0
    %675 = vmatpush1.msra.mxu0 %v465
    %676 = vmatprep.subr.mxu0 0.0
    %677 = vmatpush1.msra.mxu0 %v466
    %678 = vmatprep.subr.mxu0 0.0
    %679 = vmatpush1.msra.mxu0 %v467
    %680 = vmatprep.subr.mxu0 0.0
    %681 = vmatpush1.msra.mxu0 %v468
    %682 = vmatprep.subr.mxu0 0.0
    %683 = vmatpush1.msra.mxu0 %v469
    %684 = vmatprep.subr.mxu0 0.0
    %685 = vmatpush1.msra.mxu0 %v470
    %686 = vmatprep.subr.mxu0 0.0
    %687 = vmatpush1.msra.mxu0 %v471
    %688 = vmatprep.subr.mxu0 0.0
    %689 = vmatpush1.msra.mxu0 %v472
    %690 = vmatprep.subr.mxu0 0.0
    %691 = vmatpush1.msra.mxu0 %v473
    %692 = vmatprep.subr.mxu0 0.0
    %693 = vmatpush1.msra.mxu0 %v474
    %694 = vmatprep.subr.mxu0 0.0
    %695 = vmatpush1.msra.mxu0 %v475
    %696 = vmatprep.subr.mxu0 0.0
    %697 = vmatpush1.msra.mxu0 %v476
    %698 = vmatprep.subr.mxu0 0.0
    %699 = vmatpush1.msra.mxu0 %v477
    %700 = vmatprep.subr.mxu0 0.0
    %701 = vmatpush1.msra.mxu0 %v478
    %702 = vmatprep.subr.mxu0 0.0
    %703 = vmatpush1.msra.mxu0 %v479
    %704 = vmatprep.subr.mxu0 0.0
    %705 = vmatpush1.msra.mxu0 %v480
    %706 = vmatprep.subr.mxu0 0.0
    %707 = vmatpush1.msra.mxu0 %v481
    %708 = vmatprep.subr.mxu0 0.0
    %709 = vmatpush1.msra.mxu0 %v482
    %710 = vmatprep.subr.mxu0 0.0
    %711 = vmatpush1.msra.mxu0 %v483
    %712 = vmatprep.subr.mxu0 0.0
    %713 = vmatpush1.msra.mxu0 %v484
    %714 = vmatprep.subr.mxu0 0.0
    %715 = vmatpush1.msra.mxu0 %v485
    %716 = vmatprep.subr.mxu0 0.0
    %717 = vmatpush1.msra.mxu0 %v486
    %718 = vmatprep.subr.mxu0 0.0
    %719 = vmatpush1.msra.mxu0 %v487
    %720 = vmatprep.subr.mxu0 0.0
    %721 = vmatpush1.msra.mxu0 %v488
    %722 = vmatprep.subr.mxu0 0.0
    %723 = vmatpush1.msra.mxu0 %v489
    %724 = vmatprep.subr.mxu0 0.0
    %725 = vmatpush1.msra.mxu0 %v490
    %726 = vmatprep.subr.mxu0 0.0
    %727 = vmatpush1.msra.mxu0 %v491
    %728 = vmatprep.mubr.f32.mxu0 %v327
    %729 = vmatmul.mubr.f32.gmra.mrb[0].mxu0 %v321
    %v730 = vpop.f32.mrb[0].mxu0
    %v731 = vadd.f32 %v661, %v730
    %v732 = vpop.f32.mrb[0].mxu0
    %733 = vdwg.mxu0
    %734 = vmatprep.subr.mxu0 0.0
    %735 = vmatpush1.msra.mxu0 %v492
    %736 = vmatprep.subr.mxu0 0.0
    %737 = vmatpush1.msra.mxu0 %v493
    %738 = vmatprep.subr.mxu0 0.0
    %739 = vmatpush1.msra.mxu0 %v494
    %740 = vmatprep.subr.mxu0 0.0
    %741 = vmatpush1.msra.mxu0 %v495
    %742 = vmatprep.subr.mxu0 0.0
    %743 = vmatpush1.msra.mxu0 %v496
    %744 = vmatprep.subr.mxu0 0.0
    %745 = vmatpush1.msra.mxu0 %v497
    %746 = vmatprep.subr.mxu0 0.0
    %747 = vmatpush1.msra.mxu0 %v498
    %748 = vmatprep.subr.mxu0 0.0
    %749 = vmatpush1.msra.mxu0 %v499
    %750 = vmatprep.subr.mxu0 0.0
    %751 = vmatpush1.msra.mxu0 %v500
    %752 = vmatprep.subr.mxu0 0.0
    %753 = vmatpush1.msra.mxu0 %v501
    %754 = vmatprep.subr.mxu0 0.0
    %755 = vmatpush1.msra.mxu0 %v502
    %756 = vmatprep.subr.mxu0 0.0
    %757 = vmatpush1.msra.mxu0 %v503
    %758 = vmatprep.subr.mxu0 0.0
    %759 = vmatpush1.msra.mxu0 %v504
    %760 = vmatprep.subr.mxu0 0.0
    %761 = vmatpush1.msra.mxu0 %v505
    %762 = vmatprep.subr.mxu0 0.0
    %763 = vmatpush1.msra.mxu0 %v506
    %764 = vmatprep.subr.mxu0 0.0
    %765 = vmatpush1.msra.mxu0 %v507
    %766 = vmatprep.subr.mxu0 0.0
    %767 = vmatpush1.msra.mxu0 %v508
    %768 = vmatprep.subr.mxu0 0.0
    %769 = vmatpush1.msra.mxu0 %v509
    %770 = vmatprep.subr.mxu0 0.0
    %771 = vmatpush1.msra.mxu0 %v510
    %772 = vmatprep.subr.mxu0 0.0
    %773 = vmatpush1.msra.mxu0 %v511
    %774 = vmatprep.subr.mxu0 0.0
    %775 = vmatpush1.msra.mxu0 %v512
    %776 = vmatprep.subr.mxu0 0.0
    %777 = vmatpush1.msra.mxu0 %v513
    %778 = vmatprep.subr.mxu0 0.0
    %779 = vmatpush1.msra.mxu0 %v514
    %780 = vmatprep.subr.mxu0 0.0
    %781 = vmatpush1.msra.mxu0 %v515
    %782 = vmatprep.subr.mxu0 0.0
    %783 = vmatpush1.msra.mxu0 %v516
    %784 = vmatprep.subr.mxu0 0.0
    %785 = vmatpush1.msra.mxu0 %v517
    %786 = vmatprep.subr.mxu0 0.0
    %787 = vmatpush1.msra.mxu0 %v518
    %788 = vmatprep.subr.mxu0 0.0
    %789 = vmatpush1.msra.mxu0 %v519
    %790 = vmatprep.subr.mxu0 0.0
    %791 = vmatpush1.msra.mxu0 %v520
    %792 = vmatprep.subr.mxu0 0.0
    %793 = vmatpush1.msra.mxu0 %v521
    %794 = vmatprep.subr.mxu0 0.0
    %795 = vmatpush1.msra.mxu0 %v522
    %796 = vmatprep.subr.mxu0 0.0
    %797 = vmatpush1.msra.mxu0 %v523
    %798 = vmatprep.mubr.f32.mxu0 %v339
    %799 = vmatmul.mubr.f32.gmra.mrb[0].mxu0 %v333
    %v800 = vpop.f32.mrb[0].mxu0
    %v801 = vadd.f32 %v731, %v800
    %v802 = vpop.f32.mrb[0].mxu0
    %803 = vdwg.mxu0
    %v804 = vld [vmem:[#allocation4] sm:$0xff]
    %v805 = vld [vmem:[#allocation4 + $0x8] sm:$0xff]
    %v806 = vld [vmem:[#allocation4 + $0x10] sm:$0xff]
    %v807 = vld [vmem:[#allocation4 + $0x18] sm:$0xff]
    %v808 = vld [vmem:[#allocation4 + $0x20] sm:$0xff]
    %v809 = vld [vmem:[#allocation4 + $0x28] sm:$0xff]
    %v810 = vld [vmem:[#allocation4 + $0x30] sm:$0xff]
    %v811 = vld [vmem:[#allocation4 + $0x38] sm:$0xff]
    %v812 = vld [vmem:[#allocation4 + $0x40] sm:$0xff]
    %v813 = vld [vmem:[#allocation4 + $0x48] sm:$0xff]
    %v814 = vld [vmem:[#allocation4 + $0x50] sm:$0xff]
    %v815 = vld [vmem:[#allocation4 + $0x58] sm:$0xff]
    %v816 = vld [vmem:[#allocation4 + $0x60] sm:$0xff]
    %v817 = vld [vmem:[#allocation4 + $0x68] sm:$0xff]
    %v818 = vld [vmem:[#allocation4 + $0x70] sm:$0xff]
    %v819 = vld [vmem:[#allocation4 + $0x78] sm:$0xff]
    %v820 = vld [vmem:[#allocation4 + $0x80] sm:$0xff]
    %v821 = vld [vmem:[#allocation4 + $0x88] sm:$0xff]
    %v822 = vld [vmem:[#allocation4 + $0x90] sm:$0xff]
    %v823 = vld [vmem:[#allocation4 + $0x98] sm:$0xff]
    %v824 = vld [vmem:[#allocation4 + $0xa0] sm:$0xff]
    %v825 = vld [vmem:[#allocation4 + $0xa8] sm:$0xff]
    %v826 = vld [vmem:[#allocation4 + $0xb0] sm:$0xff]
    %v827 = vld [vmem:[#allocation4 + $0xb8] sm:$0xff]
    %v828 = vld [vmem:[#allocation4 + $0xc0] sm:$0xff]
    %v829 = vld [vmem:[#allocation4 + $0xc8] sm:$0xff]
    %v830 = vld [vmem:[#allocation4 + $0xd0] sm:$0xff]
    %v831 = vld [vmem:[#allocation4 + $0xd8] sm:$0xff]
    %v832 = vld [vmem:[#allocation4 + $0xe0] sm:$0xff]
    %v833 = vld [vmem:[#allocation4 + $0xe8] sm:$0xff]
    %v834 = vld [vmem:[#allocation4 + $0xf0] sm:$0xff]
    %v835 = vld [vmem:[#allocation4 + $0xf8] sm:$0xff]
    %v836 = vld [vmem:[#allocation4 + $0x100] sm:$0xff]
    %v837 = vld [vmem:[#allocation4 + $0x108] sm:$0xff]
    %v838 = vld [vmem:[#allocation4 + $0x110] sm:$0xff]
    %v839 = vld [vmem:[#allocation4 + $0x118] sm:$0xff]
    %v840 = vld [vmem:[#allocation4 + $0x120] sm:$0xff]
    %v841 = vld [vmem:[#allocation4 + $0x128] sm:$0xff]
    %v842 = vld [vmem:[#allocation4 + $0x130] sm:$0xff]
    %v843 = vld [vmem:[#allocation4 + $0x138] sm:$0xff]
    %v844 = vld [vmem:[#allocation4 + $0x140] sm:$0xff]
    %v845 = vld [vmem:[#allocation4 + $0x148] sm:$0xff]
    %v846 = vld [vmem:[#allocation4 + $0x150] sm:$0xff]
    %v847 = vld [vmem:[#allocation4 + $0x158] sm:$0xff]
    %v848 = vld [vmem:[#allocation4 + $0x160] sm:$0xff]
    %v849 = vld [vmem:[#allocation4 + $0x168] sm:$0xff]
    %v850 = vld [vmem:[#allocation4 + $0x170] sm:$0xff]
    %v851 = vld [vmem:[#allocation4 + $0x178] sm:$0xff]
    %v852 = vld [vmem:[#allocation4 + $0x180] sm:$0xff]
    %v853 = vld [vmem:[#allocation4 + $0x188] sm:$0xff]
    %v854 = vld [vmem:[#allocation4 + $0x190] sm:$0xff]
    %v855 = vld [vmem:[#allocation4 + $0x198] sm:$0xff]
    %v856 = vld [vmem:[#allocation4 + $0x1a0] sm:$0xff]
    %v857 = vld [vmem:[#allocation4 + $0x1a8] sm:$0xff]
    %v858 = vld [vmem:[#allocation4 + $0x1b0] sm:$0xff]
    %v859 = vld [vmem:[#allocation4 + $0x1b8] sm:$0xff]
    %v860 = vld [vmem:[#allocation4 + $0x1c0] sm:$0xff]
    %v861 = vld [vmem:[#allocation4 + $0x1c8] sm:$0xff]
    %v862 = vld [vmem:[#allocation4 + $0x1d0] sm:$0xff]
    %v863 = vld [vmem:[#allocation4 + $0x1d8] sm:$0xff]
    %v864 = vld [vmem:[#allocation4 + $0x1e0] sm:$0xff]
    %v865 = vld [vmem:[#allocation4 + $0x1e8] sm:$0xff]
    %v866 = vld [vmem:[#allocation4 + $0x1f0] sm:$0xff]
    %v867 = vld [vmem:[#allocation4 + $0x1f8] sm:$0xff]
    %vm868 = vcmask 523264
    %v870 = vsel %vm868, %v801, 0
    %872 = vmatprep.subr.mxu0 %v805
    %873 = vmatpush1.msra.mxu0 %v804
    %874 = vmatprep.subr.mxu0 %v813
    %875 = vmatpush1.msra.mxu0 %v812
    %876 = vmatprep.subr.mxu0 %v821
    %877 = vmatpush1.msra.mxu0 %v820
    %878 = vmatprep.subr.mxu0 %v829
    %879 = vmatpush1.msra.mxu0 %v828
    %880 = vmatprep.subr.mxu0 %v837
    %881 = vmatpush1.msra.mxu0 %v836
    %882 = vmatprep.subr.mxu0 %v845
    %883 = vmatpush1.msra.mxu0 %v844
    %884 = vmatprep.subr.mxu0 %v853
    %885 = vmatpush1.msra.mxu0 %v852
    %886 = vmatprep.subr.mxu0 %v861
    %887 = vmatpush1.msra.mxu0 %v860
    %888 = vmatprep.subr.mxu0 0.0
    %889 = vmatpush1.msra.mxu0 0.0
    %890 = vmatprep.subr.mxu0 0.0
    %891 = vmatpush1.msra.mxu0 0.0
    %892 = vmatprep.subr.mxu0 0.0
    %893 = vmatpush1.msra.mxu0 0.0
    %894 = vmatprep.subr.mxu0 0.0
    %895 = vmatpush1.msra.mxu0 0.0
    %896 = vmatprep.subr.mxu0 0.0
    %897 = vmatpush1.msra.mxu0 0.0
    %898 = vmatprep.subr.mxu0 0.0
    %899 = vmatpush1.msra.mxu0 0.0
    %900 = vmatprep.subr.mxu0 0.0
    %901 = vmatpush1.msra.mxu0 0.0
    %902 = vmatprep.subr.mxu0 0.0
    %903 = vmatpush1.msra.mxu0 0.0
    %904 = vmatprep.subr.mxu0 0.0
    %905 = vmatpush1.msra.mxu0 0.0
    %906 = vmatprep.subr.mxu0 0.0
    %907 = vmatpush1.msra.mxu0 0.0
    %908 = vmatprep.subr.mxu0 0.0
    %909 = vmatpush1.msra.mxu0 0.0
    %910 = vmatprep.subr.mxu0 0.0
    %911 = vmatpush1.msra.mxu0 0.0
    %912 = vmatprep.subr.mxu0 0.0
    %913 = vmatpush1.msra.mxu0 0.0
    %914 = vmatprep.subr.mxu0 0.0
    %915 = vmatpush1.msra.mxu0 0.0
    %916 = vmatprep.subr.mxu0 0.0
    %917 = vmatpush1.msra.mxu0 0.0
    %918 = vmatprep.subr.mxu0 0.0
    %919 = vmatpush1.msra.mxu0 0.0
    %920 = vmatprep.subr.mxu0 0.0
    %921 = vmatpush1.msra.mxu0 0.0
    %922 = vmatprep.subr.mxu0 0.0
    %923 = vmatpush1.msra.mxu0 0.0
    %924 = vmatprep.subr.mxu0 0.0
    %925 = vmatpush1.msra.mxu0 0.0
    %926 = vmatprep.subr.mxu0 0.0
    %927 = vmatpush1.msra.mxu0 0.0
    %928 = vmatprep.subr.mxu0 0.0
    %929 = vmatpush1.msra.mxu0 0.0
    %930 = vmatprep.subr.mxu0 0.0
    %931 = vmatpush1.msra.mxu0 0.0
    %932 = vmatprep.subr.mxu0 0.0
    %933 = vmatpush1.msra.mxu0 0.0
    %934 = vmatprep.subr.mxu0 0.0
    %935 = vmatpush1.msra.mxu0 0.0
    %936 = vmatprep.mubr.f32.mxu0 0.0
    %937 = vmatmul.mubr.f32.gmra.mrb[0].mxu0 %v870
    %v938 = vpop.f32.mrb[0].mxu0
    %v939 = vadd.f32 0.0, %v938
    %v940 = vpop.f32.mrb[0].mxu0
    %v941 = vadd.f32 0.0, %v940
    %942 = vdwg.mxu0
    %943 = vmatprep.subr.mxu0 %v807
    %944 = vmatpush1.msra.mxu0 %v806
    %945 = vmatprep.subr.mxu0 %v815
    %946 = vmatpush1.msra.mxu0 %v814
    %947 = vmatprep.subr.mxu0 %v823
    %948 = vmatpush1.msra.mxu0 %v822
    %949 = vmatprep.subr.mxu0 %v831
    %950 = vmatpush1.msra.mxu0 %v830
    %951 = vmatprep.subr.mxu0 %v839
    %952 = vmatpush1.msra.mxu0 %v838
    %953 = vmatprep.subr.mxu0 %v847
    %954 = vmatpush1.msra.mxu0 %v846
    %955 = vmatprep.subr.mxu0 %v855
    %956 = vmatpush1.msra.mxu0 %v854
    %957 = vmatprep.subr.mxu0 %v863
    %958 = vmatpush1.msra.mxu0 %v862
    %959 = vmatprep.subr.mxu0 0.0
    %960 = vmatpush1.msra.mxu0 0.0
    %961 = vmatprep.subr.mxu0 0.0
    %962 = vmatpush1.msra.mxu0 0.0
    %963 = vmatprep.subr.mxu0 0.0
    %964 = vmatpush1.msra.mxu0 0.0
    %965 = vmatprep.subr.mxu0 0.0
    %966 = vmatpush1.msra.mxu0 0.0
    %967 = vmatprep.subr.mxu0 0.0
    %968 = vmatpush1.msra.mxu0 0.0
    %969 = vmatprep.subr.mxu0 0.0
    %970 = vmatpush1.msra.mxu0 0.0
    %971 = vmatprep.subr.mxu0 0.0
    %972 = vmatpush1.msra.mxu0 0.0
    %973 = vmatprep.subr.mxu0 0.0
    %974 = vmatpush1.msra.mxu0 0.0
    %975 = vmatprep.subr.mxu0 0.0
    %976 = vmatpush1.msra.mxu0 0.0
    %977 = vmatprep.subr.mxu0 0.0
    %978 = vmatpush1.msra.mxu0 0.0
    %979 = vmatprep.subr.mxu0 0.0
    %980 = vmatpush1.msra.mxu0 0.0
    %981 = vmatprep.subr.mxu0 0.0
    %982 = vmatpush1.msra.mxu0 0.0
    %983 = vmatprep.subr.mxu0 0.0
    %984 = vmatpush1.msra.mxu0 0.0
    %985 = vmatprep.subr.mxu0 0.0
    %986 = vmatpush1.msra.mxu0 0.0
    %987 = vmatprep.subr.mxu0 0.0
    %988 = vmatpush1.msra.mxu0 0.0
    %989 = vmatprep.subr.mxu0 0.0
    %990 = vmatpush1.msra.mxu0 0.0
    %991 = vmatprep.subr.mxu0 0.0
    %992 = vmatpush1.msra.mxu0 0.0
    %993 = vmatprep.subr.mxu0 0.0
    %994 = vmatpush1.msra.mxu0 0.0
    %995 = vmatprep.subr.mxu0 0.0
    %996 = vmatpush1.msra.mxu0 0.0
    %997 = vmatprep.subr.mxu0 0.0
    %998 = vmatpush1.msra.mxu0 0.0
    %999 = vmatprep.subr.mxu0 0.0
    %1000 = vmatpush1.msra.mxu0 0.0
    %1001 = vmatprep.subr.mxu0 0.0
    %1002 = vmatpush1.msra.mxu0 0.0
    %1003 = vmatprep.subr.mxu0 0.0
    %1004 = vmatpush1.msra.mxu0 0.0
    %1005 = vmatprep.subr.mxu0 0.0
    %1006 = vmatpush1.msra.mxu0 0.0
    %1007 = vmatprep.mubr.f32.mxu0 0.0
    %1008 = vmatmul.mubr.f32.gmra.mrb[0].mxu0 %v870
    %v1009 = vpop.f32.mrb[0].mxu0
    %v1010 = vadd.f32 0.0, %v1009
    %v1011 = vpop.f32.mrb[0].mxu0
    %v1012 = vadd.f32 0.0, %v1011
    %1013 = vdwg.mxu0
    %1014 = vmatprep.subr.mxu0 %v809
    %1015 = vmatpush1.msra.mxu0 %v808
    %1016 = vmatprep.subr.mxu0 %v817
    %1017 = vmatpush1.msra.mxu0 %v816
    %1018 = vmatprep.subr.mxu0 %v825
    %1019 = vmatpush1.msra.mxu0 %v824
    %1020 = vmatprep.subr.mxu0 %v833
    %1021 = vmatpush1.msra.mxu0 %v832
    %1022 = vmatprep.subr.mxu0 %v841
    %1023 = vmatpush1.msra.mxu0 %v840
    %1024 = vmatprep.subr.mxu0 %v849
    %1025 = vmatpush1.msra.mxu0 %v848
    %1026 = vmatprep.subr.mxu0 %v857
    %1027 = vmatpush1.msra.mxu0 %v856
    %1028 = vmatprep.subr.mxu0 %v865
    %1029 = vmatpush1.msra.mxu0 %v864
    %1030 = vmatprep.subr.mxu0 0.0
    %1031 = vmatpush1.msra.mxu0 0.0
    %1032 = vmatprep.subr.mxu0 0.0
    %1033 = vmatpush1.msra.mxu0 0.0
    %1034 = vmatprep.subr.mxu0 0.0
    %1035 = vmatpush1.msra.mxu0 0.0
    %1036 = vmatprep.subr.mxu0 0.0
    %1037 = vmatpush1.msra.mxu0 0.0
    %1038 = vmatprep.subr.mxu0 0.0
    %1039 = vmatpush1.msra.mxu0 0.0
    %1040 = vmatprep.subr.mxu0 0.0
    %1041 = vmatpush1.msra.mxu0 0.0
    %1042 = vmatprep.subr.mxu0 0.0
    %1043 = vmatpush1.msra.mxu0 0.0
    %1044 = vmatprep.subr.mxu0 0.0
    %1045 = vmatpush1.msra.mxu0 0.0
    %1046 = vmatprep.subr.mxu0 0.0
    %1047 = vmatpush1.msra.mxu0 0.0
    %1048 = vmatprep.subr.mxu0 0.0
    %1049 = vmatpush1.msra.mxu0 0.0
    %1050 = vmatprep.subr.mxu0 0.0
    %1051 = vmatpush1.msra.mxu0 0.0
    %1052 = vmatprep.subr.mxu0 0.0
    %1053 = vmatpush1.msra.mxu0 0.0
    %1054 = vmatprep.subr.mxu0 0.0
    %1055 = vmatpush1.msra.mxu0 0.0
    %1056 = vmatprep.subr.mxu0 0.0
    %1057 = vmatpush1.msra.mxu0 0.0
    %1058 = vmatprep.subr.mxu0 0.0
    %1059 = vmatpush1.msra.mxu0 0.0
    %1060 = vmatprep.subr.mxu0 0.0
    %1061 = vmatpush1.msra.mxu0 0.0
    %1062 = vmatprep.subr.mxu0 0.0
    %1063 = vmatpush1.msra.mxu0 0.0
    %1064 = vmatprep.subr.mxu0 0.0
    %1065 = vmatpush1.msra.mxu0 0.0
    %1066 = vmatprep.subr.mxu0 0.0
    %1067 = vmatpush1.msra.mxu0 0.0
    %1068 = vmatprep.subr.mxu0 0.0
    %1069 = vmatpush1.msra.mxu0 0.0
    %1070 = vmatprep.subr.mxu0 0.0
    %1071 = vmatpush1.msra.mxu0 0.0
    %1072 = vmatprep.subr.mxu0 0.0
    %1073 = vmatpush1.msra.mxu0 0.0
    %1074 = vmatprep.subr.mxu0 0.0
    %1075 = vmatpush1.msra.mxu0 0.0
    %1076 = vmatprep.subr.mxu0 0.0
    %1077 = vmatpush1.msra.mxu0 0.0
    %1078 = vmatprep.mubr.f32.mxu0 0.0
    %1079 = vmatmul.mubr.f32.gmra.mrb[0].mxu0 %v870
    %v1080 = vpop.f32.mrb[0].mxu0
    %v1081 = vadd.f32 0.0, %v1080
    %v1082 = vpop.f32.mrb[0].mxu0
    %v1083 = vadd.f32 0.0, %v1082
    %1084 = vdwg.mxu0
    %1085 = vmatprep.subr.mxu0 %v811
    %1086 = vmatpush1.msra.mxu0 %v810
    %1087 = vmatprep.subr.mxu0 %v819
    %1088 = vmatpush1.msra.mxu0 %v818
    %1089 = vmatprep.subr.mxu0 %v827
    %1090 = vmatpush1.msra.mxu0 %v826
    %1091 = vmatprep.subr.mxu0 %v835
    %1092 = vmatpush1.msra.mxu0 %v834
    %1093 = vmatprep.subr.mxu0 %v843
    %1094 = vmatpush1.msra.mxu0 %v842
    %1095 = vmatprep.subr.mxu0 %v851
    %1096 = vmatpush1.msra.mxu0 %v850
    %1097 = vmatprep.subr.mxu0 %v859
    %1098 = vmatpush1.msra.mxu0 %v858
    %1099 = vmatprep.subr.mxu0 %v867
    %1100 = vmatpush1.msra.mxu0 %v866
    %1101 = vmatprep.subr.mxu0 0.0
    %1102 = vmatpush1.msra.mxu0 0.0
    %1103 = vmatprep.subr.mxu0 0.0
    %1104 = vmatpush1.msra.mxu0 0.0
    %1105 = vmatprep.subr.mxu0 0.0
    %1106 = vmatpush1.msra.mxu0 0.0
    %1107 = vmatprep.subr.mxu0 0.0
    %1108 = vmatpush1.msra.mxu0 0.0
    %1109 = vmatprep.subr.mxu0 0.0
    %1110 = vmatpush1.msra.mxu0 0.0
    %1111 = vmatprep.subr.mxu0 0.0
    %1112 = vmatpush1.msra.mxu0 0.0
    %1113 = vmatprep.subr.mxu0 0.0
    %1114 = vmatpush1.msra.mxu0 0.0
    %1115 = vmatprep.subr.mxu0 0.0
    %1116 = vmatpush1.msra.mxu0 0.0
    %1117 = vmatprep.subr.mxu0 0.0
    %1118 = vmatpush1.msra.mxu0 0.0
    %1119 = vmatprep.subr.mxu0 0.0
    %1120 = vmatpush1.msra.mxu0 0.0
    %1121 = vmatprep.subr.mxu0 0.0
    %1122 = vmatpush1.msra.mxu0 0.0
    %1123 = vmatprep.subr.mxu0 0.0
    %1124 = vmatpush1.msra.mxu0 0.0
    %1125 = vmatprep.subr.mxu0 0.0
    %1126 = vmatpush1.msra.mxu0 0.0
    %1127 = vmatprep.subr.mxu0 0.0
    %1128 = vmatpush1.msra.mxu0 0.0
    %1129 = vmatprep.subr.mxu0 0.0
    %1130 = vmatpush1.msra.mxu0 0.0
    %1131 = vmatprep.subr.mxu0 0.0
    %1132 = vmatpush1.msra.mxu0 0.0
    %1133 = vmatprep.subr.mxu0 0.0
    %1134 = vmatpush1.msra.mxu0 0.0
    %1135 = vmatprep.subr.mxu0 0.0
    %1136 = vmatpush1.msra.mxu0 0.0
    %1137 = vmatprep.subr.mxu0 0.0
    %1138 = vmatpush1.msra.mxu0 0.0
    %1139 = vmatprep.subr.mxu0 0.0
    %1140 = vmatpush1.msra.mxu0 0.0
    %1141 = vmatprep.subr.mxu0 0.0
    %1142 = vmatpush1.msra.mxu0 0.0
    %1143 = vmatprep.subr.mxu0 0.0
    %1144 = vmatpush1.msra.mxu0 0.0
    %1145 = vmatprep.subr.mxu0 0.0
    %1146 = vmatpush1.msra.mxu0 0.0
    %1147 = vmatprep.subr.mxu0 0.0
    %1148 = vmatpush1.msra.mxu0 0.0
    %1149 = vmatprep.mubr.f32.mxu0 0.0
    %1150 = vmatmul.mubr.f32.gmra.mrb[0].mxu0 %v870
    %v1151 = vpop.f32.mrb[0].mxu0
    %v1152 = vadd.f32 0.0, %v1151
    %v1153 = vpop.f32.mrb[0].mxu0
    %v1154 = vadd.f32 0.0, %v1153
    %1155 = vdwg.mxu0
    %1156 = vmatprep.subr.mxu0 0.0
    %1157 = vmatpush1.msra.mxu0 %v396
    %1158 = vmatprep.subr.mxu0 0.0
    %1159 = vmatpush1.msra.mxu0 %v397
    %1160 = vmatprep.subr.mxu0 0.0
    %1161 = vmatpush1.msra.mxu0 %v398
    %1162 = vmatprep.subr.mxu0 0.0
    %1163 = vmatpush1.msra.mxu0 %v399
    %1164 = vmatprep.subr.mxu0 0.0
    %1165 = vmatpush1.msra.mxu0 %v400
    %1166 = vmatprep.subr.mxu0 0.0
    %1167 = vmatpush1.msra.mxu0 %v401
    %1168 = vmatprep.subr.mxu0 0.0
    %1169 = vmatpush1.msra.mxu0 %v402
    %1170 = vmatprep.subr.mxu0 0.0
    %1171 = vmatpush1.msra.mxu0 %v403
    %1172 = vmatprep.subr.mxu0 0.0
    %1173 = vmatpush1.msra.mxu0 %v404
    %1174 = vmatprep.subr.mxu0 0.0
    %1175 = vmatpush1.msra.mxu0 %v405
    %1176 = vmatprep.subr.mxu0 0.0
    %1177 = vmatpush1.msra.mxu0 %v406
    %1178 = vmatprep.subr.mxu0 0.0
    %1179 = vmatpush1.msra.mxu0 %v407
    %1180 = vmatprep.subr.mxu0 0.0
    %1181 = vmatpush1.msra.mxu0 %v408
    %1182 = vmatprep.subr.mxu0 0.0
    %1183 = vmatpush1.msra.mxu0 %v409
    %1184 = vmatprep.subr.mxu0 0.0
    %1185 = vmatpush1.msra.mxu0 %v410
    %1186 = vmatprep.subr.mxu0 0.0
    %1187 = vmatpush1.msra.mxu0 %v411
    %1188 = vmatprep.subr.mxu0 0.0
    %1189 = vmatpush1.msra.mxu0 %v412
    %1190 = vmatprep.subr.mxu0 0.0
    %1191 = vmatpush1.msra.mxu0 %v413
    %1192 = vmatprep.subr.mxu0 0.0
    %1193 = vmatpush1.msra.mxu0 %v414
    %1194 = vmatprep.subr.mxu0 0.0
    %1195 = vmatpush1.msra.mxu0 %v415
    %1196 = vmatprep.subr.mxu0 0.0
    %1197 = vmatpush1.msra.mxu0 %v416
    %1198 = vmatprep.subr.mxu0 0.0
    %1199 = vmatpush1.msra.mxu0 %v417
    %1200 = vmatprep.subr.mxu0 0.0
    %1201 = vmatpush1.msra.mxu0 %v418
    %1202 = vmatprep.subr.mxu0 0.0
    %1203 = vmatpush1.msra.mxu0 %v419
    %1204 = vmatprep.subr.mxu0 0.0
    %1205 = vmatpush1.msra.mxu0 %v420
    %1206 = vmatprep.subr.mxu0 0.0
    %1207 = vmatpush1.msra.mxu0 %v421
    %1208 = vmatprep.subr.mxu0 0.0
    %1209 = vmatpush1.msra.mxu0 %v422
    %1210 = vmatprep.subr.mxu0 0.0
    %1211 = vmatpush1.msra.mxu0 %v423
    %1212 = vmatprep.subr.mxu0 0.0
    %1213 = vmatpush1.msra.mxu0 %v424
    %1214 = vmatprep.subr.mxu0 0.0
    %1215 = vmatpush1.msra.mxu0 %v425
    %1216 = vmatprep.subr.mxu0 0.0
    %1217 = vmatpush1.msra.mxu0 %v426
    %1218 = vmatprep.subr.mxu0 0.0
    %1219 = vmatpush1.msra.mxu0 %v427
    %1220 = vmatprep.mubr.f32.mxu0 %v359
    %1221 = vmatmul.mubr.f32.gmra.mrb[0].mxu0 %v353
    %v1222 = vpop.f32.mrb[0].mxu0
    %v1223 = vadd.f32 0.0, %v1222
    %v1224 = vpop.f32.mrb[0].mxu0
    %1225 = vdwg.mxu0
    %1226 = vmatprep.subr.mxu0 0.0
    %1227 = vmatpush1.msra.mxu0 %v428
    %1228 = vmatprep.subr.mxu0 0.0
    %1229 = vmatpush1.msra.mxu0 %v429
    %1230 = vmatprep.subr.mxu0 0.0
    %1231 = vmatpush1.msra.mxu0 %v430
    %1232 = vmatprep.subr.mxu0 0.0
    %1233 = vmatpush1.msra.mxu0 %v431
    %1234 = vmatprep.subr.mxu0 0.0
    %1235 = vmatpush1.msra.mxu0 %v432
    %1236 = vmatprep.subr.mxu0 0.0
    %1237 = vmatpush1.msra.mxu0 %v433
    %1238 = vmatprep.subr.mxu0 0.0
    %1239 = vmatpush1.msra.mxu0 %v434
    %1240 = vmatprep.subr.mxu0 0.0
    %1241 = vmatpush1.msra.mxu0 %v435
    %1242 = vmatprep.subr.mxu0 0.0
    %1243 = vmatpush1.msra.mxu0 %v436
    %1244 = vmatprep.subr.mxu0 0.0
    %1245 = vmatpush1.msra.mxu0 %v437
    %1246 = vmatprep.subr.mxu0 0.0
    %1247 = vmatpush1.msra.mxu0 %v438
    %1248 = vmatprep.subr.mxu0 0.0
    %1249 = vmatpush1.msra.mxu0 %v439
    %1250 = vmatprep.subr.mxu0 0.0
    %1251 = vmatpush1.msra.mxu0 %v440
    %1252 = vmatprep.subr.mxu0 0.0
    %1253 = vmatpush1.msra.mxu0 %v441
    %1254 = vmatprep.subr.mxu0 0.0
    %1255 = vmatpush1.msra.mxu0 %v442
    %1256 = vmatprep.subr.mxu0 0.0
    %1257 = vmatpush1.msra.mxu0 %v443
    %1258 = vmatprep.subr.mxu0 0.0
    %1259 = vmatpush1.msra.mxu0 %v444
    %1260 = vmatprep.subr.mxu0 0.0
    %1261 = vmatpush1.msra.mxu0 %v445
    %1262 = vmatprep.subr.mxu0 0.0
    %1263 = vmatpush1.msra.mxu0 %v446
    %1264 = vmatprep.subr.mxu0 0.0
    %1265 = vmatpush1.msra.mxu0 %v447
    %1266 = vmatprep.subr.mxu0 0.0
    %1267 = vmatpush1.msra.mxu0 %v448
    %1268 = vmatprep.subr.mxu0 0.0
    %1269 = vmatpush1.msra.mxu0 %v449
    %1270 = vmatprep.subr.mxu0 0.0
    %1271 = vmatpush1.msra.mxu0 %v450
    %1272 = vmatprep.subr.mxu0 0.0
    %1273 = vmatpush1.msra.mxu0 %v451
    %1274 = vmatprep.subr.mxu0 0.0
    %1275 = vmatpush1.msra.mxu0 %v452
    %1276 = vmatprep.subr.mxu0 0.0
    %1277 = vmatpush1.msra.mxu0 %v453
    %1278 = vmatprep.subr.mxu0 0.0
    %1279 = vmatpush1.msra.mxu0 %v454
    %1280 = vmatprep.subr.mxu0 0.0
    %1281 = vmatpush1.msra.mxu0 %v455
    %1282 = vmatprep.subr.mxu0 0.0
    %1283 = vmatpush1.msra.mxu0 %v456
    %1284 = vmatprep.subr.mxu0 0.0
    %1285 = vmatpush1.msra.mxu0 %v457
    %1286 = vmatprep.subr.mxu0 0.0
    %1287 = vmatpush1.msra.mxu0 %v458
    %1288 = vmatprep.subr.mxu0 0.0
    %1289 = vmatpush1.msra.mxu0 %v459
    %1290 = vmatprep.mubr.f32.mxu0 %v371
    %1291 = vmatmul.mubr.f32.gmra.mrb[0].mxu0 %v365
    %v1292 = vpop.f32.mrb[0].mxu0
    %v1293 = vadd.f32 %v1223, %v1292
    %v1294 = vpop.f32.mrb[0].mxu0
    %1295 = vdwg.mxu0
    %1296 = vmatprep.subr.mxu0 0.0
    %1297 = vmatpush1.msra.mxu0 %v460
    %1298 = vmatprep.subr.mxu0 0.0
    %1299 = vmatpush1.msra.mxu0 %v461
    %1300 = vmatprep.subr.mxu0 0.0
    %1301 = vmatpush1.msra.mxu0 %v462
    %1302 = vmatprep.subr.mxu0 0.0
    %1303 = vmatpush1.msra.mxu0 %v463
    %1304 = vmatprep.subr.mxu0 0.0
    %1305 = vmatpush1.msra.mxu0 %v464
    %1306 = vmatprep.subr.mxu0 0.0
    %1307 = vmatpush1.msra.mxu0 %v465
    %1308 = vmatprep.subr.mxu0 0.0
    %1309 = vmatpush1.msra.mxu0 %v466
    %1310 = vmatprep.subr.mxu0 0.0
    %1311 = vmatpush1.msra.mxu0 %v467
    %1312 = vmatprep.subr.mxu0 0.0
    %1313 = vmatpush1.msra.mxu0 %v468
    %1314 = vmatprep.subr.mxu0 0.0
    %1315 = vmatpush1.msra.mxu0 %v469
    %1316 = vmatprep.subr.mxu0 0.0
    %1317 = vmatpush1.msra.mxu0 %v470
    %1318 = vmatprep.subr.mxu0 0.0
    %1319 = vmatpush1.msra.mxu0 %v471
    %1320 = vmatprep.subr.mxu0 0.0
    %1321 = vmatpush1.msra.mxu0 %v472
    %1322 = vmatprep.subr.mxu0 0.0
    %1323 = vmatpush1.msra.mxu0 %v473
    %1324 = vmatprep.subr.mxu0 0.0
    %1325 = vmatpush1.msra.mxu0 %v474
    %1326 = vmatprep.subr.mxu0 0.0
    %1327 = vmatpush1.msra.mxu0 %v475
    %1328 = vmatprep.subr.mxu0 0.0
    %1329 = vmatpush1.msra.mxu0 %v476
    %1330 = vmatprep.subr.mxu0 0.0
    %1331 = vmatpush1.msra.mxu0 %v477
    %1332 = vmatprep.subr.mxu0 0.0
    %1333 = vmatpush1.msra.mxu0 %v478
    %1334 = vmatprep.subr.mxu0 0.0
    %1335 = vmatpush1.msra.mxu0 %v479
    %1336 = vmatprep.subr.mxu0 0.0
    %1337 = vmatpush1.msra.mxu0 %v480
    %1338 = vmatprep.subr.mxu0 0.0
    %1339 = vmatpush1.msra.mxu0 %v481
    %1340 = vmatprep.subr.mxu0 0.0
    %1341 = vmatpush1.msra.mxu0 %v482
    %1342 = vmatprep.subr.mxu0 0.0
    %1343 = vmatpush1.msra.mxu0 %v483
    %1344 = vmatprep.subr.mxu0 0.0
    %1345 = vmatpush1.msra.mxu0 %v484
    %1346 = vmatprep.subr.mxu0 0.0
    %1347 = vmatpush1.msra.mxu0 %v485
    %1348 = vmatprep.subr.mxu0 0.0
    %1349 = vmatpush1.msra.mxu0 %v486
    %1350 = vmatprep.subr.mxu0 0.0
    %1351 = vmatpush1.msra.mxu0 %v487
    %1352 = vmatprep.subr.mxu0 0.0
    %1353 = vmatpush1.msra.mxu0 %v488
    %1354 = vmatprep.subr.mxu0 0.0
    %1355 = vmatpush1.msra.mxu0 %v489
    %1356 = vmatprep.subr.mxu0 0.0
    %1357 = vmatpush1.msra.mxu0 %v490
    %1358 = vmatprep.subr.mxu0 0.0
    %1359 = vmatpush1.msra.mxu0 %v491
    %1360 = vmatprep.mubr.f32.mxu0 %v383
    %1361 = vmatmul.mubr.f32.gmra.mrb[0].mxu0 %v377
    %v1362 = vpop.f32.mrb[0].mxu0
    %v1363 = vadd.f32 %v1293, %v1362
    %v1364 = vpop.f32.mrb[0].mxu0
    %1365 = vdwg.mxu0
    %1366 = vmatprep.subr.mxu0 0.0
    %1367 = vmatpush1.msra.mxu0 %v492
    %1368 = vmatprep.subr.mxu0 0.0
    %1369 = vmatpush1.msra.mxu0 %v493
    %1370 = vmatprep.subr.mxu0 0.0
    %1371 = vmatpush1.msra.mxu0 %v494
    %1372 = vmatprep.subr.mxu0 0.0
    %1373 = vmatpush1.msra.mxu0 %v495
    %1374 = vmatprep.subr.mxu0 0.0
    %1375 = vmatpush1.msra.mxu0 %v496
    %1376 = vmatprep.subr.mxu0 0.0
    %1377 = vmatpush1.msra.mxu0 %v497
    %1378 = vmatprep.subr.mxu0 0.0
    %1379 = vmatpush1.msra.mxu0 %v498
    %1380 = vmatprep.subr.mxu0 0.0
    %1381 = vmatpush1.msra.mxu0 %v499
    %1382 = vmatprep.subr.mxu0 0.0
    %1383 = vmatpush1.msra.mxu0 %v500
    %1384 = vmatprep.subr.mxu0 0.0
    %1385 = vmatpush1.msra.mxu0 %v501
    %1386 = vmatprep.subr.mxu0 0.0
    %1387 = vmatpush1.msra.mxu0 %v502
    %1388 = vmatprep.subr.mxu0 0.0
    %1389 = vmatpush1.msra.mxu0 %v503
    %1390 = vmatprep.subr.mxu0 0.0
    %1391 = vmatpush1.msra.mxu0 %v504
    %1392 = vmatprep.subr.mxu0 0.0
    %1393 = vmatpush1.msra.mxu0 %v505
    %1394 = vmatprep.subr.mxu0 0.0
    %1395 = vmatpush1.msra.mxu0 %v506
    %1396 = vmatprep.subr.mxu0 0.0
    %1397 = vmatpush1.msra.mxu0 %v507
    %1398 = vmatprep.subr.mxu0 0.0
    %1399 = vmatpush1.msra.mxu0 %v508
    %1400 = vmatprep.subr.mxu0 0.0
    %1401 = vmatpush1.msra.mxu0 %v509
    %1402 = vmatprep.subr.mxu0 0.0
    %1403 = vmatpush1.msra.mxu0 %v510
    %1404 = vmatprep.subr.mxu0 0.0
    %1405 = vmatpush1.msra.mxu0 %v511
    %1406 = vmatprep.subr.mxu0 0.0
    %1407 = vmatpush1.msra.mxu0 %v512
    %1408 = vmatprep.subr.mxu0 0.0
    %1409 = vmatpush1.msra.mxu0 %v513
    %1410 = vmatprep.subr.mxu0 0.0
    %1411 = vmatpush1.msra.mxu0 %v514
    %1412 = vmatprep.subr.mxu0 0.0
    %1413 = vmatpush1.msra.mxu0 %v515
    %1414 = vmatprep.subr.mxu0 0.0
    %1415 = vmatpush1.msra.mxu0 %v516
    %1416 = vmatprep.subr.mxu0 0.0
    %1417 = vmatpush1.msra.mxu0 %v517
    %1418 = vmatprep.subr.mxu0 0.0
    %1419 = vmatpush1.msra.mxu0 %v518
    %1420 = vmatprep.subr.mxu0 0.0
    %1421 = vmatpush1.msra.mxu0 %v519
    %1422 = vmatprep.subr.mxu0 0.0
    %1423 = vmatpush1.msra.mxu0 %v520
    %1424 = vmatprep.subr.mxu0 0.0
    %1425 = vmatpush1.msra.mxu0 %v521
    %1426 = vmatprep.subr.mxu0 0.0
    %1427 = vmatpush1.msra.mxu0 %v522
    %1428 = vmatprep.subr.mxu0 0.0
    %1429 = vmatpush1.msra.mxu0 %v523
    %1430 = vmatprep.mubr.f32.mxu0 %v395
    %1431 = vmatmul.mubr.f32.gmra.mrb[0].mxu0 %v389
    %v1432 = vpop.f32.mrb[0].mxu0
    %v1433 = vadd.f32 %v1363, %v1432
    %v1434 = vpop.f32.mrb[0].mxu0
    %1435 = vdwg.mxu0
    %v1437 = vsel %vm868, %v1433, 0
    %1439 = vmatprep.subr.mxu0 %v805
    %1440 = vmatpush1.msra.mxu0 %v804
    %1441 = vmatprep.subr.mxu0 %v813
    %1442 = vmatpush1.msra.mxu0 %v812
    %1443 = vmatprep.subr.mxu0 %v821
    %1444 = vmatpush1.msra.mxu0 %v820
    %1445 = vmatprep.subr.mxu0 %v829
    %1446 = vmatpush1.msra.mxu0 %v828
    %1447 = vmatprep.subr.mxu0 %v837
    %1448 = vmatpush1.msra.mxu0 %v836
    %1449 = vmatprep.subr.mxu0 %v845
    %1450 = vmatpush1.msra.mxu0 %v844
    %1451 = vmatprep.subr.mxu0 %v853
    %1452 = vmatpush1.msra.mxu0 %v852
    %1453 = vmatprep.subr.mxu0 %v861
    %1454 = vmatpush1.msra.mxu0 %v860
    %1455 = vmatprep.subr.mxu0 0.0
    %1456 = vmatpush1.msra.mxu0 0.0
    %1457 = vmatprep.subr.mxu0 0.0
    %1458 = vmatpush1.msra.mxu0 0.0
    %1459 = vmatprep.subr.mxu0 0.0
    %1460 = vmatpush1.msra.mxu0 0.0
    %1461 = vmatprep.subr.mxu0 0.0
    %1462 = vmatpush1.msra.mxu0 0.0
    %1463 = vmatprep.subr.mxu0 0.0
    %1464 = vmatpush1.msra.mxu0 0.0
    %1465 = vmatprep.subr.mxu0 0.0
    %1466 = vmatpush1.msra.mxu0 0.0
    %1467 = vmatprep.subr.mxu0 0.0
    %1468 = vmatpush1.msra.mxu0 0.0
    %1469 = vmatprep.subr.mxu0 0.0
    %1470 = vmatpush1.msra.mxu0 0.0
    %1471 = vmatprep.subr.mxu0 0.0
    %1472 = vmatpush1.msra.mxu0 0.0
    %1473 = vmatprep.subr.mxu0 0.0
    %1474 = vmatpush1.msra.mxu0 0.0
    %1475 = vmatprep.subr.mxu0 0.0
    %1476 = vmatpush1.msra.mxu0 0.0
    %1477 = vmatprep.subr.mxu0 0.0
    %1478 = vmatpush1.msra.mxu0 0.0
    %1479 = vmatprep.subr.mxu0 0.0
    %1480 = vmatpush1.msra.mxu0 0.0
    %1481 = vmatprep.subr.mxu0 0.0
    %1482 = vmatpush1.msra.mxu0 0.0
    %1483 = vmatprep.subr.mxu0 0.0
    %1484 = vmatpush1.msra.mxu0 0.0
    %1485 = vmatprep.subr.mxu0 0.0
    %1486 = vmatpush1.msra.mxu0 0.0
    %1487 = vmatprep.subr.mxu0 0.0
    %1488 = vmatpush1.msra.mxu0 0.0
    %1489 = vmatprep.subr.mxu0 0.0
    %1490 = vmatpush1.msra.mxu0 0.0
    %1491 = vmatprep.subr.mxu0 0.0
    %1492 = vmatpush1.msra.mxu0 0.0
    %1493 = vmatprep.subr.mxu0 0.0
    %1494 = vmatpush1.msra.mxu0 0.0
    %1495 = vmatprep.subr.mxu0 0.0
    %1496 = vmatpush1.msra.mxu0 0.0
    %1497 = vmatprep.subr.mxu0 0.0
    %1498 = vmatpush1.msra.mxu0 0.0
    %1499 = vmatprep.subr.mxu0 0.0
    %1500 = vmatpush1.msra.mxu0 0.0
    %1501 = vmatprep.subr.mxu0 0.0
    %1502 = vmatpush1.msra.mxu0 0.0
    %1503 = vmatprep.mubr.f32.mxu0 0.0
    %1504 = vmatmul.mubr.f32.gmra.mrb[0].mxu0 %v1437
    %v1505 = vpop.f32.mrb[0].mxu0
    %v1506 = vadd.f32 0.0, %v1505
    %v1507 = vpop.f32.mrb[0].mxu0
    %v1508 = vadd.f32 0.0, %v1507
    %1509 = vdwg.mxu0
    %1510 = vmatprep.subr.mxu0 %v807
    %1511 = vmatpush1.msra.mxu0 %v806
    %1512 = vmatprep.subr.mxu0 %v815
    %1513 = vmatpush1.msra.mxu0 %v814
    %1514 = vmatprep.subr.mxu0 %v823
    %1515 = vmatpush1.msra.mxu0 %v822
    %1516 = vmatprep.subr.mxu0 %v831
    %1517 = vmatpush1.msra.mxu0 %v830
    %1518 = vmatprep.subr.mxu0 %v839
    %1519 = vmatpush1.msra.mxu0 %v838
    %1520 = vmatprep.subr.mxu0 %v847
    %1521 = vmatpush1.msra.mxu0 %v846
    %1522 = vmatprep.subr.mxu0 %v855
    %1523 = vmatpush1.msra.mxu0 %v854
    %1524 = vmatprep.subr.mxu0 %v863
    %1525 = vmatpush1.msra.mxu0 %v862
    %1526 = vmatprep.subr.mxu0 0.0
    %1527 = vmatpush1.msra.mxu0 0.0
    %1528 = vmatprep.subr.mxu0 0.0
    %1529 = vmatpush1.msra.mxu0 0.0
    %1530 = vmatprep.subr.mxu0 0.0
    %1531 = vmatpush1.msra.mxu0 0.0
    %1532 = vmatprep.subr.mxu0 0.0
    %1533 = vmatpush1.msra.mxu0 0.0
    %1534 = vmatprep.subr.mxu0 0.0
    %1535 = vmatpush1.msra.mxu0 0.0
    %1536 = vmatprep.subr.mxu0 0.0
    %1537 = vmatpush1.msra.mxu0 0.0
    %1538 = vmatprep.subr.mxu0 0.0
    %1539 = vmatpush1.msra.mxu0 0.0
    %1540 = vmatprep.subr.mxu0 0.0
    %1541 = vmatpush1.msra.mxu0 0.0
    %1542 = vmatprep.subr.mxu0 0.0
    %1543 = vmatpush1.msra.mxu0 0.0
    %1544 = vmatprep.subr.mxu0 0.0
    %1545 = vmatpush1.msra.mxu0 0.0
    %1546 = vmatprep.subr.mxu0 0.0
    %1547 = vmatpush1.msra.mxu0 0.0
    %1548 = vmatprep.subr.mxu0 0.0
    %1549 = vmatpush1.msra.mxu0 0.0
    %1550 = vmatprep.subr.mxu0 0.0
    %1551 = vmatpush1.msra.mxu0 0.0
    %1552 = vmatprep.subr.mxu0 0.0
    %1553 = vmatpush1.msra.mxu0 0.0
    %1554 = vmatprep.subr.mxu0 0.0
    %1555 = vmatpush1.msra.mxu0 0.0
    %1556 = vmatprep.subr.mxu0 0.0
    %1557 = vmatpush1.msra.mxu0 0.0
    %1558 = vmatprep.subr.mxu0 0.0
    %1559 = vmatpush1.msra.mxu0 0.0
    %1560 = vmatprep.subr.mxu0 0.0
    %1561 = vmatpush1.msra.mxu0 0.0
    %1562 = vmatprep.subr.mxu0 0.0
    %1563 = vmatpush1.msra.mxu0 0.0
    %1564 = vmatprep.subr.mxu0 0.0
    %1565 = vmatpush1.msra.mxu0 0.0
    %1566 = vmatprep.subr.mxu0 0.0
    %1567 = vmatpush1.msra.mxu0 0.0
    %1568 = vmatprep.subr.mxu0 0.0
    %1569 = vmatpush1.msra.mxu0 0.0
    %1570 = vmatprep.subr.mxu0 0.0
    %1571 = vmatpush1.msra.mxu0 0.0
    %1572 = vmatprep.subr.mxu0 0.0
    %1573 = vmatpush1.msra.mxu0 0.0
    %1574 = vmatprep.mubr.f32.mxu0 0.0
    %1575 = vmatmul.mubr.f32.gmra.mrb[0].mxu0 %v1437
    %v1576 = vpop.f32.mrb[0].mxu0
    %v1577 = vadd.f32 0.0, %v1576
    %v1578 = vpop.f32.mrb[0].mxu0
    %v1579 = vadd.f32 0.0, %v1578
    %1580 = vdwg.mxu0
    %1581 = vmatprep.subr.mxu0 %v809
    %1582 = vmatpush1.msra.mxu0 %v808
    %1583 = vmatprep.subr.mxu0 %v817
    %1584 = vmatpush1.msra.mxu0 %v816
    %1585 = vmatprep.subr.mxu0 %v825
    %1586 = vmatpush1.msra.mxu0 %v824
    %1587 = vmatprep.subr.mxu0 %v833
    %1588 = vmatpush1.msra.mxu0 %v832
    %1589 = vmatprep.subr.mxu0 %v841
    %1590 = vmatpush1.msra.mxu0 %v840
    %1591 = vmatprep.subr.mxu0 %v849
    %1592 = vmatpush1.msra.mxu0 %v848
    %1593 = vmatprep.subr.mxu0 %v857
    %1594 = vmatpush1.msra.mxu0 %v856
    %1595 = vmatprep.subr.mxu0 %v865
    %1596 = vmatpush1.msra.mxu0 %v864
    %1597 = vmatprep.subr.mxu0 0.0
    %1598 = vmatpush1.msra.mxu0 0.0
    %1599 = vmatprep.subr.mxu0 0.0
    %1600 = vmatpush1.msra.mxu0 0.0
    %1601 = vmatprep.subr.mxu0 0.0
    %1602 = vmatpush1.msra.mxu0 0.0
    %1603 = vmatprep.subr.mxu0 0.0
    %1604 = vmatpush1.msra.mxu0 0.0
    %1605 = vmatprep.subr.mxu0 0.0
    %1606 = vmatpush1.msra.mxu0 0.0
    %1607 = vmatprep.subr.mxu0 0.0
    %1608 = vmatpush1.msra.mxu0 0.0
    %1609 = vmatprep.subr.mxu0 0.0
    %1610 = vmatpush1.msra.mxu0 0.0
    %1611 = vmatprep.subr.mxu0 0.0
    %1612 = vmatpush1.msra.mxu0 0.0
    %1613 = vmatprep.subr.mxu0 0.0
    %1614 = vmatpush1.msra.mxu0 0.0
    %1615 = vmatprep.subr.mxu0 0.0
    %1616 = vmatpush1.msra.mxu0 0.0
    %1617 = vmatprep.subr.mxu0 0.0
    %1618 = vmatpush1.msra.mxu0 0.0
    %1619 = vmatprep.subr.mxu0 0.0
    %1620 = vmatpush1.msra.mxu0 0.0
    %1621 = vmatprep.subr.mxu0 0.0
    %1622 = vmatpush1.msra.mxu0 0.0
    %1623 = vmatprep.subr.mxu0 0.0
    %1624 = vmatpush1.msra.mxu0 0.0
    %1625 = vmatprep.subr.mxu0 0.0
    %1626 = vmatpush1.msra.mxu0 0.0
    %1627 = vmatprep.subr.mxu0 0.0
    %1628 = vmatpush1.msra.mxu0 0.0
    %1629 = vmatprep.subr.mxu0 0.0
    %1630 = vmatpush1.msra.mxu0 0.0
    %1631 = vmatprep.subr.mxu0 0.0
    %1632 = vmatpush1.msra.mxu0 0.0
    %1633 = vmatprep.subr.mxu0 0.0
    %1634 = vmatpush1.msra.mxu0 0.0
    %1635 = vmatprep.subr.mxu0 0.0
    %1636 = vmatpush1.msra.mxu0 0.0
    %1637 = vmatprep.subr.mxu0 0.0
    %1638 = vmatpush1.msra.mxu0 0.0
    %1639 = vmatprep.subr.mxu0 0.0
    %1640 = vmatpush1.msra.mxu0 0.0
    %1641 = vmatprep.subr.mxu0 0.0
    %1642 = vmatpush1.msra.mxu0 0.0
    %1643 = vmatprep.subr.mxu0 0.0
    %1644 = vmatpush1.msra.mxu0 0.0
    %1645 = vmatprep.mubr.f32.mxu0 0.0
    %1646 = vmatmul.mubr.f32.gmra.mrb[0].mxu0 %v1437
    %v1647 = vpop.f32.mrb[0].mxu0
    %v1648 = vadd.f32 0.0, %v1647
    %v1649 = vpop.f32.mrb[0].mxu0
    %v1650 = vadd.f32 0.0, %v1649
    %1651 = vdwg.mxu0
    %1652 = vmatprep.subr.mxu0 %v811
    %1653 = vmatpush1.msra.mxu0 %v810
    %1654 = vmatprep.subr.mxu0 %v819
    %1655 = vmatpush1.msra.mxu0 %v818
    %1656 = vmatprep.subr.mxu0 %v827
    %1657 = vmatpush1.msra.mxu0 %v826
    %1658 = vmatprep.subr.mxu0 %v835
    %1659 = vmatpush1.msra.mxu0 %v834
    %1660 = vmatprep.subr.mxu0 %v843
    %1661 = vmatpush1.msra.mxu0 %v842
    %1662 = vmatprep.subr.mxu0 %v851
    %1663 = vmatpush1.msra.mxu0 %v850
    %1664 = vmatprep.subr.mxu0 %v859
    %1665 = vmatpush1.msra.mxu0 %v858
    %1666 = vmatprep.subr.mxu0 %v867
    %1667 = vmatpush1.msra.mxu0 %v866
    %1668 = vmatprep.subr.mxu0 0.0
    %1669 = vmatpush1.msra.mxu0 0.0
    %1670 = vmatprep.subr.mxu0 0.0
    %1671 = vmatpush1.msra.mxu0 0.0
    %1672 = vmatprep.subr.mxu0 0.0
    %1673 = vmatpush1.msra.mxu0 0.0
    %1674 = vmatprep.subr.mxu0 0.0
    %1675 = vmatpush1.msra.mxu0 0.0
    %1676 = vmatprep.subr.mxu0 0.0
    %1677 = vmatpush1.msra.mxu0 0.0
    %1678 = vmatprep.subr.mxu0 0.0
    %1679 = vmatpush1.msra.mxu0 0.0
    %1680 = vmatprep.subr.mxu0 0.0
    %1681 = vmatpush1.msra.mxu0 0.0
    %1682 = vmatprep.subr.mxu0 0.0
    %1683 = vmatpush1.msra.mxu0 0.0
    %1684 = vmatprep.subr.mxu0 0.0
    %1685 = vmatpush1.msra.mxu0 0.0
    %1686 = vmatprep.subr.mxu0 0.0
    %1687 = vmatpush1.msra.mxu0 0.0
    %1688 = vmatprep.subr.mxu0 0.0
    %1689 = vmatpush1.msra.mxu0 0.0
    %1690 = vmatprep.subr.mxu0 0.0
    %1691 = vmatpush1.msra.mxu0 0.0
    %1692 = vmatprep.subr.mxu0 0.0
    %1693 = vmatpush1.msra.mxu0 0.0
    %1694 = vmatprep.subr.mxu0 0.0
    %1695 = vmatpush1.msra.mxu0 0.0
    %1696 = vmatprep.subr.mxu0 0.0
    %1697 = vmatpush1.msra.mxu0 0.0
    %1698 = vmatprep.subr.mxu0 0.0
    %1699 = vmatpush1.msra.mxu0 0.0
    %1700 = vmatprep.subr.mxu0 0.0
    %1701 = vmatpush1.msra.mxu0 0.0
    %1702 = vmatprep.subr.mxu0 0.0
    %1703 = vmatpush1.msra.mxu0 0.0
    %1704 = vmatprep.subr.mxu0 0.0
    %1705 = vmatpush1.msra.mxu0 0.0
    %1706 = vmatprep.subr.mxu0 0.0
    %1707 = vmatpush1.msra.mxu0 0.0
    %1708 = vmatprep.subr.mxu0 0.0
    %1709 = vmatpush1.msra.mxu0 0.0
    %1710 = vmatprep.subr.mxu0 0.0
    %1711 = vmatpush1.msra.mxu0 0.0
    %1712 = vmatprep.subr.mxu0 0.0
    %1713 = vmatpush1.msra.mxu0 0.0
    %1714 = vmatprep.subr.mxu0 0.0
    %1715 = vmatpush1.msra.mxu0 0.0
    %1716 = vmatprep.mubr.f32.mxu0 0.0
    %1717 = vmatmul.mubr.f32.gmra.mrb[0].mxu0 %v1437
    %v1718 = vpop.f32.mrb[0].mxu0
    %v1719 = vadd.f32 0.0, %v1718
    %v1720 = vpop.f32.mrb[0].mxu0
    %v1721 = vadd.f32 0.0, %v1720
    %1722 = vdwg.mxu0
    %v1723 = vmul.f32 %v939, 0.03125
    %v1724 = vmul.f32 %v941, 0.03125
    %v1725 = vmul.f32 %v1010, 0.03125
    %v1726 = vmul.f32 %v1012, 0.03125
    %v1727 = vmul.f32 %v1081, 0.03125
    %v1728 = vmul.f32 %v1083, 0.03125
    %v1729 = vmul.f32 %v1152, 0.03125
    %v1730 = vmul.f32 %v1154, 0.03125
    %v1731 = vmul.f32 %v1506, 0.03125
    %v1732 = vmul.f32 %v1508, 0.03125
    %v1733 = vmul.f32 %v1577, 0.03125
    %v1734 = vmul.f32 %v1579, 0.03125
    %v1735 = vmul.f32 %v1648, 0.03125
    %v1736 = vmul.f32 %v1650, 0.03125
    %v1737 = vmul.f32 %v1719, 0.03125
    %v1738 = vmul.f32 %v1721, 0.03125
    %v1739 = vmul.f32 %v1723, %v1723
    %v1740 = vmul.f32 %v1724, %v1724
    %v1741 = vmul.f32 %v1725, %v1725
    %v1742 = vmul.f32 %v1726, %v1726
    %v1743 = vmul.f32 %v1727, %v1727
    %v1744 = vmul.f32 %v1728, %v1728
    %v1745 = vmul.f32 %v1729, %v1729
    %v1746 = vmul.f32 %v1730, %v1730
    %v1747 = vsub.f32 %v1731, %v1739
    %v1748 = vsub.f32 %v1732, %v1740
    %v1749 = vsub.f32 %v1733, %v1741
    %v1750 = vsub.f32 %v1734, %v1742
    %v1751 = vsub.f32 %v1735, %v1743
    %v1752 = vsub.f32 %v1736, %v1744
    %v1753 = vsub.f32 %v1737, %v1745
    %v1754 = vsub.f32 %v1738, %v1746
    %v1755 = vmax.f32 %v1747, 0.0
    %v1756 = vmax.f32 %v1748, 0.0
    %v1757 = vmax.f32 %v1749, 0.0
    %v1758 = vmax.f32 %v1750, 0.0
    %v1759 = vmax.f32 %v1751, 0.0
    %v1760 = vmax.f32 %v1752, 0.0
    %v1761 = vmax.f32 %v1753, 0.0
    %v1762 = vmax.f32 %v1754, 0.0
    %v1763 = vld [vmem:[#allocation6] sm:$0xff]
    %v1764 = vadd.f32 %v1755, 1e-05
    %v1765 = vadd.f32 %v1756, 1e-05
    %v1766 = vadd.f32 %v1757, 1e-05
    %v1767 = vadd.f32 %v1758, 1e-05
    %v1768 = vadd.f32 %v1759, 1e-05
    %v1769 = vadd.f32 %v1760, 1e-05
    %v1770 = vadd.f32 %v1761, 1e-05
    %v1771 = vadd.f32 %v1762, 1e-05
    %v1772 = vrsqrt.pop %v1764
    %v1773 = vrsqrt.pop %v1765
    %v1774 = vrsqrt.pop %v1766
    %v1775 = vrsqrt.pop %v1767
    %v1776 = vrsqrt.pop %v1768
    %v1777 = vrsqrt.pop %v1769
    %v1778 = vrsqrt.pop %v1770
    %v1779 = vrsqrt.pop %v1771
    %v1788 = vcombine.low %v1772, %v1773
    %v1789 = vcombine.low %v1774, %v1775
    %v1790 = vcombine.low %v1776, %v1777
    %v1791 = vcombine.low %v1778, %v1779
    %v1793 = vunpack.c.l.s4 1966171168
    %v1794 = vunpack.c.0.s8 %v1793
    %v1795 = vlaneseq
    %v1796 = vshrl.u32 %v1795, 7
    %v1797 = vsub.s32 %v1794, %v1796
    %v1798 = vrot.slane %v1788, %v1797
    %v1800 = vunpack.c.l.s4 1966171168
    %v1801 = vunpack.c.0.s8 %v1800
    %v1802 = vlaneseq
    %v1803 = vshrl.u32 %v1802, 7
    %v1804 = vsub.s32 %v1801, %v1803
    %v1805 = vrot.slane %v1789, %v1804
    %v1807 = vunpack.c.l.s4 1966171168
    %v1808 = vunpack.c.0.s8 %v1807
    %v1809 = vlaneseq
    %v1810 = vshrl.u32 %v1809, 7
    %v1811 = vsub.s32 %v1808, %v1810
    %v1812 = vrot.slane %v1790, %v1811
    %v1814 = vunpack.c.l.s4 1966171168
    %v1815 = vunpack.c.0.s8 %v1814
    %v1816 = vlaneseq
    %v1817 = vshrl.u32 %v1816, 7
    %v1818 = vsub.s32 %v1815, %v1817
    %v1819 = vrot.slane %v1791, %v1818
    %v1820 = vcombine.low %v1798, %v1805
    %v1821 = vcombine.low %v1812, %v1819
    %v1823 = vunpack.c.l.s4 1966171168
    %v1824 = vunpack.c.0.s8 %v1823
    %v1825 = vlaneseq
    %v1826 = vshrl.u32 %v1825, 7
    %v1827 = vsub.s32 %v1824, %v1826
    %v1828 = vrot.slane %v1820, %v1827
    %v1830 = vunpack.c.l.s4 1966171168
    %v1831 = vunpack.c.0.s8 %v1830
    %v1832 = vlaneseq
    %v1833 = vshrl.u32 %v1832, 7
    %v1834 = vsub.s32 %v1831, %v1833
    %v1835 = vrot.slane %v1821, %v1834
    %v1836 = vcombine.low %v1828, %v1835
    %v1838 = vmul.f32 %v1763, %v1836
    %v1839 = vld [vmem:[#allocation7] sm:$0xff]
    %v1841 = vlaneseq
    %v1842 = vshrl.u32 %v1841, 7
    %v1843 = vsub.s32 0, %v1842
    %v1844 = vrot.slane %v1838, %v1843
    %v1845 = vlaneseq
    %v1846 = vshrl.u32 %v1845, 7
    %v1847 = vsub.s32 1, %v1846
    %v1848 = vrot.slane %v1838, %v1847
    %v1849 = vlaneseq
    %v1850 = vshrl.u32 %v1849, 7
    %v1851 = vsub.s32 2, %v1850
    %v1852 = vrot.slane %v1838, %v1851
    %v1853 = vlaneseq
    %v1854 = vshrl.u32 %v1853, 7
    %v1855 = vsub.s32 3, %v1854
    %v1856 = vrot.slane %v1838, %v1855
    %v1857 = vlaneseq
    %v1858 = vshrl.u32 %v1857, 7
    %v1859 = vsub.s32 4, %v1858
    %v1860 = vrot.slane %v1838, %v1859
    %v1861 = vlaneseq
    %v1862 = vshrl.u32 %v1861, 7
    %v1863 = vsub.s32 5, %v1862
    %v1864 = vrot.slane %v1838, %v1863
    %v1865 = vlaneseq
    %v1866 = vshrl.u32 %v1865, 7
    %v1867 = vsub.s32 6, %v1866
    %v1868 = vrot.slane %v1838, %v1867
    %v1869 = vlaneseq
    %v1870 = vshrl.u32 %v1869, 7
    %v1871 = vsub.s32 7, %v1870
    %v1872 = vrot.slane %v1838, %v1871
    %v1881 = vmul.f32 %v1723, %v1844
    %v1882 = vmul.f32 %v1724, %v1848
    %v1883 = vmul.f32 %v1725, %v1852
    %v1884 = vmul.f32 %v1726, %v1856
    %v1885 = vmul.f32 %v1727, %v1860
    %v1886 = vmul.f32 %v1728, %v1864
    %v1887 = vmul.f32 %v1729, %v1868
    %v1888 = vmul.f32 %v1730, %v1872
    %v1897 = vcombine.low %v1881, %v1882
    %v1898 = vcombine.low %v1883, %v1884
    %v1899 = vcombine.low %v1885, %v1886
    %v1900 = vcombine.low %v1887, %v1888
    %v1902 = vunpack.c.l.s4 1966171168
    %v1903 = vunpack.c.0.s8 %v1902
    %v1904 = vlaneseq
    %v1905 = vshrl.u32 %v1904, 7
    %v1906 = vsub.s32 %v1903, %v1905
    %v1907 = vrot.slane %v1897, %v1906
    %v1909 = vunpack.c.l.s4 1966171168
    %v1910 = vunpack.c.0.s8 %v1909
    %v1911 = vlaneseq
    %v1912 = vshrl.u32 %v1911, 7
    %v1913 = vsub.s32 %v1910, %v1912
    %v1914 = vrot.slane %v1898, %v1913
    %v1916 = vunpack.c.l.s4 1966171168
    %v1917 = vunpack.c.0.s8 %v1916
    %v1918 = vlaneseq
    %v1919 = vshrl.u32 %v1918, 7
    %v1920 = vsub.s32 %v1917, %v1919
    %v1921 = vrot.slane %v1899, %v1920
    %v1923 = vunpack.c.l.s4 1966171168
    %v1924 = vunpack.c.0.s8 %v1923
    %v1925 = vlaneseq
    %v1926 = vshrl.u32 %v1925, 7
    %v1927 = vsub.s32 %v1924, %v1926
    %v1928 = vrot.slane %v1900, %v1927
    %v1929 = vcombine.low %v1907, %v1914
    %v1930 = vcombine.low %v1921, %v1928
    %v1932 = vunpack.c.l.s4 1966171168
    %v1933 = vunpack.c.0.s8 %v1932
    %v1934 = vlaneseq
    %v1935 = vshrl.u32 %v1934, 7
    %v1936 = vsub.s32 %v1933, %v1935
    %v1937 = vrot.slane %v1929, %v1936
    %v1939 = vunpack.c.l.s4 1966171168
    %v1940 = vunpack.c.0.s8 %v1939
    %v1941 = vlaneseq
    %v1942 = vshrl.u32 %v1941, 7
    %v1943 = vsub.s32 %v1940, %v1942
    %v1944 = vrot.slane %v1930, %v1943
    %v1945 = vcombine.low %v1937, %v1944
    %v1947 = vsub.f32 %v1839, %v1945
    %v1948 = vmul.f32 %v163, %v1844
    %v1949 = vmul.f32 %v165, %v1848
    %v1950 = vmul.f32 %v204, %v1852
    %v1951 = vmul.f32 %v206, %v1856
    %v1952 = vmul.f32 %v245, %v1860
    %v1953 = vmul.f32 %v247, %v1864
    %v1954 = vmul.f32 %v286, %v1868
    %v1955 = vmul.f32 %v288, %v1872
    %v1957 = vlaneseq
    %v1958 = vshrl.u32 %v1957, 7
    %v1959 = vsub.s32 0, %v1958
    %v1960 = vrot.slane %v1947, %v1959
    %v1961 = vlaneseq
    %v1962 = vshrl.u32 %v1961, 7
    %v1963 = vsub.s32 1, %v1962
    %v1964 = vrot.slane %v1947, %v1963
    %v1965 = vlaneseq
    %v1966 = vshrl.u32 %v1965, 7
    %v1967 = vsub.s32 2, %v1966
    %v1968 = vrot.slane %v1947, %v1967
    %v1969 = vlaneseq
    %v1970 = vshrl.u32 %v1969, 7
    %v1971 = vsub.s32 3, %v1970
    %v1972 = vrot.slane %v1947, %v1971
    %v1973 = vlaneseq
    %v1974 = vshrl.u32 %v1973, 7
    %v1975 = vsub.s32 4, %v1974
    %v1976 = vrot.slane %v1947, %v1975
    %v1977 = vlaneseq
    %v1978 = vshrl.u32 %v1977, 7
    %v1979 = vsub.s32 5, %v1978
    %v1980 = vrot.slane %v1947, %v1979
    %v1981 = vlaneseq
    %v1982 = vshrl.u32 %v1981, 7
    %v1983 = vsub.s32 6, %v1982
    %v1984 = vrot.slane %v1947, %v1983
    %v1985 = vlaneseq
    %v1986 = vshrl.u32 %v1985, 7
    %v1987 = vsub.s32 7, %v1986
    %v1988 = vrot.slane %v1947, %v1987
    %v1997 = vadd.f32 %v1948, %v1960
    %v1998 = vadd.f32 %v1949, %v1964
    %v1999 = vadd.f32 %v1950, %v1968
    %v2000 = vadd.f32 %v1951, %v1972
    %v2001 = vadd.f32 %v1952, %v1976
    %v2002 = vadd.f32 %v1953, %v1980
    %v2003 = vadd.f32 %v1954, %v1984
    %v2004 = vadd.f32 %v1955, %v1988
    %v2005 = vmax.f32 %v1997, 0.0
    %v2006 = vmax.f32 %v1998, 0.0
    %v2007 = vmax.f32 %v1999, 0.0
    %v2008 = vmax.f32 %v2000, 0.0
    %v2009 = vmax.f32 %v2001, 0.0
    %v2010 = vmax.f32 %v2002, 0.0
    %v2011 = vmax.f32 %v2003, 0.0
    %v2012 = vmax.f32 %v2004, 0.0
    %v2013 = vpack.c.bf16 %v2005, %v2005
    %v2014 = vpack.c.bf16 %v2006, %v2006
    %v2015 = vpack.c.bf16 %v2007, %v2007
    %v2016 = vpack.c.bf16 %v2008, %v2008
    %v2017 = vpack.c.bf16 %v2009, %v2009
    %v2018 = vpack.c.bf16 %v2010, %v2010
    %v2019 = vpack.c.bf16 %v2011, %v2011
    %v2020 = vpack.c.bf16 %v2012, %v2012
    %v2029 = vunpack.c.l.b16 %v2013
    %v2030 = vunpack.c.l.b16 %v2014
    %v2031 = vunpack.c.l.b16 %v2015
    %v2032 = vunpack.c.l.b16 %v2016
    %v2033 = vunpack.c.l.b16 %v2017
    %v2034 = vunpack.c.l.b16 %v2018
    %v2035 = vunpack.c.l.b16 %v2019
    %v2036 = vunpack.c.l.b16 %v2020
    %v2037 = vpack.c.b16 %v2030, %v2029
    %v2038 = vpack.c.b16 %v2032, %v2031
    %v2039 = vpack.c.b16 %v2034, %v2033
    %v2040 = vpack.c.b16 %v2036, %v2035
    %2045 = vst [vmem:[%s6] sm:$0xff] %v2037
    %2046 = vst [vmem:[%s6 + $0x8] sm:$0xff] %v2038
    %2047 = vst [vmem:[%s6 + $0x10] sm:$0xff] %v2039
    %2048 = vst [vmem:[%s6 + $0x18] sm:$0xff] %v2040
    // Predicated region
    $region42: #{generator_forward.5} parent=1 // pred_check
      _
    $region43: #{generator_forward.5} parent=1 // pred_check_branch
      %2050 = sbr.rel (0) target = $region45
    $region44: #{generator_forward.5} parent=1 // pred_region
      _
    $region45: #{generator_forward.5} parent=1 // pred_fallthru
      _
    // Predicated region
    $region46: #{generator_forward.5} parent=1 // pred_check
      _
    $region47: #{generator_forward.5} parent=1 // pred_check_branch
      %2052 = sbr.rel (0) target = $region49
    $region48: #{generator_forward.5} parent=1 // pred_region
      _
    $region49: #{generator_forward.5} parent=1 // pred_fallthru
      _
    %2053 = vsyncpa [#allocation3], 1
    %2054 = vsyncpa [#allocation5], 1
    %2055 = vsyncpa [#allocation8], 1

// kernel: generator_forward.7
$region0: #{generator_forward.7}
  #allocation0 [shape = 'u32[]', space=smem, size = 0x4, offset = 0x4, fixed_abs, tag = 'smem constant byte address 0x4 - core index']
  #allocation1 [shape = 'u32[144,128]{1,0:T(1,128)}', space=vmem, size = 0x12000, scoped, tag = 'internal scratch']
  %s0 = inlined_call_operand.vmem [shape: bf16[128,288], index: 0, kind: input, shape index: {}]
  %s1 = inlined_call_operand.hbm [shape: bf16[288,128], index: 1, kind: input, shape index: {}]
  %s2 = inlined_call_operand.vmem [shape: f32[128,16], index: 2, kind: input, shape index: {}]
  %s3 = inlined_call_operand.hbm [shape: f32[16,128], index: 3, kind: input, shape index: {}]
  %s4 = inlined_call_operand.hbm [shape: f32[1,128], index: 4, kind: input, shape index: {}]
  %s5 = inlined_call_operand.hbm [shape: f32[1,128], index: 5, kind: input, shape index: {}]
  %s6 = inlined_call_operand.vmem [shape: bf16[128,128], index: 6, kind: output, shape index: {}]
  %s7 = sld [smem:[#allocation0]]
  $region50: #{generator_forward.7} parent=0
    _
  %s9 = ssub.s32 1, %s7
  %s10 = scalar_select 0, %s9, %s7
  $region1: #{generator_forward.7} parent=0
    #allocation2 [shape = 'u8[73728]{0}', space=vmem, size = 0x12000, scoped, tag = 'input window, operand 1, single buffered']
    #allocation3 [shape = 's32[1]{0}', space=sflag, size = 0x4, scoped, tag = 'scoped memory for generator_forward.7']
    #allocation4 [shape = 'u8[8192]{0}', space=vmem, size = 0x2000, scoped, tag = 'input window, operand 3, single buffered']
    #allocation5 [shape = 's32[1]{0}', space=sflag, size = 0x4, scoped, tag = 'scoped memory for generator_forward.7']
    #allocation6 [shape = 'u8[512]{0}', space=vmem, size = 0x400, scoped, tag = 'input window, operand 4, single buffered']
    #allocation7 [shape = 'u8[512]{0}', space=vmem, size = 0x400, scoped, tag = 'input window, operand 5, single buffered']
    #allocation8 [shape = 's32[1]{0}', space=sflag, size = 0x4, scoped, tag = 'scoped memory for generator_forward.7']
    %11 = vsyncpa [#allocation3], 0
    %12 = vsyncpa [#allocation5], 0
    %13 = vsyncpa [#allocation8], 0
    // Predicated region
    $region2: #{generator_forward.7} parent=1 // pred_check
      _
    $region3: #{generator_forward.7} parent=1 // pred_check_branch
      %15 = sbr.rel (0) target = $region5
    $region4: #{generator_forward.7} parent=1 // pred_region
      _
    $region5: #{generator_forward.7} parent=1 // pred_fallthru
      _
    // Predicated region
    $region6: #{generator_forward.7} parent=1 // pred_check
      _
    $region7: #{generator_forward.7} parent=1 // pred_check_branch
      %17 = sbr.rel (0) target = $region9
    $region8: #{generator_forward.7} parent=1 // pred_region
      %s19 = ssub.s32 2304, 2304
      %20 = vsyncadd [#allocation3], %s19
      %s21 = sshll.u32 [#allocation2], 4
      %s22 = int_to_ptr.vmem [resolvable:$true] %s21
      %27 = dma.hbm_to_vmem [thread:$0]  %s1, 2304, %s22, [#allocation3], 64, 64, 4
    $region9: #{generator_forward.7} parent=1 // pred_fallthru
      _
    // Predicated region
    $region10: #{generator_forward.7} parent=1 // pred_check
      _
    $region11: #{generator_forward.7} parent=1 // pred_check_branch
      %29 = sbr.rel (0) target = $region13
    $region12: #{generator_forward.7} parent=1 // pred_region
      _
    $region13: #{generator_forward.7} parent=1 // pred_fallthru
      _
    // Predicated region
    $region14: #{generator_forward.7} parent=1 // pred_check
      _
    $region15: #{generator_forward.7} parent=1 // pred_check_branch
      %31 = sbr.rel (0) target = $region17
    $region16: #{generator_forward.7} parent=1 // pred_region
      %s33 = ssub.s32 256, 256
      %34 = vsyncadd [#allocation5], %s33
      %s35 = sshll.u32 [#allocation4], 4
      %s36 = int_to_ptr.vmem [resolvable:$true] %s35
      %41 = dma.hbm_to_vmem [thread:$0]  %s3, 256, %s36, [#allocation5], 128, 128, 8
    $region17: #{generator_forward.7} parent=1 // pred_fallthru
      _
    // Predicated region
    $region18: #{generator_forward.7} parent=1 // pred_check
      _
    $region19: #{generator_forward.7} parent=1 // pred_check_branch
      %43 = sbr.rel (0) target = $region21
    $region20: #{generator_forward.7} parent=1 // pred_region
      %s45 = ssub.s32 16, 16
      %46 = vsyncadd [#allocation5], %s45
      %s48 = sshll.u32 [#allocation6], 4
      %s49 = int_to_ptr.vmem [resolvable:$true] %s48
      %51 = dma.hbm_to_vmem [thread:$0]  %s4, 16, %s49, [#allocation5]
    $region21: #{generator_forward.7} parent=1 // pred_fallthru
      _
    // Predicated region
    $region22: #{generator_forward.7} parent=1 // pred_check
      _
    $region23: #{generator_forward.7} parent=1 // pred_check_branch
      %53 = sbr.rel (0) target = $region25
    $region24: #{generator_forward.7} parent=1 // pred_region
      %s55 = ssub.s32 16, 16
      %56 = vsyncadd [#allocation8], %s55
      %s58 = sshll.u32 [#allocation7], 4
      %s59 = int_to_ptr.vmem [resolvable:$true] %s58
      %61 = dma.hbm_to_vmem [thread:$0]  %s5, 16, %s59, [#allocation8]
    $region25: #{generator_forward.7} parent=1 // pred_fallthru
      _
    // Predicated region
    $region26: #{generator_forward.7} parent=1 // pred_check
      _
    $region27: #{generator_forward.7} parent=1 // pred_check_branch
      %63 = sbr.rel (0) target = $region29
    $region28: #{generator_forward.7} parent=1 // pred_region
      %64 = dma.done [#allocation3], 2304
    $region29: #{generator_forward.7} parent=1 // pred_fallthru
      _
    // Predicated region
    $region30: #{generator_forward.7} parent=1 // pred_check
      _
    $region31: #{generator_forward.7} parent=1 // pred_check_branch
      %66 = sbr.rel (0) target = $region33
    $region32: #{generator_forward.7} parent=1 // pred_region
      %67 = dma.done [#allocation5], 256
    $region33: #{generator_forward.7} parent=1 // pred_fallthru
      _
    // Predicated region
    $region34: #{generator_forward.7} parent=1 // pred_check
      _
    $region35: #{generator_forward.7} parent=1 // pred_check_branch
      %69 = sbr.rel (0) target = $region37
    $region36: #{generator_forward.7} parent=1 // pred_region
      %70 = dma.done [#allocation5], 16
    $region37: #{generator_forward.7} parent=1 // pred_fallthru
      _
    // Predicated region
    $region38: #{generator_forward.7} parent=1 // pred_check
      _
    $region39: #{generator_forward.7} parent=1 // pred_check_branch
      %72 = sbr.rel (0) target = $region41
    $region40: #{generator_forward.7} parent=1 // pred_region
      %73 = dma.done [#allocation8], 16
    $region41: #{generator_forward.7} parent=1 // pred_fallthru
      _
    %v75 = vld [vmem:[%s0] sm:$0xff]
    %v76 = vld [vmem:[%s0 + $0x8] sm:$0xf]
    %v77 = vld [vmem:[%s0 + $0xc] sm:$0xff]
    %v78 = vld [vmem:[%s0 + $0x14] sm:$0xf]
    %v79 = vld [vmem:[%s0 + $0x18] sm:$0xff]
    %v80 = vld [vmem:[%s0 + $0x20] sm:$0xf]
    %v81 = vld [vmem:[%s0 + $0x24] sm:$0xff]
    %v82 = vld [vmem:[%s0 + $0x2c] sm:$0xf]
    %v83 = vld [vmem:[%s0 + $0x30] sm:$0xff]
    %v84 = vld [vmem:[%s0 + $0x38] sm:$0xf]
    %v85 = vld [vmem:[%s0 + $0x3c] sm:$0xff]
    %v86 = vld [vmem:[%s0 + $0x44] sm:$0xf]
    %v87 = vld [vmem:[%s0 + $0x48] sm:$0xff]
    %v88 = vld [vmem:[%s0 + $0x50] sm:$0xf]
    %v89 = vld [vmem:[%s0 + $0x54] sm:$0xff]
    %v90 = vld [vmem:[%s0 + $0x5c] sm:$0xf]
    %v91 = vld [vmem:[%s0 + $0x60] sm:$0xff]
    %v92 = vld [vmem:[%s0 + $0x68] sm:$0xf]
    %v93 = vld [vmem:[%s0 + $0x6c] sm:$0xff]
    %v94 = vld [vmem:[%s0 + $0x74] sm:$0xf]
    %v95 = vld [vmem:[%s0 + $0x78] sm:$0xff]
    %v96 = vld [vmem:[%s0 + $0x80] sm:$0xf]
    %v97 = vld [vmem:[%s0 + $0x84] sm:$0xff]
    %v98 = vld [vmem:[%s0 + $0x8c] sm:$0xf]
    %v99 = vld [vmem:[%s0 + $0x90] sm:$0xff]
    %v100 = vld [vmem:[%s0 + $0x98] sm:$0xf]
    %v101 = vld [vmem:[%s0 + $0x9c] sm:$0xff]
    %v102 = vld [vmem:[%s0 + $0xa4] sm:$0xf]
    %v103 = vld [vmem:[%s0 + $0xa8] sm:$0xff]
    %v104 = vld [vmem:[%s0 + $0xb0] sm:$0xf]
    %v105 = vld [vmem:[%s0 + $0xb4] sm:$0xff]
    %v106 = vld [vmem:[%s0 + $0xbc] sm:$0xf]
    %v107 = vld [vmem:[#allocation2] sm:$0xf]
    %v108 = vld [vmem:[#allocation2 + $0x4] sm:$0xf]
    %v109 = vld [vmem:[#allocation2 + $0x8] sm:$0xf]
    %v110 = vld [vmem:[#allocation2 + $0xc] sm:$0xf]
    %v111 = vld [vmem:[#allocation2 + $0x10] sm:$0xf]
    %v112 = vld [vmem:[#allocation2 + $0x14] sm:$0xf]
    %v113 = vld [vmem:[#allocation2 + $0x18] sm:$0xf]
    %v114 = vld [vmem:[#allocation2 + $0x1c] sm:$0xf]
    %v115 = vld [vmem:[#allocation2 + $0x20] sm:$0xf]
    %v116 = vld [vmem:[#allocation2 + $0x24] sm:$0xf]
    %v117 = vld [vmem:[#allocation2 + $0x28] sm:$0xf]
    %v118 = vld [vmem:[#allocation2 + $0x2c] sm:$0xf]
    %v119 = vld [vmem:[#allocation2 + $0x30] sm:$0xf]
    %v120 = vld [vmem:[#allocation2 + $0x34] sm:$0xf]
    %v121 = vld [vmem:[#allocation2 + $0x38] sm:$0xf]
    %v122 = vld [vmem:[#allocation2 + $0x3c] sm:$0xf]
    %v123 = vld [vmem:[#allocation2 + $0x40] sm:$0xf]
    %v124 = vld [vmem:[#allocation2 + $0x44] sm:$0xf]
    %v125 = vld [vmem:[#allocation2 + $0x48] sm:$0xf]
    %v126 = vld [vmem:[#allocation2 + $0x4c] sm:$0xf]
    %v127 = vld [vmem:[#allocation2 + $0x50] sm:$0xf]
    %v128 = vld [vmem:[#allocation2 + $0x54] sm:$0xf]
    %v129 = vld [vmem:[#allocation2 + $0x58] sm:$0xf]
    %v130 = vld [vmem:[#allocation2 + $0x5c] sm:$0xf]
    %v131 = vld [vmem:[#allocation2 + $0x60] sm:$0xf]
    %v132 = vld [vmem:[#allocation2 + $0x64] sm:$0xf]
    %v133 = vld [vmem:[#allocation2 + $0x68] sm:$0xf]
    %v134 = vld [vmem:[#allocation2 + $0x6c] sm:$0xf]
    %v135 = vld [vmem:[#allocation2 + $0x70] sm:$0xf]
    %v136 = vld [vmem:[#allocation2 + $0x74] sm:$0xf]
    %v137 = vld [vmem:[#allocation2 + $0x78] sm:$0xf]
    %v138 = vld [vmem:[#allocation2 + $0x7c] sm:$0xf]
    %v139 = vld [vmem:[#allocation2 + $0x80] sm:$0xf]
    %v140 = vld [vmem:[#allocation2 + $0x84] sm:$0xf]
    %v141 = vld [vmem:[#allocation2 + $0x88] sm:$0xf]
    %v142 = vld [vmem:[#allocation2 + $0x8c] sm:$0xf]
    %v175 = vunpack.c.l.b16 %v75
    %v176 = vunpack.c.h.b16 %v75
    %v177 = vunpack.c.l.b16 %v76
    %v178 = vunpack.c.l.b16 %v77
    %v179 = vunpack.c.h.b16 %v77
    %v180 = vunpack.c.l.b16 %v78
    %v181 = vunpack.c.l.b16 %v79
    %v182 = vunpack.c.h.b16 %v79
    %v183 = vunpack.c.l.b16 %v80
    %v184 = vunpack.c.l.b16 %v81
    %v185 = vunpack.c.h.b16 %v81
    %v186 = vunpack.c.l.b16 %v82
    %v187 = vunpack.c.l.b16 %v83
    %v188 = vunpack.c.h.b16 %v83
    %v189 = vunpack.c.l.b16 %v84
    %v190 = vunpack.c.l.b16 %v85
    %v191 = vunpack.c.h.b16 %v85
    %v192 = vunpack.c.l.b16 %v86
    %v193 = vunpack.c.l.b16 %v87
    %v194 = vunpack.c.h.b16 %v87
    %v195 = vunpack.c.l.b16 %v88
    %v196 = vunpack.c.l.b16 %v89
    %v197 = vunpack.c.h.b16 %v89
    %v198 = vunpack.c.l.b16 %v90
    %v199 = vunpack.c.l.b16 %v91
    %v200 = vunpack.c.h.b16 %v91
    %v201 = vunpack.c.l.b16 %v92
    %v202 = vunpack.c.l.b16 %v93
    %v203 = vunpack.c.h.b16 %v93
    %v204 = vunpack.c.l.b16 %v94
    %v205 = vunpack.c.l.b16 %v95
    %v206 = vunpack.c.h.b16 %v95
    %v207 = vunpack.c.l.b16 %v96
    %v208 = vunpack.c.l.b16 %v97
    %v209 = vunpack.c.h.b16 %v97
    %v210 = vunpack.c.l.b16 %v98
    %v211 = vunpack.c.l.b16 %v99
    %v212 = vunpack.c.h.b16 %v99
    %v213 = vunpack.c.l.b16 %v100
    %v214 = vunpack.c.l.b16 %v101
    %v215 = vunpack.c.h.b16 %v101
    %v216 = vunpack.c.l.b16 %v102
    %v217 = vunpack.c.l.b16 %v103
    %v218 = vunpack.c.h.b16 %v103
    %v219 = vunpack.c.l.b16 %v104
    %v220 = vunpack.c.l.b16 %v105
    %v221 = vunpack.c.h.b16 %v105
    %v222 = vunpack.c.l.b16 %v106
    %v223 = vpack.c.b16 %v178, %v175
    %v224 = vpack.c.b16 %v179, %v176
    %v225 = vpack.c.b16 %v180, %v177
    %v226 = vpack.c.b16 %v184, %v181
    %v227 = vpack.c.b16 %v185, %v182
    %v228 = vpack.c.b16 %v186, %v183
    %v229 = vpack.c.b16 %v190, %v187
    %v230 = vpack.c.b16 %v191, %v188
    %v231 = vpack.c.b16 %v192, %v189
    %v232 = vpack.c.b16 %v196, %v193
    %v233 = vpack.c.b16 %v197, %v194
    %v234 = vpack.c.b16 %v198, %v195
    %v235 = vpack.c.b16 %v202, %v199
    %v236 = vpack.c.b16 %v203, %v200
    %v237 = vpack.c.b16 %v204, %v201
    %v238 = vpack.c.b16 %v208, %v205
    %v239 = vpack.c.b16 %v209, %v206
    %v240 = vpack.c.b16 %v210, %v207
    %v241 = vpack.c.b16 %v214, %v211
    %v242 = vpack.c.b16 %v215, %v212
    %v243 = vpack.c.b16 %v216, %v213
    %v244 = vpack.c.b16 %v220, %v217
    %v245 = vpack.c.b16 %v221, %v218
    %v246 = vpack.c.b16 %v222, %v219
    %v299 = vunpack.c.l.b16 %v107
    %v300 = vunpack.c.l.b16 %v108
    %v301 = vunpack.c.l.b16 %v109
    %v302 = vunpack.c.l.b16 %v110
    %v303 = vunpack.c.l.b16 %v111
    %v304 = vunpack.c.l.b16 %v112
    %v305 = vunpack.c.l.b16 %v113
    %v306 = vunpack.c.l.b16 %v114
    %v307 = vunpack.c.l.b16 %v115
    %v308 = vunpack.c.l.b16 %v116
    %v309 = vunpack.c.l.b16 %v117
    %v310 = vunpack.c.l.b16 %v118
    %v311 = vunpack.c.l.b16 %v119
    %v312 = vunpack.c.l.b16 %v120
    %v313 = vunpack.c.l.b16 %v121
    %v314 = vunpack.c.l.b16 %v122
    %v315 = vunpack.c.l.b16 %v123
    %v316 = vunpack.c.l.b16 %v124
    %v317 = vunpack.c.l.b16 %v125
    %v318 = vunpack.c.l.b16 %v126
    %v319 = vunpack.c.l.b16 %v127
    %v320 = vunpack.c.l.b16 %v128
    %v321 = vunpack.c.l.b16 %v129
    %v322 = vunpack.c.l.b16 %v130
    %v323 = vunpack.c.l.b16 %v131
    %v324 = vunpack.c.l.b16 %v132
    %v325 = vunpack.c.l.b16 %v133
    %v326 = vunpack.c.l.b16 %v134
    %v327 = vunpack.c.l.b16 %v135
    %v328 = vunpack.c.l.b16 %v136
    %v329 = vunpack.c.l.b16 %v137
    %v330 = vunpack.c.l.b16 %v138
    %v331 = vunpack.c.l.b16 %v139
    %v332 = vunpack.c.l.b16 %v140
    %v333 = vunpack.c.l.b16 %v141
    %v334 = vunpack.c.l.b16 %v142
    %v335 = vpack.c.b16 %v300, %v299
    %v336 = vpack.c.b16 %v302, %v301
    %v337 = vpack.c.b16 %v304, %v303
    %v338 = vpack.c.b16 %v306, %v305
    %v339 = vpack.c.b16 %v308, %v307
    %v340 = vpack.c.b16 %v310, %v309
    %v341 = vpack.c.b16 %v312, %v311
    %v342 = vpack.c.b16 %v314, %v313
    %v343 = vpack.c.b16 %v316, %v315
    %v344 = vpack.c.b16 %v318, %v317
    %v345 = vpack.c.b16 %v320, %v319
    %v346 = vpack.c.b16 %v322, %v321
    %v347 = vpack.c.b16 %v324, %v323
    %v348 = vpack.c.b16 %v326, %v325
    %v349 = vpack.c.b16 %v328, %v327
    %v350 = vpack.c.b16 %v330, %v329
    %v351 = vpack.c.b16 %v332, %v331
    %v352 = vpack.c.b16 %v334, %v333
    %vm371 = vcmask 261120
    %v373 = vsel %vm371, %v225, 0
    %v376 = vsel %vm371, %v228, 0
    %v379 = vsel %vm371, %v231, 0
    %v382 = vsel %vm371, %v234, 0
    %v385 = vsel %vm371, %v237, 0
    %v388 = vsel %vm371, %v240, 0
    %v391 = vsel %vm371, %v243, 0
    %v394 = vsel %vm371, %v246, 0
    %396 = vmatprep.subr.bf16.mxu0 0
    %397 = vmatpush1.bf16.msra.mxu0 %v335
    %398 = vmatprep.subr.bf16.mxu0 0
    %399 = vmatpush1.bf16.msra.mxu0 %v336
    %400 = vmatprep.subr.bf16.mxu0 0
    %401 = vmatpush1.bf16.msra.mxu0 %v337
    %402 = vmatprep.subr.bf16.mxu0 0
    %403 = vmatpush1.bf16.msra.mxu0 %v338
    %404 = vmatprep.subr.bf16.mxu0 0
    %405 = vmatpush1.bf16.msra.mxu0 %v339
    %406 = vmatprep.subr.bf16.mxu0 0
    %407 = vmatpush1.bf16.msra.mxu0 %v340
    %408 = vmatprep.subr.bf16.mxu0 0
    %409 = vmatpush1.bf16.msra.mxu0 %v341
    %410 = vmatprep.subr.bf16.mxu0 0
    %411 = vmatpush1.bf16.msra.mxu0 %v342
    %412 = vmatprep.subr.bf16.mxu0 0
    %413 = vmatpush1.bf16.msra.mxu0 %v343
    %414 = vmatprep.subr.bf16.mxu0 0
    %415 = vmatpush1.bf16.msra.mxu0 %v344
    %416 = vmatprep.subr.bf16.mxu0 0
    %417 = vmatpush1.bf16.msra.mxu0 %v345
    %418 = vmatprep.subr.bf16.mxu0 0
    %419 = vmatpush1.bf16.msra.mxu0 %v346
    %420 = vmatprep.subr.bf16.mxu0 0
    %421 = vmatpush1.bf16.msra.mxu0 %v347
    %422 = vmatprep.subr.bf16.mxu0 0
    %423 = vmatpush1.bf16.msra.mxu0 %v348
    %424 = vmatprep.subr.bf16.mxu0 0
    %425 = vmatpush1.bf16.msra.mxu0 %v349
    %426 = vmatprep.subr.bf16.mxu0 0
    %427 = vmatpush1.bf16.msra.mxu0 %v350
    %428 = vmatprep.mubr.bf16.mxu0 %v224
    %429 = vmatmul.mubr.bf16.gmra.mrb[0].mxu0 %v223
    %v430 = vpop.f32.mrb[0].mxu0
    %v431 = vadd.f32 0.0, %v430
    %v432 = vpop.f32.mrb[0].mxu0
    %v433 = vpop.f32.mrb[0].mxu0
    %v434 = vadd.f32 0.0, %v433
    %v435 = vpop.f32.mrb[0].mxu0
    %436 = vmatprep.mubr.bf16.mxu0 %v227
    %437 = vmatmul.mubr.bf16.gmra.mrb[0].mxu0 %v226
    %v438 = vpop.f32.mrb[0].mxu0
    %v439 = vadd.f32 0.0, %v438
    %v440 = vpop.f32.mrb[0].mxu0
    %v441 = vpop.f32.mrb[0].mxu0
    %v442 = vadd.f32 0.0, %v441
    %v443 = vpop.f32.mrb[0].mxu0
    %444 = vmatprep.mubr.bf16.mxu0 %v230
    %445 = vmatmul.mubr.bf16.gmra.mrb[0].mxu0 %v229
    %v446 = vpop.f32.mrb[0].mxu0
    %v447 = vadd.f32 0.0, %v446
    %v448 = vpop.f32.mrb[0].mxu0
    %v449 = vpop.f32.mrb[0].mxu0
    %v450 = vadd.f32 0.0, %v449
    %v451 = vpop.f32.mrb[0].mxu0
    %452 = vmatprep.mubr.bf16.mxu0 %v233
    %453 = vmatmul.mubr.bf16.gmra.mrb[0].mxu0 %v232
    %v454 = vpop.f32.mrb[0].mxu0
    %v455 = vadd.f32 0.0, %v454
    %v456 = vpop.f32.mrb[0].mxu0
    %v457 = vpop.f32.mrb[0].mxu0
    %v458 = vadd.f32 0.0, %v457
    %v459 = vpop.f32.mrb[0].mxu0
    %460 = vmatprep.mubr.bf16.mxu0 %v236
    %461 = vmatmul.mubr.bf16.gmra.mrb[0].mxu0 %v235
    %v462 = vpop.f32.mrb[0].mxu0
    %v463 = vadd.f32 0.0, %v462
    %v464 = vpop.f32.mrb[0].mxu0
    %v465 = vpop.f32.mrb[0].mxu0
    %v466 = vadd.f32 0.0, %v465
    %v467 = vpop.f32.mrb[0].mxu0
    %468 = vmatprep.mubr.bf16.mxu0 %v239
    %469 = vmatmul.mubr.bf16.gmra.mrb[0].mxu0 %v238
    %v470 = vpop.f32.mrb[0].mxu0
    %v471 = vadd.f32 0.0, %v470
    %v472 = vpop.f32.mrb[0].mxu0
    %v473 = vpop.f32.mrb[0].mxu0
    %v474 = vadd.f32 0.0, %v473
    %v475 = vpop.f32.mrb[0].mxu0
    %476 = vmatprep.mubr.bf16.mxu0 %v242
    %477 = vmatmul.mubr.bf16.gmra.mrb[0].mxu0 %v241
    %v478 = vpop.f32.mrb[0].mxu0
    %v479 = vadd.f32 0.0, %v478
    %v480 = vpop.f32.mrb[0].mxu0
    %v481 = vpop.f32.mrb[0].mxu0
    %v482 = vadd.f32 0.0, %v481
    %v483 = vpop.f32.mrb[0].mxu0
    %484 = vmatprep.mubr.bf16.mxu0 %v245
    %485 = vmatmul.mubr.bf16.gmra.mrb[0].mxu0 %v244
    %v486 = vpop.f32.mrb[0].mxu0
    %v487 = vadd.f32 0.0, %v486
    %v488 = vpop.f32.mrb[0].mxu0
    %v489 = vpop.f32.mrb[0].mxu0
    %v490 = vadd.f32 0.0, %v489
    %v491 = vpop.f32.mrb[0].mxu0
    %492 = vdwg.mxu0
    %493 = vmatprep.subr.bf16.mxu0 0
    %494 = vmatpush1.bf16.msra.mxu0 %v351
    %495 = vmatprep.subr.bf16.mxu0 0
    %496 = vmatpush1.bf16.msra.mxu0 %v352
    %497 = vmatprep.subr.bf16.mxu0 0
    %498 = vmatpush1.bf16.msra.mxu0 0
    %499 = vmatprep.subr.bf16.mxu0 0
    %500 = vmatpush1.bf16.msra.mxu0 0
    %501 = vmatprep.subr.bf16.mxu0 0
    %502 = vmatpush1.bf16.msra.mxu0 0
    %503 = vmatprep.subr.bf16.mxu0 0
    %504 = vmatpush1.bf16.msra.mxu0 0
    %505 = vmatprep.subr.bf16.mxu0 0
    %506 = vmatpush1.bf16.msra.mxu0 0
    %507 = vmatprep.subr.bf16.mxu0 0
    %508 = vmatpush1.bf16.msra.mxu0 0
    %509 = vmatprep.subr.bf16.mxu0 0
    %510 = vmatpush1.bf16.msra.mxu0 0
    %511 = vmatprep.subr.bf16.mxu0 0
    %512 = vmatpush1.bf16.msra.mxu0 0
    %513 = vmatprep.subr.bf16.mxu0 0
    %514 = vmatpush1.bf16.msra.mxu0 0
    %515 = vmatprep.subr.bf16.mxu0 0
    %516 = vmatpush1.bf16.msra.mxu0 0
    %517 = vmatprep.subr.bf16.mxu0 0
    %518 = vmatpush1.bf16.msra.mxu0 0
    %519 = vmatprep.subr.bf16.mxu0 0
    %520 = vmatpush1.bf16.msra.mxu0 0
    %521 = vmatprep.subr.bf16.mxu0 0
    %522 = vmatpush1.bf16.msra.mxu0 0
    %523 = vmatprep.subr.bf16.mxu0 0
    %524 = vmatpush1.bf16.msra.mxu0 0
    %525 = vmatprep.mubr.bf16.mxu0 0
    %526 = vmatmul.mubr.bf16.gmra.mrb[0].mxu0 %v373
    %v527 = vpop.f32.mrb[0].mxu0
    %v528 = vadd.f32 %v431, %v527
    %v529 = vpop.f32.mrb[0].mxu0
    %v530 = vpop.f32.mrb[0].mxu0
    %v531 = vadd.f32 %v434, %v530
    %v532 = vpop.f32.mrb[0].mxu0
    %533 = vmatprep.mubr.bf16.mxu0 0
    %534 = vmatmul.mubr.bf16.gmra.mrb[0].mxu0 %v376
    %v535 = vpop.f32.mrb[0].mxu0
    %v536 = vadd.f32 %v439, %v535
    %v537 = vpop.f32.mrb[0].mxu0
    %v538 = vpop.f32.mrb[0].mxu0
    %v539 = vadd.f32 %v442, %v538
    %v540 = vpop.f32.mrb[0].mxu0
    %541 = vmatprep.mubr.bf16.mxu0 0
    %542 = vmatmul.mubr.bf16.gmra.mrb[0].mxu0 %v379
    %v543 = vpop.f32.mrb[0].mxu0
    %v544 = vadd.f32 %v447, %v543
    %v545 = vpop.f32.mrb[0].mxu0
    %v546 = vpop.f32.mrb[0].mxu0
    %v547 = vadd.f32 %v450, %v546
    %v548 = vpop.f32.mrb[0].mxu0
    %549 = vmatprep.mubr.bf16.mxu0 0
    %550 = vmatmul.mubr.bf16.gmra.mrb[0].mxu0 %v382
    %v551 = vpop.f32.mrb[0].mxu0
    %v552 = vadd.f32 %v455, %v551
    %v553 = vpop.f32.mrb[0].mxu0
    %v554 = vpop.f32.mrb[0].mxu0
    %v555 = vadd.f32 %v458, %v554
    %v556 = vpop.f32.mrb[0].mxu0
    %557 = vmatprep.mubr.bf16.mxu0 0
    %558 = vmatmul.mubr.bf16.gmra.mrb[0].mxu0 %v385
    %v559 = vpop.f32.mrb[0].mxu0
    %v560 = vadd.f32 %v463, %v559
    %v561 = vpop.f32.mrb[0].mxu0
    %v562 = vpop.f32.mrb[0].mxu0
    %v563 = vadd.f32 %v466, %v562
    %v564 = vpop.f32.mrb[0].mxu0
    %565 = vmatprep.mubr.bf16.mxu0 0
    %566 = vmatmul.mubr.bf16.gmra.mrb[0].mxu0 %v388
    %v567 = vpop.f32.mrb[0].mxu0
    %v568 = vadd.f32 %v471, %v567
    %v569 = vpop.f32.mrb[0].mxu0
    %v570 = vpop.f32.mrb[0].mxu0
    %v571 = vadd.f32 %v474, %v570
    %v572 = vpop.f32.mrb[0].mxu0
    %573 = vmatprep.mubr.bf16.mxu0 0
    %574 = vmatmul.mubr.bf16.gmra.mrb[0].mxu0 %v391
    %v575 = vpop.f32.mrb[0].mxu0
    %v576 = vadd.f32 %v479, %v575
    %v577 = vpop.f32.mrb[0].mxu0
    %v578 = vpop.f32.mrb[0].mxu0
    %v579 = vadd.f32 %v482, %v578
    %v580 = vpop.f32.mrb[0].mxu0
    %581 = vmatprep.mubr.bf16.mxu0 0
    %582 = vmatmul.mubr.bf16.gmra.mrb[0].mxu0 %v394
    %v583 = vpop.f32.mrb[0].mxu0
    %v584 = vadd.f32 %v487, %v583
    %v585 = vpop.f32.mrb[0].mxu0
    %v586 = vpop.f32.mrb[0].mxu0
    %v587 = vadd.f32 %v490, %v586
    %v588 = vpop.f32.mrb[0].mxu0
    %589 = vdwg.mxu0
    %v590 = vadd.f32 %v528, %v531
    %v591 = vadd.f32 %v590, %v536
    %v592 = vadd.f32 %v591, %v539
    %v593 = vadd.f32 %v592, %v544
    %v594 = vadd.f32 %v593, %v547
    %v595 = vadd.f32 %v594, %v552
    %v596 = vadd.f32 %v595, %v555
    %v597 = vadd.f32 %v596, %v560
    %v598 = vadd.f32 %v597, %v563
    %v599 = vadd.f32 %v598, %v568
    %v600 = vadd.f32 %v599, %v571
    %v601 = vadd.f32 %v600, %v576
    %v602 = vadd.f32 %v601, %v579
    %v603 = vadd.f32 %v602, %v584
    %v604 = vadd.f32 %v603, %v587
    %v605 = vrot.slane %v604, 4
    %v606 = vadd.f32 %v604, %v605
    %v607 = vrot.slane %v606, 2
    %v608 = vadd.f32 %v606, %v607
    %v609 = vrot.slane %v608, 1
    %v610 = vadd.f32 %v608, %v609
    %v611 = vmul.f32 %v528, %v528
    %v612 = vmul.f32 %v531, %v531
    %v613 = vmul.f32 %v536, %v536
    %v614 = vmul.f32 %v539, %v539
    %v615 = vmul.f32 %v544, %v544
    %v616 = vmul.f32 %v547, %v547
    %v617 = vmul.f32 %v552, %v552
    %v618 = vmul.f32 %v555, %v555
    %v619 = vmul.f32 %v560, %v560
    %v620 = vmul.f32 %v563, %v563
    %v621 = vmul.f32 %v568, %v568
    %v622 = vmul.f32 %v571, %v571
    %v623 = vmul.f32 %v576, %v576
    %v624 = vmul.f32 %v579, %v579
    %v625 = vmul.f32 %v584, %v584
    %v626 = vmul.f32 %v587, %v587
    %v627 = vadd.f32 %v611, %v612
    %v628 = vadd.f32 %v627, %v613
    %v629 = vadd.f32 %v628, %v614
    %v630 = vadd.f32 %v629, %v615
    %v631 = vadd.f32 %v630, %v616
    %v632 = vadd.f32 %v631, %v617
    %v633 = vadd.f32 %v632, %v618
    %v634 = vadd.f32 %v633, %v619
    %v635 = vadd.f32 %v634, %v620
    %v636 = vadd.f32 %v635, %v621
    %v637 = vadd.f32 %v636, %v622
    %v638 = vadd.f32 %v637, %v623
    %v639 = vadd.f32 %v638, %v624
    %v640 = vadd.f32 %v639, %v625
    %v641 = vadd.f32 %v640, %v626
    %v642 = vrot.slane %v641, 4
    %v643 = vadd.f32 %v641, %v642
    %v644 = vrot.slane %v643, 2
    %v645 = vadd.f32 %v643, %v644
    %v646 = vrot.slane %v645, 1
    %v647 = vadd.f32 %v645, %v646
    %v648 = vld [vmem:[%s2] sm:$0xff]
    %v649 = vld [vmem:[%s2 + $0x8] sm:$0xff]
    %v650 = vld [vmem:[%s2 + $0x10] sm:$0xff]
    %v651 = vld [vmem:[%s2 + $0x18] sm:$0xff]
    %v652 = vld [vmem:[%s2 + $0x20] sm:$0xff]
    %v653 = vld [vmem:[%s2 + $0x28] sm:$0xff]
    %v654 = vld [vmem:[%s2 + $0x30] sm:$0xff]
    %v655 = vld [vmem:[%s2 + $0x38] sm:$0xff]
    %v656 = vld [vmem:[%s2 + $0x40] sm:$0xff]
    %v657 = vld [vmem:[%s2 + $0x48] sm:$0xff]
    %v658 = vld [vmem:[%s2 + $0x50] sm:$0xff]
    %v659 = vld [vmem:[%s2 + $0x58] sm:$0xff]
    %v660 = vld [vmem:[%s2 + $0x60] sm:$0xff]
    %v661 = vld [vmem:[%s2 + $0x68] sm:$0xff]
    %v662 = vld [vmem:[%s2 + $0x70] sm:$0xff]
    %v663 = vld [vmem:[%s2 + $0x78] sm:$0xff]
    %664 = vmatprep.subr.mxu0 0.0
    %665 = vmatpush1.msra.mxu0 %v648
    %666 = vmatprep.subr.mxu0 0.0
    %667 = vmatpush1.msra.mxu0 %v649
    %668 = vmatprep.subr.mxu0 0.0
    %669 = vmatpush1.msra.mxu0 %v650
    %670 = vmatprep.subr.mxu0 0.0
    %671 = vmatpush1.msra.mxu0 %v651
    %672 = vmatprep.subr.mxu0 0.0
    %673 = vmatpush1.msra.mxu0 %v652
    %674 = vmatprep.subr.mxu0 0.0
    %675 = vmatpush1.msra.mxu0 %v653
    %676 = vmatprep.subr.mxu0 0.0
    %677 = vmatpush1.msra.mxu0 %v654
    %678 = vmatprep.subr.mxu0 0.0
    %679 = vmatpush1.msra.mxu0 %v655
    %680 = vmatprep.subr.mxu0 0.0
    %681 = vmatpush1.msra.mxu0 %v656
    %682 = vmatprep.subr.mxu0 0.0
    %683 = vmatpush1.msra.mxu0 %v657
    %684 = vmatprep.subr.mxu0 0.0
    %685 = vmatpush1.msra.mxu0 %v658
    %686 = vmatprep.subr.mxu0 0.0
    %687 = vmatpush1.msra.mxu0 %v659
    %688 = vmatprep.subr.mxu0 0.0
    %689 = vmatpush1.msra.mxu0 %v660
    %690 = vmatprep.subr.mxu0 0.0
    %691 = vmatpush1.msra.mxu0 %v661
    %692 = vmatprep.subr.mxu0 0.0
    %693 = vmatpush1.msra.mxu0 %v662
    %694 = vmatprep.subr.mxu0 0.0
    %695 = vmatpush1.msra.mxu0 %v663
    %696 = vmatprep.subr.mxu0 0.0
    %697 = vmatpush1.msra.mxu0 0.0
    %698 = vmatprep.subr.mxu0 0.0
    %699 = vmatpush1.msra.mxu0 0.0
    %700 = vmatprep.subr.mxu0 0.0
    %701 = vmatpush1.msra.mxu0 0.0
    %702 = vmatprep.subr.mxu0 0.0
    %703 = vmatpush1.msra.mxu0 0.0
    %704 = vmatprep.subr.mxu0 0.0
    %705 = vmatpush1.msra.mxu0 0.0
    %706 = vmatprep.subr.mxu0 0.0
    %707 = vmatpush1.msra.mxu0 0.0
    %708 = vmatprep.subr.mxu0 0.0
    %709 = vmatpush1.msra.mxu0 0.0
    %710 = vmatprep.subr.mxu0 0.0
    %711 = vmatpush1.msra.mxu0 0.0
    %712 = vmatprep.subr.mxu0 0.0
    %713 = vmatpush1.msra.mxu0 0.0
    %714 = vmatprep.subr.mxu0 0.0
    %715 = vmatpush1.msra.mxu0 0.0
    %716 = vmatprep.subr.mxu0 0.0
    %717 = vmatpush1.msra.mxu0 0.0
    %718 = vmatprep.subr.mxu0 0.0
    %719 = vmatpush1.msra.mxu0 0.0
    %720 = vmatprep.subr.mxu0 0.0
    %721 = vmatpush1.msra.mxu0 0.0
    %722 = vmatprep.subr.mxu0 0.0
    %723 = vmatpush1.msra.mxu0 0.0
    %724 = vmatprep.subr.mxu0 0.0
    %725 = vmatpush1.msra.mxu0 0.0
    %726 = vmatprep.subr.mxu0 0.0
    %727 = vmatpush1.msra.mxu0 0.0
    %728 = vmatprep.mubr.f32.mxu0 0.0
    %729 = vmatmul.mubr.f32.gmra.mrb[0].mxu0 %v610
    %v730 = vpop.f32.mrb[0].mxu0
    %v731 = vadd.f32 0.0, %v730
    %v732 = vpop.f32.mrb[0].mxu0
    %733 = vdwg.mxu0
    %v734 = vld [vmem:[#allocation4] sm:$0xff]
    %v735 = vld [vmem:[#allocation4 + $0x8] sm:$0xff]
    %vm736 = vcmask 130048
    %v738 = vsel %vm736, %v731, 0
    %740 = vmatprep.subr.mxu0 0.0
    %741 = vmatpush1.msra.mxu0 %v734
    %742 = vmatprep.subr.mxu0 0.0
    %743 = vmatpush1.msra.mxu0 %v735
    %744 = vmatprep.subr.mxu0 0.0
    %745 = vmatpush1.msra.mxu0 0.0
    %746 = vmatprep.subr.mxu0 0.0
    %747 = vmatpush1.msra.mxu0 0.0
    %748 = vmatprep.subr.mxu0 0.0
    %749 = vmatpush1.msra.mxu0 0.0
    %750 = vmatprep.subr.mxu0 0.0
    %751 = vmatpush1.msra.mxu0 0.0
    %752 = vmatprep.subr.mxu0 0.0
    %753 = vmatpush1.msra.mxu0 0.0
    %754 = vmatprep.subr.mxu0 0.0
    %755 = vmatpush1.msra.mxu0 0.0
    %756 = vmatprep.subr.mxu0 0.0
    %757 = vmatpush1.msra.mxu0 0.0
    %758 = vmatprep.subr.mxu0 0.0
    %759 = vmatpush1.msra.mxu0 0.0
    %760 = vmatprep.subr.mxu0 0.0
    %761 = vmatpush1.msra.mxu0 0.0
    %762 = vmatprep.subr.mxu0 0.0
    %763 = vmatpush1.msra.mxu0 0.0
    %764 = vmatprep.subr.mxu0 0.0
    %765 = vmatpush1.msra.mxu0 0.0
    %766 = vmatprep.subr.mxu0 0.0
    %767 = vmatpush1.msra.mxu0 0.0
    %768 = vmatprep.subr.mxu0 0.0
    %769 = vmatpush1.msra.mxu0 0.0
    %770 = vmatprep.subr.mxu0 0.0
    %771 = vmatpush1.msra.mxu0 0.0
    %772 = vmatprep.subr.mxu0 0.0
    %773 = vmatpush1.msra.mxu0 0.0
    %774 = vmatprep.subr.mxu0 0.0
    %775 = vmatpush1.msra.mxu0 0.0
    %776 = vmatprep.subr.mxu0 0.0
    %777 = vmatpush1.msra.mxu0 0.0
    %778 = vmatprep.subr.mxu0 0.0
    %779 = vmatpush1.msra.mxu0 0.0
    %780 = vmatprep.subr.mxu0 0.0
    %781 = vmatpush1.msra.mxu0 0.0
    %782 = vmatprep.subr.mxu0 0.0
    %783 = vmatpush1.msra.mxu0 0.0
    %784 = vmatprep.subr.mxu0 0.0
    %785 = vmatpush1.msra.mxu0 0.0
    %786 = vmatprep.subr.mxu0 0.0
    %787 = vmatpush1.msra.mxu0 0.0
    %788 = vmatprep.subr.mxu0 0.0
    %789 = vmatpush1.msra.mxu0 0.0
    %790 = vmatprep.subr.mxu0 0.0
    %791 = vmatpush1.msra.mxu0 0.0
    %792 = vmatprep.subr.mxu0 0.0
    %793 = vmatpush1.msra.mxu0 0.0
    %794 = vmatprep.subr.mxu0 0.0
    %795 = vmatpush1.msra.mxu0 0.0
    %796 = vmatprep.subr.mxu0 0.0
    %797 = vmatpush1.msra.mxu0 0.0
    %798 = vmatprep.subr.mxu0 0.0
    %799 = vmatpush1.msra.mxu0 0.0
    %800 = vmatprep.subr.mxu0 0.0
    %801 = vmatpush1.msra.mxu0 0.0
    %802 = vmatprep.subr.mxu0 0.0
    %803 = vmatpush1.msra.mxu0 0.0
    %804 = vmatprep.mubr.f32.mxu0 0.0
    %805 = vmatmul.mubr.f32.gmra.mrb[0].mxu0 %v738
    %v806 = vpop.f32.mrb[0].mxu0
    %v807 = vadd.f32 0.0, %v806
    %v808 = vpop.f32.mrb[0].mxu0
    %809 = vdwg.mxu0
    %810 = vmatprep.subr.mxu0 0.0
    %811 = vmatpush1.msra.mxu0 %v648
    %812 = vmatprep.subr.mxu0 0.0
    %813 = vmatpush1.msra.mxu0 %v649
    %814 = vmatprep.subr.mxu0 0.0
    %815 = vmatpush1.msra.mxu0 %v650
    %816 = vmatprep.subr.mxu0 0.0
    %817 = vmatpush1.msra.mxu0 %v651
    %818 = vmatprep.subr.mxu0 0.0
    %819 = vmatpush1.msra.mxu0 %v652
    %820 = vmatprep.subr.mxu0 0.0
    %821 = vmatpush1.msra.mxu0 %v653
    %822 = vmatprep.subr.mxu0 0.0
    %823 = vmatpush1.msra.mxu0 %v654
    %824 = vmatprep.subr.mxu0 0.0
    %825 = vmatpush1.msra.mxu0 %v655
    %826 = vmatprep.subr.mxu0 0.0
    %827 = vmatpush1.msra.mxu0 %v656
    %828 = vmatprep.subr.mxu0 0.0
    %829 = vmatpush1.msra.mxu0 %v657
    %830 = vmatprep.subr.mxu0 0.0
    %831 = vmatpush1.msra.mxu0 %v658
    %832 = vmatprep.subr.mxu0 0.0
    %833 = vmatpush1.msra.mxu0 %v659
    %834 = vmatprep.subr.mxu0 0.0
    %835 = vmatpush1.msra.mxu0 %v660
    %836 = vmatprep.subr.mxu0 0.0
    %837 = vmatpush1.msra.mxu0 %v661
    %838 = vmatprep.subr.mxu0 0.0
    %839 = vmatpush1.msra.mxu0 %v662
    %840 = vmatprep.subr.mxu0 0.0
    %841 = vmatpush1.msra.mxu0 %v663
    %842 = vmatprep.subr.mxu0 0.0
    %843 = vmatpush1.msra.mxu0 0.0
    %844 = vmatprep.subr.mxu0 0.0
    %845 = vmatpush1.msra.mxu0 0.0
    %846 = vmatprep.subr.mxu0 0.0
    %847 = vmatpush1.msra.mxu0 0.0
    %848 = vmatprep.subr.mxu0 0.0
    %849 = vmatpush1.msra.mxu0 0.0
    %850 = vmatprep.subr.mxu0 0.0
    %851 = vmatpush1.msra.mxu0 0.0
    %852 = vmatprep.subr.mxu0 0.0
    %853 = vmatpush1.msra.mxu0 0.0
    %854 = vmatprep.subr.mxu0 0.0
    %855 = vmatpush1.msra.mxu0 0.0
    %856 = vmatprep.subr.mxu0 0.0
    %857 = vmatpush1.msra.mxu0 0.0
    %858 = vmatprep.subr.mxu0 0.0
    %859 = vmatpush1.msra.mxu0 0.0
    %860 = vmatprep.subr.mxu0 0.0
    %861 = vmatpush1.msra.mxu0 0.0
    %862 = vmatprep.subr.mxu0 0.0
    %863 = vmatpush1.msra.mxu0 0.0
    %864 = vmatprep.subr.mxu0 0.0
    %865 = vmatpush1.msra.mxu0 0.0
    %866 = vmatprep.subr.mxu0 0.0
    %867 = vmatpush1.msra.mxu0 0.0
    %868 = vmatprep.subr.mxu0 0.0
    %869 = vmatpush1.msra.mxu0 0.0
    %870 = vmatprep.subr.mxu0 0.0
    %871 = vmatpush1.msra.mxu0 0.0
    %872 = vmatprep.subr.mxu0 0.0
    %873 = vmatpush1.msra.mxu0 0.0
    %874 = vmatprep.mubr.f32.mxu0 0.0
    %875 = vmatmul.mubr.f32.gmra.mrb[0].mxu0 %v647
    %v876 = vpop.f32.mrb[0].mxu0
    %v877 = vadd.f32 0.0, %v876
    %v878 = vpop.f32.mrb[0].mxu0
    %879 = vdwg.mxu0
    %v881 = vsel %vm736, %v877, 0
    %883 = vmatprep.subr.mxu0 0.0
    %884 = vmatpush1.msra.mxu0 %v734
    %885 = vmatprep.subr.mxu0 0.0
    %886 = vmatpush1.msra.mxu0 %v735
    %887 = vmatprep.subr.mxu0 0.0
    %888 = vmatpush1.msra.mxu0 0.0
    %889 = vmatprep.subr.mxu0 0.0
    %890 = vmatpush1.msra.mxu0 0.0
    %891 = vmatprep.subr.mxu0 0.0
    %892 = vmatpush1.msra.mxu0 0.0
    %893 = vmatprep.subr.mxu0 0.0
    %894 = vmatpush1.msra.mxu0 0.0
    %895 = vmatprep.subr.mxu0 0.0
    %896 = vmatpush1.msra.mxu0 0.0
    %897 = vmatprep.subr.mxu0 0.0
    %898 = vmatpush1.msra.mxu0 0.0
    %899 = vmatprep.subr.mxu0 0.0
    %900 = vmatpush1.msra.mxu0 0.0
    %901 = vmatprep.subr.mxu0 0.0
    %902 = vmatpush1.msra.mxu0 0.0
    %903 = vmatprep.subr.mxu0 0.0
    %904 = vmatpush1.msra.mxu0 0.0
    %905 = vmatprep.subr.mxu0 0.0
    %906 = vmatpush1.msra.mxu0 0.0
    %907 = vmatprep.subr.mxu0 0.0
    %908 = vmatpush1.msra.mxu0 0.0
    %909 = vmatprep.subr.mxu0 0.0
    %910 = vmatpush1.msra.mxu0 0.0
    %911 = vmatprep.subr.mxu0 0.0
    %912 = vmatpush1.msra.mxu0 0.0
    %913 = vmatprep.subr.mxu0 0.0
    %914 = vmatpush1.msra.mxu0 0.0
    %915 = vmatprep.subr.mxu0 0.0
    %916 = vmatpush1.msra.mxu0 0.0
    %917 = vmatprep.subr.mxu0 0.0
    %918 = vmatpush1.msra.mxu0 0.0
    %919 = vmatprep.subr.mxu0 0.0
    %920 = vmatpush1.msra.mxu0 0.0
    %921 = vmatprep.subr.mxu0 0.0
    %922 = vmatpush1.msra.mxu0 0.0
    %923 = vmatprep.subr.mxu0 0.0
    %924 = vmatpush1.msra.mxu0 0.0
    %925 = vmatprep.subr.mxu0 0.0
    %926 = vmatpush1.msra.mxu0 0.0
    %927 = vmatprep.subr.mxu0 0.0
    %928 = vmatpush1.msra.mxu0 0.0
    %929 = vmatprep.subr.mxu0 0.0
    %930 = vmatpush1.msra.mxu0 0.0
    %931 = vmatprep.subr.mxu0 0.0
    %932 = vmatpush1.msra.mxu0 0.0
    %933 = vmatprep.subr.mxu0 0.0
    %934 = vmatpush1.msra.mxu0 0.0
    %935 = vmatprep.subr.mxu0 0.0
    %936 = vmatpush1.msra.mxu0 0.0
    %937 = vmatprep.subr.mxu0 0.0
    %938 = vmatpush1.msra.mxu0 0.0
    %939 = vmatprep.subr.mxu0 0.0
    %940 = vmatpush1.msra.mxu0 0.0
    %941 = vmatprep.subr.mxu0 0.0
    %942 = vmatpush1.msra.mxu0 0.0
    %943 = vmatprep.subr.mxu0 0.0
    %944 = vmatpush1.msra.mxu0 0.0
    %945 = vmatprep.subr.mxu0 0.0
    %946 = vmatpush1.msra.mxu0 0.0
    %947 = vmatprep.mubr.f32.mxu0 0.0
    %948 = vmatmul.mubr.f32.gmra.mrb[0].mxu0 %v881
    %v949 = vpop.f32.mrb[0].mxu0
    %v950 = vadd.f32 0.0, %v949
    %v951 = vpop.f32.mrb[0].mxu0
    %952 = vdwg.mxu0
    %v953 = vmul.f32 %v807, 0.001953125
    %v954 = vmul.f32 %v950, 0.001953125
    %v955 = vmul.f32 %v953, %v953
    %v956 = vsub.f32 %v954, %v955
    %v957 = vmax.f32 %v956, 0.0
    %v958 = vld [vmem:[#allocation6] sm:$0x1]
    %v959 = vadd.f32 %v957, 1e-05
    %v960 = vrsqrt.pop %v959
    %v961 = vmul.f32 %v958, %v960
    %v962 = vld [vmem:[#allocation7] sm:$0x1]
    %v963 = vmul.f32 %v953, %v961
    %v964 = vsub.f32 %v962, %v963
    %v966 = vlaneseq
    %v967 = vshrl.u32 %v966, 7
    %v968 = vsub.s32 0, %v967
    %v969 = vrot.slane %v961, %v968
    %v971 = vmul.f32 %v528, %v969
    %v972 = vmul.f32 %v531, %v969
    %v973 = vmul.f32 %v536, %v969
    %v974 = vmul.f32 %v539, %v969
    %v975 = vmul.f32 %v544, %v969
    %v976 = vmul.f32 %v547, %v969
    %v977 = vmul.f32 %v552, %v969
    %v978 = vmul.f32 %v555, %v969
    %v979 = vmul.f32 %v560, %v969
    %v980 = vmul.f32 %v563, %v969
    %v981 = vmul.f32 %v568, %v969
    %v982 = vmul.f32 %v571, %v969
    %v983 = vmul.f32 %v576, %v969
    %v984 = vmul.f32 %v579, %v969
    %v985 = vmul.f32 %v584, %v969
    %v986 = vmul.f32 %v587, %v969
    %v988 = vlaneseq
    %v989 = vshrl.u32 %v988, 7
    %v990 = vsub.s32 0, %v989
    %v991 = vrot.slane %v964, %v990
    %v993 = vadd.f32 %v971, %v991
    %v994 = vadd.f32 %v972, %v991
    %v995 = vadd.f32 %v973, %v991
    %v996 = vadd.f32 %v974, %v991
    %v997 = vadd.f32 %v975, %v991
    %v998 = vadd.f32 %v976, %v991
    %v999 = vadd.f32 %v977, %v991
    %v1000 = vadd.f32 %v978, %v991
    %v1001 = vadd.f32 %v979, %v991
    %v1002 = vadd.f32 %v980, %v991
    %v1003 = vadd.f32 %v981, %v991
    %v1004 = vadd.f32 %v982, %v991
    %v1005 = vadd.f32 %v983, %v991
    %v1006 = vadd.f32 %v984, %v991
    %v1007 = vadd.f32 %v985, %v991
    %v1008 = vadd.f32 %v986, %v991
    %v1009 = vmax.f32 %v993, 0.0
    %v1010 = vmax.f32 %v994, 0.0
    %v1011 = vmax.f32 %v995, 0.0
    %v1012 = vmax.f32 %v996, 0.0
    %v1013 = vmax.f32 %v997, 0.0
    %v1014 = vmax.f32 %v998, 0.0
    %v1015 = vmax.f32 %v999, 0.0
    %v1016 = vmax.f32 %v1000, 0.0
    %v1017 = vmax.f32 %v1001, 0.0
    %v1018 = vmax.f32 %v1002, 0.0
    %v1019 = vmax.f32 %v1003, 0.0
    %v1020 = vmax.f32 %v1004, 0.0
    %v1021 = vmax.f32 %v1005, 0.0
    %v1022 = vmax.f32 %v1006, 0.0
    %v1023 = vmax.f32 %v1007, 0.0
    %v1024 = vmax.f32 %v1008, 0.0
    %v1025 = vpack.c.bf16 %v1010, %v1009
    %v1026 = vpack.c.bf16 %v1012, %v1011
    %v1027 = vpack.c.bf16 %v1014, %v1013
    %v1028 = vpack.c.bf16 %v1016, %v1015
    %v1029 = vpack.c.bf16 %v1018, %v1017
    %v1030 = vpack.c.bf16 %v1020, %v1019
    %v1031 = vpack.c.bf16 %v1022, %v1021
    %v1032 = vpack.c.bf16 %v1024, %v1023
    %v1041 = vunpack.c.l.b16 %v1025
    %v1042 = vunpack.c.h.b16 %v1025
    %v1043 = vunpack.c.l.b16 %v1026
    %v1044 = vunpack.c.h.b16 %v1026
    %v1045 = vunpack.c.l.b16 %v1027
    %v1046 = vunpack.c.h.b16 %v1027
    %v1047 = vunpack.c.l.b16 %v1028
    %v1048 = vunpack.c.h.b16 %v1028
    %v1049 = vunpack.c.l.b16 %v1029
    %v1050 = vunpack.c.h.b16 %v1029
    %v1051 = vunpack.c.l.b16 %v1030
    %v1052 = vunpack.c.h.b16 %v1030
    %v1053 = vunpack.c.l.b16 %v1031
    %v1054 = vunpack.c.h.b16 %v1031
    %v1055 = vunpack.c.l.b16 %v1032
    %v1056 = vunpack.c.h.b16 %v1032
    %v1057 = vpack.c.b16 %v1041, %v1041
    %v1058 = vpack.c.b16 %v1042, %v1042
    %v1059 = vpack.c.b16 %v1043, %v1043
    %v1060 = vpack.c.b16 %v1044, %v1044
    %v1061 = vpack.c.b16 %v1045, %v1045
    %v1062 = vpack.c.b16 %v1046, %v1046
    %v1063 = vpack.c.b16 %v1047, %v1047
    %v1064 = vpack.c.b16 %v1048, %v1048
    %v1065 = vpack.c.b16 %v1049, %v1049
    %v1066 = vpack.c.b16 %v1050, %v1050
    %v1067 = vpack.c.b16 %v1051, %v1051
    %v1068 = vpack.c.b16 %v1052, %v1052
    %v1069 = vpack.c.b16 %v1053, %v1053
    %v1070 = vpack.c.b16 %v1054, %v1054
    %v1071 = vpack.c.b16 %v1055, %v1055
    %v1072 = vpack.c.b16 %v1056, %v1056
    %1089 = vst [vmem:[%s6] sm:$0xf] %v1057
    %1090 = vst [vmem:[%s6 + $0x4] sm:$0xf] %v1058
    %1091 = vst [vmem:[%s6 + $0x8] sm:$0xf] %v1059
    %1092 = vst [vmem:[%s6 + $0xc] sm:$0xf] %v1060
    %1093 = vst [vmem:[%s6 + $0x10] sm:$0xf] %v1061
    %1094 = vst [vmem:[%s6 + $0x14] sm:$0xf] %v1062
    %1095 = vst [vmem:[%s6 + $0x18] sm:$0xf] %v1063
    %1096 = vst [vmem:[%s6 + $0x1c] sm:$0xf] %v1064
    %1097 = vst [vmem:[%s6 + $0x20] sm:$0xf] %v1065
    %1098 = vst [vmem:[%s6 + $0x24] sm:$0xf] %v1066
    %1099 = vst [vmem:[%s6 + $0x28] sm:$0xf] %v1067
    %1100 = vst [vmem:[%s6 + $0x2c] sm:$0xf] %v1068
    %1101 = vst [vmem:[%s6 + $0x30] sm:$0xf] %v1069
    %1102 = vst [vmem:[%s6 + $0x34] sm:$0xf] %v1070
    %1103 = vst [vmem:[%s6 + $0x38] sm:$0xf] %v1071
    %1104 = vst [vmem:[%s6 + $0x3c] sm:$0xf] %v1072
    // Predicated region
    $region42: #{generator_forward.7} parent=1 // pred_check
      _
    $region43: #{generator_forward.7} parent=1 // pred_check_branch
      %1106 = sbr.rel (0) target = $region45
    $region44: #{generator_forward.7} parent=1 // pred_region
      _
    $region45: #{generator_forward.7} parent=1 // pred_fallthru
      _
    // Predicated region
    $region46: #{generator_forward.7} parent=1 // pred_check
      _
    $region47: #{generator_forward.7} parent=1 // pred_check_branch
      %1108 = sbr.rel (0) target = $region49
    $region48: #{generator_forward.7} parent=1 // pred_region
      _
    $region49: #{generator_forward.7} parent=1 // pred_fallthru
      _
    %1109 = vsyncpa [#allocation3], 1
    %1110 = vsyncpa [#allocation5], 1
    %1111 = vsyncpa [#allocation8], 1

// kernel: generator_forward.8
$region0: #{generator_forward.8}
  #allocation0 [shape = 'u32[]', space=smem, size = 0x4, offset = 0x4, fixed_abs, tag = 'smem constant byte address 0x4 - core index']
  #allocation1 [shape = 'u32[144,128]{1,0:T(1,128)}', space=vmem, size = 0x12000, scoped, tag = 'internal scratch']
  %s0 = inlined_call_operand.vmem [shape: bf16[512,144], index: 0, kind: input, shape index: {}]
  %s1 = inlined_call_operand.vmem [shape: bf16[144,128], index: 1, kind: input, shape index: {}]
  %s2 = inlined_call_operand.vmem [shape: f32[128,8], index: 2, kind: input, shape index: {}]
  %s3 = inlined_call_operand.vmem [shape: f32[8,128], index: 3, kind: input, shape index: {}]
  %s4 = inlined_call_operand.vmem [shape: f32[1,128], index: 4, kind: input, shape index: {}]
  %s5 = inlined_call_operand.vmem [shape: f32[1,128], index: 5, kind: input, shape index: {}]
  %s6 = inlined_call_operand.vmem [shape: bf16[512,128], index: 6, kind: output, shape index: {}]
  %s7 = sld [smem:[#allocation0]]
  $region34: #{generator_forward.8} parent=0
    _
  %s9 = ssub.s32 1, %s7
  %s10 = scalar_select 0, %s9, %s7
  // Predicated region
  $region2: #{generator_forward.8} parent=0 // pred_check
    _
  $region3: #{generator_forward.8} parent=0 // pred_check_branch
    %12 = sbr.rel (0) target = $region5
  $region4: #{generator_forward.8} parent=0 // pred_region
    _
  $region5: #{generator_forward.8} parent=0 // pred_fallthru
    _
  // Predicated region
  $region6: #{generator_forward.8} parent=0 // pred_check
    _
  $region7: #{generator_forward.8} parent=0 // pred_check_branch
    %14 = sbr.rel (0) target = $region9
  $region8: #{generator_forward.8} parent=0 // pred_region
    _
  $region9: #{generator_forward.8} parent=0 // pred_fallthru
    _
  // Predicated region
  $region10: #{generator_forward.8} parent=0 // pred_check
    _
  $region11: #{generator_forward.8} parent=0 // pred_check_branch
    %16 = sbr.rel (0) target = $region13
  $region12: #{generator_forward.8} parent=0 // pred_region
    _
  $region13: #{generator_forward.8} parent=0 // pred_fallthru
    _
  // Predicated region
  $region14: #{generator_forward.8} parent=0 // pred_check
    _
  $region15: #{generator_forward.8} parent=0 // pred_check_branch
    %18 = sbr.rel (0) target = $region17
  $region16: #{generator_forward.8} parent=0 // pred_region
    _
  $region17: #{generator_forward.8} parent=0 // pred_fallthru
    _
  // Predicated region
  $region18: #{generator_forward.8} parent=0 // pred_check
    _
  $region19: #{generator_forward.8} parent=0 // pred_check_branch
    %20 = sbr.rel (0) target = $region21
  $region20: #{generator_forward.8} parent=0 // pred_region
    _
  $region21: #{generator_forward.8} parent=0 // pred_fallthru
    _
  // Predicated region
  $region22: #{generator_forward.8} parent=0 // pred_check
    _
  $region23: #{generator_forward.8} parent=0 // pred_check_branch
    %22 = sbr.rel (0) target = $region25
  $region24: #{generator_forward.8} parent=0 // pred_region
    _
  $region25: #{generator_forward.8} parent=0 // pred_fallthru
    _
  %v24 = vld [vmem:[%s0] sm:$0xff]
  %v25 = vld [vmem:[%s0 + $0x8] sm:$0xff]
  %v26 = vld [vmem:[%s0 + $0x10] sm:$0xff]
  %v27 = vld [vmem:[%s0 + $0x18] sm:$0xff]
  %v28 = vld [vmem:[%s0 + $0x20] sm:$0xff]
  %v29 = vld [vmem:[%s0 + $0x28] sm:$0xff]
  %v30 = vld [vmem:[%s0 + $0x30] sm:$0xff]
  %v31 = vld [vmem:[%s0 + $0x38] sm:$0xff]
  %v32 = vld [vmem:[%s0 + $0x40] sm:$0xff]
  %v33 = vld [vmem:[%s0 + $0x48] sm:$0xff]
  %v34 = vld [vmem:[%s0 + $0x50] sm:$0xff]
  %v35 = vld [vmem:[%s0 + $0x58] sm:$0xff]
  %v36 = vld [vmem:[%s0 + $0x60] sm:$0xff]
  %v37 = vld [vmem:[%s0 + $0x68] sm:$0xff]
  %v38 = vld [vmem:[%s0 + $0x70] sm:$0xff]
  %v39 = vld [vmem:[%s0 + $0x78] sm:$0xff]
  %v40 = vld [vmem:[%s0 + $0x80] sm:$0xff]
  %v41 = vld [vmem:[%s0 + $0x88] sm:$0xff]
  %v42 = vld [vmem:[%s0 + $0x90] sm:$0xff]
  %v43 = vld [vmem:[%s0 + $0x98] sm:$0xff]
  %v44 = vld [vmem:[%s0 + $0xa0] sm:$0xff]
  %v45 = vld [vmem:[%s0 + $0xa8] sm:$0xff]
  %v46 = vld [vmem:[%s0 + $0xb0] sm:$0xff]
  %v47 = vld [vmem:[%s0 + $0xb8] sm:$0xff]
  %v48 = vld [vmem:[%s0 + $0xc0] sm:$0xff]
  %v49 = vld [vmem:[%s0 + $0xc8] sm:$0xff]
  %v50 = vld [vmem:[%s0 + $0xd0] sm:$0xff]
  %v51 = vld [vmem:[%s0 + $0xd8] sm:$0xff]
  %v52 = vld [vmem:[%s0 + $0xe0] sm:$0xff]
  %v53 = vld [vmem:[%s0 + $0xe8] sm:$0xff]
  %v54 = vld [vmem:[%s0 + $0xf0] sm:$0xff]
  %v55 = vld [vmem:[%s0 + $0xf8] sm:$0xff]
  %v56 = vld [vmem:[%s0 + $0x100] sm:$0xff]
  %v57 = vld [vmem:[%s0 + $0x108] sm:$0xff]
  %v58 = vld [vmem:[%s0 + $0x110] sm:$0xff]
  %v59 = vld [vmem:[%s0 + $0x118] sm:$0xff]
  %v60 = vld [vmem:[%s0 + $0x120] sm:$0xff]
  %v61 = vld [vmem:[%s0 + $0x128] sm:$0xff]
  %v62 = vld [vmem:[%s0 + $0x130] sm:$0xff]
  %v63 = vld [vmem:[%s0 + $0x138] sm:$0xff]
  %v64 = vld [vmem:[%s0 + $0x140] sm:$0xff]
  %v65 = vld [vmem:[%s0 + $0x148] sm:$0xff]
  %v66 = vld [vmem:[%s0 + $0x150] sm:$0xff]
  %v67 = vld [vmem:[%s0 + $0x158] sm:$0xff]
  %v68 = vld [vmem:[%s0 + $0x160] sm:$0xff]
  %v69 = vld [vmem:[%s0 + $0x168] sm:$0xff]
  %v70 = vld [vmem:[%s0 + $0x170] sm:$0xff]
  %v71 = vld [vmem:[%s0 + $0x178] sm:$0xff]
  %v72 = vld [vmem:[%s0 + $0x180] sm:$0xff]
  %v73 = vld [vmem:[%s0 + $0x188] sm:$0xff]
  %v74 = vld [vmem:[%s0 + $0x190] sm:$0xff]
  %v75 = vld [vmem:[%s0 + $0x198] sm:$0xff]
  %v76 = vld [vmem:[%s0 + $0x1a0] sm:$0xff]
  %v77 = vld [vmem:[%s0 + $0x1a8] sm:$0xff]
  %v78 = vld [vmem:[%s0 + $0x1b0] sm:$0xff]
  %v79 = vld [vmem:[%s0 + $0x1b8] sm:$0xff]
  %v80 = vld [vmem:[%s0 + $0x1c0] sm:$0xff]
  %v81 = vld [vmem:[%s0 + $0x1c8] sm:$0xff]
  %v82 = vld [vmem:[%s0 + $0x1d0] sm:$0xff]
  %v83 = vld [vmem:[%s0 + $0x1d8] sm:$0xff]
  %v84 = vld [vmem:[%s0 + $0x1e0] sm:$0xff]
  %v85 = vld [vmem:[%s0 + $0x1e8] sm:$0xff]
  %v86 = vld [vmem:[%s0 + $0x1f0] sm:$0xff]
  %v87 = vld [vmem:[%s0 + $0x1f8] sm:$0xff]
  %v88 = vld [vmem:[%s1] sm:$0xf]
  %v89 = vld [vmem:[%s1 + $0x4] sm:$0xf]
  %v90 = vld [vmem:[%s1 + $0x8] sm:$0xf]
  %v91 = vld [vmem:[%s1 + $0xc] sm:$0xf]
  %v92 = vld [vmem:[%s1 + $0x10] sm:$0xf]
  %v93 = vld [vmem:[%s1 + $0x14] sm:$0xf]
  %v94 = vld [vmem:[%s1 + $0x18] sm:$0xf]
  %v95 = vld [vmem:[%s1 + $0x1c] sm:$0xf]
  %v96 = vld [vmem:[%s1 + $0x20] sm:$0xf]
  %v97 = vld [vmem:[%s1 + $0x24] sm:$0xf]
  %v98 = vld [vmem:[%s1 + $0x28] sm:$0xf]
  %v99 = vld [vmem:[%s1 + $0x2c] sm:$0xf]
  %v100 = vld [vmem:[%s1 + $0x30] sm:$0xf]
  %v101 = vld [vmem:[%s1 + $0x34] sm:$0xf]
  %v102 = vld [vmem:[%s1 + $0x38] sm:$0xf]
  %v103 = vld [vmem:[%s1 + $0x3c] sm:$0xf]
  %v104 = vld [vmem:[%s1 + $0x40] sm:$0xf]
  %v105 = vld [vmem:[%s1 + $0x44] sm:$0xf]
  %v170 = vunpack.c.l.b16 %v24
  %v171 = vunpack.c.h.b16 %v24
  %v172 = vunpack.c.l.b16 %v25
  %v173 = vunpack.c.h.b16 %v25
  %v174 = vunpack.c.l.b16 %v26
  %v175 = vunpack.c.h.b16 %v26
  %v176 = vunpack.c.l.b16 %v27
  %v177 = vunpack.c.h.b16 %v27
  %v178 = vunpack.c.l.b16 %v28
  %v179 = vunpack.c.h.b16 %v28
  %v180 = vunpack.c.l.b16 %v29
  %v181 = vunpack.c.h.b16 %v29
  %v182 = vunpack.c.l.b16 %v30
  %v183 = vunpack.c.h.b16 %v30
  %v184 = vunpack.c.l.b16 %v31
  %v185 = vunpack.c.h.b16 %v31
  %v186 = vunpack.c.l.b16 %v32
  %v187 = vunpack.c.h.b16 %v32
  %v188 = vunpack.c.l.b16 %v33
  %v189 = vunpack.c.h.b16 %v33
  %v190 = vunpack.c.l.b16 %v34
  %v191 = vunpack.c.h.b16 %v34
  %v192 = vunpack.c.l.b16 %v35
  %v193 = vunpack.c.h.b16 %v35
  %v194 = vunpack.c.l.b16 %v36
  %v195 = vunpack.c.h.b16 %v36
  %v196 = vunpack.c.l.b16 %v37
  %v197 = vunpack.c.h.b16 %v37
  %v198 = vunpack.c.l.b16 %v38
  %v199 = vunpack.c.h.b16 %v38
  %v200 = vunpack.c.l.b16 %v39
  %v201 = vunpack.c.h.b16 %v39
  %v202 = vunpack.c.l.b16 %v40
  %v203 = vunpack.c.h.b16 %v40
  %v204 = vunpack.c.l.b16 %v41
  %v205 = vunpack.c.h.b16 %v41
  %v206 = vunpack.c.l.b16 %v42
  %v207 = vunpack.c.h.b16 %v42
  %v208 = vunpack.c.l.b16 %v43
  %v209 = vunpack.c.h.b16 %v43
  %v210 = vunpack.c.l.b16 %v44
  %v211 = vunpack.c.h.b16 %v44
  %v212 = vunpack.c.l.b16 %v45
  %v213 = vunpack.c.h.b16 %v45
  %v214 = vunpack.c.l.b16 %v46
  %v215 = vunpack.c.h.b16 %v46
  %v216 = vunpack.c.l.b16 %v47
  %v217 = vunpack.c.h.b16 %v47
  %v218 = vunpack.c.l.b16 %v48
  %v219 = vunpack.c.h.b16 %v48
  %v220 = vunpack.c.l.b16 %v49
  %v221 = vunpack.c.h.b16 %v49
  %v222 = vunpack.c.l.b16 %v50
  %v223 = vunpack.c.h.b16 %v50
  %v224 = vunpack.c.l.b16 %v51
  %v225 = vunpack.c.h.b16 %v51
  %v226 = vunpack.c.l.b16 %v52
  %v227 = vunpack.c.h.b16 %v52
  %v228 = vunpack.c.l.b16 %v53
  %v229 = vunpack.c.h.b16 %v53
  %v230 = vunpack.c.l.b16 %v54
  %v231 = vunpack.c.h.b16 %v54
  %v232 = vunpack.c.l.b16 %v55
  %v233 = vunpack.c.h.b16 %v55
  %v234 = vunpack.c.l.b16 %v56
  %v235 = vunpack.c.h.b16 %v56
  %v236 = vunpack.c.l.b16 %v57
  %v237 = vunpack.c.h.b16 %v57
  %v238 = vunpack.c.l.b16 %v58
  %v239 = vunpack.c.h.b16 %v58
  %v240 = vunpack.c.l.b16 %v59
  %v241 = vunpack.c.h.b16 %v59
  %v242 = vunpack.c.l.b16 %v60
  %v243 = vunpack.c.h.b16 %v60
  %v244 = vunpack.c.l.b16 %v61
  %v245 = vunpack.c.h.b16 %v61
  %v246 = vunpack.c.l.b16 %v62
  %v247 = vunpack.c.h.b16 %v62
  %v248 = vunpack.c.l.b16 %v63
  %v249 = vunpack.c.h.b16 %v63
  %v250 = vunpack.c.l.b16 %v64
  %v251 = vunpack.c.h.b16 %v64
  %v252 = vunpack.c.l.b16 %v65
  %v253 = vunpack.c.h.b16 %v65
  %v254 = vunpack.c.l.b16 %v66
  %v255 = vunpack.c.h.b16 %v66
  %v256 = vunpack.c.l.b16 %v67
  %v257 = vunpack.c.h.b16 %v67
  %v258 = vunpack.c.l.b16 %v68
  %v259 = vunpack.c.h.b16 %v68
  %v260 = vunpack.c.l.b16 %v69
  %v261 = vunpack.c.h.b16 %v69
  %v262 = vunpack.c.l.b16 %v70
  %v263 = vunpack.c.h.b16 %v70
  %v264 = vunpack.c.l.b16 %v71
  %v265 = vunpack.c.h.b16 %v71
  %v266 = vunpack.c.l.b16 %v72
  %v267 = vunpack.c.h.b16 %v72
  %v268 = vunpack.c.l.b16 %v73
  %v269 = vunpack.c.h.b16 %v73
  %v270 = vunpack.c.l.b16 %v74
  %v271 = vunpack.c.h.b16 %v74
  %v272 = vunpack.c.l.b16 %v75
  %v273 = vunpack.c.h.b16 %v75
  %v274 = vunpack.c.l.b16 %v76
  %v275 = vunpack.c.h.b16 %v76
  %v276 = vunpack.c.l.b16 %v77
  %v277 = vunpack.c.h.b16 %v77
  %v278 = vunpack.c.l.b16 %v78
  %v279 = vunpack.c.h.b16 %v78
  %v280 = vunpack.c.l.b16 %v79
  %v281 = vunpack.c.h.b16 %v79
  %v282 = vunpack.c.l.b16 %v80
  %v283 = vunpack.c.h.b16 %v80
  %v284 = vunpack.c.l.b16 %v81
  %v285 = vunpack.c.h.b16 %v81
  %v286 = vunpack.c.l.b16 %v82
  %v287 = vunpack.c.h.b16 %v82
  %v288 = vunpack.c.l.b16 %v83
  %v289 = vunpack.c.h.b16 %v83
  %v290 = vunpack.c.l.b16 %v84
  %v291 = vunpack.c.h.b16 %v84
  %v292 = vunpack.c.l.b16 %v85
  %v293 = vunpack.c.h.b16 %v85
  %v294 = vunpack.c.l.b16 %v86
  %v295 = vunpack.c.h.b16 %v86
  %v296 = vunpack.c.l.b16 %v87
  %v297 = vunpack.c.h.b16 %v87
  %v298 = vpack.c.b16 %v172, %v170
  %v299 = vpack.c.b16 %v173, %v171
  %v300 = vpack.c.b16 %v176, %v174
  %v301 = vpack.c.b16 %v177, %v175
  %v302 = vpack.c.b16 %v180, %v178
  %v303 = vpack.c.b16 %v181, %v179
  %v304 = vpack.c.b16 %v184, %v182
  %v305 = vpack.c.b16 %v185, %v183
  %v306 = vpack.c.b16 %v188, %v186
  %v307 = vpack.c.b16 %v189, %v187
  %v308 = vpack.c.b16 %v192, %v190
  %v309 = vpack.c.b16 %v193, %v191
  %v310 = vpack.c.b16 %v196, %v194
  %v311 = vpack.c.b16 %v197, %v195
  %v312 = vpack.c.b16 %v200, %v198
  %v313 = vpack.c.b16 %v201, %v199
  %v314 = vpack.c.b16 %v204, %v202
  %v315 = vpack.c.b16 %v205, %v203
  %v316 = vpack.c.b16 %v208, %v206
  %v317 = vpack.c.b16 %v209, %v207
  %v318 = vpack.c.b16 %v212, %v210
  %v319 = vpack.c.b16 %v213, %v211
  %v320 = vpack.c.b16 %v216, %v214
  %v321 = vpack.c.b16 %v217, %v215
  %v322 = vpack.c.b16 %v220, %v218
  %v323 = vpack.c.b16 %v221, %v219
  %v324 = vpack.c.b16 %v224, %v222
  %v325 = vpack.c.b16 %v225, %v223
  %v326 = vpack.c.b16 %v228, %v226
  %v327 = vpack.c.b16 %v229, %v227
  %v328 = vpack.c.b16 %v232, %v230
  %v329 = vpack.c.b16 %v233, %v231
  %v330 = vpack.c.b16 %v236, %v234
  %v331 = vpack.c.b16 %v237, %v235
  %v332 = vpack.c.b16 %v240, %v238
  %v333 = vpack.c.b16 %v241, %v239
  %v334 = vpack.c.b16 %v244, %v242
  %v335 = vpack.c.b16 %v245, %v243
  %v336 = vpack.c.b16 %v248, %v246
  %v337 = vpack.c.b16 %v249, %v247
  %v338 = vpack.c.b16 %v252, %v250
  %v339 = vpack.c.b16 %v253, %v251
  %v340 = vpack.c.b16 %v256, %v254
  %v341 = vpack.c.b16 %v257, %v255
  %v342 = vpack.c.b16 %v260, %v258
  %v343 = vpack.c.b16 %v261, %v259
  %v344 = vpack.c.b16 %v264, %v262
  %v345 = vpack.c.b16 %v265, %v263
  %v346 = vpack.c.b16 %v268, %v266
  %v347 = vpack.c.b16 %v269, %v267
  %v348 = vpack.c.b16 %v272, %v270
  %v349 = vpack.c.b16 %v273, %v271
  %v350 = vpack.c.b16 %v276, %v274
  %v351 = vpack.c.b16 %v277, %v275
  %v352 = vpack.c.b16 %v280, %v278
  %v353 = vpack.c.b16 %v281, %v279
  %v354 = vpack.c.b16 %v284, %v282
  %v355 = vpack.c.b16 %v285, %v283
  %v356 = vpack.c.b16 %v288, %v286
  %v357 = vpack.c.b16 %v289, %v287
  %v358 = vpack.c.b16 %v292, %v290
  %v359 = vpack.c.b16 %v293, %v291
  %v360 = vpack.c.b16 %v296, %v294
  %v361 = vpack.c.b16 %v297, %v295
  %v412 = vunpack.c.l.b16 %v88
  %v413 = vunpack.c.l.b16 %v89
  %v414 = vunpack.c.l.b16 %v90
  %v415 = vunpack.c.l.b16 %v91
  %v416 = vunpack.c.l.b16 %v92
  %v417 = vunpack.c.l.b16 %v93
  %v418 = vunpack.c.l.b16 %v94
  %v419 = vunpack.c.l.b16 %v95
  %v420 = vunpack.c.l.b16 %v96
  %v421 = vunpack.c.l.b16 %v97
  %v422 = vunpack.c.l.b16 %v98
  %v423 = vunpack.c.l.b16 %v99
  %v424 = vunpack.c.l.b16 %v100
  %v425 = vunpack.c.l.b16 %v101
  %v426 = vunpack.c.l.b16 %v102
  %v427 = vunpack.c.l.b16 %v103
  %v428 = vunpack.c.l.b16 %v104
  %v429 = vunpack.c.l.b16 %v105
  %v430 = vpack.c.b16 %v413, %v412
  %v431 = vpack.c.b16 %v415, %v414
  %v432 = vpack.c.b16 %v417, %v416
  %v433 = vpack.c.b16 %v419, %v418
  %v434 = vpack.c.b16 %v421, %v420
  %v435 = vpack.c.b16 %v423, %v422
  %v436 = vpack.c.b16 %v425, %v424
  %v437 = vpack.c.b16 %v427, %v426
  %v438 = vpack.c.b16 %v429, %v428
  %vm448 = vcmask 130048
  %v450 = vsel %vm448, %v299, 0
  %v453 = vsel %vm448, %v301, 0
  %v456 = vsel %vm448, %v303, 0
  %v459 = vsel %vm448, %v305, 0
  %v462 = vsel %vm448, %v307, 0
  %v465 = vsel %vm448, %v309, 0
  %v468 = vsel %vm448, %v311, 0
  %v471 = vsel %vm448, %v313, 0
  %v474 = vsel %vm448, %v315, 0
  %v477 = vsel %vm448, %v317, 0
  %v480 = vsel %vm448, %v319, 0
  %v483 = vsel %vm448, %v321, 0
  %v486 = vsel %vm448, %v323, 0
  %v489 = vsel %vm448, %v325, 0
  %v492 = vsel %vm448, %v327, 0
  %v495 = vsel %vm448, %v329, 0
  %v498 = vsel %vm448, %v331, 0
  %v501 = vsel %vm448, %v333, 0
  %v504 = vsel %vm448, %v335, 0
  %v507 = vsel %vm448, %v337, 0
  %v510 = vsel %vm448, %v339, 0
  %v513 = vsel %vm448, %v341, 0
  %v516 = vsel %vm448, %v343, 0
  %v519 = vsel %vm448, %v345, 0
  %v522 = vsel %vm448, %v347, 0
  %v525 = vsel %vm448, %v349, 0
  %v528 = vsel %vm448, %v351, 0
  %v531 = vsel %vm448, %v353, 0
  %v534 = vsel %vm448, %v355, 0
  %v537 = vsel %vm448, %v357, 0
  %v540 = vsel %vm448, %v359, 0
  %v543 = vsel %vm448, %v361, 0
  %545 = vmatprep.subr.bf16.mxu0 0
  %546 = vmatpush1.bf16.msra.mxu0 %v430
  %547 = vmatprep.subr.bf16.mxu0 0
  %548 = vmatpush1.bf16.msra.mxu0 %v431
  %549 = vmatprep.subr.bf16.mxu0 0
  %550 = vmatpush1.bf16.msra.mxu0 %v432
  %551 = vmatprep.subr.bf16.mxu0 0
  %552 = vmatpush1.bf16.msra.mxu0 %v433
  %553 = vmatprep.subr.bf16.mxu0 0
  %554 = vmatpush1.bf16.msra.mxu0 %v434
  %555 = vmatprep.subr.bf16.mxu0 0
  %556 = vmatpush1.bf16.msra.mxu0 %v435
  %557 = vmatprep.subr.bf16.mxu0 0
  %558 = vmatpush1.bf16.msra.mxu0 %v436
  %559 = vmatprep.subr.bf16.mxu0 0
  %560 = vmatpush1.bf16.msra.mxu0 %v437
  %561 = vmatprep.subr.bf16.mxu0 0
  %562 = vmatpush1.bf16.msra.mxu0 %v438
  %563 = vmatprep.subr.bf16.mxu0 0
  %564 = vmatpush1.bf16.msra.mxu0 0
  %565 = vmatprep.subr.bf16.mxu0 0
  %566 = vmatpush1.bf16.msra.mxu0 0
  %567 = vmatprep.subr.bf16.mxu0 0
  %568 = vmatpush1.bf16.msra.mxu0 0
  %569 = vmatprep.subr.bf16.mxu0 0
  %570 = vmatpush1.bf16.msra.mxu0 0
  %571 = vmatprep.subr.bf16.mxu0 0
  %572 = vmatpush1.bf16.msra.mxu0 0
  %573 = vmatprep.subr.bf16.mxu0 0
  %574 = vmatpush1.bf16.msra.mxu0 0
  %575 = vmatprep.subr.bf16.mxu0 0
  %576 = vmatpush1.bf16.msra.mxu0 0
  %577 = vmatprep.mubr.bf16.mxu0 %v450
  %578 = vmatmul.mubr.bf16.gmra.mrb[0].mxu0 %v298
  %v579 = vpop.f32.mrb[0].mxu0
  %v580 = vadd.f32 0.0, %v579
  %v581 = vpop.f32.mrb[0].mxu0
  %v582 = vpop.f32.mrb[0].mxu0
  %v583 = vadd.f32 0.0, %v582
  %v584 = vpop.f32.mrb[0].mxu0
  %585 = vmatprep.mubr.bf16.mxu0 %v453
  %586 = vmatmul.mubr.bf16.gmra.mrb[0].mxu0 %v300
  %v587 = vpop.f32.mrb[0].mxu0
  %v588 = vadd.f32 0.0, %v587
  %v589 = vpop.f32.mrb[0].mxu0
  %v590 = vpop.f32.mrb[0].mxu0
  %v591 = vadd.f32 0.0, %v590
  %v592 = vpop.f32.mrb[0].mxu0
  %593 = vmatprep.mubr.bf16.mxu0 %v456
  %594 = vmatmul.mubr.bf16.gmra.mrb[0].mxu0 %v302
  %v595 = vpop.f32.mrb[0].mxu0
  %v596 = vadd.f32 0.0, %v595
  %v597 = vpop.f32.mrb[0].mxu0
  %v598 = vpop.f32.mrb[0].mxu0
  %v599 = vadd.f32 0.0, %v598
  %v600 = vpop.f32.mrb[0].mxu0
  %601 = vmatprep.mubr.bf16.mxu0 %v459
  %602 = vmatmul.mubr.bf16.gmra.mrb[0].mxu0 %v304
  %v603 = vpop.f32.mrb[0].mxu0
  %v604 = vadd.f32 0.0, %v603
  %v605 = vpop.f32.mrb[0].mxu0
  %v606 = vpop.f32.mrb[0].mxu0
  %v607 = vadd.f32 0.0, %v606
  %v608 = vpop.f32.mrb[0].mxu0
  %609 = vmatprep.mubr.bf16.mxu0 %v462
  %610 = vmatmul.mubr.bf16.gmra.mrb[0].mxu0 %v306
  %v611 = vpop.f32.mrb[0].mxu0
  %v612 = vadd.f32 0.0, %v611
  %v613 = vpop.f32.mrb[0].mxu0
  %v614 = vpop.f32.mrb[0].mxu0
  %v615 = vadd.f32 0.0, %v614
  %v616 = vpop.f32.mrb[0].mxu0
  %617 = vmatprep.mubr.bf16.mxu0 %v465
  %618 = vmatmul.mubr.bf16.gmra.mrb[0].mxu0 %v308
  %v619 = vpop.f32.mrb[0].mxu0
  %v620 = vadd.f32 0.0, %v619
  %v621 = vpop.f32.mrb[0].mxu0
  %v622 = vpop.f32.mrb[0].mxu0
  %v623 = vadd.f32 0.0, %v622
  %v624 = vpop.f32.mrb[0].mxu0
  %625 = vmatprep.mubr.bf16.mxu0 %v468
  %626 = vmatmul.mubr.bf16.gmra.mrb[0].mxu0 %v310
  %v627 = vpop.f32.mrb[0].mxu0
  %v628 = vadd.f32 0.0, %v627
  %v629 = vpop.f32.mrb[0].mxu0
  %v630 = vpop.f32.mrb[0].mxu0
  %v631 = vadd.f32 0.0, %v630
  %v632 = vpop.f32.mrb[0].mxu0
  %633 = vmatprep.mubr.bf16.mxu0 %v471
  %634 = vmatmul.mubr.bf16.gmra.mrb[0].mxu0 %v312
  %v635 = vpop.f32.mrb[0].mxu0
  %v636 = vadd.f32 0.0, %v635
  %v637 = vpop.f32.mrb[0].mxu0
  %v638 = vpop.f32.mrb[0].mxu0
  %v639 = vadd.f32 0.0, %v638
  %v640 = vpop.f32.mrb[0].mxu0
  %641 = vmatprep.mubr.bf16.mxu0 %v474
  %642 = vmatmul.mubr.bf16.gmra.mrb[0].mxu0 %v314
  %v643 = vpop.f32.mrb[0].mxu0
  %v644 = vadd.f32 0.0, %v643
  %v645 = vpop.f32.mrb[0].mxu0
  %v646 = vpop.f32.mrb[0].mxu0
  %v647 = vadd.f32 0.0, %v646
  %v648 = vpop.f32.mrb[0].mxu0
  %649 = vmatprep.mubr.bf16.mxu0 %v477
  %650 = vmatmul.mubr.bf16.gmra.mrb[0].mxu0 %v316
  %v651 = vpop.f32.mrb[0].mxu0
  %v652 = vadd.f32 0.0, %v651
  %v653 = vpop.f32.mrb[0].mxu0
  %v654 = vpop.f32.mrb[0].mxu0
  %v655 = vadd.f32 0.0, %v654
  %v656 = vpop.f32.mrb[0].mxu0
  %657 = vmatprep.mubr.bf16.mxu0 %v480
  %658 = vmatmul.mubr.bf16.gmra.mrb[0].mxu0 %v318
  %v659 = vpop.f32.mrb[0].mxu0
  %v660 = vadd.f32 0.0, %v659
  %v661 = vpop.f32.mrb[0].mxu0
  %v662 = vpop.f32.mrb[0].mxu0
  %v663 = vadd.f32 0.0, %v662
  %v664 = vpop.f32.mrb[0].mxu0
  %665 = vmatprep.mubr.bf16.mxu0 %v483
  %666 = vmatmul.mubr.bf16.gmra.mrb[0].mxu0 %v320
  %v667 = vpop.f32.mrb[0].mxu0
  %v668 = vadd.f32 0.0, %v667
  %v669 = vpop.f32.mrb[0].mxu0
  %v670 = vpop.f32.mrb[0].mxu0
  %v671 = vadd.f32 0.0, %v670
  %v672 = vpop.f32.mrb[0].mxu0
  %673 = vmatprep.mubr.bf16.mxu0 %v486
  %674 = vmatmul.mubr.bf16.gmra.mrb[0].mxu0 %v322
  %v675 = vpop.f32.mrb[0].mxu0
  %v676 = vadd.f32 0.0, %v675
  %v677 = vpop.f32.mrb[0].mxu0
  %v678 = vpop.f32.mrb[0].mxu0
  %v679 = vadd.f32 0.0, %v678
  %v680 = vpop.f32.mrb[0].mxu0
  %681 = vmatprep.mubr.bf16.mxu0 %v489
  %682 = vmatmul.mubr.bf16.gmra.mrb[0].mxu0 %v324
  %v683 = vpop.f32.mrb[0].mxu0
  %v684 = vadd.f32 0.0, %v683
  %v685 = vpop.f32.mrb[0].mxu0
  %v686 = vpop.f32.mrb[0].mxu0
  %v687 = vadd.f32 0.0, %v686
  %v688 = vpop.f32.mrb[0].mxu0
  %689 = vmatprep.mubr.bf16.mxu0 %v492
  %690 = vmatmul.mubr.bf16.gmra.mrb[0].mxu0 %v326
  %v691 = vpop.f32.mrb[0].mxu0
  %v692 = vadd.f32 0.0, %v691
  %v693 = vpop.f32.mrb[0].mxu0
  %v694 = vpop.f32.mrb[0].mxu0
  %v695 = vadd.f32 0.0, %v694
  %v696 = vpop.f32.mrb[0].mxu0
  %697 = vmatprep.mubr.bf16.mxu0 %v495
  %698 = vmatmul.mubr.bf16.gmra.mrb[0].mxu0 %v328
  %v699 = vpop.f32.mrb[0].mxu0
  %v700 = vadd.f32 0.0, %v699
  %v701 = vpop.f32.mrb[0].mxu0
  %v702 = vpop.f32.mrb[0].mxu0
  %v703 = vadd.f32 0.0, %v702
  %v704 = vpop.f32.mrb[0].mxu0
  %705 = vmatprep.mubr.bf16.mxu0 %v498
  %706 = vmatmul.mubr.bf16.gmra.mrb[0].mxu0 %v330
  %v707 = vpop.f32.mrb[0].mxu0
  %v708 = vadd.f32 0.0, %v707
  %v709 = vpop.f32.mrb[0].mxu0
  %v710 = vpop.f32.mrb[0].mxu0
  %v711 = vadd.f32 0.0, %v710
  %v712 = vpop.f32.mrb[0].mxu0
  %713 = vmatprep.mubr.bf16.mxu0 %v501
  %714 = vmatmul.mubr.bf16.gmra.mrb[0].mxu0 %v332
  %v715 = vpop.f32.mrb[0].mxu0
  %v716 = vadd.f32 0.0, %v715
  %v717 = vpop.f32.mrb[0].mxu0
  %v718 = vpop.f32.mrb[0].mxu0
  %v719 = vadd.f32 0.0, %v718
  %v720 = vpop.f32.mrb[0].mxu0
  %721 = vmatprep.mubr.bf16.mxu0 %v504
  %722 = vmatmul.mubr.bf16.gmra.mrb[0].mxu0 %v334
  %v723 = vpop.f32.mrb[0].mxu0
  %v724 = vadd.f32 0.0, %v723
  %v725 = vpop.f32.mrb[0].mxu0
  %v726 = vpop.f32.mrb[0].mxu0
  %v727 = vadd.f32 0.0, %v726
  %v728 = vpop.f32.mrb[0].mxu0
  %729 = vmatprep.mubr.bf16.mxu0 %v507
  %730 = vmatmul.mubr.bf16.gmra.mrb[0].mxu0 %v336
  %v731 = vpop.f32.mrb[0].mxu0
  %v732 = vadd.f32 0.0, %v731
  %v733 = vpop.f32.mrb[0].mxu0
  %v734 = vpop.f32.mrb[0].mxu0
  %v735 = vadd.f32 0.0, %v734
  %v736 = vpop.f32.mrb[0].mxu0
  %737 = vmatprep.mubr.bf16.mxu0 %v510
  %738 = vmatmul.mubr.bf16.gmra.mrb[0].mxu0 %v338
  %v739 = vpop.f32.mrb[0].mxu0
  %v740 = vadd.f32 0.0, %v739
  %v741 = vpop.f32.mrb[0].mxu0
  %v742 = vpop.f32.mrb[0].mxu0
  %v743 = vadd.f32 0.0, %v742
  %v744 = vpop.f32.mrb[0].mxu0
  %745 = vmatprep.mubr.bf16.mxu0 %v513
  %746 = vmatmul.mubr.bf16.gmra.mrb[0].mxu0 %v340
  %v747 = vpop.f32.mrb[0].mxu0
  %v748 = vadd.f32 0.0, %v747
  %v749 = vpop.f32.mrb[0].mxu0
  %v750 = vpop.f32.mrb[0].mxu0
  %v751 = vadd.f32 0.0, %v750
  %v752 = vpop.f32.mrb[0].mxu0
  %753 = vmatprep.mubr.bf16.mxu0 %v516
  %754 = vmatmul.mubr.bf16.gmra.mrb[0].mxu0 %v342
  %v755 = vpop.f32.mrb[0].mxu0
  %v756 = vadd.f32 0.0, %v755
  %v757 = vpop.f32.mrb[0].mxu0
  %v758 = vpop.f32.mrb[0].mxu0
  %v759 = vadd.f32 0.0, %v758
  %v760 = vpop.f32.mrb[0].mxu0
  %761 = vmatprep.mubr.bf16.mxu0 %v519
  %762 = vmatmul.mubr.bf16.gmra.mrb[0].mxu0 %v344
  %v763 = vpop.f32.mrb[0].mxu0
  %v764 = vadd.f32 0.0, %v763
  %v765 = vpop.f32.mrb[0].mxu0
  %v766 = vpop.f32.mrb[0].mxu0
  %v767 = vadd.f32 0.0, %v766
  %v768 = vpop.f32.mrb[0].mxu0
  %769 = vmatprep.mubr.bf16.mxu0 %v522
  %770 = vmatmul.mubr.bf16.gmra.mrb[0].mxu0 %v346
  %v771 = vpop.f32.mrb[0].mxu0
  %v772 = vadd.f32 0.0, %v771
  %v773 = vpop.f32.mrb[0].mxu0
  %v774 = vpop.f32.mrb[0].mxu0
  %v775 = vadd.f32 0.0, %v774
  %v776 = vpop.f32.mrb[0].mxu0
  %777 = vmatprep.mubr.bf16.mxu0 %v525
  %778 = vmatmul.mubr.bf16.gmra.mrb[0].mxu0 %v348
  %v779 = vpop.f32.mrb[0].mxu0
  %v780 = vadd.f32 0.0, %v779
  %v781 = vpop.f32.mrb[0].mxu0
  %v782 = vpop.f32.mrb[0].mxu0
  %v783 = vadd.f32 0.0, %v782
  %v784 = vpop.f32.mrb[0].mxu0
  %785 = vmatprep.mubr.bf16.mxu0 %v528
  %786 = vmatmul.mubr.bf16.gmra.mrb[0].mxu0 %v350
  %v787 = vpop.f32.mrb[0].mxu0
  %v788 = vadd.f32 0.0, %v787
  %v789 = vpop.f32.mrb[0].mxu0
  %v790 = vpop.f32.mrb[0].mxu0
  %v791 = vadd.f32 0.0, %v790
  %v792 = vpop.f32.mrb[0].mxu0
  %793 = vmatprep.mubr.bf16.mxu0 %v531
  %794 = vmatmul.mubr.bf16.gmra.mrb[0].mxu0 %v352
  %v795 = vpop.f32.mrb[0].mxu0
  %v796 = vadd.f32 0.0, %v795
  %v797 = vpop.f32.mrb[0].mxu0
  %v798 = vpop.f32.mrb[0].mxu0
  %v799 = vadd.f32 0.0, %v798
  %v800 = vpop.f32.mrb[0].mxu0
  %801 = vmatprep.mubr.bf16.mxu0 %v534
  %802 = vmatmul.mubr.bf16.gmra.mrb[0].mxu0 %v354
  %v803 = vpop.f32.mrb[0].mxu0
  %v804 = vadd.f32 0.0, %v803
  %v805 = vpop.f32.mrb[0].mxu0
  %v806 = vpop.f32.mrb[0].mxu0
  %v807 = vadd.f32 0.0, %v806
  %v808 = vpop.f32.mrb[0].mxu0
  %809 = vmatprep.mubr.bf16.mxu0 %v537
  %810 = vmatmul.mubr.bf16.gmra.mrb[0].mxu0 %v356
  %v811 = vpop.f32.mrb[0].mxu0
  %v812 = vadd.f32 0.0, %v811
  %v813 = vpop.f32.mrb[0].mxu0
  %v814 = vpop.f32.mrb[0].mxu0
  %v815 = vadd.f32 0.0, %v814
  %v816 = vpop.f32.mrb[0].mxu0
  %817 = vmatprep.mubr.bf16.mxu0 %v540
  %818 = vmatmul.mubr.bf16.gmra.mrb[0].mxu0 %v358
  %v819 = vpop.f32.mrb[0].mxu0
  %v820 = vadd.f32 0.0, %v819
  %v821 = vpop.f32.mrb[0].mxu0
  %v822 = vpop.f32.mrb[0].mxu0
  %v823 = vadd.f32 0.0, %v822
  %v824 = vpop.f32.mrb[0].mxu0
  %825 = vmatprep.mubr.bf16.mxu0 %v543
  %826 = vmatmul.mubr.bf16.gmra.mrb[0].mxu0 %v360
  %v827 = vpop.f32.mrb[0].mxu0
  %v828 = vadd.f32 0.0, %v827
  %v829 = vpop.f32.mrb[0].mxu0
  %v830 = vpop.f32.mrb[0].mxu0
  %v831 = vadd.f32 0.0, %v830
  %v832 = vpop.f32.mrb[0].mxu0
  %833 = vdwg.mxu0
  %v834 = vadd.f32 %v580, %v583
  %v835 = vadd.f32 %v834, %v588
  %v836 = vadd.f32 %v835, %v591
  %v837 = vadd.f32 %v836, %v596
  %v838 = vadd.f32 %v837, %v599
  %v839 = vadd.f32 %v838, %v604
  %v840 = vadd.f32 %v839, %v607
  %v841 = vadd.f32 %v840, %v612
  %v842 = vadd.f32 %v841, %v615
  %v843 = vadd.f32 %v842, %v620
  %v844 = vadd.f32 %v843, %v623
  %v845 = vadd.f32 %v844, %v628
  %v846 = vadd.f32 %v845, %v631
  %v847 = vadd.f32 %v846, %v636
  %v848 = vadd.f32 %v847, %v639
  %v849 = vadd.f32 %v848, %v644
  %v850 = vadd.f32 %v849, %v647
  %v851 = vadd.f32 %v850, %v652
  %v852 = vadd.f32 %v851, %v655
  %v853 = vadd.f32 %v852, %v660
  %v854 = vadd.f32 %v853, %v663
  %v855 = vadd.f32 %v854, %v668
  %v856 = vadd.f32 %v855, %v671
  %v857 = vadd.f32 %v856, %v676
  %v858 = vadd.f32 %v857, %v679
  %v859 = vadd.f32 %v858, %v684
  %v860 = vadd.f32 %v859, %v687
  %v861 = vadd.f32 %v860, %v692
  %v862 = vadd.f32 %v861, %v695
  %v863 = vadd.f32 %v862, %v700
  %v864 = vadd.f32 %v863, %v703
  %v865 = vadd.f32 %v864, %v708
  %v866 = vadd.f32 %v865, %v711
  %v867 = vadd.f32 %v866, %v716
  %v868 = vadd.f32 %v867, %v719
  %v869 = vadd.f32 %v868, %v724
  %v870 = vadd.f32 %v869, %v727
  %v871 = vadd.f32 %v870, %v732
  %v872 = vadd.f32 %v871, %v735
  %v873 = vadd.f32 %v872, %v740
  %v874 = vadd.f32 %v873, %v743
  %v875 = vadd.f32 %v874, %v748
  %v876 = vadd.f32 %v875, %v751
  %v877 = vadd.f32 %v876, %v756
  %v878 = vadd.f32 %v877, %v759
  %v879 = vadd.f32 %v878, %v764
  %v880 = vadd.f32 %v879, %v767
  %v881 = vadd.f32 %v880, %v772
  %v882 = vadd.f32 %v881, %v775
  %v883 = vadd.f32 %v882, %v780
  %v884 = vadd.f32 %v883, %v783
  %v885 = vadd.f32 %v884, %v788
  %v886 = vadd.f32 %v885, %v791
  %v887 = vadd.f32 %v886, %v796
  %v888 = vadd.f32 %v887, %v799
  %v889 = vadd.f32 %v888, %v804
  %v890 = vadd.f32 %v889, %v807
  %v891 = vadd.f32 %v890, %v812
  %v892 = vadd.f32 %v891, %v815
  %v893 = vadd.f32 %v892, %v820
  %v894 = vadd.f32 %v893, %v823
  %v895 = vadd.f32 %v894, %v828
  %v896 = vadd.f32 %v895, %v831
  %v897 = vrot.slane %v896, 4
  %v898 = vadd.f32 %v896, %v897
  %v899 = vrot.slane %v898, 2
  %v900 = vadd.f32 %v898, %v899
  %v901 = vrot.slane %v900, 1
  %v902 = vadd.f32 %v900, %v901
  %v903 = vmul.f32 %v580, %v580
  %v904 = vmul.f32 %v583, %v583
  %v905 = vmul.f32 %v588, %v588
  %v906 = vmul.f32 %v591, %v591
  %v907 = vmul.f32 %v596, %v596
  %v908 = vmul.f32 %v599, %v599
  %v909 = vmul.f32 %v604, %v604
  %v910 = vmul.f32 %v607, %v607
  %v911 = vmul.f32 %v612, %v612
  %v912 = vmul.f32 %v615, %v615
  %v913 = vmul.f32 %v620, %v620
  %v914 = vmul.f32 %v623, %v623
  %v915 = vmul.f32 %v628, %v628
  %v916 = vmul.f32 %v631, %v631
  %v917 = vmul.f32 %v636, %v636
  %v918 = vmul.f32 %v639, %v639
  %v919 = vmul.f32 %v644, %v644
  %v920 = vmul.f32 %v647, %v647
  %v921 = vmul.f32 %v652, %v652
  %v922 = vmul.f32 %v655, %v655
  %v923 = vmul.f32 %v660, %v660
  %v924 = vmul.f32 %v663, %v663
  %v925 = vmul.f32 %v668, %v668
  %v926 = vmul.f32 %v671, %v671
  %v927 = vmul.f32 %v676, %v676
  %v928 = vmul.f32 %v679, %v679
  %v929 = vmul.f32 %v684, %v684
  %v930 = vmul.f32 %v687, %v687
  %v931 = vmul.f32 %v692, %v692
  %v932 = vmul.f32 %v695, %v695
  %v933 = vmul.f32 %v700, %v700
  %v934 = vmul.f32 %v703, %v703
  %v935 = vmul.f32 %v708, %v708
  %v936 = vmul.f32 %v711, %v711
  %v937 = vmul.f32 %v716, %v716
  %v938 = vmul.f32 %v719, %v719
  %v939 = vmul.f32 %v724, %v724
  %v940 = vmul.f32 %v727, %v727
  %v941 = vmul.f32 %v732, %v732
  %v942 = vmul.f32 %v735, %v735
  %v943 = vmul.f32 %v740, %v740
  %v944 = vmul.f32 %v743, %v743
  %v945 = vmul.f32 %v748, %v748
  %v946 = vmul.f32 %v751, %v751
  %v947 = vmul.f32 %v756, %v756
  %v948 = vmul.f32 %v759, %v759
  %v949 = vmul.f32 %v764, %v764
  %v950 = vmul.f32 %v767, %v767
  %v951 = vmul.f32 %v772, %v772
  %v952 = vmul.f32 %v775, %v775
  %v953 = vmul.f32 %v780, %v780
  %v954 = vmul.f32 %v783, %v783
  %v955 = vmul.f32 %v788, %v788
  %v956 = vmul.f32 %v791, %v791
  %v957 = vmul.f32 %v796, %v796
  %v958 = vmul.f32 %v799, %v799
  %v959 = vmul.f32 %v804, %v804
  %v960 = vmul.f32 %v807, %v807
  %v961 = vmul.f32 %v812, %v812
  %v962 = vmul.f32 %v815, %v815
  %v963 = vmul.f32 %v820, %v820
  %v964 = vmul.f32 %v823, %v823
  %v965 = vmul.f32 %v828, %v828
  %v966 = vmul.f32 %v831, %v831
  %v967 = vadd.f32 %v903, %v904
  %v968 = vadd.f32 %v967, %v905
  %v969 = vadd.f32 %v968, %v906
  %v970 = vadd.f32 %v969, %v907
  %v971 = vadd.f32 %v970, %v908
  %v972 = vadd.f32 %v971, %v909
  %v973 = vadd.f32 %v972, %v910
  %v974 = vadd.f32 %v973, %v911
  %v975 = vadd.f32 %v974, %v912
  %v976 = vadd.f32 %v975, %v913
  %v977 = vadd.f32 %v976, %v914
  %v978 = vadd.f32 %v977, %v915
  %v979 = vadd.f32 %v978, %v916
  %v980 = vadd.f32 %v979, %v917
  %v981 = vadd.f32 %v980, %v918
  %v982 = vadd.f32 %v981, %v919
  %v983 = vadd.f32 %v982, %v920
  %v984 = vadd.f32 %v983, %v921
  %v985 = vadd.f32 %v984, %v922
  %v986 = vadd.f32 %v985, %v923
  %v987 = vadd.f32 %v986, %v924
  %v988 = vadd.f32 %v987, %v925
  %v989 = vadd.f32 %v988, %v926
  %v990 = vadd.f32 %v989, %v927
  %v991 = vadd.f32 %v990, %v928
  %v992 = vadd.f32 %v991, %v929
  %v993 = vadd.f32 %v992, %v930
  %v994 = vadd.f32 %v993, %v931
  %v995 = vadd.f32 %v994, %v932
  %v996 = vadd.f32 %v995, %v933
  %v997 = vadd.f32 %v996, %v934
  %v998 = vadd.f32 %v997, %v935
  %v999 = vadd.f32 %v998, %v936
  %v1000 = vadd.f32 %v999, %v937
  %v1001 = vadd.f32 %v1000, %v938
  %v1002 = vadd.f32 %v1001, %v939
  %v1003 = vadd.f32 %v1002, %v940
  %v1004 = vadd.f32 %v1003, %v941
  %v1005 = vadd.f32 %v1004, %v942
  %v1006 = vadd.f32 %v1005, %v943
  %v1007 = vadd.f32 %v1006, %v944
  %v1008 = vadd.f32 %v1007, %v945
  %v1009 = vadd.f32 %v1008, %v946
  %v1010 = vadd.f32 %v1009, %v947
  %v1011 = vadd.f32 %v1010, %v948
  %v1012 = vadd.f32 %v1011, %v949
  %v1013 = vadd.f32 %v1012, %v950
  %v1014 = vadd.f32 %v1013, %v951
  %v1015 = vadd.f32 %v1014, %v952
  %v1016 = vadd.f32 %v1015, %v953
  %v1017 = vadd.f32 %v1016, %v954
  %v1018 = vadd.f32 %v1017, %v955
  %v1019 = vadd.f32 %v1018, %v956
  %v1020 = vadd.f32 %v1019, %v957
  %v1021 = vadd.f32 %v1020, %v958
  %v1022 = vadd.f32 %v1021, %v959
  %v1023 = vadd.f32 %v1022, %v960
  %v1024 = vadd.f32 %v1023, %v961
  %v1025 = vadd.f32 %v1024, %v962
  %v1026 = vadd.f32 %v1025, %v963
  %v1027 = vadd.f32 %v1026, %v964
  %v1028 = vadd.f32 %v1027, %v965
  %v1029 = vadd.f32 %v1028, %v966
  %v1030 = vrot.slane %v1029, 4
  %v1031 = vadd.f32 %v1029, %v1030
  %v1032 = vrot.slane %v1031, 2
  %v1033 = vadd.f32 %v1031, %v1032
  %v1034 = vrot.slane %v1033, 1
  %v1035 = vadd.f32 %v1033, %v1034
  %v1036 = vld [vmem:[%s2] sm:$0xff]
  %v1037 = vld [vmem:[%s2 + $0x8] sm:$0xff]
  %v1038 = vld [vmem:[%s2 + $0x10] sm:$0xff]
  %v1039 = vld [vmem:[%s2 + $0x18] sm:$0xff]
  %v1040 = vld [vmem:[%s2 + $0x20] sm:$0xff]
  %v1041 = vld [vmem:[%s2 + $0x28] sm:$0xff]
  %v1042 = vld [vmem:[%s2 + $0x30] sm:$0xff]
  %v1043 = vld [vmem:[%s2 + $0x38] sm:$0xff]
  %v1044 = vld [vmem:[%s2 + $0x40] sm:$0xff]
  %v1045 = vld [vmem:[%s2 + $0x48] sm:$0xff]
  %v1046 = vld [vmem:[%s2 + $0x50] sm:$0xff]
  %v1047 = vld [vmem:[%s2 + $0x58] sm:$0xff]
  %v1048 = vld [vmem:[%s2 + $0x60] sm:$0xff]
  %v1049 = vld [vmem:[%s2 + $0x68] sm:$0xff]
  %v1050 = vld [vmem:[%s2 + $0x70] sm:$0xff]
  %v1051 = vld [vmem:[%s2 + $0x78] sm:$0xff]
  %1052 = vmatprep.subr.mxu0 0.0
  %1053 = vmatpush1.msra.mxu0 %v1036
  %1054 = vmatprep.subr.mxu0 0.0
  %1055 = vmatpush1.msra.mxu0 %v1037
  %1056 = vmatprep.subr.mxu0 0.0
  %1057 = vmatpush1.msra.mxu0 %v1038
  %1058 = vmatprep.subr.mxu0 0.0
  %1059 = vmatpush1.msra.mxu0 %v1039
  %1060 = vmatprep.subr.mxu0 0.0
  %1061 = vmatpush1.msra.mxu0 %v1040
  %1062 = vmatprep.subr.mxu0 0.0
  %1063 = vmatpush1.msra.mxu0 %v1041
  %1064 = vmatprep.subr.mxu0 0.0
  %1065 = vmatpush1.msra.mxu0 %v1042
  %1066 = vmatprep.subr.mxu0 0.0
  %1067 = vmatpush1.msra.mxu0 %v1043
  %1068 = vmatprep.subr.mxu0 0.0
  %1069 = vmatpush1.msra.mxu0 %v1044
  %1070 = vmatprep.subr.mxu0 0.0
  %1071 = vmatpush1.msra.mxu0 %v1045
  %1072 = vmatprep.subr.mxu0 0.0
  %1073 = vmatpush1.msra.mxu0 %v1046
  %1074 = vmatprep.subr.mxu0 0.0
  %1075 = vmatpush1.msra.mxu0 %v1047
  %1076 = vmatprep.subr.mxu0 0.0
  %1077 = vmatpush1.msra.mxu0 %v1048
  %1078 = vmatprep.subr.mxu0 0.0
  %1079 = vmatpush1.msra.mxu0 %v1049
  %1080 = vmatprep.subr.mxu0 0.0
  %1081 = vmatpush1.msra.mxu0 %v1050
  %1082 = vmatprep.subr.mxu0 0.0
  %1083 = vmatpush1.msra.mxu0 %v1051
  %1084 = vmatprep.subr.mxu0 0.0
  %1085 = vmatpush1.msra.mxu0 0.0
  %1086 = vmatprep.subr.mxu0 0.0
  %1087 = vmatpush1.msra.mxu0 0.0
  %1088 = vmatprep.subr.mxu0 0.0
  %1089 = vmatpush1.msra.mxu0 0.0
  %1090 = vmatprep.subr.mxu0 0.0
  %1091 = vmatpush1.msra.mxu0 0.0
  %1092 = vmatprep.subr.mxu0 0.0
  %1093 = vmatpush1.msra.mxu0 0.0
  %1094 = vmatprep.subr.mxu0 0.0
  %1095 = vmatpush1.msra.mxu0 0.0
  %1096 = vmatprep.subr.mxu0 0.0
  %1097 = vmatpush1.msra.mxu0 0.0
  %1098 = vmatprep.subr.mxu0 0.0
  %1099 = vmatpush1.msra.mxu0 0.0
  %1100 = vmatprep.subr.mxu0 0.0
  %1101 = vmatpush1.msra.mxu0 0.0
  %1102 = vmatprep.subr.mxu0 0.0
  %1103 = vmatpush1.msra.mxu0 0.0
  %1104 = vmatprep.subr.mxu0 0.0
  %1105 = vmatpush1.msra.mxu0 0.0
  %1106 = vmatprep.subr.mxu0 0.0
  %1107 = vmatpush1.msra.mxu0 0.0
  %1108 = vmatprep.subr.mxu0 0.0
  %1109 = vmatpush1.msra.mxu0 0.0
  %1110 = vmatprep.subr.mxu0 0.0
  %1111 = vmatpush1.msra.mxu0 0.0
  %1112 = vmatprep.subr.mxu0 0.0
  %1113 = vmatpush1.msra.mxu0 0.0
  %1114 = vmatprep.subr.mxu0 0.0
  %1115 = vmatpush1.msra.mxu0 0.0
  %1116 = vmatprep.mubr.f32.mxu0 0.0
  %1117 = vmatmul.mubr.f32.gmra.mrb[0].mxu0 %v902
  %v1118 = vpop.f32.mrb[0].mxu0
  %v1119 = vadd.f32 0.0, %v1118
  %v1120 = vpop.f32.mrb[0].mxu0
  %1121 = vdwg.mxu0
  %v1122 = vld [vmem:[%s3] sm:$0xff]
  %vm1123 = vcmask 64512
  %v1125 = vsel %vm1123, %v1119, 0
  %1127 = vmatprep.subr.mxu0 0.0
  %1128 = vmatpush1.msra.mxu0 %v1122
  %1129 = vmatprep.subr.mxu0 0.0
  %1130 = vmatpush1.msra.mxu0 0.0
  %1131 = vmatprep.subr.mxu0 0.0
  %1132 = vmatpush1.msra.mxu0 0.0
  %1133 = vmatprep.subr.mxu0 0.0
  %1134 = vmatpush1.msra.mxu0 0.0
  %1135 = vmatprep.subr.mxu0 0.0
  %1136 = vmatpush1.msra.mxu0 0.0
  %1137 = vmatprep.subr.mxu0 0.0
  %1138 = vmatpush1.msra.mxu0 0.0
  %1139 = vmatprep.subr.mxu0 0.0
  %1140 = vmatpush1.msra.mxu0 0.0
  %1141 = vmatprep.subr.mxu0 0.0
  %1142 = vmatpush1.msra.mxu0 0.0
  %1143 = vmatprep.subr.mxu0 0.0
  %1144 = vmatpush1.msra.mxu0 0.0
  %1145 = vmatprep.subr.mxu0 0.0
  %1146 = vmatpush1.msra.mxu0 0.0
  %1147 = vmatprep.subr.mxu0 0.0
  %1148 = vmatpush1.msra.mxu0 0.0
  %1149 = vmatprep.subr.mxu0 0.0
  %1150 = vmatpush1.msra.mxu0 0.0
  %1151 = vmatprep.subr.mxu0 0.0
  %1152 = vmatpush1.msra.mxu0 0.0
  %1153 = vmatprep.subr.mxu0 0.0
  %1154 = vmatpush1.msra.mxu0 0.0
  %1155 = vmatprep.subr.mxu0 0.0
  %1156 = vmatpush1.msra.mxu0 0.0
  %1157 = vmatprep.subr.mxu0 0.0
  %1158 = vmatpush1.msra.mxu0 0.0
  %1159 = vmatprep.subr.mxu0 0.0
  %1160 = vmatpush1.msra.mxu0 0.0
  %1161 = vmatprep.subr.mxu0 0.0
  %1162 = vmatpush1.msra.mxu0 0.0
  %1163 = vmatprep.subr.mxu0 0.0
  %1164 = vmatpush1.msra.mxu0 0.0
  %1165 = vmatprep.subr.mxu0 0.0
  %1166 = vmatpush1.msra.mxu0 0.0
  %1167 = vmatprep.subr.mxu0 0.0
  %1168 = vmatpush1.msra.mxu0 0.0
  %1169 = vmatprep.subr.mxu0 0.0
  %1170 = vmatpush1.msra.mxu0 0.0
  %1171 = vmatprep.subr.mxu0 0.0
  %1172 = vmatpush1.msra.mxu0 0.0
  %1173 = vmatprep.subr.mxu0 0.0
  %1174 = vmatpush1.msra.mxu0 0.0
  %1175 = vmatprep.subr.mxu0 0.0
  %1176 = vmatpush1.msra.mxu0 0.0
  %1177 = vmatprep.subr.mxu0 0.0
  %1178 = vmatpush1.msra.mxu0 0.0
  %1179 = vmatprep.subr.mxu0 0.0
  %1180 = vmatpush1.msra.mxu0 0.0
  %1181 = vmatprep.subr.mxu0 0.0
  %1182 = vmatpush1.msra.mxu0 0.0
  %1183 = vmatprep.subr.mxu0 0.0
  %1184 = vmatpush1.msra.mxu0 0.0
  %1185 = vmatprep.subr.mxu0 0.0
  %1186 = vmatpush1.msra.mxu0 0.0
  %1187 = vmatprep.subr.mxu0 0.0
  %1188 = vmatpush1.msra.mxu0 0.0
  %1189 = vmatprep.subr.mxu0 0.0
  %1190 = vmatpush1.msra.mxu0 0.0
  %1191 = vmatprep.mubr.f32.mxu0 0.0
  %1192 = vmatmul.mubr.f32.gmra.mrb[0].mxu0 %v1125
  %v1193 = vpop.f32.mrb[0].mxu0
  %v1194 = vadd.f32 0.0, %v1193
  %v1195 = vpop.f32.mrb[0].mxu0
  %1196 = vdwg.mxu0
  %1197 = vmatprep.subr.mxu0 0.0
  %1198 = vmatpush1.msra.mxu0 %v1036
  %1199 = vmatprep.subr.mxu0 0.0
  %1200 = vmatpush1.msra.mxu0 %v1037
  %1201 = vmatprep.subr.mxu0 0.0
  %1202 = vmatpush1.msra.mxu0 %v1038
  %1203 = vmatprep.subr.mxu0 0.0
  %1204 = vmatpush1.msra.mxu0 %v1039
  %1205 = vmatprep.subr.mxu0 0.0
  %1206 = vmatpush1.msra.mxu0 %v1040
  %1207 = vmatprep.subr.mxu0 0.0
  %1208 = vmatpush1.msra.mxu0 %v1041
  %1209 = vmatprep.subr.mxu0 0.0
  %1210 = vmatpush1.msra.mxu0 %v1042
  %1211 = vmatprep.subr.mxu0 0.0
  %1212 = vmatpush1.msra.mxu0 %v1043
  %1213 = vmatprep.subr.mxu0 0.0
  %1214 = vmatpush1.msra.mxu0 %v1044
  %1215 = vmatprep.subr.mxu0 0.0
  %1216 = vmatpush1.msra.mxu0 %v1045
  %1217 = vmatprep.subr.mxu0 0.0
  %1218 = vmatpush1.msra.mxu0 %v1046
  %1219 = vmatprep.subr.mxu0 0.0
  %1220 = vmatpush1.msra.mxu0 %v1047
  %1221 = vmatprep.subr.mxu0 0.0
  %1222 = vmatpush1.msra.mxu0 %v1048
  %1223 = vmatprep.subr.mxu0 0.0
  %1224 = vmatpush1.msra.mxu0 %v1049
  %1225 = vmatprep.subr.mxu0 0.0
  %1226 = vmatpush1.msra.mxu0 %v1050
  %1227 = vmatprep.subr.mxu0 0.0
  %1228 = vmatpush1.msra.mxu0 %v1051
  %1229 = vmatprep.subr.mxu0 0.0
  %1230 = vmatpush1.msra.mxu0 0.0
  %1231 = vmatprep.subr.mxu0 0.0
  %1232 = vmatpush1.msra.mxu0 0.0
  %1233 = vmatprep.subr.mxu0 0.0
  %1234 = vmatpush1.msra.mxu0 0.0
  %1235 = vmatprep.subr.mxu0 0.0
  %1236 = vmatpush1.msra.mxu0 0.0
  %1237 = vmatprep.subr.mxu0 0.0
  %1238 = vmatpush1.msra.mxu0 0.0
  %1239 = vmatprep.subr.mxu0 0.0
  %1240 = vmatpush1.msra.mxu0 0.0
  %1241 = vmatprep.subr.mxu0 0.0
  %1242 = vmatpush1.msra.mxu0 0.0
  %1243 = vmatprep.subr.mxu0 0.0
  %1244 = vmatpush1.msra.mxu0 0.0
  %1245 = vmatprep.subr.mxu0 0.0
  %1246 = vmatpush1.msra.mxu0 0.0
  %1247 = vmatprep.subr.mxu0 0.0
  %1248 = vmatpush1.msra.mxu0 0.0
  %1249 = vmatprep.subr.mxu0 0.0
  %1250 = vmatpush1.msra.mxu0 0.0
  %1251 = vmatprep.subr.mxu0 0.0
  %1252 = vmatpush1.msra.mxu0 0.0
  %1253 = vmatprep.subr.mxu0 0.0
  %1254 = vmatpush1.msra.mxu0 0.0
  %1255 = vmatprep.subr.mxu0 0.0
  %1256 = vmatpush1.msra.mxu0 0.0
  %1257 = vmatprep.subr.mxu0 0.0
  %1258 = vmatpush1.msra.mxu0 0.0
  %1259 = vmatprep.subr.mxu0 0.0
  %1260 = vmatpush1.msra.mxu0 0.0
  %1261 = vmatprep.mubr.f32.mxu0 0.0
  %1262 = vmatmul.mubr.f32.gmra.mrb[0].mxu0 %v1035
  %v1263 = vpop.f32.mrb[0].mxu0
  %v1264 = vadd.f32 0.0, %v1263
  %v1265 = vpop.f32.mrb[0].mxu0
  %1266 = vdwg.mxu0
  %v1268 = vsel %vm1123, %v1264, 0
  %1270 = vmatprep.subr.mxu0 0.0
  %1271 = vmatpush1.msra.mxu0 %v1122
  %1272 = vmatprep.subr.mxu0 0.0
  %1273 = vmatpush1.msra.mxu0 0.0
  %1274 = vmatprep.subr.mxu0 0.0
  %1275 = vmatpush1.msra.mxu0 0.0
  %1276 = vmatprep.subr.mxu0 0.0
  %1277 = vmatpush1.msra.mxu0 0.0
  %1278 = vmatprep.subr.mxu0 0.0
  %1279 = vmatpush1.msra.mxu0 0.0
  %1280 = vmatprep.subr.mxu0 0.0
  %1281 = vmatpush1.msra.mxu0 0.0
  %1282 = vmatprep.subr.mxu0 0.0
  %1283 = vmatpush1.msra.mxu0 0.0
  %1284 = vmatprep.subr.mxu0 0.0
  %1285 = vmatpush1.msra.mxu0 0.0
  %1286 = vmatprep.subr.mxu0 0.0
  %1287 = vmatpush1.msra.mxu0 0.0
  %1288 = vmatprep.subr.mxu0 0.0
  %1289 = vmatpush1.msra.mxu0 0.0
  %1290 = vmatprep.subr.mxu0 0.0
  %1291 = vmatpush1.msra.mxu0 0.0
  %1292 = vmatprep.subr.mxu0 0.0
  %1293 = vmatpush1.msra.mxu0 0.0
  %1294 = vmatprep.subr.mxu0 0.0
  %1295 = vmatpush1.msra.mxu0 0.0
  %1296 = vmatprep.subr.mxu0 0.0
  %1297 = vmatpush1.msra.mxu0 0.0
  %1298 = vmatprep.subr.mxu0 0.0
  %1299 = vmatpush1.msra.mxu0 0.0
  %1300 = vmatprep.subr.mxu0 0.0
  %1301 = vmatpush1.msra.mxu0 0.0
  %1302 = vmatprep.subr.mxu0 0.0
  %1303 = vmatpush1.msra.mxu0 0.0
  %1304 = vmatprep.subr.mxu0 0.0
  %1305 = vmatpush1.msra.mxu0 0.0
  %1306 = vmatprep.subr.mxu0 0.0
  %1307 = vmatpush1.msra.mxu0 0.0
  %1308 = vmatprep.subr.mxu0 0.0
  %1309 = vmatpush1.msra.mxu0 0.0
  %1310 = vmatprep.subr.mxu0 0.0
  %1311 = vmatpush1.msra.mxu0 0.0
  %1312 = vmatprep.subr.mxu0 0.0
  %1313 = vmatpush1.msra.mxu0 0.0
  %1314 = vmatprep.subr.mxu0 0.0
  %1315 = vmatpush1.msra.mxu0 0.0
  %1316 = vmatprep.subr.mxu0 0.0
  %1317 = vmatpush1.msra.mxu0 0.0
  %1318 = vmatprep.subr.mxu0 0.0
  %1319 = vmatpush1.msra.mxu0 0.0
  %1320 = vmatprep.subr.mxu0 0.0
  %1321 = vmatpush1.msra.mxu0 0.0
  %1322 = vmatprep.subr.mxu0 0.0
  %1323 = vmatpush1.msra.mxu0 0.0
  %1324 = vmatprep.subr.mxu0 0.0
  %1325 = vmatpush1.msra.mxu0 0.0
  %1326 = vmatprep.subr.mxu0 0.0
  %1327 = vmatpush1.msra.mxu0 0.0
  %1328 = vmatprep.subr.mxu0 0.0
  %1329 = vmatpush1.msra.mxu0 0.0
  %1330 = vmatprep.subr.mxu0 0.0
  %1331 = vmatpush1.msra.mxu0 0.0
  %1332 = vmatprep.subr.mxu0 0.0
  %1333 = vmatpush1.msra.mxu0 0.0
  %1334 = vmatprep.mubr.f32.mxu0 0.0
  %1335 = vmatmul.mubr.f32.gmra.mrb[0].mxu0 %v1268
  %v1336 = vpop.f32.mrb[0].mxu0
  %v1337 = vadd.f32 0.0, %v1336
  %v1338 = vpop.f32.mrb[0].mxu0
  %1339 = vdwg.mxu0
  %v1340 = vmul.f32 %v1194, 0.00048828125
  %v1341 = vmul.f32 %v1337, 0.00048828125
  %v1342 = vmul.f32 %v1340, %v1340
  %v1343 = vsub.f32 %v1341, %v1342
  %v1344 = vmax.f32 %v1343, 0.0
  %v1345 = vld [vmem:[%s4] sm:$0x1]
  %v1346 = vadd.f32 %v1344, 1e-05
  %v1347 = vrsqrt.pop %v1346
  %v1348 = vmul.f32 %v1345, %v1347
  %v1349 = vld [vmem:[%s5] sm:$0x1]
  %v1350 = vmul.f32 %v1340, %v1348
  %v1351 = vsub.f32 %v1349, %v1350
  %v1353 = vlaneseq
  %v1354 = vshrl.u32 %v1353, 7
  %v1355 = vsub.s32 0, %v1354
  %v1356 = vrot.slane %v1348, %v1355
  %v1358 = vmul.f32 %v580, %v1356
  %v1359 = vmul.f32 %v583, %v1356
  %v1360 = vmul.f32 %v588, %v1356
  %v1361 = vmul.f32 %v591, %v1356
  %v1362 = vmul.f32 %v596, %v1356
  %v1363 = vmul.f32 %v599, %v1356
  %v1364 = vmul.f32 %v604, %v1356
  %v1365 = vmul.f32 %v607, %v1356
  %v1366 = vmul.f32 %v612, %v1356
  %v1367 = vmul.f32 %v615, %v1356
  %v1368 = vmul.f32 %v620, %v1356
  %v1369 = vmul.f32 %v623, %v1356
  %v1370 = vmul.f32 %v628, %v1356
  %v1371 = vmul.f32 %v631, %v1356
  %v1372 = vmul.f32 %v636, %v1356
  %v1373 = vmul.f32 %v639, %v1356
  %v1374 = vmul.f32 %v644, %v1356
  %v1375 = vmul.f32 %v647, %v1356
  %v1376 = vmul.f32 %v652, %v1356
  %v1377 = vmul.f32 %v655, %v1356
  %v1378 = vmul.f32 %v660, %v1356
  %v1379 = vmul.f32 %v663, %v1356
  %v1380 = vmul.f32 %v668, %v1356
  %v1381 = vmul.f32 %v671, %v1356
  %v1382 = vmul.f32 %v676, %v1356
  %v1383 = vmul.f32 %v679, %v1356
  %v1384 = vmul.f32 %v684, %v1356
  %v1385 = vmul.f32 %v687, %v1356
  %v1386 = vmul.f32 %v692, %v1356
  %v1387 = vmul.f32 %v695, %v1356
  %v1388 = vmul.f32 %v700, %v1356
  %v1389 = vmul.f32 %v703, %v1356
  %v1390 = vmul.f32 %v708, %v1356
  %v1391 = vmul.f32 %v711, %v1356
  %v1392 = vmul.f32 %v716, %v1356
  %v1393 = vmul.f32 %v719, %v1356
  %v1394 = vmul.f32 %v724, %v1356
  %v1395 = vmul.f32 %v727, %v1356
  %v1396 = vmul.f32 %v732, %v1356
  %v1397 = vmul.f32 %v735, %v1356
  %v1398 = vmul.f32 %v740, %v1356
  %v1399 = vmul.f32 %v743, %v1356
  %v1400 = vmul.f32 %v748, %v1356
  %v1401 = vmul.f32 %v751, %v1356
  %v1402 = vmul.f32 %v756, %v1356
  %v1403 = vmul.f32 %v759, %v1356
  %v1404 = vmul.f32 %v764, %v1356
  %v1405 = vmul.f32 %v767, %v1356
  %v1406 = vmul.f32 %v772, %v1356
  %v1407 = vmul.f32 %v775, %v1356
  %v1408 = vmul.f32 %v780, %v1356
  %v1409 = vmul.f32 %v783, %v1356
  %v1410 = vmul.f32 %v788, %v1356
  %v1411 = vmul.f32 %v791, %v1356
  %v1412 = vmul.f32 %v796, %v1356
  %v1413 = vmul.f32 %v799, %v1356
  %v1414 = vmul.f32 %v804, %v1356
  %v1415 = vmul.f32 %v807, %v1356
  %v1416 = vmul.f32 %v812, %v1356
  %v1417 = vmul.f32 %v815, %v1356
  %v1418 = vmul.f32 %v820, %v1356
  %v1419 = vmul.f32 %v823, %v1356
  %v1420 = vmul.f32 %v828, %v1356
  %v1421 = vmul.f32 %v831, %v1356
  %v1423 = vlaneseq
  %v1424 = vshrl.u32 %v1423, 7
  %v1425 = vsub.s32 0, %v1424
  %v1426 = vrot.slane %v1351, %v1425
  %v1428 = vadd.f32 %v1358, %v1426
  %v1429 = vadd.f32 %v1359, %v1426
  %v1430 = vadd.f32 %v1360, %v1426
  %v1431 = vadd.f32 %v1361, %v1426
  %v1432 = vadd.f32 %v1362, %v1426
  %v1433 = vadd.f32 %v1363, %v1426
  %v1434 = vadd.f32 %v1364, %v1426
  %v1435 = vadd.f32 %v1365, %v1426
  %v1436 = vadd.f32 %v1366, %v1426
  %v1437 = vadd.f32 %v1367, %v1426
  %v1438 = vadd.f32 %v1368, %v1426
  %v1439 = vadd.f32 %v1369, %v1426
  %v1440 = vadd.f32 %v1370, %v1426
  %v1441 = vadd.f32 %v1371, %v1426
  %v1442 = vadd.f32 %v1372, %v1426
  %v1443 = vadd.f32 %v1373, %v1426
  %v1444 = vadd.f32 %v1374, %v1426
  %v1445 = vadd.f32 %v1375, %v1426
  %v1446 = vadd.f32 %v1376, %v1426
  %v1447 = vadd.f32 %v1377, %v1426
  %v1448 = vadd.f32 %v1378, %v1426
  %v1449 = vadd.f32 %v1379, %v1426
  %v1450 = vadd.f32 %v1380, %v1426
  %v1451 = vadd.f32 %v1381, %v1426
  %v1452 = vadd.f32 %v1382, %v1426
  %v1453 = vadd.f32 %v1383, %v1426
  %v1454 = vadd.f32 %v1384, %v1426
  %v1455 = vadd.f32 %v1385, %v1426
  %v1456 = vadd.f32 %v1386, %v1426
  %v1457 = vadd.f32 %v1387, %v1426
  %v1458 = vadd.f32 %v1388, %v1426
  %v1459 = vadd.f32 %v1389, %v1426
  %v1460 = vadd.f32 %v1390, %v1426
  %v1461 = vadd.f32 %v1391, %v1426
  %v1462 = vadd.f32 %v1392, %v1426
  %v1463 = vadd.f32 %v1393, %v1426
  %v1464 = vadd.f32 %v1394, %v1426
  %v1465 = vadd.f32 %v1395, %v1426
  %v1466 = vadd.f32 %v1396, %v1426
  %v1467 = vadd.f32 %v1397, %v1426
  %v1468 = vadd.f32 %v1398, %v1426
  %v1469 = vadd.f32 %v1399, %v1426
  %v1470 = vadd.f32 %v1400, %v1426
  %v1471 = vadd.f32 %v1401, %v1426
  %v1472 = vadd.f32 %v1402, %v1426
  %v1473 = vadd.f32 %v1403, %v1426
  %v1474 = vadd.f32 %v1404, %v1426
  %v1475 = vadd.f32 %v1405, %v1426
  %v1476 = vadd.f32 %v1406, %v1426
  %v1477 = vadd.f32 %v1407, %v1426
  %v1478 = vadd.f32 %v1408, %v1426
  %v1479 = vadd.f32 %v1409, %v1426
  %v1480 = vadd.f32 %v1410, %v1426
  %v1481 = vadd.f32 %v1411, %v1426
  %v1482 = vadd.f32 %v1412, %v1426
  %v1483 = vadd.f32 %v1413, %v1426
  %v1484 = vadd.f32 %v1414, %v1426
  %v1485 = vadd.f32 %v1415, %v1426
  %v1486 = vadd.f32 %v1416, %v1426
  %v1487 = vadd.f32 %v1417, %v1426
  %v1488 = vadd.f32 %v1418, %v1426
  %v1489 = vadd.f32 %v1419, %v1426
  %v1490 = vadd.f32 %v1420, %v1426
  %v1491 = vadd.f32 %v1421, %v1426
  %v1492 = vmax.f32 %v1428, 0.0
  %v1493 = vmax.f32 %v1429, 0.0
  %v1494 = vmax.f32 %v1430, 0.0
  %v1495 = vmax.f32 %v1431, 0.0
  %v1496 = vmax.f32 %v1432, 0.0
  %v1497 = vmax.f32 %v1433, 0.0
  %v1498 = vmax.f32 %v1434, 0.0
  %v1499 = vmax.f32 %v1435, 0.0
  %v1500 = vmax.f32 %v1436, 0.0
  %v1501 = vmax.f32 %v1437, 0.0
  %v1502 = vmax.f32 %v1438, 0.0
  %v1503 = vmax.f32 %v1439, 0.0
  %v1504 = vmax.f32 %v1440, 0.0
  %v1505 = vmax.f32 %v1441, 0.0
  %v1506 = vmax.f32 %v1442, 0.0
  %v1507 = vmax.f32 %v1443, 0.0
  %v1508 = vmax.f32 %v1444, 0.0
  %v1509 = vmax.f32 %v1445, 0.0
  %v1510 = vmax.f32 %v1446, 0.0
  %v1511 = vmax.f32 %v1447, 0.0
  %v1512 = vmax.f32 %v1448, 0.0
  %v1513 = vmax.f32 %v1449, 0.0
  %v1514 = vmax.f32 %v1450, 0.0
  %v1515 = vmax.f32 %v1451, 0.0
  %v1516 = vmax.f32 %v1452, 0.0
  %v1517 = vmax.f32 %v1453, 0.0
  %v1518 = vmax.f32 %v1454, 0.0
  %v1519 = vmax.f32 %v1455, 0.0
  %v1520 = vmax.f32 %v1456, 0.0
  %v1521 = vmax.f32 %v1457, 0.0
  %v1522 = vmax.f32 %v1458, 0.0
  %v1523 = vmax.f32 %v1459, 0.0
  %v1524 = vmax.f32 %v1460, 0.0
  %v1525 = vmax.f32 %v1461, 0.0
  %v1526 = vmax.f32 %v1462, 0.0
  %v1527 = vmax.f32 %v1463, 0.0
  %v1528 = vmax.f32 %v1464, 0.0
  %v1529 = vmax.f32 %v1465, 0.0
  %v1530 = vmax.f32 %v1466, 0.0
  %v1531 = vmax.f32 %v1467, 0.0
  %v1532 = vmax.f32 %v1468, 0.0
  %v1533 = vmax.f32 %v1469, 0.0
  %v1534 = vmax.f32 %v1470, 0.0
  %v1535 = vmax.f32 %v1471, 0.0
  %v1536 = vmax.f32 %v1472, 0.0
  %v1537 = vmax.f32 %v1473, 0.0
  %v1538 = vmax.f32 %v1474, 0.0
  %v1539 = vmax.f32 %v1475, 0.0
  %v1540 = vmax.f32 %v1476, 0.0
  %v1541 = vmax.f32 %v1477, 0.0
  %v1542 = vmax.f32 %v1478, 0.0
  %v1543 = vmax.f32 %v1479, 0.0
  %v1544 = vmax.f32 %v1480, 0.0
  %v1545 = vmax.f32 %v1481, 0.0
  %v1546 = vmax.f32 %v1482, 0.0
  %v1547 = vmax.f32 %v1483, 0.0
  %v1548 = vmax.f32 %v1484, 0.0
  %v1549 = vmax.f32 %v1485, 0.0
  %v1550 = vmax.f32 %v1486, 0.0
  %v1551 = vmax.f32 %v1487, 0.0
  %v1552 = vmax.f32 %v1488, 0.0
  %v1553 = vmax.f32 %v1489, 0.0
  %v1554 = vmax.f32 %v1490, 0.0
  %v1555 = vmax.f32 %v1491, 0.0
  %v1556 = vpack.c.bf16 %v1493, %v1492
  %v1557 = vpack.c.bf16 %v1495, %v1494
  %v1558 = vpack.c.bf16 %v1497, %v1496
  %v1559 = vpack.c.bf16 %v1499, %v1498
  %v1560 = vpack.c.bf16 %v1501, %v1500
  %v1561 = vpack.c.bf16 %v1503, %v1502
  %v1562 = vpack.c.bf16 %v1505, %v1504
  %v1563 = vpack.c.bf16 %v1507, %v1506
  %v1564 = vpack.c.bf16 %v1509, %v1508
  %v1565 = vpack.c.bf16 %v1511, %v1510
  %v1566 = vpack.c.bf16 %v1513, %v1512
  %v1567 = vpack.c.bf16 %v1515, %v1514
  %v1568 = vpack.c.bf16 %v1517, %v1516
  %v1569 = vpack.c.bf16 %v1519, %v1518
  %v1570 = vpack.c.bf16 %v1521, %v1520
  %v1571 = vpack.c.bf16 %v1523, %v1522
  %v1572 = vpack.c.bf16 %v1525, %v1524
  %v1573 = vpack.c.bf16 %v1527, %v1526
  %v1574 = vpack.c.bf16 %v1529, %v1528
  %v1575 = vpack.c.bf16 %v1531, %v1530
  %v1576 = vpack.c.bf16 %v1533, %v1532
  %v1577 = vpack.c.bf16 %v1535, %v1534
  %v1578 = vpack.c.bf16 %v1537, %v1536
  %v1579 = vpack.c.bf16 %v1539, %v1538
  %v1580 = vpack.c.bf16 %v1541, %v1540
  %v1581 = vpack.c.bf16 %v1543, %v1542
  %v1582 = vpack.c.bf16 %v1545, %v1544
  %v1583 = vpack.c.bf16 %v1547, %v1546
  %v1584 = vpack.c.bf16 %v1549, %v1548
  %v1585 = vpack.c.bf16 %v1551, %v1550
  %v1586 = vpack.c.bf16 %v1553, %v1552
  %v1587 = vpack.c.bf16 %v1555, %v1554
  %v1620 = vunpack.c.l.b16 %v1556
  %v1621 = vunpack.c.h.b16 %v1556
  %v1622 = vunpack.c.l.b16 %v1557
  %v1623 = vunpack.c.h.b16 %v1557
  %v1624 = vunpack.c.l.b16 %v1558
  %v1625 = vunpack.c.h.b16 %v1558
  %v1626 = vunpack.c.l.b16 %v1559
  %v1627 = vunpack.c.h.b16 %v1559
  %v1628 = vunpack.c.l.b16 %v1560
  %v1629 = vunpack.c.h.b16 %v1560
  %v1630 = vunpack.c.l.b16 %v1561
  %v1631 = vunpack.c.h.b16 %v1561
  %v1632 = vunpack.c.l.b16 %v1562
  %v1633 = vunpack.c.h.b16 %v1562
  %v1634 = vunpack.c.l.b16 %v1563
  %v1635 = vunpack.c.h.b16 %v1563
  %v1636 = vunpack.c.l.b16 %v1564
  %v1637 = vunpack.c.h.b16 %v1564
  %v1638 = vunpack.c.l.b16 %v1565
  %v1639 = vunpack.c.h.b16 %v1565
  %v1640 = vunpack.c.l.b16 %v1566
  %v1641 = vunpack.c.h.b16 %v1566
  %v1642 = vunpack.c.l.b16 %v1567
  %v1643 = vunpack.c.h.b16 %v1567
  %v1644 = vunpack.c.l.b16 %v1568
  %v1645 = vunpack.c.h.b16 %v1568
  %v1646 = vunpack.c.l.b16 %v1569
  %v1647 = vunpack.c.h.b16 %v1569
  %v1648 = vunpack.c.l.b16 %v1570
  %v1649 = vunpack.c.h.b16 %v1570
  %v1650 = vunpack.c.l.b16 %v1571
  %v1651 = vunpack.c.h.b16 %v1571
  %v1652 = vunpack.c.l.b16 %v1572
  %v1653 = vunpack.c.h.b16 %v1572
  %v1654 = vunpack.c.l.b16 %v1573
  %v1655 = vunpack.c.h.b16 %v1573
  %v1656 = vunpack.c.l.b16 %v1574
  %v1657 = vunpack.c.h.b16 %v1574
  %v1658 = vunpack.c.l.b16 %v1575
  %v1659 = vunpack.c.h.b16 %v1575
  %v1660 = vunpack.c.l.b16 %v1576
  %v1661 = vunpack.c.h.b16 %v1576
  %v1662 = vunpack.c.l.b16 %v1577
  %v1663 = vunpack.c.h.b16 %v1577
  %v1664 = vunpack.c.l.b16 %v1578
  %v1665 = vunpack.c.h.b16 %v1578
  %v1666 = vunpack.c.l.b16 %v1579
  %v1667 = vunpack.c.h.b16 %v1579
  %v1668 = vunpack.c.l.b16 %v1580
  %v1669 = vunpack.c.h.b16 %v1580
  %v1670 = vunpack.c.l.b16 %v1581
  %v1671 = vunpack.c.h.b16 %v1581
  %v1672 = vunpack.c.l.b16 %v1582
  %v1673 = vunpack.c.h.b16 %v1582
  %v1674 = vunpack.c.l.b16 %v1583
  %v1675 = vunpack.c.h.b16 %v1583
  %v1676 = vunpack.c.l.b16 %v1584
  %v1677 = vunpack.c.h.b16 %v1584
  %v1678 = vunpack.c.l.b16 %v1585
  %v1679 = vunpack.c.h.b16 %v1585
  %v1680 = vunpack.c.l.b16 %v1586
  %v1681 = vunpack.c.h.b16 %v1586
  %v1682 = vunpack.c.l.b16 %v1587
  %v1683 = vunpack.c.h.b16 %v1587
  %v1684 = vpack.c.b16 %v1620, %v1620
  %v1685 = vpack.c.b16 %v1621, %v1621
  %v1686 = vpack.c.b16 %v1622, %v1622
  %v1687 = vpack.c.b16 %v1623, %v1623
  %v1688 = vpack.c.b16 %v1624, %v1624
  %v1689 = vpack.c.b16 %v1625, %v1625
  %v1690 = vpack.c.b16 %v1626, %v1626
  %v1691 = vpack.c.b16 %v1627, %v1627
  %v1692 = vpack.c.b16 %v1628, %v1628
  %v1693 = vpack.c.b16 %v1629, %v1629
  %v1694 = vpack.c.b16 %v1630, %v1630
  %v1695 = vpack.c.b16 %v1631, %v1631
  %v1696 = vpack.c.b16 %v1632, %v1632
  %v1697 = vpack.c.b16 %v1633, %v1633
  %v1698 = vpack.c.b16 %v1634, %v1634
  %v1699 = vpack.c.b16 %v1635, %v1635
  %v1700 = vpack.c.b16 %v1636, %v1636
  %v1701 = vpack.c.b16 %v1637, %v1637
  %v1702 = vpack.c.b16 %v1638, %v1638
  %v1703 = vpack.c.b16 %v1639, %v1639
  %v1704 = vpack.c.b16 %v1640, %v1640
  %v1705 = vpack.c.b16 %v1641, %v1641
  %v1706 = vpack.c.b16 %v1642, %v1642
  %v1707 = vpack.c.b16 %v1643, %v1643
  %v1708 = vpack.c.b16 %v1644, %v1644
  %v1709 = vpack.c.b16 %v1645, %v1645
  %v1710 = vpack.c.b16 %v1646, %v1646
  %v1711 = vpack.c.b16 %v1647, %v1647
  %v1712 = vpack.c.b16 %v1648, %v1648
  %v1713 = vpack.c.b16 %v1649, %v1649
  %v1714 = vpack.c.b16 %v1650, %v1650
  %v1715 = vpack.c.b16 %v1651, %v1651
  %v1716 = vpack.c.b16 %v1652, %v1652
  %v1717 = vpack.c.b16 %v1653, %v1653
  %v1718 = vpack.c.b16 %v1654, %v1654
  %v1719 = vpack.c.b16 %v1655, %v1655
  %v1720 = vpack.c.b16 %v1656, %v1656
  %v1721 = vpack.c.b16 %v1657, %v1657
  %v1722 = vpack.c.b16 %v1658, %v1658
  %v1723 = vpack.c.b16 %v1659, %v1659
  %v1724 = vpack.c.b16 %v1660, %v1660
  %v1725 = vpack.c.b16 %v1661, %v1661
  %v1726 = vpack.c.b16 %v1662, %v1662
  %v1727 = vpack.c.b16 %v1663, %v1663
  %v1728 = vpack.c.b16 %v1664, %v1664
  %v1729 = vpack.c.b16 %v1665, %v1665
  %v1730 = vpack.c.b16 %v1666, %v1666
  %v1731 = vpack.c.b16 %v1667, %v1667
  %v1732 = vpack.c.b16 %v1668, %v1668
  %v1733 = vpack.c.b16 %v1669, %v1669
  %v1734 = vpack.c.b16 %v1670, %v1670
  %v1735 = vpack.c.b16 %v1671, %v1671
  %v1736 = vpack.c.b16 %v1672, %v1672
  %v1737 = vpack.c.b16 %v1673, %v1673
  %v1738 = vpack.c.b16 %v1674, %v1674
  %v1739 = vpack.c.b16 %v1675, %v1675
  %v1740 = vpack.c.b16 %v1676, %v1676
  %v1741 = vpack.c.b16 %v1677, %v1677
  %v1742 = vpack.c.b16 %v1678, %v1678
  %v1743 = vpack.c.b16 %v1679, %v1679
  %v1744 = vpack.c.b16 %v1680, %v1680
  %v1745 = vpack.c.b16 %v1681, %v1681
  %v1746 = vpack.c.b16 %v1682, %v1682
  %v1747 = vpack.c.b16 %v1683, %v1683
  %1812 = vst [vmem:[%s6] sm:$0xf] %v1684
  %1813 = vst [vmem:[%s6 + $0x4] sm:$0xf] %v1685
  %1814 = vst [vmem:[%s6 + $0x8] sm:$0xf] %v1686
  %1815 = vst [vmem:[%s6 + $0xc] sm:$0xf] %v1687
  %1816 = vst [vmem:[%s6 + $0x10] sm:$0xf] %v1688
  %1817 = vst [vmem:[%s6 + $0x14] sm:$0xf] %v1689
  %1818 = vst [vmem:[%s6 + $0x18] sm:$0xf] %v1690
  %1819 = vst [vmem:[%s6 + $0x1c] sm:$0xf] %v1691
  %1820 = vst [vmem:[%s6 + $0x20] sm:$0xf] %v1692
  %1821 = vst [vmem:[%s6 + $0x24] sm:$0xf] %v1693
  %1822 = vst [vmem:[%s6 + $0x28] sm:$0xf] %v1694
  %1823 = vst [vmem:[%s6 + $0x2c] sm:$0xf] %v1695
  %1824 = vst [vmem:[%s6 + $0x30] sm:$0xf] %v1696
  %1825 = vst [vmem:[%s6 + $0x34] sm:$0xf] %v1697
  %1826 = vst [vmem:[%s6 + $0x38] sm:$0xf] %v1698
  %1827 = vst [vmem:[%s6 + $0x3c] sm:$0xf] %v1699
  %1828 = vst [vmem:[%s6 + $0x40] sm:$0xf] %v1700
  %1829 = vst [vmem:[%s6 + $0x44] sm:$0xf] %v1701
  %1830 = vst [vmem:[%s6 + $0x48] sm:$0xf] %v1702
  %1831 = vst [vmem:[%s6 + $0x4c] sm:$0xf] %v1703
  %1832 = vst [vmem:[%s6 + $0x50] sm:$0xf] %v1704
  %1833 = vst [vmem:[%s6 + $0x54] sm:$0xf] %v1705
  %1834 = vst [vmem:[%s6 + $0x58] sm:$0xf] %v1706
  %1835 = vst [vmem:[%s6 + $0x5c] sm:$0xf] %v1707
  %1836 = vst [vmem:[%s6 + $0x60] sm:$0xf] %v1708
  %1837 = vst [vmem:[%s6 + $0x64] sm:$0xf] %v1709
  %1838 = vst [vmem:[%s6 + $0x68] sm:$0xf] %v1710
  %1839 = vst [vmem:[%s6 + $0x6c] sm:$0xf] %v1711
  %1840 = vst [vmem:[%s6 + $0x70] sm:$0xf] %v1712
  %1841 = vst [vmem:[%s6 + $0x74] sm:$0xf] %v1713
  %1842 = vst [vmem:[%s6 + $0x78] sm:$0xf] %v1714
  %1843 = vst [vmem:[%s6 + $0x7c] sm:$0xf] %v1715
  %1844 = vst [vmem:[%s6 + $0x80] sm:$0xf] %v1716
  %1845 = vst [vmem:[%s6 + $0x84] sm:$0xf] %v1717
  %1846 = vst [vmem:[%s6 + $0x88] sm:$0xf] %v1718
  %1847 = vst [vmem:[%s6 + $0x8c] sm:$0xf] %v1719
  %1848 = vst [vmem:[%s6 + $0x90] sm:$0xf] %v1720
  %1849 = vst [vmem:[%s6 + $0x94] sm:$0xf] %v1721
  %1850 = vst [vmem:[%s6 + $0x98] sm:$0xf] %v1722
  %1851 = vst [vmem:[%s6 + $0x9c] sm:$0xf] %v1723
  %1852 = vst [vmem:[%s6 + $0xa0] sm:$0xf] %v1724
  %1853 = vst [vmem:[%s6 + $0xa4] sm:$0xf] %v1725
  %1854 = vst [vmem:[%s6 + $0xa8] sm:$0xf] %v1726
  %1855 = vst [vmem:[%s6 + $0xac] sm:$0xf] %v1727
  %1856 = vst [vmem:[%s6 + $0xb0] sm:$0xf] %v1728
  %1857 = vst [vmem:[%s6 + $0xb4] sm:$0xf] %v1729
  %1858 = vst [vmem:[%s6 + $0xb8] sm:$0xf] %v1730
  %1859 = vst [vmem:[%s6 + $0xbc] sm:$0xf] %v1731
  %1860 = vst [vmem:[%s6 + $0xc0] sm:$0xf] %v1732
  %1861 = vst [vmem:[%s6 + $0xc4] sm:$0xf] %v1733
  %1862 = vst [vmem:[%s6 + $0xc8] sm:$0xf] %v1734
  %1863 = vst [vmem:[%s6 + $0xcc] sm:$0xf] %v1735
  %1864 = vst [vmem:[%s6 + $0xd0] sm:$0xf] %v1736
  %1865 = vst [vmem:[%s6 + $0xd4] sm:$0xf] %v1737
  %1866 = vst [vmem:[%s6 + $0xd8] sm:$0xf] %v1738
  %1867 = vst [vmem:[%s6 + $0xdc] sm:$0xf] %v1739
  %1868 = vst [vmem:[%s6 + $0xe0] sm:$0xf] %v1740
  %1869 = vst [vmem:[%s6 + $0xe4] sm:$0xf] %v1741
  %1870 = vst [vmem:[%s6 + $0xe8] sm:$0xf] %v1742
  %1871 = vst [vmem:[%s6 + $0xec] sm:$0xf] %v1743
  %1872 = vst [vmem:[%s6 + $0xf0] sm:$0xf] %v1744
  %1873 = vst [vmem:[%s6 + $0xf4] sm:$0xf] %v1745
  %1874 = vst [vmem:[%s6 + $0xf8] sm:$0xf] %v1746
  %1875 = vst [vmem:[%s6 + $0xfc] sm:$0xf] %v1747
  // Predicated region
  $region26: #{generator_forward.8} parent=0 // pred_check
    _
  $region27: #{generator_forward.8} parent=0 // pred_check_branch
    %1877 = sbr.rel (0) target = $region29
  $region28: #{generator_forward.8} parent=0 // pred_region
    _
  $region29: #{generator_forward.8} parent=0 // pred_fallthru
    _
  // Predicated region
  $region30: #{generator_forward.8} parent=0 // pred_check
    _
  $region31: #{generator_forward.8} parent=0 // pred_check_branch
    %1879 = sbr.rel (0) target = $region33
  $region32: #{generator_forward.8} parent=0 // pred_region
    _
  $region33: #{generator_forward.8} parent=0 // pred_fallthru
    _

// kernel: generator_forward.9
$region0: #{generator_forward.9}
  #allocation0 [shape = 'u32[]', space=smem, size = 0x4, offset = 0x4, fixed_abs, tag = 'smem constant byte address 0x4 - core index']
  #allocation1 [shape = 'u32[144,128]{1,0:T(1,128)}', space=vmem, size = 0x12000, scoped, tag = 'internal scratch']
  %s0 = inlined_call_operand.vmem [shape: bf16[2048,72], index: 0, kind: input, shape index: {}]
  %s1 = inlined_call_operand.vmem [shape: bf16[72,128], index: 1, kind: input, shape index: {}]
  %s2 = inlined_call_operand.vmem [shape: bf16[2048,128], index: 2, kind: output, shape index: {}]
  %s3 = sld [smem:[#allocation0]]
  $region41: #{generator_forward.9} parent=0
    _
  %s5 = ssub.s32 1, %s3
  %s6 = scalar_select 0, %s5, %s3
  loop: start=0, step=1, limit=4
  $region2: #{generator_forward.9} parent=0 // loop_pre_header
    _
  $region3: #{generator_forward.9} parent=0 // loop_header
    %s8 = sphi 0, %s12
    %p9 = scmp.ge.s32.totalorder %s8, 4
    %s18 = sphi 0, %s20
    %s21 = sphi 0, %s18
    %s22 = sphi 0, %s21
    %s38 = sphi 0, %s22
    %s42 = sphi 0, %s42
    %s44 = sphi 0, %s42
    %s45 = sphi 0, %s44
    %s59 = sphi 0, %s45
    %s65 = sphi 0, %s67
    %s68 = sphi 0, %s65
    %s69 = sphi 0, %s68
    %s85 = sphi 0, %s69
  $region4: #{generator_forward.9} parent=0 // loop_header_branch
    %11 = sbr.rel (%p9) target = $region8
  $region5: #{generator_forward.9} parent=0 // loop_body
    %s13 = ssub.s32 %s8, 1
    %s14 = ssub.s32 %s8, 2
    %s15 = sadd.s32 %s8, 1
    %s16 = ssub.s32 %s8, %s15
    %p17 = scmp.eq.s32.totalorder %s16, 0
    %s19 = sadd.s32 %s18, 1
    %s20 = scalar_select %p17, %s18, %s19
    %p23 = pneg %p17
    %p24 = scmp.eq.s32.totalorder %s8, 1
    %p25 = por %p23, %p24
    %p26 = scmp.ne.s32.totalorder %s18, %s21
    %p27 = scmp.eq.s32.totalorder %s8, 0
    %p28 = por %p26, %p27
    %p29 = scmp.ne.s32.totalorder %s18, %s21
    %p30 = scmp.eq.s32.totalorder %s13, 1
    %p31 = por %p29, %p30
    %p32 = scmp.ne.s32.totalorder %s21, %s22
    %p33 = scmp.eq.s32.totalorder %s13, 0
    %p34 = por %p32, %p33
    %p35 = scmp.ne.s32.totalorder %s21, %s22
    %p36 = scmp.eq.s32.totalorder %s14, 1
    %p37 = por %p35, %p36
    %p39 = scmp.ne.s32.totalorder %s22, %s38
    %p40 = scmp.eq.s32.totalorder %s14, 0
    %p41 = por %p39, %p40
    %s43 = sadd.s32 %s42, 1
    %p46 = scmp.eq.s32.totalorder %s8, 1
    %p47 = scmp.ne.s32.totalorder %s42, %s44
    %p48 = scmp.eq.s32.totalorder %s8, 0
    %p49 = por %p47, %p48
    %p50 = scmp.ne.s32.totalorder %s42, %s44
    %p51 = scmp.eq.s32.totalorder %s13, 1
    %p52 = por %p50, %p51
    %p53 = scmp.ne.s32.totalorder %s44, %s45
    %p54 = scmp.eq.s32.totalorder %s13, 0
    %p55 = por %p53, %p54
    %p56 = scmp.ne.s32.totalorder %s44, %s45
    %p57 = scmp.eq.s32.totalorder %s14, 1
    %p58 = por %p56, %p57
    %p60 = scmp.ne.s32.totalorder %s45, %s59
    %p61 = scmp.eq.s32.totalorder %s14, 0
    %p62 = por %p60, %p61
    %s63 = ssub.s32 %s8, %s15
    %p64 = scmp.eq.s32.totalorder %s63, 0
    %s66 = sadd.s32 %s65, 1
    %s67 = scalar_select %p64, %s65, %s66
    %p70 = pneg %p64
    %p71 = scmp.eq.s32.totalorder %s8, 1
    %p72 = por %p70, %p71
    %p73 = scmp.ne.s32.totalorder %s65, %s68
    %p74 = scmp.eq.s32.totalorder %s8, 0
    %p75 = por %p73, %p74
    %p76 = scmp.ne.s32.totalorder %s65, %s68
    %p77 = scmp.eq.s32.totalorder %s13, 1
    %p78 = por %p76, %p77
    %p79 = scmp.ne.s32.totalorder %s68, %s69
    %p80 = scmp.eq.s32.totalorder %s13, 0
    %p81 = por %p79, %p80
    %p82 = scmp.ne.s32.totalorder %s68, %s69
    %p83 = scmp.eq.s32.totalorder %s14, 1
    %p84 = por %p82, %p83
    %p86 = scmp.ne.s32.totalorder %s69, %s85
    %p87 = scmp.eq.s32.totalorder %s14, 0
    %p88 = por %p86, %p87
    %p89 = scmp.le.s32.totalorder 1, %s8
    %p90 = scmp.lt.s32.totalorder %s8, 3
    %p91 = pnand %p89, %p90
    %p92 = pneg %p91
    // Predicated region
    $region9: #{generator_forward.9} parent=5 // pred_check
      _
    $region10: #{generator_forward.9} parent=5 // pred_check_branch
      %94 = sbr.rel (%p91) target = $region12
    $region11: #{generator_forward.9} parent=5 // pred_region
      %s95 = ssub.s32 %s8, 1
      // Predicated region
      $region13: #{generator_forward.9} parent=11 // pred_check
        %p96 = pneg %p55
      $region14: #{generator_forward.9} parent=11 // pred_check_branch
        %98 = sbr.rel (%p96) target = $region16
      $region15: #{generator_forward.9} parent=11 // pred_region
        _
      $region16: #{generator_forward.9} parent=11 // pred_fallthru
        _
    $region12: #{generator_forward.9} parent=5 // pred_fallthru
      _
    %p99 = scmp.lt.s32.totalorder %s8, 2
    // Predicated region
    $region17: #{generator_forward.9} parent=5 // pred_check
      %p100 = pneg %p99
    $region18: #{generator_forward.9} parent=5 // pred_check_branch
      %102 = sbr.rel (%p100) target = $region20
    $region19: #{generator_forward.9} parent=5 // pred_region
      // Predicated region
      $region21: #{generator_forward.9} parent=19 // pred_check
        %p103 = pneg %p28
      $region22: #{generator_forward.9} parent=19 // pred_check_branch
        %105 = sbr.rel (%p103) target = $region24
      $region23: #{generator_forward.9} parent=19 // pred_region
        %s106 = smul.u32 128, %s8
        %p107 = scmp.lt.s32.totalorder %s106, 255
        %s108 = scalar_select %p107, %s106, 255
        %s109 = smul.addr %s108, 4
        %s110 = scalar_lea.vmem %s0, %s109
        %s111 = smul.u32 128, %s8
      $region24: #{generator_forward.9} parent=19 // pred_fallthru
        _
    $region20: #{generator_forward.9} parent=5 // pred_fallthru
      _
    %p112 = scmp.le.s32.totalorder 1, %s8
    %p113 = scmp.lt.s32.totalorder %s8, 3
    %p114 = pnand %p112, %p113
    %p115 = pneg %p114
    // Predicated region
    $region25: #{generator_forward.9} parent=5 // pred_check
      _
    $region26: #{generator_forward.9} parent=5 // pred_check_branch
      %117 = sbr.rel (%p114) target = $region28
    $region27: #{generator_forward.9} parent=5 // pred_region
      %s118 = ssub.s32 %s8, 1
      %s119 = smul.u32 128, %s13
      %p120 = scmp.lt.s32.totalorder %s119, 255
      %s121 = scalar_select %p120, %s119, 255
      %s122 = smul.addr %s121, 4
      %s123 = scalar_lea.vmem %s0, %s122
      %p124 = pneg %p34
      %p125 = pneg %p31
      %p126 = pneg %p55
      %p127 = pneg %p52
      %p128 = pneg %p81
      %p129 = pneg %p78
      %s130 = smul.u32 128, %s13
      %p131 = scmp.lt.s32.totalorder %s130, 255
      %s132 = scalar_select %p131, %s130, 255
      %s133 = smul.addr %s132, 4
      %s134 = scalar_lea.vmem %s2, %s133
      %s135 = smul.u32 128, %s13
      %p136 = scmp.lt.s32.totalorder %s135, 255
      %s137 = scalar_select %p136, %s135, 255
      %s138 = smul.addr %s137, 4
      %s139 = scalar_lea.vmem %s0, %s138
      %s140 = smul.u32 128, %s13
      %s141 = smul.u32 128, %s13
      %p142 = scmp.lt.s32.totalorder %s141, 255
      %s143 = scalar_select %p142, %s141, 255
      %s144 = smul.addr %s143, 4
      %s145 = scalar_lea.vmem %s2, %s144
      %s146 = smul.u32 128, %s13
      %v148 = vld [vmem:[%s139] sm:$0xf]
      %v149 = vld [vmem:[%s139 + $0x4] sm:$0xf]
      %v150 = vld [vmem:[%s139 + $0x8] sm:$0xf]
      %v151 = vld [vmem:[%s139 + $0xc] sm:$0xf]
      %v152 = vld [vmem:[%s139 + $0x10] sm:$0xf]
      %v153 = vld [vmem:[%s139 + $0x14] sm:$0xf]
      %v154 = vld [vmem:[%s139 + $0x18] sm:$0xf]
      %v155 = vld [vmem:[%s139 + $0x1c] sm:$0xf]
      %v156 = vld [vmem:[%s139 + $0x20] sm:$0xf]
      %v157 = vld [vmem:[%s139 + $0x24] sm:$0xf]
      %v158 = vld [vmem:[%s139 + $0x28] sm:$0xf]
      %v159 = vld [vmem:[%s139 + $0x2c] sm:$0xf]
      %v160 = vld [vmem:[%s139 + $0x30] sm:$0xf]
      %v161 = vld [vmem:[%s139 + $0x34] sm:$0xf]
      %v162 = vld [vmem:[%s139 + $0x38] sm:$0xf]
      %v163 = vld [vmem:[%s139 + $0x3c] sm:$0xf]
      %v164 = vld [vmem:[%s139 + $0x40] sm:$0xf]
      %v165 = vld [vmem:[%s139 + $0x44] sm:$0xf]
      %v166 = vld [vmem:[%s139 + $0x48] sm:$0xf]
      %v167 = vld [vmem:[%s139 + $0x4c] sm:$0xf]
      %v168 = vld [vmem:[%s139 + $0x50] sm:$0xf]
      %v169 = vld [vmem:[%s139 + $0x54] sm:$0xf]
      %v170 = vld [vmem:[%s139 + $0x58] sm:$0xf]
      %v171 = vld [vmem:[%s139 + $0x5c] sm:$0xf]
      %v172 = vld [vmem:[%s139 + $0x60] sm:$0xf]
      %v173 = vld [vmem:[%s139 + $0x64] sm:$0xf]
      %v174 = vld [vmem:[%s139 + $0x68] sm:$0xf]
      %v175 = vld [vmem:[%s139 + $0x6c] sm:$0xf]
      %v176 = vld [vmem:[%s139 + $0x70] sm:$0xf]
      %v177 = vld [vmem:[%s139 + $0x74] sm:$0xf]
      %v178 = vld [vmem:[%s139 + $0x78] sm:$0xf]
      %v179 = vld [vmem:[%s139 + $0x7c] sm:$0xf]
      %v180 = vld [vmem:[%s139 + $0x80] sm:$0xf]
      %v181 = vld [vmem:[%s139 + $0x84] sm:$0xf]
      %v182 = vld [vmem:[%s139 + $0x88] sm:$0xf]
      %v183 = vld [vmem:[%s139 + $0x8c] sm:$0xf]
      %v184 = vld [vmem:[%s139 + $0x90] sm:$0xf]
      %v185 = vld [vmem:[%s139 + $0x94] sm:$0xf]
      %v186 = vld [vmem:[%s139 + $0x98] sm:$0xf]
      %v187 = vld [vmem:[%s139 + $0x9c] sm:$0xf]
      %v188 = vld [vmem:[%s139 + $0xa0] sm:$0xf]
      %v189 = vld [vmem:[%s139 + $0xa4] sm:$0xf]
      %v190 = vld [vmem:[%s139 + $0xa8] sm:$0xf]
      %v191 = vld [vmem:[%s139 + $0xac] sm:$0xf]
      %v192 = vld [vmem:[%s139 + $0xb0] sm:$0xf]
      %v193 = vld [vmem:[%s139 + $0xb4] sm:$0xf]
      %v194 = vld [vmem:[%s139 + $0xb8] sm:$0xf]
      %v195 = vld [vmem:[%s139 + $0xbc] sm:$0xf]
      %v196 = vld [vmem:[%s139 + $0xc0] sm:$0xf]
      %v197 = vld [vmem:[%s139 + $0xc4] sm:$0xf]
      %v198 = vld [vmem:[%s139 + $0xc8] sm:$0xf]
      %v199 = vld [vmem:[%s139 + $0xcc] sm:$0xf]
      %v200 = vld [vmem:[%s139 + $0xd0] sm:$0xf]
      %v201 = vld [vmem:[%s139 + $0xd4] sm:$0xf]
      %v202 = vld [vmem:[%s139 + $0xd8] sm:$0xf]
      %v203 = vld [vmem:[%s139 + $0xdc] sm:$0xf]
      %v204 = vld [vmem:[%s139 + $0xe0] sm:$0xf]
      %v205 = vld [vmem:[%s139 + $0xe4] sm:$0xf]
      %v206 = vld [vmem:[%s139 + $0xe8] sm:$0xf]
      %v207 = vld [vmem:[%s139 + $0xec] sm:$0xf]
      %v208 = vld [vmem:[%s139 + $0xf0] sm:$0xf]
      %v209 = vld [vmem:[%s139 + $0xf4] sm:$0xf]
      %v210 = vld [vmem:[%s139 + $0xf8] sm:$0xf]
      %v211 = vld [vmem:[%s139 + $0xfc] sm:$0xf]
      %v212 = vld [vmem:[%s139 + $0x100] sm:$0xf]
      %v213 = vld [vmem:[%s139 + $0x104] sm:$0xf]
      %v214 = vld [vmem:[%s139 + $0x108] sm:$0xf]
      %v215 = vld [vmem:[%s139 + $0x10c] sm:$0xf]
      %v216 = vld [vmem:[%s139 + $0x110] sm:$0xf]
      %v217 = vld [vmem:[%s139 + $0x114] sm:$0xf]
      %v218 = vld [vmem:[%s139 + $0x118] sm:$0xf]
      %v219 = vld [vmem:[%s139 + $0x11c] sm:$0xf]
      %v220 = vld [vmem:[%s139 + $0x120] sm:$0xf]
      %v221 = vld [vmem:[%s139 + $0x124] sm:$0xf]
      %v222 = vld [vmem:[%s139 + $0x128] sm:$0xf]
      %v223 = vld [vmem:[%s139 + $0x12c] sm:$0xf]
      %v224 = vld [vmem:[%s139 + $0x130] sm:$0xf]
      %v225 = vld [vmem:[%s139 + $0x134] sm:$0xf]
      %v226 = vld [vmem:[%s139 + $0x138] sm:$0xf]
      %v227 = vld [vmem:[%s139 + $0x13c] sm:$0xf]
      %v228 = vld [vmem:[%s139 + $0x140] sm:$0xf]
      %v229 = vld [vmem:[%s139 + $0x144] sm:$0xf]
      %v230 = vld [vmem:[%s139 + $0x148] sm:$0xf]
      %v231 = vld [vmem:[%s139 + $0x14c] sm:$0xf]
      %v232 = vld [vmem:[%s139 + $0x150] sm:$0xf]
      %v233 = vld [vmem:[%s139 + $0x154] sm:$0xf]
      %v234 = vld [vmem:[%s139 + $0x158] sm:$0xf]
      %v235 = vld [vmem:[%s139 + $0x15c] sm:$0xf]
      %v236 = vld [vmem:[%s139 + $0x160] sm:$0xf]
      %v237 = vld [vmem:[%s139 + $0x164] sm:$0xf]
      %v238 = vld [vmem:[%s139 + $0x168] sm:$0xf]
      %v239 = vld [vmem:[%s139 + $0x16c] sm:$0xf]
      %v240 = vld [vmem:[%s139 + $0x170] sm:$0xf]
      %v241 = vld [vmem:[%s139 + $0x174] sm:$0xf]
      %v242 = vld [vmem:[%s139 + $0x178] sm:$0xf]
      %v243 = vld [vmem:[%s139 + $0x17c] sm:$0xf]
      %v244 = vld [vmem:[%s139 + $0x180] sm:$0xf]
      %v245 = vld [vmem:[%s139 + $0x184] sm:$0xf]
      %v246 = vld [vmem:[%s139 + $0x188] sm:$0xf]
      %v247 = vld [vmem:[%s139 + $0x18c] sm:$0xf]
      %v248 = vld [vmem:[%s139 + $0x190] sm:$0xf]
      %v249 = vld [vmem:[%s139 + $0x194] sm:$0xf]
      %v250 = vld [vmem:[%s139 + $0x198] sm:$0xf]
      %v251 = vld [vmem:[%s139 + $0x19c] sm:$0xf]
      %v252 = vld [vmem:[%s139 + $0x1a0] sm:$0xf]
      %v253 = vld [vmem:[%s139 + $0x1a4] sm:$0xf]
      %v254 = vld [vmem:[%s139 + $0x1a8] sm:$0xf]
      %v255 = vld [vmem:[%s139 + $0x1ac] sm:$0xf]
      %v256 = vld [vmem:[%s139 + $0x1b0] sm:$0xf]
      %v257 = vld [vmem:[%s139 + $0x1b4] sm:$0xf]
      %v258 = vld [vmem:[%s139 + $0x1b8] sm:$0xf]
      %v259 = vld [vmem:[%s139 + $0x1bc] sm:$0xf]
      %v260 = vld [vmem:[%s139 + $0x1c0] sm:$0xf]
      %v261 = vld [vmem:[%s139 + $0x1c4] sm:$0xf]
      %v262 = vld [vmem:[%s139 + $0x1c8] sm:$0xf]
      %v263 = vld [vmem:[%s139 + $0x1cc] sm:$0xf]
      %v264 = vld [vmem:[%s139 + $0x1d0] sm:$0xf]
      %v265 = vld [vmem:[%s139 + $0x1d4] sm:$0xf]
      %v266 = vld [vmem:[%s139 + $0x1d8] sm:$0xf]
      %v267 = vld [vmem:[%s139 + $0x1dc] sm:$0xf]
      %v268 = vld [vmem:[%s139 + $0x1e0] sm:$0xf]
      %v269 = vld [vmem:[%s139 + $0x1e4] sm:$0xf]
      %v270 = vld [vmem:[%s139 + $0x1e8] sm:$0xf]
      %v271 = vld [vmem:[%s139 + $0x1ec] sm:$0xf]
      %v272 = vld [vmem:[%s139 + $0x1f0] sm:$0xf]
      %v273 = vld [vmem:[%s139 + $0x1f4] sm:$0xf]
      %v274 = vld [vmem:[%s139 + $0x1f8] sm:$0xf]
      %v275 = vld [vmem:[%s139 + $0x1fc] sm:$0xf]
      %v276 = vld [vmem:[%s1] sm:$0xf]
      %v277 = vld [vmem:[%s1 + $0x4] sm:$0xf]
      %v278 = vld [vmem:[%s1 + $0x8] sm:$0xf]
      %v279 = vld [vmem:[%s1 + $0xc] sm:$0xf]
      %v280 = vld [vmem:[%s1 + $0x10] sm:$0xf]
      %v281 = vld [vmem:[%s1 + $0x14] sm:$0xf]
      %v282 = vld [vmem:[%s1 + $0x18] sm:$0xf]
      %v283 = vld [vmem:[%s1 + $0x1c] sm:$0xf]
      %v284 = vld [vmem:[%s1 + $0x20] sm:$0xf]
      %v413 = vunpack.c.l.b16 %v148
      %v414 = vunpack.c.l.b16 %v149
      %v415 = vunpack.c.l.b16 %v150
      %v416 = vunpack.c.l.b16 %v151
      %v417 = vunpack.c.l.b16 %v152
      %v418 = vunpack.c.l.b16 %v153
      %v419 = vunpack.c.l.b16 %v154
      %v420 = vunpack.c.l.b16 %v155
      %v421 = vunpack.c.l.b16 %v156
      %v422 = vunpack.c.l.b16 %v157
      %v423 = vunpack.c.l.b16 %v158
      %v424 = vunpack.c.l.b16 %v159
      %v425 = vunpack.c.l.b16 %v160
      %v426 = vunpack.c.l.b16 %v161
      %v427 = vunpack.c.l.b16 %v162
      %v428 = vunpack.c.l.b16 %v163
      %v429 = vunpack.c.l.b16 %v164
      %v430 = vunpack.c.l.b16 %v165
      %v431 = vunpack.c.l.b16 %v166
      %v432 = vunpack.c.l.b16 %v167
      %v433 = vunpack.c.l.b16 %v168
      %v434 = vunpack.c.l.b16 %v169
      %v435 = vunpack.c.l.b16 %v170
      %v436 = vunpack.c.l.b16 %v171
      %v437 = vunpack.c.l.b16 %v172
      %v438 = vunpack.c.l.b16 %v173
      %v439 = vunpack.c.l.b16 %v174
      %v440 = vunpack.c.l.b16 %v175
      %v441 = vunpack.c.l.b16 %v176
      %v442 = vunpack.c.l.b16 %v177
      %v443 = vunpack.c.l.b16 %v178
      %v444 = vunpack.c.l.b16 %v179
      %v445 = vunpack.c.l.b16 %v180
      %v446 = vunpack.c.l.b16 %v181
      %v447 = vunpack.c.l.b16 %v182
      %v448 = vunpack.c.l.b16 %v183
      %v449 = vunpack.c.l.b16 %v184
      %v450 = vunpack.c.l.b16 %v185
      %v451 = vunpack.c.l.b16 %v186
      %v452 = vunpack.c.l.b16 %v187
      %v453 = vunpack.c.l.b16 %v188
      %v454 = vunpack.c.l.b16 %v189
      %v455 = vunpack.c.l.b16 %v190
      %v456 = vunpack.c.l.b16 %v191
      %v457 = vunpack.c.l.b16 %v192
      %v458 = vunpack.c.l.b16 %v193
      %v459 = vunpack.c.l.b16 %v194
      %v460 = vunpack.c.l.b16 %v195
      %v461 = vunpack.c.l.b16 %v196
      %v462 = vunpack.c.l.b16 %v197
      %v463 = vunpack.c.l.b16 %v198
      %v464 = vunpack.c.l.b16 %v199
      %v465 = vunpack.c.l.b16 %v200
      %v466 = vunpack.c.l.b16 %v201
      %v467 = vunpack.c.l.b16 %v202
      %v468 = vunpack.c.l.b16 %v203
      %v469 = vunpack.c.l.b16 %v204
      %v470 = vunpack.c.l.b16 %v205
      %v471 = vunpack.c.l.b16 %v206
      %v472 = vunpack.c.l.b16 %v207
      %v473 = vunpack.c.l.b16 %v208
      %v474 = vunpack.c.l.b16 %v209
      %v475 = vunpack.c.l.b16 %v210
      %v476 = vunpack.c.l.b16 %v211
      %v477 = vunpack.c.l.b16 %v212
      %v478 = vunpack.c.l.b16 %v213
      %v479 = vunpack.c.l.b16 %v214
      %v480 = vunpack.c.l.b16 %v215
      %v481 = vunpack.c.l.b16 %v216
      %v482 = vunpack.c.l.b16 %v217
      %v483 = vunpack.c.l.b16 %v218
      %v484 = vunpack.c.l.b16 %v219
      %v485 = vunpack.c.l.b16 %v220
      %v486 = vunpack.c.l.b16 %v221
      %v487 = vunpack.c.l.b16 %v222
      %v488 = vunpack.c.l.b16 %v223
      %v489 = vunpack.c.l.b16 %v224
      %v490 = vunpack.c.l.b16 %v225
      %v491 = vunpack.c.l.b16 %v226
      %v492 = vunpack.c.l.b16 %v227
      %v493 = vunpack.c.l.b16 %v228
      %v494 = vunpack.c.l.b16 %v229
      %v495 = vunpack.c.l.b16 %v230
      %v496 = vunpack.c.l.b16 %v231
      %v497 = vunpack.c.l.b16 %v232
      %v498 = vunpack.c.l.b16 %v233
      %v499 = vunpack.c.l.b16 %v234
      %v500 = vunpack.c.l.b16 %v235
      %v501 = vunpack.c.l.b16 %v236
      %v502 = vunpack.c.l.b16 %v237
      %v503 = vunpack.c.l.b16 %v238
      %v504 = vunpack.c.l.b16 %v239
      %v505 = vunpack.c.l.b16 %v240
      %v506 = vunpack.c.l.b16 %v241
      %v507 = vunpack.c.l.b16 %v242
      %v508 = vunpack.c.l.b16 %v243
      %v509 = vunpack.c.l.b16 %v244
      %v510 = vunpack.c.l.b16 %v245
      %v511 = vunpack.c.l.b16 %v246
      %v512 = vunpack.c.l.b16 %v247
      %v513 = vunpack.c.l.b16 %v248
      %v514 = vunpack.c.l.b16 %v249
      %v515 = vunpack.c.l.b16 %v250
      %v516 = vunpack.c.l.b16 %v251
      %v517 = vunpack.c.l.b16 %v252
      %v518 = vunpack.c.l.b16 %v253
      %v519 = vunpack.c.l.b16 %v254
      %v520 = vunpack.c.l.b16 %v255
      %v521 = vunpack.c.l.b16 %v256
      %v522 = vunpack.c.l.b16 %v257
      %v523 = vunpack.c.l.b16 %v258
      %v524 = vunpack.c.l.b16 %v259
      %v525 = vunpack.c.l.b16 %v260
      %v526 = vunpack.c.l.b16 %v261
      %v527 = vunpack.c.l.b16 %v262
      %v528 = vunpack.c.l.b16 %v263
      %v529 = vunpack.c.l.b16 %v264
      %v530 = vunpack.c.l.b16 %v265
      %v531 = vunpack.c.l.b16 %v266
      %v532 = vunpack.c.l.b16 %v267
      %v533 = vunpack.c.l.b16 %v268
      %v534 = vunpack.c.l.b16 %v269
      %v535 = vunpack.c.l.b16 %v270
      %v536 = vunpack.c.l.b16 %v271
      %v537 = vunpack.c.l.b16 %v272
      %v538 = vunpack.c.l.b16 %v273
      %v539 = vunpack.c.l.b16 %v274
      %v540 = vunpack.c.l.b16 %v275
      %v541 = vpack.c.b16 %v414, %v413
      %v542 = vpack.c.b16 %v416, %v415
      %v543 = vpack.c.b16 %v418, %v417
      %v544 = vpack.c.b16 %v420, %v419
      %v545 = vpack.c.b16 %v422, %v421
      %v546 = vpack.c.b16 %v424, %v423
      %v547 = vpack.c.b16 %v426, %v425
      %v548 = vpack.c.b16 %v428, %v427
      %v549 = vpack.c.b16 %v430, %v429
      %v550 = vpack.c.b16 %v432, %v431
      %v551 = vpack.c.b16 %v434, %v433
      %v552 = vpack.c.b16 %v436, %v435
      %v553 = vpack.c.b16 %v438, %v437
      %v554 = vpack.c.b16 %v440, %v439
      %v555 = vpack.c.b16 %v442, %v441
      %v556 = vpack.c.b16 %v444, %v443
      %v557 = vpack.c.b16 %v446, %v445
      %v558 = vpack.c.b16 %v448, %v447
      %v559 = vpack.c.b16 %v450, %v449
      %v560 = vpack.c.b16 %v452, %v451
      %v561 = vpack.c.b16 %v454, %v453
      %v562 = vpack.c.b16 %v456, %v455
      %v563 = vpack.c.b16 %v458, %v457
      %v564 = vpack.c.b16 %v460, %v459
      %v565 = vpack.c.b16 %v462, %v461
      %v566 = vpack.c.b16 %v464, %v463
      %v567 = vpack.c.b16 %v466, %v465
      %v568 = vpack.c.b16 %v468, %v467
      %v569 = vpack.c.b16 %v470, %v469
      %v570 = vpack.c.b16 %v472, %v471
      %v571 = vpack.c.b16 %v474, %v473
      %v572 = vpack.c.b16 %v476, %v475
      %v573 = vpack.c.b16 %v478, %v477
      %v574 = vpack.c.b16 %v480, %v479
      %v575 = vpack.c.b16 %v482, %v481
      %v576 = vpack.c.b16 %v484, %v483
      %v577 = vpack.c.b16 %v486, %v485
      %v578 = vpack.c.b16 %v488, %v487
      %v579 = vpack.c.b16 %v490, %v489
      %v580 = vpack.c.b16 %v492, %v491
      %v581 = vpack.c.b16 %v494, %v493
      %v582 = vpack.c.b16 %v496, %v495
      %v583 = vpack.c.b16 %v498, %v497
      %v584 = vpack.c.b16 %v500, %v499
      %v585 = vpack.c.b16 %v502, %v501
      %v586 = vpack.c.b16 %v504, %v503
      %v587 = vpack.c.b16 %v506, %v505
      %v588 = vpack.c.b16 %v508, %v507
      %v589 = vpack.c.b16 %v510, %v509
      %v590 = vpack.c.b16 %v512, %v511
      %v591 = vpack.c.b16 %v514, %v513
      %v592 = vpack.c.b16 %v516, %v515
      %v593 = vpack.c.b16 %v518, %v517
      %v594 = vpack.c.b16 %v520, %v519
      %v595 = vpack.c.b16 %v522, %v521
      %v596 = vpack.c.b16 %v524, %v523
      %v597 = vpack.c.b16 %v526, %v525
      %v598 = vpack.c.b16 %v528, %v527
      %v599 = vpack.c.b16 %v530, %v529
      %v600 = vpack.c.b16 %v532, %v531
      %v601 = vpack.c.b16 %v534, %v533
      %v602 = vpack.c.b16 %v536, %v535
      %v603 = vpack.c.b16 %v538, %v537
      %v604 = vpack.c.b16 %v540, %v539
      %v614 = vunpack.c.l.b16 %v276
      %v615 = vunpack.c.l.b16 %v277
      %v616 = vunpack.c.l.b16 %v278
      %v617 = vunpack.c.l.b16 %v279
      %v618 = vunpack.c.l.b16 %v280
      %v619 = vunpack.c.l.b16 %v281
      %v620 = vunpack.c.l.b16 %v282
      %v621 = vunpack.c.l.b16 %v283
      %v622 = vunpack.c.l.b16 %v284
      %v623 = vpack.c.b16 %v615, %v614
      %v624 = vpack.c.b16 %v617, %v616
      %v625 = vpack.c.b16 %v619, %v618
      %v626 = vpack.c.b16 %v621, %v620
      %v627 = vpack.c.b16 %v622, %v622
      %vm632 = vcmask 588800
      %v634 = vsel %vm632, %v541, 0
      %v637 = vsel %vm632, %v542, 0
      %v640 = vsel %vm632, %v543, 0
      %v643 = vsel %vm632, %v544, 0
      %v646 = vsel %vm632, %v545, 0
      %v649 = vsel %vm632, %v546, 0
      %v652 = vsel %vm632, %v547, 0
      %v655 = vsel %vm632, %v548, 0
      %v658 = vsel %vm632, %v549, 0
      %v661 = vsel %vm632, %v550, 0
      %v664 = vsel %vm632, %v551, 0
      %v667 = vsel %vm632, %v552, 0
      %v670 = vsel %vm632, %v553, 0
      %v673 = vsel %vm632, %v554, 0
      %v676 = vsel %vm632, %v555, 0
      %v679 = vsel %vm632, %v556, 0
      %v682 = vsel %vm632, %v557, 0
      %v685 = vsel %vm632, %v558, 0
      %v688 = vsel %vm632, %v559, 0
      %v691 = vsel %vm632, %v560, 0
      %v694 = vsel %vm632, %v561, 0
      %v697 = vsel %vm632, %v562, 0
      %v700 = vsel %vm632, %v563, 0
      %v703 = vsel %vm632, %v564, 0
      %v706 = vsel %vm632, %v565, 0
      %v709 = vsel %vm632, %v566, 0
      %v712 = vsel %vm632, %v567, 0
      %v715 = vsel %vm632, %v568, 0
      %v718 = vsel %vm632, %v569, 0
      %v721 = vsel %vm632, %v570, 0
      %v724 = vsel %vm632, %v571, 0
      %v727 = vsel %vm632, %v572, 0
      %v730 = vsel %vm632, %v573, 0
      %v733 = vsel %vm632, %v574, 0
      %v736 = vsel %vm632, %v575, 0
      %v739 = vsel %vm632, %v576, 0
      %v742 = vsel %vm632, %v577, 0
      %v745 = vsel %vm632, %v578, 0
      %v748 = vsel %vm632, %v579, 0
      %v751 = vsel %vm632, %v580, 0
      %v754 = vsel %vm632, %v581, 0
      %v757 = vsel %vm632, %v582, 0
      %v760 = vsel %vm632, %v583, 0
      %v763 = vsel %vm632, %v584, 0
      %v766 = vsel %vm632, %v585, 0
      %v769 = vsel %vm632, %v586, 0
      %v772 = vsel %vm632, %v587, 0
      %v775 = vsel %vm632, %v588, 0
      %v778 = vsel %vm632, %v589, 0
      %v781 = vsel %vm632, %v590, 0
      %v784 = vsel %vm632, %v591, 0
      %v787 = vsel %vm632, %v592, 0
      %v790 = vsel %vm632, %v593, 0
      %v793 = vsel %vm632, %v594, 0
      %v796 = vsel %vm632, %v595, 0
      %v799 = vsel %vm632, %v596, 0
      %v802 = vsel %vm632, %v597, 0
      %v805 = vsel %vm632, %v598, 0
      %v808 = vsel %vm632, %v599, 0
      %v811 = vsel %vm632, %v600, 0
      %v814 = vsel %vm632, %v601, 0
      %v817 = vsel %vm632, %v602, 0
      %v820 = vsel %vm632, %v603, 0
      %v823 = vsel %vm632, %v604, 0
      %vm825 = vcmask 1043456
      %v827 = vsel %vm825, %v627, 0
      %829 = vmatprep.subr.bf16.mxu0 0
      %830 = vmatpush1.bf16.msra.mxu0 %v623
      %831 = vmatprep.subr.bf16.mxu0 0
      %832 = vmatpush1.bf16.msra.mxu0 %v624
      %833 = vmatprep.subr.bf16.mxu0 0
      %834 = vmatpush1.bf16.msra.mxu0 %v625
      %835 = vmatprep.subr.bf16.mxu0 0
      %836 = vmatpush1.bf16.msra.mxu0 %v626
      %837 = vmatprep.subr.bf16.mxu0 0
      %838 = vmatpush1.bf16.msra.mxu0 %v827
      %839 = vmatprep.subr.bf16.mxu0 0
      %840 = vmatpush1.bf16.msra.mxu0 0
      %841 = vmatprep.subr.bf16.mxu0 0
      %842 = vmatpush1.bf16.msra.mxu0 0
      %843 = vmatprep.subr.bf16.mxu0 0
      %844 = vmatpush1.bf16.msra.mxu0 0
      %845 = vmatprep.subr.bf16.mxu0 0
      %846 = vmatpush1.bf16.msra.mxu0 0
      %847 = vmatprep.subr.bf16.mxu0 0
      %848 = vmatpush1.bf16.msra.mxu0 0
      %849 = vmatprep.subr.bf16.mxu0 0
      %850 = vmatpush1.bf16.msra.mxu0 0
      %851 = vmatprep.subr.bf16.mxu0 0
      %852 = vmatpush1.bf16.msra.mxu0 0
      %853 = vmatprep.subr.bf16.mxu0 0
      %854 = vmatpush1.bf16.msra.mxu0 0
      %855 = vmatprep.subr.bf16.mxu0 0
      %856 = vmatpush1.bf16.msra.mxu0 0
      %857 = vmatprep.subr.bf16.mxu0 0
      %858 = vmatpush1.bf16.msra.mxu0 0
      %859 = vmatprep.subr.bf16.mxu0 0
      %860 = vmatpush1.bf16.msra.mxu0 0
      %861 = vmatprep.mubr.bf16.mxu0 0
      %862 = vmatmul.mubr.bf16.gmra.mrb[0].mxu0 %v634
      %v863 = vpop.f32.mrb[0].mxu0
      %v864 = vadd.f32 0.0, %v863
      %v865 = vpop.f32.mrb[0].mxu0
      %v866 = vpop.f32.mrb[0].mxu0
      %v867 = vadd.f32 0.0, %v866
      %v868 = vpop.f32.mrb[0].mxu0
      %869 = vmatprep.mubr.bf16.mxu0 0
      %870 = vmatmul.mubr.bf16.gmra.mrb[0].mxu0 %v637
      %v871 = vpop.f32.mrb[0].mxu0
      %v872 = vadd.f32 0.0, %v871
      %v873 = vpop.f32.mrb[0].mxu0
      %v874 = vpop.f32.mrb[0].mxu0
      %v875 = vadd.f32 0.0, %v874
      %v876 = vpop.f32.mrb[0].mxu0
      %877 = vmatprep.mubr.bf16.mxu0 0
      %878 = vmatmul.mubr.bf16.gmra.mrb[0].mxu0 %v640
      %v879 = vpop.f32.mrb[0].mxu0
      %v880 = vadd.f32 0.0, %v879
      %v881 = vpop.f32.mrb[0].mxu0
      %v882 = vpop.f32.mrb[0].mxu0
      %v883 = vadd.f32 0.0, %v882
      %v884 = vpop.f32.mrb[0].mxu0
      %885 = vmatprep.mubr.bf16.mxu0 0
      %886 = vmatmul.mubr.bf16.gmra.mrb[0].mxu0 %v643
      %v887 = vpop.f32.mrb[0].mxu0
      %v888 = vadd.f32 0.0, %v887
      %v889 = vpop.f32.mrb[0].mxu0
      %v890 = vpop.f32.mrb[0].mxu0
      %v891 = vadd.f32 0.0, %v890
      %v892 = vpop.f32.mrb[0].mxu0
      %893 = vmatprep.mubr.bf16.mxu0 0
      %894 = vmatmul.mubr.bf16.gmra.mrb[0].mxu0 %v646
      %v895 = vpop.f32.mrb[0].mxu0
      %v896 = vadd.f32 0.0, %v895
      %v897 = vpop.f32.mrb[0].mxu0
      %v898 = vpop.f32.mrb[0].mxu0
      %v899 = vadd.f32 0.0, %v898
      %v900 = vpop.f32.mrb[0].mxu0
      %901 = vmatprep.mubr.bf16.mxu0 0
      %902 = vmatmul.mubr.bf16.gmra.mrb[0].mxu0 %v649
      %v903 = vpop.f32.mrb[0].mxu0
      %v904 = vadd.f32 0.0, %v903
      %v905 = vpop.f32.mrb[0].mxu0
      %v906 = vpop.f32.mrb[0].mxu0
      %v907 = vadd.f32 0.0, %v906
      %v908 = vpop.f32.mrb[0].mxu0
      %909 = vmatprep.mubr.bf16.mxu0 0
      %910 = vmatmul.mubr.bf16.gmra.mrb[0].mxu0 %v652
      %v911 = vpop.f32.mrb[0].mxu0
      %v912 = vadd.f32 0.0, %v911
      %v913 = vpop.f32.mrb[0].mxu0
      %v914 = vpop.f32.mrb[0].mxu0
      %v915 = vadd.f32 0.0, %v914
      %v916 = vpop.f32.mrb[0].mxu0
      %917 = vmatprep.mubr.bf16.mxu0 0
      %918 = vmatmul.mubr.bf16.gmra.mrb[0].mxu0 %v655
      %v919 = vpop.f32.mrb[0].mxu0
      %v920 = vadd.f32 0.0, %v919
      %v921 = vpop.f32.mrb[0].mxu0
      %v922 = vpop.f32.mrb[0].mxu0
      %v923 = vadd.f32 0.0, %v922
      %v924 = vpop.f32.mrb[0].mxu0
      %925 = vmatprep.mubr.bf16.mxu0 0
      %926 = vmatmul.mubr.bf16.gmra.mrb[0].mxu0 %v658
      %v927 = vpop.f32.mrb[0].mxu0
      %v928 = vadd.f32 0.0, %v927
      %v929 = vpop.f32.mrb[0].mxu0
      %v930 = vpop.f32.mrb[0].mxu0
      %v931 = vadd.f32 0.0, %v930
      %v932 = vpop.f32.mrb[0].mxu0
      %933 = vmatprep.mubr.bf16.mxu0 0
      %934 = vmatmul.mubr.bf16.gmra.mrb[0].mxu0 %v661
      %v935 = vpop.f32.mrb[0].mxu0
      %v936 = vadd.f32 0.0, %v935
      %v937 = vpop.f32.mrb[0].mxu0
      %v938 = vpop.f32.mrb[0].mxu0
      %v939 = vadd.f32 0.0, %v938
      %v940 = vpop.f32.mrb[0].mxu0
      %941 = vmatprep.mubr.bf16.mxu0 0
      %942 = vmatmul.mubr.bf16.gmra.mrb[0].mxu0 %v664
      %v943 = vpop.f32.mrb[0].mxu0
      %v944 = vadd.f32 0.0, %v943
      %v945 = vpop.f32.mrb[0].mxu0
      %v946 = vpop.f32.mrb[0].mxu0
      %v947 = vadd.f32 0.0, %v946
      %v948 = vpop.f32.mrb[0].mxu0
      %949 = vmatprep.mubr.bf16.mxu0 0
      %950 = vmatmul.mubr.bf16.gmra.mrb[0].mxu0 %v667
      %v951 = vpop.f32.mrb[0].mxu0
      %v952 = vadd.f32 0.0, %v951
      %v953 = vpop.f32.mrb[0].mxu0
      %v954 = vpop.f32.mrb[0].mxu0
      %v955 = vadd.f32 0.0, %v954
      %v956 = vpop.f32.mrb[0].mxu0
      %957 = vmatprep.mubr.bf16.mxu0 0
      %958 = vmatmul.mubr.bf16.gmra.mrb[0].mxu0 %v670
      %v959 = vpop.f32.mrb[0].mxu0
      %v960 = vadd.f32 0.0, %v959
      %v961 = vpop.f32.mrb[0].mxu0
      %v962 = vpop.f32.mrb[0].mxu0
      %v963 = vadd.f32 0.0, %v962
      %v964 = vpop.f32.mrb[0].mxu0
      %965 = vmatprep.mubr.bf16.mxu0 0
      %966 = vmatmul.mubr.bf16.gmra.mrb[0].mxu0 %v673
      %v967 = vpop.f32.mrb[0].mxu0
      %v968 = vadd.f32 0.0, %v967
      %v969 = vpop.f32.mrb[0].mxu0
      %v970 = vpop.f32.mrb[0].mxu0
      %v971 = vadd.f32 0.0, %v970
      %v972 = vpop.f32.mrb[0].mxu0
      %973 = vmatprep.mubr.bf16.mxu0 0
      %974 = vmatmul.mubr.bf16.gmra.mrb[0].mxu0 %v676
      %v975 = vpop.f32.mrb[0].mxu0
      %v976 = vadd.f32 0.0, %v975
      %v977 = vpop.f32.mrb[0].mxu0
      %v978 = vpop.f32.mrb[0].mxu0
      %v979 = vadd.f32 0.0, %v978
      %v980 = vpop.f32.mrb[0].mxu0
      %981 = vmatprep.mubr.bf16.mxu0 0
      %982 = vmatmul.mubr.bf16.gmra.mrb[0].mxu0 %v679
      %v983 = vpop.f32.mrb[0].mxu0
      %v984 = vadd.f32 0.0, %v983
      %v985 = vpop.f32.mrb[0].mxu0
      %v986 = vpop.f32.mrb[0].mxu0
      %v987 = vadd.f32 0.0, %v986
      %v988 = vpop.f32.mrb[0].mxu0
      %989 = vmatprep.mubr.bf16.mxu0 0
      %990 = vmatmul.mubr.bf16.gmra.mrb[0].mxu0 %v682
      %v991 = vpop.f32.mrb[0].mxu0
      %v992 = vadd.f32 0.0, %v991
      %v993 = vpop.f32.mrb[0].mxu0
      %v994 = vpop.f32.mrb[0].mxu0
      %v995 = vadd.f32 0.0, %v994
      %v996 = vpop.f32.mrb[0].mxu0
      %997 = vmatprep.mubr.bf16.mxu0 0
      %998 = vmatmul.mubr.bf16.gmra.mrb[0].mxu0 %v685
      %v999 = vpop.f32.mrb[0].mxu0
      %v1000 = vadd.f32 0.0, %v999
      %v1001 = vpop.f32.mrb[0].mxu0
      %v1002 = vpop.f32.mrb[0].mxu0
      %v1003 = vadd.f32 0.0, %v1002
      %v1004 = vpop.f32.mrb[0].mxu0
      %1005 = vmatprep.mubr.bf16.mxu0 0
      %1006 = vmatmul.mubr.bf16.gmra.mrb[0].mxu0 %v688
      %v1007 = vpop.f32.mrb[0].mxu0
      %v1008 = vadd.f32 0.0, %v1007
      %v1009 = vpop.f32.mrb[0].mxu0
      %v1010 = vpop.f32.mrb[0].mxu0
      %v1011 = vadd.f32 0.0, %v1010
      %v1012 = vpop.f32.mrb[0].mxu0
      %1013 = vmatprep.mubr.bf16.mxu0 0
      %1014 = vmatmul.mubr.bf16.gmra.mrb[0].mxu0 %v691
      %v1015 = vpop.f32.mrb[0].mxu0
      %v1016 = vadd.f32 0.0, %v1015
      %v1017 = vpop.f32.mrb[0].mxu0
      %v1018 = vpop.f32.mrb[0].mxu0
      %v1019 = vadd.f32 0.0, %v1018
      %v1020 = vpop.f32.mrb[0].mxu0
      %1021 = vmatprep.mubr.bf16.mxu0 0
      %1022 = vmatmul.mubr.bf16.gmra.mrb[0].mxu0 %v694
      %v1023 = vpop.f32.mrb[0].mxu0
      %v1024 = vadd.f32 0.0, %v1023
      %v1025 = vpop.f32.mrb[0].mxu0
      %v1026 = vpop.f32.mrb[0].mxu0
      %v1027 = vadd.f32 0.0, %v1026
      %v1028 = vpop.f32.mrb[0].mxu0
      %1029 = vmatprep.mubr.bf16.mxu0 0
      %1030 = vmatmul.mubr.bf16.gmra.mrb[0].mxu0 %v697
      %v1031 = vpop.f32.mrb[0].mxu0
      %v1032 = vadd.f32 0.0, %v1031
      %v1033 = vpop.f32.mrb[0].mxu0
      %v1034 = vpop.f32.mrb[0].mxu0
      %v1035 = vadd.f32 0.0, %v1034
      %v1036 = vpop.f32.mrb[0].mxu0
      %1037 = vmatprep.mubr.bf16.mxu0 0
      %1038 = vmatmul.mubr.bf16.gmra.mrb[0].mxu0 %v700
      %v1039 = vpop.f32.mrb[0].mxu0
      %v1040 = vadd.f32 0.0, %v1039
      %v1041 = vpop.f32.mrb[0].mxu0
      %v1042 = vpop.f32.mrb[0].mxu0
      %v1043 = vadd.f32 0.0, %v1042
      %v1044 = vpop.f32.mrb[0].mxu0
      %1045 = vmatprep.mubr.bf16.mxu0 0
      %1046 = vmatmul.mubr.bf16.gmra.mrb[0].mxu0 %v703
      %v1047 = vpop.f32.mrb[0].mxu0
      %v1048 = vadd.f32 0.0, %v1047
      %v1049 = vpop.f32.mrb[0].mxu0
      %v1050 = vpop.f32.mrb[0].mxu0
      %v1051 = vadd.f32 0.0, %v1050
      %v1052 = vpop.f32.mrb[0].mxu0
      %1053 = vmatprep.mubr.bf16.mxu0 0
      %1054 = vmatmul.mubr.bf16.gmra.mrb[0].mxu0 %v706
      %v1055 = vpop.f32.mrb[0].mxu0
      %v1056 = vadd.f32 0.0, %v1055
      %v1057 = vpop.f32.mrb[0].mxu0
      %v1058 = vpop.f32.mrb[0].mxu0
      %v1059 = vadd.f32 0.0, %v1058
      %v1060 = vpop.f32.mrb[0].mxu0
      %1061 = vmatprep.mubr.bf16.mxu0 0
      %1062 = vmatmul.mubr.bf16.gmra.mrb[0].mxu0 %v709
      %v1063 = vpop.f32.mrb[0].mxu0
      %v1064 = vadd.f32 0.0, %v1063
      %v1065 = vpop.f32.mrb[0].mxu0
      %v1066 = vpop.f32.mrb[0].mxu0
      %v1067 = vadd.f32 0.0, %v1066
      %v1068 = vpop.f32.mrb[0].mxu0
      %1069 = vmatprep.mubr.bf16.mxu0 0
      %1070 = vmatmul.mubr.bf16.gmra.mrb[0].mxu0 %v712
      %v1071 = vpop.f32.mrb[0].mxu0
      %v1072 = vadd.f32 0.0, %v1071
      %v1073 = vpop.f32.mrb[0].mxu0
      %v1074 = vpop.f32.mrb[0].mxu0
      %v1075 = vadd.f32 0.0, %v1074
      %v1076 = vpop.f32.mrb[0].mxu0
      %1077 = vmatprep.mubr.bf16.mxu0 0
      %1078 = vmatmul.mubr.bf16.gmra.mrb[0].mxu0 %v715
      %v1079 = vpop.f32.mrb[0].mxu0
      %v1080 = vadd.f32 0.0, %v1079
      %v1081 = vpop.f32.mrb[0].mxu0
      %v1082 = vpop.f32.mrb[0].mxu0
      %v1083 = vadd.f32 0.0, %v1082
      %v1084 = vpop.f32.mrb[0].mxu0
      %1085 = vmatprep.mubr.bf16.mxu0 0
      %1086 = vmatmul.mubr.bf16.gmra.mrb[0].mxu0 %v718
      %v1087 = vpop.f32.mrb[0].mxu0
      %v1088 = vadd.f32 0.0, %v1087
      %v1089 = vpop.f32.mrb[0].mxu0
      %v1090 = vpop.f32.mrb[0].mxu0
      %v1091 = vadd.f32 0.0, %v1090
      %v1092 = vpop.f32.mrb[0].mxu0
      %1093 = vmatprep.mubr.bf16.mxu0 0
      %1094 = vmatmul.mubr.bf16.gmra.mrb[0].mxu0 %v721
      %v1095 = vpop.f32.mrb[0].mxu0
      %v1096 = vadd.f32 0.0, %v1095
      %v1097 = vpop.f32.mrb[0].mxu0
      %v1098 = vpop.f32.mrb[0].mxu0
      %v1099 = vadd.f32 0.0, %v1098
      %v1100 = vpop.f32.mrb[0].mxu0
      %1101 = vmatprep.mubr.bf16.mxu0 0
      %1102 = vmatmul.mubr.bf16.gmra.mrb[0].mxu0 %v724
      %v1103 = vpop.f32.mrb[0].mxu0
      %v1104 = vadd.f32 0.0, %v1103
      %v1105 = vpop.f32.mrb[0].mxu0
      %v1106 = vpop.f32.mrb[0].mxu0
      %v1107 = vadd.f32 0.0, %v1106
      %v1108 = vpop.f32.mrb[0].mxu0
      %1109 = vmatprep.mubr.bf16.mxu0 0
      %1110 = vmatmul.mubr.bf16.gmra.mrb[0].mxu0 %v727
      %v1111 = vpop.f32.mrb[0].mxu0
      %v1112 = vadd.f32 0.0, %v1111
      %v1113 = vpop.f32.mrb[0].mxu0
      %v1114 = vpop.f32.mrb[0].mxu0
      %v1115 = vadd.f32 0.0, %v1114
      %v1116 = vpop.f32.mrb[0].mxu0
      %1117 = vmatprep.mubr.bf16.mxu0 0
      %1118 = vmatmul.mubr.bf16.gmra.mrb[0].mxu0 %v730
      %v1119 = vpop.f32.mrb[0].mxu0
      %v1120 = vadd.f32 0.0, %v1119
      %v1121 = vpop.f32.mrb[0].mxu0
      %v1122 = vpop.f32.mrb[0].mxu0
      %v1123 = vadd.f32 0.0, %v1122
      %v1124 = vpop.f32.mrb[0].mxu0
      %1125 = vmatprep.mubr.bf16.mxu0 0
      %1126 = vmatmul.mubr.bf16.gmra.mrb[0].mxu0 %v733
      %v1127 = vpop.f32.mrb[0].mxu0
      %v1128 = vadd.f32 0.0, %v1127
      %v1129 = vpop.f32.mrb[0].mxu0
      %v1130 = vpop.f32.mrb[0].mxu0
      %v1131 = vadd.f32 0.0, %v1130
      %v1132 = vpop.f32.mrb[0].mxu0
      %1133 = vmatprep.mubr.bf16.mxu0 0
      %1134 = vmatmul.mubr.bf16.gmra.mrb[0].mxu0 %v736
      %v1135 = vpop.f32.mrb[0].mxu0
      %v1136 = vadd.f32 0.0, %v1135
      %v1137 = vpop.f32.mrb[0].mxu0
      %v1138 = vpop.f32.mrb[0].mxu0
      %v1139 = vadd.f32 0.0, %v1138
      %v1140 = vpop.f32.mrb[0].mxu0
      %1141 = vmatprep.mubr.bf16.mxu0 0
      %1142 = vmatmul.mubr.bf16.gmra.mrb[0].mxu0 %v739
      %v1143 = vpop.f32.mrb[0].mxu0
      %v1144 = vadd.f32 0.0, %v1143
      %v1145 = vpop.f32.mrb[0].mxu0
      %v1146 = vpop.f32.mrb[0].mxu0
      %v1147 = vadd.f32 0.0, %v1146
      %v1148 = vpop.f32.mrb[0].mxu0
      %1149 = vmatprep.mubr.bf16.mxu0 0
      %1150 = vmatmul.mubr.bf16.gmra.mrb[0].mxu0 %v742
      %v1151 = vpop.f32.mrb[0].mxu0
      %v1152 = vadd.f32 0.0, %v1151
      %v1153 = vpop.f32.mrb[0].mxu0
      %v1154 = vpop.f32.mrb[0].mxu0
      %v1155 = vadd.f32 0.0, %v1154
      %v1156 = vpop.f32.mrb[0].mxu0
      %1157 = vmatprep.mubr.bf16.mxu0 0
      %1158 = vmatmul.mubr.bf16.gmra.mrb[0].mxu0 %v745
      %v1159 = vpop.f32.mrb[0].mxu0
      %v1160 = vadd.f32 0.0, %v1159
      %v1161 = vpop.f32.mrb[0].mxu0
      %v1162 = vpop.f32.mrb[0].mxu0
      %v1163 = vadd.f32 0.0, %v1162
      %v1164 = vpop.f32.mrb[0].mxu0
      %1165 = vmatprep.mubr.bf16.mxu0 0
      %1166 = vmatmul.mubr.bf16.gmra.mrb[0].mxu0 %v748
      %v1167 = vpop.f32.mrb[0].mxu0
      %v1168 = vadd.f32 0.0, %v1167
      %v1169 = vpop.f32.mrb[0].mxu0
      %v1170 = vpop.f32.mrb[0].mxu0
      %v1171 = vadd.f32 0.0, %v1170
      %v1172 = vpop.f32.mrb[0].mxu0
      %1173 = vmatprep.mubr.bf16.mxu0 0
      %1174 = vmatmul.mubr.bf16.gmra.mrb[0].mxu0 %v751
      %v1175 = vpop.f32.mrb[0].mxu0
      %v1176 = vadd.f32 0.0, %v1175
      %v1177 = vpop.f32.mrb[0].mxu0
      %v1178 = vpop.f32.mrb[0].mxu0
      %v1179 = vadd.f32 0.0, %v1178
      %v1180 = vpop.f32.mrb[0].mxu0
      %1181 = vmatprep.mubr.bf16.mxu0 0
      %1182 = vmatmul.mubr.bf16.gmra.mrb[0].mxu0 %v754
      %v1183 = vpop.f32.mrb[0].mxu0
      %v1184 = vadd.f32 0.0, %v1183
      %v1185 = vpop.f32.mrb[0].mxu0
      %v1186 = vpop.f32.mrb[0].mxu0
      %v1187 = vadd.f32 0.0, %v1186
      %v1188 = vpop.f32.mrb[0].mxu0
      %1189 = vmatprep.mubr.bf16.mxu0 0
      %1190 = vmatmul.mubr.bf16.gmra.mrb[0].mxu0 %v757
      %v1191 = vpop.f32.mrb[0].mxu0
      %v1192 = vadd.f32 0.0, %v1191
      %v1193 = vpop.f32.mrb[0].mxu0
      %v1194 = vpop.f32.mrb[0].mxu0
      %v1195 = vadd.f32 0.0, %v1194
      %v1196 = vpop.f32.mrb[0].mxu0
      %1197 = vmatprep.mubr.bf16.mxu0 0
      %1198 = vmatmul.mubr.bf16.gmra.mrb[0].mxu0 %v760
      %v1199 = vpop.f32.mrb[0].mxu0
      %v1200 = vadd.f32 0.0, %v1199
      %v1201 = vpop.f32.mrb[0].mxu0
      %v1202 = vpop.f32.mrb[0].mxu0
      %v1203 = vadd.f32 0.0, %v1202
      %v1204 = vpop.f32.mrb[0].mxu0
      %1205 = vmatprep.mubr.bf16.mxu0 0
      %1206 = vmatmul.mubr.bf16.gmra.mrb[0].mxu0 %v763
      %v1207 = vpop.f32.mrb[0].mxu0
      %v1208 = vadd.f32 0.0, %v1207
      %v1209 = vpop.f32.mrb[0].mxu0
      %v1210 = vpop.f32.mrb[0].mxu0
      %v1211 = vadd.f32 0.0, %v1210
      %v1212 = vpop.f32.mrb[0].mxu0
      %1213 = vmatprep.mubr.bf16.mxu0 0
      %1214 = vmatmul.mubr.bf16.gmra.mrb[0].mxu0 %v766
      %v1215 = vpop.f32.mrb[0].mxu0
      %v1216 = vadd.f32 0.0, %v1215
      %v1217 = vpop.f32.mrb[0].mxu0
      %v1218 = vpop.f32.mrb[0].mxu0
      %v1219 = vadd.f32 0.0, %v1218
      %v1220 = vpop.f32.mrb[0].mxu0
      %1221 = vmatprep.mubr.bf16.mxu0 0
      %1222 = vmatmul.mubr.bf16.gmra.mrb[0].mxu0 %v769
      %v1223 = vpop.f32.mrb[0].mxu0
      %v1224 = vadd.f32 0.0, %v1223
      %v1225 = vpop.f32.mrb[0].mxu0
      %v1226 = vpop.f32.mrb[0].mxu0
      %v1227 = vadd.f32 0.0, %v1226
      %v1228 = vpop.f32.mrb[0].mxu0
      %1229 = vmatprep.mubr.bf16.mxu0 0
      %1230 = vmatmul.mubr.bf16.gmra.mrb[0].mxu0 %v772
      %v1231 = vpop.f32.mrb[0].mxu0
      %v1232 = vadd.f32 0.0, %v1231
      %v1233 = vpop.f32.mrb[0].mxu0
      %v1234 = vpop.f32.mrb[0].mxu0
      %v1235 = vadd.f32 0.0, %v1234
      %v1236 = vpop.f32.mrb[0].mxu0
      %1237 = vmatprep.mubr.bf16.mxu0 0
      %1238 = vmatmul.mubr.bf16.gmra.mrb[0].mxu0 %v775
      %v1239 = vpop.f32.mrb[0].mxu0
      %v1240 = vadd.f32 0.0, %v1239
      %v1241 = vpop.f32.mrb[0].mxu0
      %v1242 = vpop.f32.mrb[0].mxu0
      %v1243 = vadd.f32 0.0, %v1242
      %v1244 = vpop.f32.mrb[0].mxu0
      %1245 = vmatprep.mubr.bf16.mxu0 0
      %1246 = vmatmul.mubr.bf16.gmra.mrb[0].mxu0 %v778
      %v1247 = vpop.f32.mrb[0].mxu0
      %v1248 = vadd.f32 0.0, %v1247
      %v1249 = vpop.f32.mrb[0].mxu0
      %v1250 = vpop.f32.mrb[0].mxu0
      %v1251 = vadd.f32 0.0, %v1250
      %v1252 = vpop.f32.mrb[0].mxu0
      %1253 = vmatprep.mubr.bf16.mxu0 0
      %1254 = vmatmul.mubr.bf16.gmra.mrb[0].mxu0 %v781
      %v1255 = vpop.f32.mrb[0].mxu0
      %v1256 = vadd.f32 0.0, %v1255
      %v1257 = vpop.f32.mrb[0].mxu0
      %v1258 = vpop.f32.mrb[0].mxu0
      %v1259 = vadd.f32 0.0, %v1258
      %v1260 = vpop.f32.mrb[0].mxu0
      %1261 = vmatprep.mubr.bf16.mxu0 0
      %1262 = vmatmul.mubr.bf16.gmra.mrb[0].mxu0 %v784
      %v1263 = vpop.f32.mrb[0].mxu0
      %v1264 = vadd.f32 0.0, %v1263
      %v1265 = vpop.f32.mrb[0].mxu0
      %v1266 = vpop.f32.mrb[0].mxu0
      %v1267 = vadd.f32 0.0, %v1266
      %v1268 = vpop.f32.mrb[0].mxu0
      %1269 = vmatprep.mubr.bf16.mxu0 0
      %1270 = vmatmul.mubr.bf16.gmra.mrb[0].mxu0 %v787
      %v1271 = vpop.f32.mrb[0].mxu0
      %v1272 = vadd.f32 0.0, %v1271
      %v1273 = vpop.f32.mrb[0].mxu0
      %v1274 = vpop.f32.mrb[0].mxu0
      %v1275 = vadd.f32 0.0, %v1274
      %v1276 = vpop.f32.mrb[0].mxu0
      %1277 = vmatprep.mubr.bf16.mxu0 0
      %1278 = vmatmul.mubr.bf16.gmra.mrb[0].mxu0 %v790
      %v1279 = vpop.f32.mrb[0].mxu0
      %v1280 = vadd.f32 0.0, %v1279
      %v1281 = vpop.f32.mrb[0].mxu0
      %v1282 = vpop.f32.mrb[0].mxu0
      %v1283 = vadd.f32 0.0, %v1282
      %v1284 = vpop.f32.mrb[0].mxu0
      %1285 = vmatprep.mubr.bf16.mxu0 0
      %1286 = vmatmul.mubr.bf16.gmra.mrb[0].mxu0 %v793
      %v1287 = vpop.f32.mrb[0].mxu0
      %v1288 = vadd.f32 0.0, %v1287
      %v1289 = vpop.f32.mrb[0].mxu0
      %v1290 = vpop.f32.mrb[0].mxu0
      %v1291 = vadd.f32 0.0, %v1290
      %v1292 = vpop.f32.mrb[0].mxu0
      %1293 = vmatprep.mubr.bf16.mxu0 0
      %1294 = vmatmul.mubr.bf16.gmra.mrb[0].mxu0 %v796
      %v1295 = vpop.f32.mrb[0].mxu0
      %v1296 = vadd.f32 0.0, %v1295
      %v1297 = vpop.f32.mrb[0].mxu0
      %v1298 = vpop.f32.mrb[0].mxu0
      %v1299 = vadd.f32 0.0, %v1298
      %v1300 = vpop.f32.mrb[0].mxu0
      %1301 = vmatprep.mubr.bf16.mxu0 0
      %1302 = vmatmul.mubr.bf16.gmra.mrb[0].mxu0 %v799
      %v1303 = vpop.f32.mrb[0].mxu0
      %v1304 = vadd.f32 0.0, %v1303
      %v1305 = vpop.f32.mrb[0].mxu0
      %v1306 = vpop.f32.mrb[0].mxu0
      %v1307 = vadd.f32 0.0, %v1306
      %v1308 = vpop.f32.mrb[0].mxu0
      %1309 = vmatprep.mubr.bf16.mxu0 0
      %1310 = vmatmul.mubr.bf16.gmra.mrb[0].mxu0 %v802
      %v1311 = vpop.f32.mrb[0].mxu0
      %v1312 = vadd.f32 0.0, %v1311
      %v1313 = vpop.f32.mrb[0].mxu0
      %v1314 = vpop.f32.mrb[0].mxu0
      %v1315 = vadd.f32 0.0, %v1314
      %v1316 = vpop.f32.mrb[0].mxu0
      %1317 = vmatprep.mubr.bf16.mxu0 0
      %1318 = vmatmul.mubr.bf16.gmra.mrb[0].mxu0 %v805
      %v1319 = vpop.f32.mrb[0].mxu0
      %v1320 = vadd.f32 0.0, %v1319
      %v1321 = vpop.f32.mrb[0].mxu0
      %v1322 = vpop.f32.mrb[0].mxu0
      %v1323 = vadd.f32 0.0, %v1322
      %v1324 = vpop.f32.mrb[0].mxu0
      %1325 = vmatprep.mubr.bf16.mxu0 0
      %1326 = vmatmul.mubr.bf16.gmra.mrb[0].mxu0 %v808
      %v1327 = vpop.f32.mrb[0].mxu0
      %v1328 = vadd.f32 0.0, %v1327
      %v1329 = vpop.f32.mrb[0].mxu0
      %v1330 = vpop.f32.mrb[0].mxu0
      %v1331 = vadd.f32 0.0, %v1330
      %v1332 = vpop.f32.mrb[0].mxu0
      %1333 = vmatprep.mubr.bf16.mxu0 0
      %1334 = vmatmul.mubr.bf16.gmra.mrb[0].mxu0 %v811
      %v1335 = vpop.f32.mrb[0].mxu0
      %v1336 = vadd.f32 0.0, %v1335
      %v1337 = vpop.f32.mrb[0].mxu0
      %v1338 = vpop.f32.mrb[0].mxu0
      %v1339 = vadd.f32 0.0, %v1338
      %v1340 = vpop.f32.mrb[0].mxu0
      %1341 = vmatprep.mubr.bf16.mxu0 0
      %1342 = vmatmul.mubr.bf16.gmra.mrb[0].mxu0 %v814
      %v1343 = vpop.f32.mrb[0].mxu0
      %v1344 = vadd.f32 0.0, %v1343
      %v1345 = vpop.f32.mrb[0].mxu0
      %v1346 = vpop.f32.mrb[0].mxu0
      %v1347 = vadd.f32 0.0, %v1346
      %v1348 = vpop.f32.mrb[0].mxu0
      %1349 = vmatprep.mubr.bf16.mxu0 0
      %1350 = vmatmul.mubr.bf16.gmra.mrb[0].mxu0 %v817
      %v1351 = vpop.f32.mrb[0].mxu0
      %v1352 = vadd.f32 0.0, %v1351
      %v1353 = vpop.f32.mrb[0].mxu0
      %v1354 = vpop.f32.mrb[0].mxu0
      %v1355 = vadd.f32 0.0, %v1354
      %v1356 = vpop.f32.mrb[0].mxu0
      %1357 = vmatprep.mubr.bf16.mxu0 0
      %1358 = vmatmul.mubr.bf16.gmra.mrb[0].mxu0 %v820
      %v1359 = vpop.f32.mrb[0].mxu0
      %v1360 = vadd.f32 0.0, %v1359
      %v1361 = vpop.f32.mrb[0].mxu0
      %v1362 = vpop.f32.mrb[0].mxu0
      %v1363 = vadd.f32 0.0, %v1362
      %v1364 = vpop.f32.mrb[0].mxu0
      %1365 = vmatprep.mubr.bf16.mxu0 0
      %1366 = vmatmul.mubr.bf16.gmra.mrb[0].mxu0 %v823
      %v1367 = vpop.f32.mrb[0].mxu0
      %v1368 = vadd.f32 0.0, %v1367
      %v1369 = vpop.f32.mrb[0].mxu0
      %v1370 = vpop.f32.mrb[0].mxu0
      %v1371 = vadd.f32 0.0, %v1370
      %v1372 = vpop.f32.mrb[0].mxu0
      %1373 = vdwg.mxu0
      %v1374 = vtanh.pop %v864
      %v1375 = vtanh.pop %v867
      %v1376 = vtanh.pop %v872
      %v1377 = vtanh.pop %v875
      %v1378 = vtanh.pop %v880
      %v1379 = vtanh.pop %v883
      %v1380 = vtanh.pop %v888
      %v1381 = vtanh.pop %v891
      %v1382 = vtanh.pop %v896
      %v1383 = vtanh.pop %v899
      %v1384 = vtanh.pop %v904
      %v1385 = vtanh.pop %v907
      %v1386 = vtanh.pop %v912
      %v1387 = vtanh.pop %v915
      %v1388 = vtanh.pop %v920
      %v1389 = vtanh.pop %v923
      %v1390 = vtanh.pop %v928
      %v1391 = vtanh.pop %v931
      %v1392 = vtanh.pop %v936
      %v1393 = vtanh.pop %v939
      %v1394 = vtanh.pop %v944
      %v1395 = vtanh.pop %v947
      %v1396 = vtanh.pop %v952
      %v1397 = vtanh.pop %v955
      %v1398 = vtanh.pop %v960
      %v1399 = vtanh.pop %v963
      %v1400 = vtanh.pop %v968
      %v1401 = vtanh.pop %v971
      %v1402 = vtanh.pop %v976
      %v1403 = vtanh.pop %v979
      %v1404 = vtanh.pop %v984
      %v1405 = vtanh.pop %v987
      %v1406 = vtanh.pop %v992
      %v1407 = vtanh.pop %v995
      %v1408 = vtanh.pop %v1000
      %v1409 = vtanh.pop %v1003
      %v1410 = vtanh.pop %v1008
      %v1411 = vtanh.pop %v1011
      %v1412 = vtanh.pop %v1016
      %v1413 = vtanh.pop %v1019
      %v1414 = vtanh.pop %v1024
      %v1415 = vtanh.pop %v1027
      %v1416 = vtanh.pop %v1032
      %v1417 = vtanh.pop %v1035
      %v1418 = vtanh.pop %v1040
      %v1419 = vtanh.pop %v1043
      %v1420 = vtanh.pop %v1048
      %v1421 = vtanh.pop %v1051
      %v1422 = vtanh.pop %v1056
      %v1423 = vtanh.pop %v1059
      %v1424 = vtanh.pop %v1064
      %v1425 = vtanh.pop %v1067
      %v1426 = vtanh.pop %v1072
      %v1427 = vtanh.pop %v1075
      %v1428 = vtanh.pop %v1080
      %v1429 = vtanh.pop %v1083
      %v1430 = vtanh.pop %v1088
      %v1431 = vtanh.pop %v1091
      %v1432 = vtanh.pop %v1096
      %v1433 = vtanh.pop %v1099
      %v1434 = vtanh.pop %v1104
      %v1435 = vtanh.pop %v1107
      %v1436 = vtanh.pop %v1112
      %v1437 = vtanh.pop %v1115
      %v1438 = vtanh.pop %v1120
      %v1439 = vtanh.pop %v1123
      %v1440 = vtanh.pop %v1128
      %v1441 = vtanh.pop %v1131
      %v1442 = vtanh.pop %v1136
      %v1443 = vtanh.pop %v1139
      %v1444 = vtanh.pop %v1144
      %v1445 = vtanh.pop %v1147
      %v1446 = vtanh.pop %v1152
      %v1447 = vtanh.pop %v1155
      %v1448 = vtanh.pop %v1160
      %v1449 = vtanh.pop %v1163
      %v1450 = vtanh.pop %v1168
      %v1451 = vtanh.pop %v1171
      %v1452 = vtanh.pop %v1176
      %v1453 = vtanh.pop %v1179
      %v1454 = vtanh.pop %v1184
      %v1455 = vtanh.pop %v1187
      %v1456 = vtanh.pop %v1192
      %v1457 = vtanh.pop %v1195
      %v1458 = vtanh.pop %v1200
      %v1459 = vtanh.pop %v1203
      %v1460 = vtanh.pop %v1208
      %v1461 = vtanh.pop %v1211
      %v1462 = vtanh.pop %v1216
      %v1463 = vtanh.pop %v1219
      %v1464 = vtanh.pop %v1224
      %v1465 = vtanh.pop %v1227
      %v1466 = vtanh.pop %v1232
      %v1467 = vtanh.pop %v1235
      %v1468 = vtanh.pop %v1240
      %v1469 = vtanh.pop %v1243
      %v1470 = vtanh.pop %v1248
      %v1471 = vtanh.pop %v1251
      %v1472 = vtanh.pop %v1256
      %v1473 = vtanh.pop %v1259
      %v1474 = vtanh.pop %v1264
      %v1475 = vtanh.pop %v1267
      %v1476 = vtanh.pop %v1272
      %v1477 = vtanh.pop %v1275
      %v1478 = vtanh.pop %v1280
      %v1479 = vtanh.pop %v1283
      %v1480 = vtanh.pop %v1288
      %v1481 = vtanh.pop %v1291
      %v1482 = vtanh.pop %v1296
      %v1483 = vtanh.pop %v1299
      %v1484 = vtanh.pop %v1304
      %v1485 = vtanh.pop %v1307
      %v1486 = vtanh.pop %v1312
      %v1487 = vtanh.pop %v1315
      %v1488 = vtanh.pop %v1320
      %v1489 = vtanh.pop %v1323
      %v1490 = vtanh.pop %v1328
      %v1491 = vtanh.pop %v1331
      %v1492 = vtanh.pop %v1336
      %v1493 = vtanh.pop %v1339
      %v1494 = vtanh.pop %v1344
      %v1495 = vtanh.pop %v1347
      %v1496 = vtanh.pop %v1352
      %v1497 = vtanh.pop %v1355
      %v1498 = vtanh.pop %v1360
      %v1499 = vtanh.pop %v1363
      %v1500 = vtanh.pop %v1368
      %v1501 = vtanh.pop %v1371
      %v1502 = vpack.c.bf16 %v1375, %v1374
      %v1503 = vpack.c.bf16 %v1377, %v1376
      %v1504 = vpack.c.bf16 %v1379, %v1378
      %v1505 = vpack.c.bf16 %v1381, %v1380
      %v1506 = vpack.c.bf16 %v1383, %v1382
      %v1507 = vpack.c.bf16 %v1385, %v1384
      %v1508 = vpack.c.bf16 %v1387, %v1386
      %v1509 = vpack.c.bf16 %v1389, %v1388
      %v1510 = vpack.c.bf16 %v1391, %v1390
      %v1511 = vpack.c.bf16 %v1393, %v1392
      %v1512 = vpack.c.bf16 %v1395, %v1394
      %v1513 = vpack.c.bf16 %v1397, %v1396
      %v1514 = vpack.c.bf16 %v1399, %v1398
      %v1515 = vpack.c.bf16 %v1401, %v1400
      %v1516 = vpack.c.bf16 %v1403, %v1402
      %v1517 = vpack.c.bf16 %v1405, %v1404
      %v1518 = vpack.c.bf16 %v1407, %v1406
      %v1519 = vpack.c.bf16 %v1409, %v1408
      %v1520 = vpack.c.bf16 %v1411, %v1410
      %v1521 = vpack.c.bf16 %v1413, %v1412
      %v1522 = vpack.c.bf16 %v1415, %v1414
      %v1523 = vpack.c.bf16 %v1417, %v1416
      %v1524 = vpack.c.bf16 %v1419, %v1418
      %v1525 = vpack.c.bf16 %v1421, %v1420
      %v1526 = vpack.c.bf16 %v1423, %v1422
      %v1527 = vpack.c.bf16 %v1425, %v1424
      %v1528 = vpack.c.bf16 %v1427, %v1426
      %v1529 = vpack.c.bf16 %v1429, %v1428
      %v1530 = vpack.c.bf16 %v1431, %v1430
      %v1531 = vpack.c.bf16 %v1433, %v1432
      %v1532 = vpack.c.bf16 %v1435, %v1434
      %v1533 = vpack.c.bf16 %v1437, %v1436
      %v1534 = vpack.c.bf16 %v1439, %v1438
      %v1535 = vpack.c.bf16 %v1441, %v1440
      %v1536 = vpack.c.bf16 %v1443, %v1442
      %v1537 = vpack.c.bf16 %v1445, %v1444
      %v1538 = vpack.c.bf16 %v1447, %v1446
      %v1539 = vpack.c.bf16 %v1449, %v1448
      %v1540 = vpack.c.bf16 %v1451, %v1450
      %v1541 = vpack.c.bf16 %v1453, %v1452
      %v1542 = vpack.c.bf16 %v1455, %v1454
      %v1543 = vpack.c.bf16 %v1457, %v1456
      %v1544 = vpack.c.bf16 %v1459, %v1458
      %v1545 = vpack.c.bf16 %v1461, %v1460
      %v1546 = vpack.c.bf16 %v1463, %v1462
      %v1547 = vpack.c.bf16 %v1465, %v1464
      %v1548 = vpack.c.bf16 %v1467, %v1466
      %v1549 = vpack.c.bf16 %v1469, %v1468
      %v1550 = vpack.c.bf16 %v1471, %v1470
      %v1551 = vpack.c.bf16 %v1473, %v1472
      %v1552 = vpack.c.bf16 %v1475, %v1474
      %v1553 = vpack.c.bf16 %v1477, %v1476
      %v1554 = vpack.c.bf16 %v1479, %v1478
      %v1555 = vpack.c.bf16 %v1481, %v1480
      %v1556 = vpack.c.bf16 %v1483, %v1482
      %v1557 = vpack.c.bf16 %v1485, %v1484
      %v1558 = vpack.c.bf16 %v1487, %v1486
      %v1559 = vpack.c.bf16 %v1489, %v1488
      %v1560 = vpack.c.bf16 %v1491, %v1490
      %v1561 = vpack.c.bf16 %v1493, %v1492
      %v1562 = vpack.c.bf16 %v1495, %v1494
      %v1563 = vpack.c.bf16 %v1497, %v1496
      %v1564 = vpack.c.bf16 %v1499, %v1498
      %v1565 = vpack.c.bf16 %v1501, %v1500
      %v1630 = vunpack.c.l.b16 %v1502
      %v1631 = vunpack.c.h.b16 %v1502
      %v1632 = vunpack.c.l.b16 %v1503
      %v1633 = vunpack.c.h.b16 %v1503
      %v1634 = vunpack.c.l.b16 %v1504
      %v1635 = vunpack.c.h.b16 %v1504
      %v1636 = vunpack.c.l.b16 %v1505
      %v1637 = vunpack.c.h.b16 %v1505
      %v1638 = vunpack.c.l.b16 %v1506
      %v1639 = vunpack.c.h.b16 %v1506
      %v1640 = vunpack.c.l.b16 %v1507
      %v1641 = vunpack.c.h.b16 %v1507
      %v1642 = vunpack.c.l.b16 %v1508
      %v1643 = vunpack.c.h.b16 %v1508
      %v1644 = vunpack.c.l.b16 %v1509
      %v1645 = vunpack.c.h.b16 %v1509
      %v1646 = vunpack.c.l.b16 %v1510
      %v1647 = vunpack.c.h.b16 %v1510
      %v1648 = vunpack.c.l.b16 %v1511
      %v1649 = vunpack.c.h.b16 %v1511
      %v1650 = vunpack.c.l.b16 %v1512
      %v1651 = vunpack.c.h.b16 %v1512
      %v1652 = vunpack.c.l.b16 %v1513
      %v1653 = vunpack.c.h.b16 %v1513
      %v1654 = vunpack.c.l.b16 %v1514
      %v1655 = vunpack.c.h.b16 %v1514
      %v1656 = vunpack.c.l.b16 %v1515
      %v1657 = vunpack.c.h.b16 %v1515
      %v1658 = vunpack.c.l.b16 %v1516
      %v1659 = vunpack.c.h.b16 %v1516
      %v1660 = vunpack.c.l.b16 %v1517
      %v1661 = vunpack.c.h.b16 %v1517
      %v1662 = vunpack.c.l.b16 %v1518
      %v1663 = vunpack.c.h.b16 %v1518
      %v1664 = vunpack.c.l.b16 %v1519
      %v1665 = vunpack.c.h.b16 %v1519
      %v1666 = vunpack.c.l.b16 %v1520
      %v1667 = vunpack.c.h.b16 %v1520
      %v1668 = vunpack.c.l.b16 %v1521
      %v1669 = vunpack.c.h.b16 %v1521
      %v1670 = vunpack.c.l.b16 %v1522
      %v1671 = vunpack.c.h.b16 %v1522
      %v1672 = vunpack.c.l.b16 %v1523
      %v1673 = vunpack.c.h.b16 %v1523
      %v1674 = vunpack.c.l.b16 %v1524
      %v1675 = vunpack.c.h.b16 %v1524
      %v1676 = vunpack.c.l.b16 %v1525
      %v1677 = vunpack.c.h.b16 %v1525
      %v1678 = vunpack.c.l.b16 %v1526
      %v1679 = vunpack.c.h.b16 %v1526
      %v1680 = vunpack.c.l.b16 %v1527
      %v1681 = vunpack.c.h.b16 %v1527
      %v1682 = vunpack.c.l.b16 %v1528
      %v1683 = vunpack.c.h.b16 %v1528
      %v1684 = vunpack.c.l.b16 %v1529
      %v1685 = vunpack.c.h.b16 %v1529
      %v1686 = vunpack.c.l.b16 %v1530
      %v1687 = vunpack.c.h.b16 %v1530
      %v1688 = vunpack.c.l.b16 %v1531
      %v1689 = vunpack.c.h.b16 %v1531
      %v1690 = vunpack.c.l.b16 %v1532
      %v1691 = vunpack.c.h.b16 %v1532
      %v1692 = vunpack.c.l.b16 %v1533
      %v1693 = vunpack.c.h.b16 %v1533
      %v1694 = vunpack.c.l.b16 %v1534
      %v1695 = vunpack.c.h.b16 %v1534
      %v1696 = vunpack.c.l.b16 %v1535
      %v1697 = vunpack.c.h.b16 %v1535
      %v1698 = vunpack.c.l.b16 %v1536
      %v1699 = vunpack.c.h.b16 %v1536
      %v1700 = vunpack.c.l.b16 %v1537
      %v1701 = vunpack.c.h.b16 %v1537
      %v1702 = vunpack.c.l.b16 %v1538
      %v1703 = vunpack.c.h.b16 %v1538
      %v1704 = vunpack.c.l.b16 %v1539
      %v1705 = vunpack.c.h.b16 %v1539
      %v1706 = vunpack.c.l.b16 %v1540
      %v1707 = vunpack.c.h.b16 %v1540
      %v1708 = vunpack.c.l.b16 %v1541
      %v1709 = vunpack.c.h.b16 %v1541
      %v1710 = vunpack.c.l.b16 %v1542
      %v1711 = vunpack.c.h.b16 %v1542
      %v1712 = vunpack.c.l.b16 %v1543
      %v1713 = vunpack.c.h.b16 %v1543
      %v1714 = vunpack.c.l.b16 %v1544
      %v1715 = vunpack.c.h.b16 %v1544
      %v1716 = vunpack.c.l.b16 %v1545
      %v1717 = vunpack.c.h.b16 %v1545
      %v1718 = vunpack.c.l.b16 %v1546
      %v1719 = vunpack.c.h.b16 %v1546
      %v1720 = vunpack.c.l.b16 %v1547
      %v1721 = vunpack.c.h.b16 %v1547
      %v1722 = vunpack.c.l.b16 %v1548
      %v1723 = vunpack.c.h.b16 %v1548
      %v1724 = vunpack.c.l.b16 %v1549
      %v1725 = vunpack.c.h.b16 %v1549
      %v1726 = vunpack.c.l.b16 %v1550
      %v1727 = vunpack.c.h.b16 %v1550
      %v1728 = vunpack.c.l.b16 %v1551
      %v1729 = vunpack.c.h.b16 %v1551
      %v1730 = vunpack.c.l.b16 %v1552
      %v1731 = vunpack.c.h.b16 %v1552
      %v1732 = vunpack.c.l.b16 %v1553
      %v1733 = vunpack.c.h.b16 %v1553
      %v1734 = vunpack.c.l.b16 %v1554
      %v1735 = vunpack.c.h.b16 %v1554
      %v1736 = vunpack.c.l.b16 %v1555
      %v1737 = vunpack.c.h.b16 %v1555
      %v1738 = vunpack.c.l.b16 %v1556
      %v1739 = vunpack.c.h.b16 %v1556
      %v1740 = vunpack.c.l.b16 %v1557
      %v1741 = vunpack.c.h.b16 %v1557
      %v1742 = vunpack.c.l.b16 %v1558
      %v1743 = vunpack.c.h.b16 %v1558
      %v1744 = vunpack.c.l.b16 %v1559
      %v1745 = vunpack.c.h.b16 %v1559
      %v1746 = vunpack.c.l.b16 %v1560
      %v1747 = vunpack.c.h.b16 %v1560
      %v1748 = vunpack.c.l.b16 %v1561
      %v1749 = vunpack.c.h.b16 %v1561
      %v1750 = vunpack.c.l.b16 %v1562
      %v1751 = vunpack.c.h.b16 %v1562
      %v1752 = vunpack.c.l.b16 %v1563
      %v1753 = vunpack.c.h.b16 %v1563
      %v1754 = vunpack.c.l.b16 %v1564
      %v1755 = vunpack.c.h.b16 %v1564
      %v1756 = vunpack.c.l.b16 %v1565
      %v1757 = vunpack.c.h.b16 %v1565
      %v1758 = vpack.c.b16 %v1630, %v1630
      %v1759 = vpack.c.b16 %v1631, %v1631
      %v1760 = vpack.c.b16 %v1632, %v1632
      %v1761 = vpack.c.b16 %v1633, %v1633
      %v1762 = vpack.c.b16 %v1634, %v1634
      %v1763 = vpack.c.b16 %v1635, %v1635
      %v1764 = vpack.c.b16 %v1636, %v1636
      %v1765 = vpack.c.b16 %v1637, %v1637
      %v1766 = vpack.c.b16 %v1638, %v1638
      %v1767 = vpack.c.b16 %v1639, %v1639
      %v1768 = vpack.c.b16 %v1640, %v1640
      %v1769 = vpack.c.b16 %v1641, %v1641
      %v1770 = vpack.c.b16 %v1642, %v1642
      %v1771 = vpack.c.b16 %v1643, %v1643
      %v1772 = vpack.c.b16 %v1644, %v1644
      %v1773 = vpack.c.b16 %v1645, %v1645
      %v1774 = vpack.c.b16 %v1646, %v1646
      %v1775 = vpack.c.b16 %v1647, %v1647
      %v1776 = vpack.c.b16 %v1648, %v1648
      %v1777 = vpack.c.b16 %v1649, %v1649
      %v1778 = vpack.c.b16 %v1650, %v1650
      %v1779 = vpack.c.b16 %v1651, %v1651
      %v1780 = vpack.c.b16 %v1652, %v1652
      %v1781 = vpack.c.b16 %v1653, %v1653
      %v1782 = vpack.c.b16 %v1654, %v1654
      %v1783 = vpack.c.b16 %v1655, %v1655
      %v1784 = vpack.c.b16 %v1656, %v1656
      %v1785 = vpack.c.b16 %v1657, %v1657
      %v1786 = vpack.c.b16 %v1658, %v1658
      %v1787 = vpack.c.b16 %v1659, %v1659
      %v1788 = vpack.c.b16 %v1660, %v1660
      %v1789 = vpack.c.b16 %v1661, %v1661
      %v1790 = vpack.c.b16 %v1662, %v1662
      %v1791 = vpack.c.b16 %v1663, %v1663
      %v1792 = vpack.c.b16 %v1664, %v1664
      %v1793 = vpack.c.b16 %v1665, %v1665
      %v1794 = vpack.c.b16 %v1666, %v1666
      %v1795 = vpack.c.b16 %v1667, %v1667
      %v1796 = vpack.c.b16 %v1668, %v1668
      %v1797 = vpack.c.b16 %v1669, %v1669
      %v1798 = vpack.c.b16 %v1670, %v1670
      %v1799 = vpack.c.b16 %v1671, %v1671
      %v1800 = vpack.c.b16 %v1672, %v1672
      %v1801 = vpack.c.b16 %v1673, %v1673
      %v1802 = vpack.c.b16 %v1674, %v1674
      %v1803 = vpack.c.b16 %v1675, %v1675
      %v1804 = vpack.c.b16 %v1676, %v1676
      %v1805 = vpack.c.b16 %v1677, %v1677
      %v1806 = vpack.c.b16 %v1678, %v1678
      %v1807 = vpack.c.b16 %v1679, %v1679
      %v1808 = vpack.c.b16 %v1680, %v1680
      %v1809 = vpack.c.b16 %v1681, %v1681
      %v1810 = vpack.c.b16 %v1682, %v1682
      %v1811 = vpack.c.b16 %v1683, %v1683
      %v1812 = vpack.c.b16 %v1684, %v1684
      %v1813 = vpack.c.b16 %v1685, %v1685
      %v1814 = vpack.c.b16 %v1686, %v1686
      %v1815 = vpack.c.b16 %v1687, %v1687
      %v1816 = vpack.c.b16 %v1688, %v1688
      %v1817 = vpack.c.b16 %v1689, %v1689
      %v1818 = vpack.c.b16 %v1690, %v1690
      %v1819 = vpack.c.b16 %v1691, %v1691
      %v1820 = vpack.c.b16 %v1692, %v1692
      %v1821 = vpack.c.b16 %v1693, %v1693
      %v1822 = vpack.c.b16 %v1694, %v1694
      %v1823 = vpack.c.b16 %v1695, %v1695
      %v1824 = vpack.c.b16 %v1696, %v1696
      %v1825 = vpack.c.b16 %v1697, %v1697
      %v1826 = vpack.c.b16 %v1698, %v1698
      %v1827 = vpack.c.b16 %v1699, %v1699
      %v1828 = vpack.c.b16 %v1700, %v1700
      %v1829 = vpack.c.b16 %v1701, %v1701
      %v1830 = vpack.c.b16 %v1702, %v1702
      %v1831 = vpack.c.b16 %v1703, %v1703
      %v1832 = vpack.c.b16 %v1704, %v1704
      %v1833 = vpack.c.b16 %v1705, %v1705
      %v1834 = vpack.c.b16 %v1706, %v1706
      %v1835 = vpack.c.b16 %v1707, %v1707
      %v1836 = vpack.c.b16 %v1708, %v1708
      %v1837 = vpack.c.b16 %v1709, %v1709
      %v1838 = vpack.c.b16 %v1710, %v1710
      %v1839 = vpack.c.b16 %v1711, %v1711
      %v1840 = vpack.c.b16 %v1712, %v1712
      %v1841 = vpack.c.b16 %v1713, %v1713
      %v1842 = vpack.c.b16 %v1714, %v1714
      %v1843 = vpack.c.b16 %v1715, %v1715
      %v1844 = vpack.c.b16 %v1716, %v1716
      %v1845 = vpack.c.b16 %v1717, %v1717
      %v1846 = vpack.c.b16 %v1718, %v1718
      %v1847 = vpack.c.b16 %v1719, %v1719
      %v1848 = vpack.c.b16 %v1720, %v1720
      %v1849 = vpack.c.b16 %v1721, %v1721
      %v1850 = vpack.c.b16 %v1722, %v1722
      %v1851 = vpack.c.b16 %v1723, %v1723
      %v1852 = vpack.c.b16 %v1724, %v1724
      %v1853 = vpack.c.b16 %v1725, %v1725
      %v1854 = vpack.c.b16 %v1726, %v1726
      %v1855 = vpack.c.b16 %v1727, %v1727
      %v1856 = vpack.c.b16 %v1728, %v1728
      %v1857 = vpack.c.b16 %v1729, %v1729
      %v1858 = vpack.c.b16 %v1730, %v1730
      %v1859 = vpack.c.b16 %v1731, %v1731
      %v1860 = vpack.c.b16 %v1732, %v1732
      %v1861 = vpack.c.b16 %v1733, %v1733
      %v1862 = vpack.c.b16 %v1734, %v1734
      %v1863 = vpack.c.b16 %v1735, %v1735
      %v1864 = vpack.c.b16 %v1736, %v1736
      %v1865 = vpack.c.b16 %v1737, %v1737
      %v1866 = vpack.c.b16 %v1738, %v1738
      %v1867 = vpack.c.b16 %v1739, %v1739
      %v1868 = vpack.c.b16 %v1740, %v1740
      %v1869 = vpack.c.b16 %v1741, %v1741
      %v1870 = vpack.c.b16 %v1742, %v1742
      %v1871 = vpack.c.b16 %v1743, %v1743
      %v1872 = vpack.c.b16 %v1744, %v1744
      %v1873 = vpack.c.b16 %v1745, %v1745
      %v1874 = vpack.c.b16 %v1746, %v1746
      %v1875 = vpack.c.b16 %v1747, %v1747
      %v1876 = vpack.c.b16 %v1748, %v1748
      %v1877 = vpack.c.b16 %v1749, %v1749
      %v1878 = vpack.c.b16 %v1750, %v1750
      %v1879 = vpack.c.b16 %v1751, %v1751
      %v1880 = vpack.c.b16 %v1752, %v1752
      %v1881 = vpack.c.b16 %v1753, %v1753
      %v1882 = vpack.c.b16 %v1754, %v1754
      %v1883 = vpack.c.b16 %v1755, %v1755
      %v1884 = vpack.c.b16 %v1756, %v1756
      %v1885 = vpack.c.b16 %v1757, %v1757
      %2014 = vst [vmem:[%s145] sm:$0xf] %v1758
      %2015 = vst [vmem:[%s145 + $0x4] sm:$0xf] %v1759
      %2016 = vst [vmem:[%s145 + $0x8] sm:$0xf] %v1760
      %2017 = vst [vmem:[%s145 + $0xc] sm:$0xf] %v1761
      %2018 = vst [vmem:[%s145 + $0x10] sm:$0xf] %v1762
      %2019 = vst [vmem:[%s145 + $0x14] sm:$0xf] %v1763
      %2020 = vst [vmem:[%s145 + $0x18] sm:$0xf] %v1764
      %2021 = vst [vmem:[%s145 + $0x1c] sm:$0xf] %v1765
      %2022 = vst [vmem:[%s145 + $0x20] sm:$0xf] %v1766
      %2023 = vst [vmem:[%s145 + $0x24] sm:$0xf] %v1767
      %2024 = vst [vmem:[%s145 + $0x28] sm:$0xf] %v1768
      %2025 = vst [vmem:[%s145 + $0x2c] sm:$0xf] %v1769
      %2026 = vst [vmem:[%s145 + $0x30] sm:$0xf] %v1770
      %2027 = vst [vmem:[%s145 + $0x34] sm:$0xf] %v1771
      %2028 = vst [vmem:[%s145 + $0x38] sm:$0xf] %v1772
      %2029 = vst [vmem:[%s145 + $0x3c] sm:$0xf] %v1773
      %2030 = vst [vmem:[%s145 + $0x40] sm:$0xf] %v1774
      %2031 = vst [vmem:[%s145 + $0x44] sm:$0xf] %v1775
      %2032 = vst [vmem:[%s145 + $0x48] sm:$0xf] %v1776
      %2033 = vst [vmem:[%s145 + $0x4c] sm:$0xf] %v1777
      %2034 = vst [vmem:[%s145 + $0x50] sm:$0xf] %v1778
      %2035 = vst [vmem:[%s145 + $0x54] sm:$0xf] %v1779
      %2036 = vst [vmem:[%s145 + $0x58] sm:$0xf] %v1780
      %2037 = vst [vmem:[%s145 + $0x5c] sm:$0xf] %v1781
      %2038 = vst [vmem:[%s145 + $0x60] sm:$0xf] %v1782
      %2039 = vst [vmem:[%s145 + $0x64] sm:$0xf] %v1783
      %2040 = vst [vmem:[%s145 + $0x68] sm:$0xf] %v1784
      %2041 = vst [vmem:[%s145 + $0x6c] sm:$0xf] %v1785
      %2042 = vst [vmem:[%s145 + $0x70] sm:$0xf] %v1786
      %2043 = vst [vmem:[%s145 + $0x74] sm:$0xf] %v1787
      %2044 = vst [vmem:[%s145 + $0x78] sm:$0xf] %v1788
      %2045 = vst [vmem:[%s145 + $0x7c] sm:$0xf] %v1789
      %2046 = vst [vmem:[%s145 + $0x80] sm:$0xf] %v1790
      %2047 = vst [vmem:[%s145 + $0x84] sm:$0xf] %v1791
      %2048 = vst [vmem:[%s145 + $0x88] sm:$0xf] %v1792
      %2049 = vst [vmem:[%s145 + $0x8c] sm:$0xf] %v1793
      %2050 = vst [vmem:[%s145 + $0x90] sm:$0xf] %v1794
      %2051 = vst [vmem:[%s145 + $0x94] sm:$0xf] %v1795
      %2052 = vst [vmem:[%s145 + $0x98] sm:$0xf] %v1796
      %2053 = vst [vmem:[%s145 + $0x9c] sm:$0xf] %v1797
      %2054 = vst [vmem:[%s145 + $0xa0] sm:$0xf] %v1798
      %2055 = vst [vmem:[%s145 + $0xa4] sm:$0xf] %v1799
      %2056 = vst [vmem:[%s145 + $0xa8] sm:$0xf] %v1800
      %2057 = vst [vmem:[%s145 + $0xac] sm:$0xf] %v1801
      %2058 = vst [vmem:[%s145 + $0xb0] sm:$0xf] %v1802
      %2059 = vst [vmem:[%s145 + $0xb4] sm:$0xf] %v1803
      %2060 = vst [vmem:[%s145 + $0xb8] sm:$0xf] %v1804
      %2061 = vst [vmem:[%s145 + $0xbc] sm:$0xf] %v1805
      %2062 = vst [vmem:[%s145 + $0xc0] sm:$0xf] %v1806
      %2063 = vst [vmem:[%s145 + $0xc4] sm:$0xf] %v1807
      %2064 = vst [vmem:[%s145 + $0xc8] sm:$0xf] %v1808
      %2065 = vst [vmem:[%s145 + $0xcc] sm:$0xf] %v1809
      %2066 = vst [vmem:[%s145 + $0xd0] sm:$0xf] %v1810
      %2067 = vst [vmem:[%s145 + $0xd4] sm:$0xf] %v1811
      %2068 = vst [vmem:[%s145 + $0xd8] sm:$0xf] %v1812
      %2069 = vst [vmem:[%s145 + $0xdc] sm:$0xf] %v1813
      %2070 = vst [vmem:[%s145 + $0xe0] sm:$0xf] %v1814
      %2071 = vst [vmem:[%s145 + $0xe4] sm:$0xf] %v1815
      %2072 = vst [vmem:[%s145 + $0xe8] sm:$0xf] %v1816
      %2073 = vst [vmem:[%s145 + $0xec] sm:$0xf] %v1817
      %2074 = vst [vmem:[%s145 + $0xf0] sm:$0xf] %v1818
      %2075 = vst [vmem:[%s145 + $0xf4] sm:$0xf] %v1819
      %2076 = vst [vmem:[%s145 + $0xf8] sm:$0xf] %v1820
      %2077 = vst [vmem:[%s145 + $0xfc] sm:$0xf] %v1821
      %2078 = vst [vmem:[%s145 + $0x100] sm:$0xf] %v1822
      %2079 = vst [vmem:[%s145 + $0x104] sm:$0xf] %v1823
      %2080 = vst [vmem:[%s145 + $0x108] sm:$0xf] %v1824
      %2081 = vst [vmem:[%s145 + $0x10c] sm:$0xf] %v1825
      %2082 = vst [vmem:[%s145 + $0x110] sm:$0xf] %v1826
      %2083 = vst [vmem:[%s145 + $0x114] sm:$0xf] %v1827
      %2084 = vst [vmem:[%s145 + $0x118] sm:$0xf] %v1828
      %2085 = vst [vmem:[%s145 + $0x11c] sm:$0xf] %v1829
      %2086 = vst [vmem:[%s145 + $0x120] sm:$0xf] %v1830
      %2087 = vst [vmem:[%s145 + $0x124] sm:$0xf] %v1831
      %2088 = vst [vmem:[%s145 + $0x128] sm:$0xf] %v1832
      %2089 = vst [vmem:[%s145 + $0x12c] sm:$0xf] %v1833
      %2090 = vst [vmem:[%s145 + $0x130] sm:$0xf] %v1834
      %2091 = vst [vmem:[%s145 + $0x134] sm:$0xf] %v1835
      %2092 = vst [vmem:[%s145 + $0x138] sm:$0xf] %v1836
      %2093 = vst [vmem:[%s145 + $0x13c] sm:$0xf] %v1837
      %2094 = vst [vmem:[%s145 + $0x140] sm:$0xf] %v1838
      %2095 = vst [vmem:[%s145 + $0x144] sm:$0xf] %v1839
      %2096 = vst [vmem:[%s145 + $0x148] sm:$0xf] %v1840
      %2097 = vst [vmem:[%s145 + $0x14c] sm:$0xf] %v1841
      %2098 = vst [vmem:[%s145 + $0x150] sm:$0xf] %v1842
      %2099 = vst [vmem:[%s145 + $0x154] sm:$0xf] %v1843
      %2100 = vst [vmem:[%s145 + $0x158] sm:$0xf] %v1844
      %2101 = vst [vmem:[%s145 + $0x15c] sm:$0xf] %v1845
      %2102 = vst [vmem:[%s145 + $0x160] sm:$0xf] %v1846
      %2103 = vst [vmem:[%s145 + $0x164] sm:$0xf] %v1847
      %2104 = vst [vmem:[%s145 + $0x168] sm:$0xf] %v1848
      %2105 = vst [vmem:[%s145 + $0x16c] sm:$0xf] %v1849
      %2106 = vst [vmem:[%s145 + $0x170] sm:$0xf] %v1850
      %2107 = vst [vmem:[%s145 + $0x174] sm:$0xf] %v1851
      %2108 = vst [vmem:[%s145 + $0x178] sm:$0xf] %v1852
      %2109 = vst [vmem:[%s145 + $0x17c] sm:$0xf] %v1853
      %2110 = vst [vmem:[%s145 + $0x180] sm:$0xf] %v1854
      %2111 = vst [vmem:[%s145 + $0x184] sm:$0xf] %v1855
      %2112 = vst [vmem:[%s145 + $0x188] sm:$0xf] %v1856
      %2113 = vst [vmem:[%s145 + $0x18c] sm:$0xf] %v1857
      %2114 = vst [vmem:[%s145 + $0x190] sm:$0xf] %v1858
      %2115 = vst [vmem:[%s145 + $0x194] sm:$0xf] %v1859
      %2116 = vst [vmem:[%s145 + $0x198] sm:$0xf] %v1860
      %2117 = vst [vmem:[%s145 + $0x19c] sm:$0xf] %v1861
      %2118 = vst [vmem:[%s145 + $0x1a0] sm:$0xf] %v1862
      %2119 = vst [vmem:[%s145 + $0x1a4] sm:$0xf] %v1863
      %2120 = vst [vmem:[%s145 + $0x1a8] sm:$0xf] %v1864
      %2121 = vst [vmem:[%s145 + $0x1ac] sm:$0xf] %v1865
      %2122 = vst [vmem:[%s145 + $0x1b0] sm:$0xf] %v1866
      %2123 = vst [vmem:[%s145 + $0x1b4] sm:$0xf] %v1867
      %2124 = vst [vmem:[%s145 + $0x1b8] sm:$0xf] %v1868
      %2125 = vst [vmem:[%s145 + $0x1bc] sm:$0xf] %v1869
      %2126 = vst [vmem:[%s145 + $0x1c0] sm:$0xf] %v1870
      %2127 = vst [vmem:[%s145 + $0x1c4] sm:$0xf] %v1871
      %2128 = vst [vmem:[%s145 + $0x1c8] sm:$0xf] %v1872
      %2129 = vst [vmem:[%s145 + $0x1cc] sm:$0xf] %v1873
      %2130 = vst [vmem:[%s145 + $0x1d0] sm:$0xf] %v1874
      %2131 = vst [vmem:[%s145 + $0x1d4] sm:$0xf] %v1875
      %2132 = vst [vmem:[%s145 + $0x1d8] sm:$0xf] %v1876
      %2133 = vst [vmem:[%s145 + $0x1dc] sm:$0xf] %v1877
      %2134 = vst [vmem:[%s145 + $0x1e0] sm:$0xf] %v1878
      %2135 = vst [vmem:[%s145 + $0x1e4] sm:$0xf] %v1879
      %2136 = vst [vmem:[%s145 + $0x1e8] sm:$0xf] %v1880
      %2137 = vst [vmem:[%s145 + $0x1ec] sm:$0xf] %v1881
      %2138 = vst [vmem:[%s145 + $0x1f0] sm:$0xf] %v1882
      %2139 = vst [vmem:[%s145 + $0x1f4] sm:$0xf] %v1883
      %2140 = vst [vmem:[%s145 + $0x1f8] sm:$0xf] %v1884
      %2141 = vst [vmem:[%s145 + $0x1fc] sm:$0xf] %v1885
      %s2142 = smul.u32 128, %s13
      %p2143 = scmp.lt.s32.totalorder %s2142, 255
      %s2144 = scalar_select %p2143, %s2142, 255
      %s2145 = smul.addr %s2144, 4
      %s2146 = scalar_lea.vmem %s2, %s2145
      // Predicated region
      $region29: #{generator_forward.9} parent=27 // pred_check
        %p2147 = pneg %p78
      $region30: #{generator_forward.9} parent=27 // pred_check_branch
        %2149 = sbr.rel (%p2147) target = $region32
      $region31: #{generator_forward.9} parent=27 // pred_region
        %s2150 = smul.u32 128, %s13
      $region32: #{generator_forward.9} parent=27 // pred_fallthru
        _
    $region28: #{generator_forward.9} parent=5 // pred_fallthru
      _
    %p2151 = scmp.le.s32.totalorder 2, %s8
    // Predicated region
    $region33: #{generator_forward.9} parent=5 // pred_check
      %p2152 = pneg %p2151
    $region34: #{generator_forward.9} parent=5 // pred_check_branch
      %2154 = sbr.rel (%p2152) target = $region36
    $region35: #{generator_forward.9} parent=5 // pred_region
      %s2155 = ssub.s32 %s8, 2
      // Predicated region
      $region37: #{generator_forward.9} parent=35 // pred_check
        %p2156 = pneg %p84
      $region38: #{generator_forward.9} parent=35 // pred_check_branch
        %2158 = sbr.rel (%p2156) target = $region40
      $region39: #{generator_forward.9} parent=35 // pred_region
        %s2159 = smul.u32 128, %s14
        %p2160 = scmp.lt.s32.totalorder %s2159, 255
        %s2161 = scalar_select %p2160, %s2159, 255
        %s2162 = smul.addr %s2161, 4
        %s2163 = scalar_lea.vmem %s2, %s2162
      $region40: #{generator_forward.9} parent=35 // pred_fallthru
        _
    $region36: #{generator_forward.9} parent=5 // pred_fallthru
      _
  $region6: #{generator_forward.9} parent=0 // loop_footer
    %s12 = sadd.s32 1, %s8
  $region7: #{generator_forward.9} parent=0 // loop_footer_branch
    %7 = sbr.rel target = $region3
  $region8: #{generator_forward.9} parent=0 // loop_exit
    _

</llo_original>
